<compile_context>
chip_gen: v5e
topology: v5e:2x2
jax: 0.10.0
libtpu: 0.0.40
codegen_flags: <defaults>
</compile_context>

<pallas_src>
import functools
import math

import jax
import jax.numpy as jnp
from jax import lax
from jax.experimental import pallas as pl
from jax.experimental.pallas import tpu as pltpu

BN_EPS = 1e-5
LANE = 128


def _round_up(x, m):
    return (x + m - 1) // m * m


# ----------------------------------------------------------------------------
# Per-generation VMEM budget (review: raise on v5e/v6e, keep ~48 MiB on v7x)
# ----------------------------------------------------------------------------
def _pick_vmem_limit():
    try:
        info = pltpu.get_tpu_info()
        cap = getattr(info, "vmem_capacity_bytes", None)
        if cap is not None and cap >= 100 * 1024 * 1024:   # v5e / v6e: 128 MiB
            return 100 * 1024 * 1024
    except Exception:
        pass
    return 48 * 1024 * 1024                                # v7x: 64 MiB physical


VMEM_LIMIT = _pick_vmem_limit()
# Target bf16 patch bytes resident per grid step (Pallas double-buffers it).
TARGET_PATCH_BYTES = (8 << 20) if VMEM_LIMIT >= (96 << 20) else (4 << 20)

# Set by _probe_single_buffer_weights(); weights are single-buffered when the
# installed JAX supports pipeline_mode=pl.Buffered(1).
_SINGLE_BUF_W = False


def _choose_m_tile(m, kc, cp):
    """Adaptive M tile: ~TARGET_PATCH_BYTES of bf16 patches per grid step,
    >= 2 grid steps whenever possible (v7x megacore), rows a multiple of 8."""
    bytes_per_row = 2 * max(kc, cp)
    target = TARGET_PATCH_BYTES // bytes_per_row
    target = max(256, min(4096, target))
    n_tiles = max(1, -(-m // target))
    if m >= 16:
        n_tiles = max(n_tiles, 2)          # keep both v7x TensorCores busy
    tile = _round_up(-(-m // n_tiles), 8)
    return tile, tile * n_tiles


def _pad_rows(x, rows):
    r = x.shape[0]
    if r == rows:
        return x
    return jnp.pad(x, ((0, rows - r), (0, 0)))


# ----------------------------------------------------------------------------
# Pass 1: conv-as-single-matmul + per-tile BN statistics (sum, sum of squares)
# ----------------------------------------------------------------------------
def _conv_stats_kernel(p_ref, w_ref, o_ref, sum_ref, sq_ref):
    acc = jnp.dot(p_ref[...], w_ref[...], preferred_element_type=jnp.float32)
    o_ref[...] = acc.astype(o_ref.dtype)          # bf16 intermediate (review)
    sum_ref[...] = jnp.sum(acc, axis=0, keepdims=True)[None]
    sq_ref[...] = jnp.sum(acc * acc, axis=0, keepdims=True)[None]


def _weight_spec(kc, cp):
    # Constant index_map -> weights never change across the grid; single-buffer
    # them (saves kc*cp*2 bytes of VMEM, matters most on v7x's 64 MiB).
    if _SINGLE_BUF_W:
        return pl.BlockSpec((kc, cp), lambda i: (0, 0),
                            pipeline_mode=pl.Buffered(1))
    return pl.BlockSpec((kc, cp), lambda i: (0, 0))


def conv_stats(patches, w, m_tile):
    """patches: [M_pad, Kc] bf16, w: [Kc, Cp] bf16 ->
       (acc [M_pad, Cp] bf16, sums [grid,1,Cp] f32, sumsqs [grid,1,Cp] f32)."""
    m_pad, kc = patches.shape
    cp = w.shape[1]
    grid = m_pad // m_tile
    cost = pl.CostEstimate(
        flops=2 * m_pad * kc * cp,
        transcendentals=0,
        bytes_accessed=(patches.size * 2 + w.size * 2
                        + m_pad * cp * 2 + 2 * grid * cp * 4))
    stat_spec = pl.BlockSpec((1, 1, cp), lambda i: (i, 0, 0))
    return pl.pallas_call(
        _conv_stats_kernel,
        out_shape=(jax.ShapeDtypeStruct((m_pad, cp), jnp.bfloat16),
                   jax.ShapeDtypeStruct((grid, 1, cp), jnp.float32),
                   jax.ShapeDtypeStruct((grid, 1, cp), jnp.float32)),
        grid=(grid,),
        in_specs=[pl.BlockSpec((m_tile, kc), lambda i: (i, 0)),
                  _weight_spec(kc, cp)],
        out_specs=(pl.BlockSpec((m_tile, cp), lambda i: (i, 0)),
                   stat_spec, stat_spec),
        compiler_params=pltpu.CompilerParams(
            dimension_semantics=("parallel",),
            vmem_limit_bytes=VMEM_LIMIT),
        cost_estimate=cost,
    )(patches, w)


def _probe_single_buffer_weights():
    """Enable pl.Buffered(1) weight staging if this JAX/TPU supports it."""
    global _SINGLE_BUF_W
    try:
        _SINGLE_BUF_W = True
        p = jnp.zeros((16, 128), jnp.bfloat16)
        w = jnp.zeros((128, 128), jnp.bfloat16)
        jax.block_until_ready(conv_stats(p, w, 8))
    except Exception:
        _SINGLE_BUF_W = False


def bn_scale_shift(sums, sqs, m_true, gamma, beta):
    """Finalize batch stats (biased var, eps=1e-5) -> per-channel scale/shift.
    Note: single-pass E[x^2]-E[x]^2 in f32 (clamped at 0)."""
    mean = jnp.sum(sums, axis=(0, 1)) / m_true
    ex2 = jnp.sum(sqs, axis=(0, 1)) / m_true
    var = jnp.maximum(ex2 - mean * mean, 0.0)
    scale = gamma * lax.rsqrt(var + BN_EPS)
    shift = beta - mean * scale
    return scale[None, :], shift[None, :]


# ----------------------------------------------------------------------------
# Pass 2: normalize (+ optional residual with optional fused residual-BN) + ReLU
# ----------------------------------------------------------------------------
def _bn_act_kernel(*refs, relu, res_mode):
    if res_mode == 2:
        x_ref, sc_ref, sh_ref, r_ref, rsc_ref, rsh_ref, o_ref = refs
    elif res_mode == 1:
        x_ref, sc_ref, sh_ref, r_ref, o_ref = refs
    else:
        x_ref, sc_ref, sh_ref, o_ref = refs
    y = x_ref[...].astype(jnp.float32) * sc_ref[...] + sh_ref[...]
    if res_mode == 1:
        y = y + r_ref[...].astype(jnp.float32)
    elif res_mode == 2:
        y = y + (r_ref[...].astype(jnp.float32) * rsc_ref[...] + rsh_ref[...])
    if relu:
        y = jnp.maximum(y, 0.0)
    o_ref[...] = y.astype(o_ref.dtype)


def bn_act(acc, scale, shift, m_tile, *, relu=True, residual=None,
           res_scale=None, res_shift=None):
    """acc: [M_pad, Cp] bf16 -> bf16 output (feeds the next conv's im2col)."""
    m_pad, cp = acc.shape
    grid = m_pad // m_tile
    row_spec = pl.BlockSpec((m_tile, cp), lambda i: (i, 0))
    vec_spec = pl.BlockSpec((1, cp), lambda i: (0, 0))
    if residual is None:
        res_mode, args = 0, (acc, scale, shift)
        in_specs = [row_spec, vec_spec, vec_spec]
    elif res_scale is None:
        res_mode, args = 1, (acc, scale, shift, residual)
        in_specs = [row_spec, vec_spec, vec_spec, row_spec]
    else:
        res_mode, args = 2, (acc, scale, shift, residual, res_scale, res_shift)
        in_specs = [row_spec, vec_spec, vec_spec, row_spec, vec_spec, vec_spec]
    kern = functools.partial(_bn_act_kernel, relu=relu, res_mode=res_mode)
    return pl.pallas_call(
        kern,
        out_shape=jax.ShapeDtypeStruct((m_pad, cp), jnp.bfloat16),
        grid=(grid,),
        in_specs=in_specs,
        out_specs=row_spec,
        compiler_params=pltpu.CompilerParams(
            dimension_semantics=("parallel",),
            vmem_limit_bytes=VMEM_LIMIT),
    )(*args)


# ----------------------------------------------------------------------------
# JAX glue: im2col directly in [M, 9*C] layout (tap-major, channel-minor),
# performed on a bf16 image so the 9x intermediate is half the HBM traffic.
# ----------------------------------------------------------------------------
def extract_patches_3x3(x, stride):
    """x: [N, H, W, C] (bf16) -> ([N*Ho*Wo, 9*C], (N, Ho, Wo))."""
    N, H, W, C = x.shape
    Ho = (H + 2 - 3) // stride + 1
    Wo = (W + 2 - 3) // stride + 1
    xp = jnp.pad(x, ((0, 0), (1, 1), (1, 1), (0, 0)))
    taps = []
    for dy in range(3):
        for dx in range(3):
            taps.append(xp[:, dy: dy + stride * (Ho - 1) + 1: stride,
                              dx: dx + stride * (Wo - 1) + 1: stride, :])
    pat = jnp.concatenate(taps, axis=-1)          # [N, Ho, Wo, 9*C]
    return pat.reshape(N * Ho * Wo, 9 * C), (N, Ho, Wo)


# ----------------------------------------------------------------------------
# BasicBlock forward (NHWC bf16 in / out, un-padded channels)
# ----------------------------------------------------------------------------
def basic_block(x_img, params, stride):
    N, H, W, Cin = x_img.shape
    Cout = params["cout"]
    Cp = params["cp"]

    # ---- conv1 (3x3, stride) + bn1 + relu --------------------------------
    p1, (n, ho, wo) = extract_patches_3x3(x_img, stride)        # bf16 patches
    m = n * ho * wo
    m_tile, m_pad = _choose_m_tile(m, 9 * max(Cin, Cout), Cp)
    acc1, su1, sq1 = conv_stats(_pad_rows(p1, m_pad), params["w1"], m_tile)
    s1, t1 = bn_scale_shift(su1, sq1, m, params["g1"], params["b1"])
    out1 = bn_act(acc1, s1, t1, m_tile, relu=True)              # bf16

    # ---- residual path (identity, or 1x1 conv whose BN is fused below) ---
    if "wd" in params:
        xs = x_img[:, ::stride, ::stride, :].reshape(m, Cin)
        accd, sud, sqd = conv_stats(_pad_rows(xs, m_pad), params["wd"], m_tile)
        rs, rt = bn_scale_shift(sud, sqd, m, params["gd"], params["bd"])
        res = accd
    else:
        x_flat = x_img.reshape(m, Cin)
        if Cin == Cp and m == m_pad:
            res = x_flat                 # already lane-dense & row-aligned: no copy
        else:
            res = jnp.pad(x_flat, ((0, m_pad - m), (0, Cp - Cin)))
        rs = rt = None

    # ---- conv2 (3x3, stride 1) + bn2 + residual + relu -------------------
    out1_img = out1[:m, :Cout].reshape(n, ho, wo, Cout)          # bf16
    p2, _ = extract_patches_3x3(out1_img, 1)
    acc2, su2, sq2 = conv_stats(_pad_rows(p2, m_pad), params["w2"], m_tile)
    s2, t2 = bn_scale_shift(su2, sq2, m, params["g2"], params["b2"])
    out2 = bn_act(acc2, s2, t2, m_tile, relu=True,
                  residual=res, res_scale=rs, res_shift=rt)
    return out2[:m, :Cout].reshape(n, ho, wo, Cout)


# ----------------------------------------------------------------------------
# Parameter construction (matches torch init; lane-padded Cout, exact K rows)
# ----------------------------------------------------------------------------
def init_block_params(key, cin, cout, stride):
    k1, k2, k3 = jax.random.split(key, 3)
    cp = _round_up(cout, LANE)
    std3 = math.sqrt(2.0 / (3 * 3 * cout))        # Conv2d normal_(0, sqrt(2/n))

    def make_w(k, rows, std):
        w = jnp.zeros((rows, cp), jnp.float32)
        w = w.at[:, :cout].set(
            jax.random.normal(k, (rows, cout), jnp.float32) * std)
        return w.astype(jnp.bfloat16)

    params = dict(
        cout=cout, cp=cp,
        w1=make_w(k1, 9 * cin, std3),
        g1=jnp.ones((cp,), jnp.float32), b1=jnp.zeros((cp,), jnp.float32),
        w2=make_w(k2, 9 * cout, std3),
        g2=jnp.ones((cp,), jnp.float32), b2=jnp.zeros((cp,), jnp.float32),
    )
    if stride != 1 or cin != cout:                # downsample: 1x1 conv + BN
        std1 = math.sqrt(2.0 / (1 * 1 * cout))
        params.update(
            wd=make_w(k3, cin, std1),
            gd=jnp.ones((cp,), jnp.float32), bd=jnp.zeros((cp,), jnp.float32))
    return params


class ResNetBasePallas:
    """Pallas port of ResNetBase (start_layers=None, BasicBlock, groups=1)."""

    def __init__(self, key, input_size, layers, layers_in_planes,
                 layers_out_planes, strides=None):
        if strides is None:
            strides = [1, 2, 2, 2]
        assert (len(layers) == len(layers_in_planes)
                == len(layers_out_planes) == len(strides))
        self.blocks = []
        for il in range(len(layers)):
            for b in range(layers[il]):
                key, sub = jax.random.split(key)
                cin = layers_in_planes[il] if b == 0 else layers_out_planes[il]
                s = strides[il] if b == 0 else 1
                self.blocks.append(
                    (init_block_params(sub, cin, layers_out_planes[il], s), s))
        self.outshape = [layers_out_planes[-1],
                         int(input_size[0] / 8), int(input_size[1] / 8)]

    def __call__(self, x_nchw):
        # NCHW -> NHWC, bf16 images throughout (MXU operands are bf16 anyway).
        x = jnp.transpose(x_nchw, (0, 2, 3, 1)).astype(jnp.bfloat16)
        for params, s in self.blocks:
            x = basic_block(x, params, s)
        return jnp.transpose(x, (0, 3, 1, 2)).astype(jnp.float32)   # -> NCHW f32


# ----------------------------------------------------------------------------
if __name__ == "__main__":
    _probe_single_buffer_weights()

    key = jax.random.PRNGKey(0)
    k_model, k_x = jax.random.split(key)

    # Small config: 2 layer-groups, one BasicBlock each.
    model = ResNetBasePallas(
        k_model,
        input_size=(16, 16),
        layers=[1, 1],
        layers_in_planes=[4, 8],
        layers_out_planes=[8, 16],
        strides=[1, 2],
    )

    x = jax.random.normal(k_x, (2, 4, 16, 16), jnp.float32)  # NCHW, like torch
    fwd = jax.jit(lambda inp: model(inp))
    y = jax.block_until_ready(fwd(x))

    assert y.shape == (2, 16, 8, 8), y.shape
    assert y.dtype == jnp.float32
    assert bool(jnp.all(jnp.isfinite(y)))
    print("KERNEL_OK")
</pallas_src>

<mosaic_0001>
module attributes {stable_mosaic.version = 11 : i64} {
  func.func @_conv_stats_kernel(%arg0: i32, %arg1: memref<8x128xbf16, #tpu.memory_space<vmem>>, %arg2: memref<128x128xbf16, #tpu.memory_space<vmem>>, %arg3: memref<8x128xbf16, #tpu.memory_space<vmem>>, %arg4: memref<1x1x128xf32, #tpu.memory_space<vmem>>, %arg5: memref<1x1x128xf32, #tpu.memory_space<vmem>>) attributes {dimension_semantics = [#tpu.dimension_semantics<parallel>], iteration_bounds = array<i64: 2>, scalar_prefetch = 0 : i64, scratch_operands = 0 : i64, tpu.core_type = #tpu.core_type<tc>, window_params = [{transform_indices = @transform_0, window_bounds = array<i64: 8, 128>}, {pipeline_mode = #tpu.pipeline_mode<synchronous>, transform_indices = @transform_1, window_bounds = array<i64: 128, 128>}, {transform_indices = @transform_2, window_bounds = array<i64: 8, 128>}, {transform_indices = @transform_3, window_bounds = array<i64: 1, 1, 128>}, {transform_indices = @transform_4, window_bounds = array<i64: 1, 1, 128>}]} {
    %c0 = arith.constant 0 : index
    %c0_0 = arith.constant 0 : index
    %0 = vector.load %arg1[%c0, %c0_0] : memref<8x128xbf16, #tpu.memory_space<vmem>>, vector<8x128xbf16>
    %c0_1 = arith.constant 0 : index
    %c0_2 = arith.constant 0 : index
    %1 = vector.load %arg2[%c0_1, %c0_2] : memref<128x128xbf16, #tpu.memory_space<vmem>>, vector<128x128xbf16>
    %cst = arith.constant dense<0.000000e+00> : vector<8x128xf32>
    %2 = tpu.matmul %0, %1, %cst {dimension_numbers = #tpu.dot_dimension_numbers<[1], [0], [0], [1], [0, 0, 1, 1], [], []>} : vector<8x128xbf16>, vector<128x128xbf16>, vector<8x128xf32> -> vector<8x128xf32>
    %3 = arith.truncf %2 : vector<8x128xf32> to vector<8x128xbf16>
    %c0_3 = arith.constant 0 : index
    %c0_4 = arith.constant 0 : index
    %4 = vector.load %arg3[%c0_3, %c0_4] : memref<8x128xbf16, #tpu.memory_space<vmem>>, vector<8x128xbf16>
    tpu.vector_store %arg3[%c0_3, %c0_4], %3 {strides = array<i32>} : memref<8x128xbf16, #tpu.memory_space<vmem>>, vector<8x128xbf16>,
    %cst_5 = arith.constant dense<0.000000e+00> : vector<128xf32>
    %5 = vector.multi_reduction <add>, %2, %cst_5 [0] : vector<8x128xf32> to vector<128xf32>
    %6 = vector.shape_cast %5 : vector<128xf32> to vector<1x128xf32>
    %7 = vector.shape_cast %6 : vector<1x128xf32> to vector<1x1x128xf32>
    %c0_6 = arith.constant 0 : index
    %c0_7 = arith.constant 0 : index
    %c0_8 = arith.constant 0 : index
    %8 = vector.load %arg4[%c0_6, %c0_7, %c0_8] : memref<1x1x128xf32, #tpu.memory_space<vmem>>, vector<1x1x128xf32>
    tpu.vector_store %arg4[%c0_6, %c0_7, %c0_8], %7 {strides = array<i32>} : memref<1x1x128xf32, #tpu.memory_space<vmem>>, vector<1x1x128xf32>,
    %9 = arith.mulf %2, %2 : vector<8x128xf32>
    %cst_9 = arith.constant dense<0.000000e+00> : vector<128xf32>
    %10 = vector.multi_reduction <add>, %9, %cst_9 [0] : vector<8x128xf32> to vector<128xf32>
    %11 = vector.shape_cast %10 : vector<128xf32> to vector<1x128xf32>
    %12 = vector.shape_cast %11 : vector<1x128xf32> to vector<1x1x128xf32>
    %c0_10 = arith.constant 0 : index
    %c0_11 = arith.constant 0 : index
    %c0_12 = arith.constant 0 : index
    %13 = vector.load %arg5[%c0_10, %c0_11, %c0_12] : memref<1x1x128xf32, #tpu.memory_space<vmem>>, vector<1x1x128xf32>
    tpu.vector_store %arg5[%c0_10, %c0_11, %c0_12], %12 {strides = array<i32>} : memref<1x1x128xf32, #tpu.memory_space<vmem>>, vector<1x1x128xf32>,
    return
  }
  func.func @transform_0(%arg0: i32) -> (i32, i32) {
    %c0_i32 = arith.constant 0 : i32
    %c0_i32_0 = arith.constant 0 : i32
    return %arg0, %c0_i32 : i32, i32
  }
  func.func @transform_1(%arg0: i32) -> (i32, i32) {
    %c0_i32 = arith.constant 0 : i32
    %c0_i32_0 = arith.constant 0 : i32
    %c0_i32_1 = arith.constant 0 : i32
    return %c0_i32, %c0_i32_0 : i32, i32
  }
  func.func @transform_2(%arg0: i32) -> (i32, i32) {
    %c0_i32 = arith.constant 0 : i32
    %c0_i32_0 = arith.constant 0 : i32
    return %arg0, %c0_i32 : i32, i32
  }
  func.func @transform_3(%arg0: i32) -> (i32, i32, i32) {
    %c0_i32 = arith.constant 0 : i32
    %c0_i32_0 = arith.constant 0 : i32
    %c0_i32_1 = arith.constant 0 : i32
    return %arg0, %c0_i32, %c0_i32_0 : i32, i32, i32
  }
  func.func @transform_4(%arg0: i32) -> (i32, i32, i32) {
    %c0_i32 = arith.constant 0 : i32
    %c0_i32_0 = arith.constant 0 : i32
    %c0_i32_1 = arith.constant 0 : i32
    return %arg0, %c0_i32, %c0_i32_0 : i32, i32, i32
  }
}

module attributes {stable_mosaic.version = 11 : i64} {
  func.func @_bn_act_kernel(%arg0: i32, %arg1: memref<256x128xbf16, #tpu.memory_space<vmem>>, %arg2: memref<1x128xf32, #tpu.memory_space<vmem>>, %arg3: memref<1x128xf32, #tpu.memory_space<vmem>>, %arg4: memref<256x128xbf16, #tpu.memory_space<vmem>>) attributes {dimension_semantics = [#tpu.dimension_semantics<parallel>], iteration_bounds = array<i64: 2>, scalar_prefetch = 0 : i64, scratch_operands = 0 : i64, tpu.core_type = #tpu.core_type<tc>, window_params = [{transform_indices = @transform_0, window_bounds = array<i64: 256, 128>}, {pipeline_mode = #tpu.pipeline_mode<synchronous>, transform_indices = @transform_1, window_bounds = array<i64: 1, 128>}, {pipeline_mode = #tpu.pipeline_mode<synchronous>, transform_indices = @transform_2, window_bounds = array<i64: 1, 128>}, {transform_indices = @transform_3, window_bounds = array<i64: 256, 128>}]} {
    %c0 = arith.constant 0 : index
    %c0_0 = arith.constant 0 : index
    %0 = vector.load %arg1[%c0, %c0_0] : memref<256x128xbf16, #tpu.memory_space<vmem>>, vector<256x128xbf16>
    %1 = arith.extf %0 : vector<256x128xbf16> to vector<256x128xf32>
    %c0_1 = arith.constant 0 : index
    %c0_2 = arith.constant 0 : index
    %2 = vector.load %arg2[%c0_1, %c0_2] : memref<1x128xf32, #tpu.memory_space<vmem>>, vector<1x128xf32>
    %3 = vector.broadcast %2 : vector<1x128xf32> to vector<256x128xf32>
    %4 = arith.mulf %1, %3 : vector<256x128xf32>
    %c0_3 = arith.constant 0 : index
    %c0_4 = arith.constant 0 : index
    %5 = vector.load %arg3[%c0_3, %c0_4] : memref<1x128xf32, #tpu.memory_space<vmem>>, vector<1x128xf32>
    %6 = vector.broadcast %5 : vector<1x128xf32> to vector<256x128xf32>
    %7 = arith.addf %4, %6 : vector<256x128xf32>
    %cst = arith.constant 0.000000e+00 : f32
    %8 = vector.broadcast %cst : f32 to vector<256x128xf32>
    %9 = arith.maximumf %7, %8 : vector<256x128xf32>
    %10 = arith.truncf %9 : vector<256x128xf32> to vector<256x128xbf16>
    %c0_5 = arith.constant 0 : index
    %c0_6 = arith.constant 0 : index
    %11 = vector.load %arg4[%c0_5, %c0_6] : memref<256x128xbf16, #tpu.memory_space<vmem>>, vector<256x128xbf16>
    tpu.vector_store %arg4[%c0_5, %c0_6], %10 {strides = array<i32>} : memref<256x128xbf16, #tpu.memory_space<vmem>>, vector<256x128xbf16>,
    return
  }
  func.func @transform_0(%arg0: i32) -> (i32, i32) {
    %c0_i32 = arith.constant 0 : i32
    %c0_i32_0 = arith.constant 0 : i32
    return %arg0, %c0_i32 : i32, i32
  }
  func.func @transform_1(%arg0: i32) -> (i32, i32) {
    %c0_i32 = arith.constant 0 : i32
    %c0_i32_0 = arith.constant 0 : i32
    %c0_i32_1 = arith.constant 0 : i32
    return %c0_i32, %c0_i32_0 : i32, i32
  }
  func.func @transform_2(%arg0: i32) -> (i32, i32) {
    %c0_i32 = arith.constant 0 : i32
    %c0_i32_0 = arith.constant 0 : i32
    %c0_i32_1 = arith.constant 0 : i32
    return %c0_i32, %c0_i32_0 : i32, i32
  }
  func.func @transform_3(%arg0: i32) -> (i32, i32) {
    %c0_i32 = arith.constant 0 : i32
    %c0_i32_0 = arith.constant 0 : i32
    return %arg0, %c0_i32 : i32, i32
  }
}

module attributes {stable_mosaic.version = 11 : i64} {
  func.func @_conv_stats_kernel(%arg0: i32, %arg1: memref<256x36xbf16, #tpu.memory_space<vmem>>, %arg2: memref<36x128xbf16, #tpu.memory_space<vmem>>, %arg3: memref<256x128xbf16, #tpu.memory_space<vmem>>, %arg4: memref<1x1x128xf32, #tpu.memory_space<vmem>>, %arg5: memref<1x1x128xf32, #tpu.memory_space<vmem>>) attributes {dimension_semantics = [#tpu.dimension_semantics<parallel>], iteration_bounds = array<i64: 2>, scalar_prefetch = 0 : i64, scratch_operands = 0 : i64, tpu.core_type = #tpu.core_type<tc>, window_params = [{transform_indices = @transform_0, window_bounds = array<i64: 256, 36>}, {pipeline_mode = #tpu.pipeline_mode<synchronous>, transform_indices = @transform_1, window_bounds = array<i64: 36, 128>}, {transform_indices = @transform_2, window_bounds = array<i64: 256, 128>}, {transform_indices = @transform_3, window_bounds = array<i64: 1, 1, 128>}, {transform_indices = @transform_4, window_bounds = array<i64: 1, 1, 128>}]} {
    %c0 = arith.constant 0 : index
    %c0_0 = arith.constant 0 : index
    %0 = vector.load %arg1[%c0, %c0_0] : memref<256x36xbf16, #tpu.memory_space<vmem>>, vector<256x36xbf16>
    %c0_1 = arith.constant 0 : index
    %c0_2 = arith.constant 0 : index
    %1 = vector.load %arg2[%c0_1, %c0_2] : memref<36x128xbf16, #tpu.memory_space<vmem>>, vector<36x128xbf16>
    %cst = arith.constant dense<0.000000e+00> : vector<256x128xf32>
    %2 = tpu.matmul %0, %1, %cst {dimension_numbers = #tpu.dot_dimension_numbers<[1], [0], [0], [1], [0, 0, 1, 1], [], []>} : vector<256x36xbf16>, vector<36x128xbf16>, vector<256x128xf32> -> vector<256x128xf32>
    %3 = arith.truncf %2 : vector<256x128xf32> to vector<256x128xbf16>
    %c0_3 = arith.constant 0 : index
    %c0_4 = arith.constant 0 : index
    %4 = vector.load %arg3[%c0_3, %c0_4] : memref<256x128xbf16, #tpu.memory_space<vmem>>, vector<256x128xbf16>
    tpu.vector_store %arg3[%c0_3, %c0_4], %3 {strides = array<i32>} : memref<256x128xbf16, #tpu.memory_space<vmem>>, vector<256x128xbf16>,
    %cst_5 = arith.constant dense<0.000000e+00> : vector<128xf32>
    %5 = vector.multi_reduction <add>, %2, %cst_5 [0] : vector<256x128xf32> to vector<128xf32>
    %6 = vector.shape_cast %5 : vector<128xf32> to vector<1x128xf32>
    %7 = vector.shape_cast %6 : vector<1x128xf32> to vector<1x1x128xf32>
    %c0_6 = arith.constant 0 : index
    %c0_7 = arith.constant 0 : index
    %c0_8 = arith.constant 0 : index
    %8 = vector.load %arg4[%c0_6, %c0_7, %c0_8] : memref<1x1x128xf32, #tpu.memory_space<vmem>>, vector<1x1x128xf32>
    tpu.vector_store %arg4[%c0_6, %c0_7, %c0_8], %7 {strides = array<i32>} : memref<1x1x128xf32, #tpu.memory_space<vmem>>, vector<1x1x128xf32>,
    %9 = arith.mulf %2, %2 : vector<256x128xf32>
    %cst_9 = arith.constant dense<0.000000e+00> : vector<128xf32>
    %10 = vector.multi_reduction <add>, %9, %cst_9 [0] : vector<256x128xf32> to vector<128xf32>
    %11 = vector.shape_cast %10 : vector<128xf32> to vector<1x128xf32>
    %12 = vector.shape_cast %11 : vector<1x128xf32> to vector<1x1x128xf32>
    %c0_10 = arith.constant 0 : index
    %c0_11 = arith.constant 0 : index
    %c0_12 = arith.constant 0 : index
    %13 = vector.load %arg5[%c0_10, %c0_11, %c0_12] : memref<1x1x128xf32, #tpu.memory_space<vmem>>, vector<1x1x128xf32>
    tpu.vector_store %arg5[%c0_10, %c0_11, %c0_12], %12 {strides = array<i32>} : memref<1x1x128xf32, #tpu.memory_space<vmem>>, vector<1x1x128xf32>,
    return
  }
  func.func @transform_0(%arg0: i32) -> (i32, i32) {
    %c0_i32 = arith.constant 0 : i32
    %c0_i32_0 = arith.constant 0 : i32
    return %arg0, %c0_i32 : i32, i32
  }
  func.func @transform_1(%arg0: i32) -> (i32, i32) {
    %c0_i32 = arith.constant 0 : i32
    %c0_i32_0 = arith.constant 0 : i32
    %c0_i32_1 = arith.constant 0 : i32
    return %c0_i32, %c0_i32_0 : i32, i32
  }
  func.func @transform_2(%arg0: i32) -> (i32, i32) {
    %c0_i32 = arith.constant 0 : i32
    %c0_i32_0 = arith.constant 0 : i32
    return %arg0, %c0_i32 : i32, i32
  }
  func.func @transform_3(%arg0: i32) -> (i32, i32, i32) {
    %c0_i32 = arith.constant 0 : i32
    %c0_i32_0 = arith.constant 0 : i32
    %c0_i32_1 = arith.constant 0 : i32
    return %arg0, %c0_i32, %c0_i32_0 : i32, i32, i32
  }
  func.func @transform_4(%arg0: i32) -> (i32, i32, i32) {
    %c0_i32 = arith.constant 0 : i32
    %c0_i32_0 = arith.constant 0 : i32
    %c0_i32_1 = arith.constant 0 : i32
    return %arg0, %c0_i32, %c0_i32_0 : i32, i32, i32
  }
}

module attributes {stable_mosaic.version = 11 : i64} {
  func.func @_conv_stats_kernel(%arg0: i32, %arg1: memref<256x72xbf16, #tpu.memory_space<vmem>>, %arg2: memref<72x128xbf16, #tpu.memory_space<vmem>>, %arg3: memref<256x128xbf16, #tpu.memory_space<vmem>>, %arg4: memref<1x1x128xf32, #tpu.memory_space<vmem>>, %arg5: memref<1x1x128xf32, #tpu.memory_space<vmem>>) attributes {dimension_semantics = [#tpu.dimension_semantics<parallel>], iteration_bounds = array<i64: 2>, scalar_prefetch = 0 : i64, scratch_operands = 0 : i64, tpu.core_type = #tpu.core_type<tc>, window_params = [{transform_indices = @transform_0, window_bounds = array<i64: 256, 72>}, {pipeline_mode = #tpu.pipeline_mode<synchronous>, transform_indices = @transform_1, window_bounds = array<i64: 72, 128>}, {transform_indices = @transform_2, window_bounds = array<i64: 256, 128>}, {transform_indices = @transform_3, window_bounds = array<i64: 1, 1, 128>}, {transform_indices = @transform_4, window_bounds = array<i64: 1, 1, 128>}]} {
    %c0 = arith.constant 0 : index
    %c0_0 = arith.constant 0 : index
    %0 = vector.load %arg1[%c0, %c0_0] : memref<256x72xbf16, #tpu.memory_space<vmem>>, vector<256x72xbf16>
    %c0_1 = arith.constant 0 : index
    %c0_2 = arith.constant 0 : index
    %1 = vector.load %arg2[%c0_1, %c0_2] : memref<72x128xbf16, #tpu.memory_space<vmem>>, vector<72x128xbf16>
    %cst = arith.constant dense<0.000000e+00> : vector<256x128xf32>
    %2 = tpu.matmul %0, %1, %cst {dimension_numbers = #tpu.dot_dimension_numbers<[1], [0], [0], [1], [0, 0, 1, 1], [], []>} : vector<256x72xbf16>, vector<72x128xbf16>, vector<256x128xf32> -> vector<256x128xf32>
    %3 = arith.truncf %2 : vector<256x128xf32> to vector<256x128xbf16>
    %c0_3 = arith.constant 0 : index
    %c0_4 = arith.constant 0 : index
    %4 = vector.load %arg3[%c0_3, %c0_4] : memref<256x128xbf16, #tpu.memory_space<vmem>>, vector<256x128xbf16>
    tpu.vector_store %arg3[%c0_3, %c0_4], %3 {strides = array<i32>} : memref<256x128xbf16, #tpu.memory_space<vmem>>, vector<256x128xbf16>,
    %cst_5 = arith.constant dense<0.000000e+00> : vector<128xf32>
    %5 = vector.multi_reduction <add>, %2, %cst_5 [0] : vector<256x128xf32> to vector<128xf32>
    %6 = vector.shape_cast %5 : vector<128xf32> to vector<1x128xf32>
    %7 = vector.shape_cast %6 : vector<1x128xf32> to vector<1x1x128xf32>
    %c0_6 = arith.constant 0 : index
    %c0_7 = arith.constant 0 : index
    %c0_8 = arith.constant 0 : index
    %8 = vector.load %arg4[%c0_6, %c0_7, %c0_8] : memref<1x1x128xf32, #tpu.memory_space<vmem>>, vector<1x1x128xf32>
    tpu.vector_store %arg4[%c0_6, %c0_7, %c0_8], %7 {strides = array<i32>} : memref<1x1x128xf32, #tpu.memory_space<vmem>>, vector<1x1x128xf32>,
    %9 = arith.mulf %2, %2 : vector<256x128xf32>
    %cst_9 = arith.constant dense<0.000000e+00> : vector<128xf32>
    %10 = vector.multi_reduction <add>, %9, %cst_9 [0] : vector<256x128xf32> to vector<128xf32>
    %11 = vector.shape_cast %10 : vector<128xf32> to vector<1x128xf32>
    %12 = vector.shape_cast %11 : vector<1x128xf32> to vector<1x1x128xf32>
    %c0_10 = arith.constant 0 : index
    %c0_11 = arith.constant 0 : index
    %c0_12 = arith.constant 0 : index
    %13 = vector.load %arg5[%c0_10, %c0_11, %c0_12] : memref<1x1x128xf32, #tpu.memory_space<vmem>>, vector<1x1x128xf32>
    tpu.vector_store %arg5[%c0_10, %c0_11, %c0_12], %12 {strides = array<i32>} : memref<1x1x128xf32, #tpu.memory_space<vmem>>, vector<1x1x128xf32>,
    return
  }
  func.func @transform_0(%arg0: i32) -> (i32, i32) {
    %c0_i32 = arith.constant 0 : i32
    %c0_i32_0 = arith.constant 0 : i32
    return %arg0, %c0_i32 : i32, i32
  }
  func.func @transform_1(%arg0: i32) -> (i32, i32) {
    %c0_i32 = arith.constant 0 : i32
    %c0_i32_0 = arith.constant 0 : i32
    %c0_i32_1 = arith.constant 0 : i32
    return %c0_i32, %c0_i32_0 : i32, i32
  }
  func.func @transform_2(%arg0: i32) -> (i32, i32) {
    %c0_i32 = arith.constant 0 : i32
    %c0_i32_0 = arith.constant 0 : i32
    return %arg0, %c0_i32 : i32, i32
  }
  func.func @transform_3(%arg0: i32) -> (i32, i32, i32) {
    %c0_i32 = arith.constant 0 : i32
    %c0_i32_0 = arith.constant 0 : i32
    %c0_i32_1 = arith.constant 0 : i32
    return %arg0, %c0_i32, %c0_i32_0 : i32, i32, i32
  }
  func.func @transform_4(%arg0: i32) -> (i32, i32, i32) {
    %c0_i32 = arith.constant 0 : i32
    %c0_i32_0 = arith.constant 0 : i32
    %c0_i32_1 = arith.constant 0 : i32
    return %arg0, %c0_i32, %c0_i32_0 : i32, i32, i32
  }
}

module attributes {stable_mosaic.version = 11 : i64} {
  func.func @_conv_stats_kernel(%arg0: i32, %arg1: memref<256x4xbf16, #tpu.memory_space<vmem>>, %arg2: memref<4x128xbf16, #tpu.memory_space<vmem>>, %arg3: memref<256x128xbf16, #tpu.memory_space<vmem>>, %arg4: memref<1x1x128xf32, #tpu.memory_space<vmem>>, %arg5: memref<1x1x128xf32, #tpu.memory_space<vmem>>) attributes {dimension_semantics = [#tpu.dimension_semantics<parallel>], iteration_bounds = array<i64: 2>, scalar_prefetch = 0 : i64, scratch_operands = 0 : i64, tpu.core_type = #tpu.core_type<tc>, window_params = [{transform_indices = @transform_0, window_bounds = array<i64: 256, 4>}, {pipeline_mode = #tpu.pipeline_mode<synchronous>, transform_indices = @transform_1, window_bounds = array<i64: 4, 128>}, {transform_indices = @transform_2, window_bounds = array<i64: 256, 128>}, {transform_indices = @transform_3, window_bounds = array<i64: 1, 1, 128>}, {transform_indices = @transform_4, window_bounds = array<i64: 1, 1, 128>}]} {
    %c0 = arith.constant 0 : index
    %c0_0 = arith.constant 0 : index
    %0 = vector.load %arg1[%c0, %c0_0] : memref<256x4xbf16, #tpu.memory_space<vmem>>, vector<256x4xbf16>
    %c0_1 = arith.constant 0 : index
    %c0_2 = arith.constant 0 : index
    %1 = vector.load %arg2[%c0_1, %c0_2] : memref<4x128xbf16, #tpu.memory_space<vmem>>, vector<4x128xbf16>
    %cst = arith.constant dense<0.000000e+00> : vector<256x128xf32>
    %2 = tpu.matmul %0, %1, %cst {dimension_numbers = #tpu.dot_dimension_numbers<[1], [0], [0], [1], [0, 0, 1, 1], [], []>} : vector<256x4xbf16>, vector<4x128xbf16>, vector<256x128xf32> -> vector<256x128xf32>
    %3 = arith.truncf %2 : vector<256x128xf32> to vector<256x128xbf16>
    %c0_3 = arith.constant 0 : index
    %c0_4 = arith.constant 0 : index
    %4 = vector.load %arg3[%c0_3, %c0_4] : memref<256x128xbf16, #tpu.memory_space<vmem>>, vector<256x128xbf16>
    tpu.vector_store %arg3[%c0_3, %c0_4], %3 {strides = array<i32>} : memref<256x128xbf16, #tpu.memory_space<vmem>>, vector<256x128xbf16>,
    %cst_5 = arith.constant dense<0.000000e+00> : vector<128xf32>
    %5 = vector.multi_reduction <add>, %2, %cst_5 [0] : vector<256x128xf32> to vector<128xf32>
    %6 = vector.shape_cast %5 : vector<128xf32> to vector<1x128xf32>
    %7 = vector.shape_cast %6 : vector<1x128xf32> to vector<1x1x128xf32>
    %c0_6 = arith.constant 0 : index
    %c0_7 = arith.constant 0 : index
    %c0_8 = arith.constant 0 : index
    %8 = vector.load %arg4[%c0_6, %c0_7, %c0_8] : memref<1x1x128xf32, #tpu.memory_space<vmem>>, vector<1x1x128xf32>
    tpu.vector_store %arg4[%c0_6, %c0_7, %c0_8], %7 {strides = array<i32>} : memref<1x1x128xf32, #tpu.memory_space<vmem>>, vector<1x1x128xf32>,
    %9 = arith.mulf %2, %2 : vector<256x128xf32>
    %cst_9 = arith.constant dense<0.000000e+00> : vector<128xf32>
    %10 = vector.multi_reduction <add>, %9, %cst_9 [0] : vector<256x128xf32> to vector<128xf32>
    %11 = vector.shape_cast %10 : vector<128xf32> to vector<1x128xf32>
    %12 = vector.shape_cast %11 : vector<1x128xf32> to vector<1x1x128xf32>
    %c0_10 = arith.constant 0 : index
    %c0_11 = arith.constant 0 : index
    %c0_12 = arith.constant 0 : index
    %13 = vector.load %arg5[%c0_10, %c0_11, %c0_12] : memref<1x1x128xf32, #tpu.memory_space<vmem>>, vector<1x1x128xf32>
    tpu.vector_store %arg5[%c0_10, %c0_11, %c0_12], %12 {strides = array<i32>} : memref<1x1x128xf32, #tpu.memory_space<vmem>>, vector<1x1x128xf32>,
    return
  }
  func.func @transform_0(%arg0: i32) -> (i32, i32) {
    %c0_i32 = arith.constant 0 : i32
    %c0_i32_0 = arith.constant 0 : i32
    return %arg0, %c0_i32 : i32, i32
  }
  func.func @transform_1(%arg0: i32) -> (i32, i32) {
    %c0_i32 = arith.constant 0 : i32
    %c0_i32_0 = arith.constant 0 : i32
    %c0_i32_1 = arith.constant 0 : i32
    return %c0_i32, %c0_i32_0 : i32, i32
  }
  func.func @transform_2(%arg0: i32) -> (i32, i32) {
    %c0_i32 = arith.constant 0 : i32
    %c0_i32_0 = arith.constant 0 : i32
    return %arg0, %c0_i32 : i32, i32
  }
  func.func @transform_3(%arg0: i32) -> (i32, i32, i32) {
    %c0_i32 = arith.constant 0 : i32
    %c0_i32_0 = arith.constant 0 : i32
    %c0_i32_1 = arith.constant 0 : i32
    return %arg0, %c0_i32, %c0_i32_0 : i32, i32, i32
  }
  func.func @transform_4(%arg0: i32) -> (i32, i32, i32) {
    %c0_i32 = arith.constant 0 : i32
    %c0_i32_0 = arith.constant 0 : i32
    %c0_i32_1 = arith.constant 0 : i32
    return %arg0, %c0_i32, %c0_i32_0 : i32, i32, i32
  }
}

module attributes {stable_mosaic.version = 11 : i64} {
  func.func @_bn_act_kernel(%arg0: i32, %arg1: memref<256x128xbf16, #tpu.memory_space<vmem>>, %arg2: memref<1x128xf32, #tpu.memory_space<vmem>>, %arg3: memref<1x128xf32, #tpu.memory_space<vmem>>, %arg4: memref<256x128xbf16, #tpu.memory_space<vmem>>, %arg5: memref<1x128xf32, #tpu.memory_space<vmem>>, %arg6: memref<1x128xf32, #tpu.memory_space<vmem>>, %arg7: memref<256x128xbf16, #tpu.memory_space<vmem>>) attributes {dimension_semantics = [#tpu.dimension_semantics<parallel>], iteration_bounds = array<i64: 2>, scalar_prefetch = 0 : i64, scratch_operands = 0 : i64, tpu.core_type = #tpu.core_type<tc>, window_params = [{transform_indices = @transform_0, window_bounds = array<i64: 256, 128>}, {pipeline_mode = #tpu.pipeline_mode<synchronous>, transform_indices = @transform_1, window_bounds = array<i64: 1, 128>}, {pipeline_mode = #tpu.pipeline_mode<synchronous>, transform_indices = @transform_2, window_bounds = array<i64: 1, 128>}, {transform_indices = @transform_3, window_bounds = array<i64: 256, 128>}, {pipeline_mode = #tpu.pipeline_mode<synchronous>, transform_indices = @transform_4, window_bounds = array<i64: 1, 128>}, {pipeline_mode = #tpu.pipeline_mode<synchronous>, transform_indices = @transform_5, window_bounds = array<i64: 1, 128>}, {transform_indices = @transform_6, window_bounds = array<i64: 256, 128>}]} {
    %c0 = arith.constant 0 : index
    %c0_0 = arith.constant 0 : index
    %0 = vector.load %arg1[%c0, %c0_0] : memref<256x128xbf16, #tpu.memory_space<vmem>>, vector<256x128xbf16>
    %1 = arith.extf %0 : vector<256x128xbf16> to vector<256x128xf32>
    %c0_1 = arith.constant 0 : index
    %c0_2 = arith.constant 0 : index
    %2 = vector.load %arg2[%c0_1, %c0_2] : memref<1x128xf32, #tpu.memory_space<vmem>>, vector<1x128xf32>
    %3 = vector.broadcast %2 : vector<1x128xf32> to vector<256x128xf32>
    %4 = arith.mulf %1, %3 : vector<256x128xf32>
    %c0_3 = arith.constant 0 : index
    %c0_4 = arith.constant 0 : index
    %5 = vector.load %arg3[%c0_3, %c0_4] : memref<1x128xf32, #tpu.memory_space<vmem>>, vector<1x128xf32>
    %6 = vector.broadcast %5 : vector<1x128xf32> to vector<256x128xf32>
    %7 = arith.addf %4, %6 : vector<256x128xf32>
    %c0_5 = arith.constant 0 : index
    %c0_6 = arith.constant 0 : index
    %8 = vector.load %arg4[%c0_5, %c0_6] : memref<256x128xbf16, #tpu.memory_space<vmem>>, vector<256x128xbf16>
    %9 = arith.extf %8 : vector<256x128xbf16> to vector<256x128xf32>
    %c0_7 = arith.constant 0 : index
    %c0_8 = arith.constant 0 : index
    %10 = vector.load %arg5[%c0_7, %c0_8] : memref<1x128xf32, #tpu.memory_space<vmem>>, vector<1x128xf32>
    %11 = vector.broadcast %10 : vector<1x128xf32> to vector<256x128xf32>
    %12 = arith.mulf %9, %11 : vector<256x128xf32>
    %c0_9 = arith.constant 0 : index
    %c0_10 = arith.constant 0 : index
    %13 = vector.load %arg6[%c0_9, %c0_10] : memref<1x128xf32, #tpu.memory_space<vmem>>, vector<1x128xf32>
    %14 = vector.broadcast %13 : vector<1x128xf32> to vector<256x128xf32>
    %15 = arith.addf %12, %14 : vector<256x128xf32>
    %16 = arith.addf %7, %15 : vector<256x128xf32>
    %cst = arith.constant 0.000000e+00 : f32
    %17 = vector.broadcast %cst : f32 to vector<256x128xf32>
    %18 = arith.maximumf %16, %17 : vector<256x128xf32>
    %19 = arith.truncf %18 : vector<256x128xf32> to vector<256x128xbf16>
    %c0_11 = arith.constant 0 : index
    %c0_12 = arith.constant 0 : index
    %20 = vector.load %arg7[%c0_11, %c0_12] : memref<256x128xbf16, #tpu.memory_space<vmem>>, vector<256x128xbf16>
    tpu.vector_store %arg7[%c0_11, %c0_12], %19 {strides = array<i32>} : memref<256x128xbf16, #tpu.memory_space<vmem>>, vector<256x128xbf16>,
    return
  }
  func.func @transform_0(%arg0: i32) -> (i32, i32) {
    %c0_i32 = arith.constant 0 : i32
    %c0_i32_0 = arith.constant 0 : i32
    return %arg0, %c0_i32 : i32, i32
  }
  func.func @transform_1(%arg0: i32) -> (i32, i32) {
    %c0_i32 = arith.constant 0 : i32
    %c0_i32_0 = arith.constant 0 : i32
    %c0_i32_1 = arith.constant 0 : i32
    return %c0_i32, %c0_i32_0 : i32, i32
  }
  func.func @transform_2(%arg0: i32) -> (i32, i32) {
    %c0_i32 = arith.constant 0 : i32
    %c0_i32_0 = arith.constant 0 : i32
    %c0_i32_1 = arith.constant 0 : i32
    return %c0_i32, %c0_i32_0 : i32, i32
  }
  func.func @transform_3(%arg0: i32) -> (i32, i32) {
    %c0_i32 = arith.constant 0 : i32
    %c0_i32_0 = arith.constant 0 : i32
    return %arg0, %c0_i32 : i32, i32
  }
  func.func @transform_4(%arg0: i32) -> (i32, i32) {
    %c0_i32 = arith.constant 0 : i32
    %c0_i32_0 = arith.constant 0 : i32
    %c0_i32_1 = arith.constant 0 : i32
    return %c0_i32, %c0_i32_0 : i32, i32
  }
  func.func @transform_5(%arg0: i32) -> (i32, i32) {
    %c0_i32 = arith.constant 0 : i32
    %c0_i32_0 = arith.constant 0 : i32
    %c0_i32_1 = arith.constant 0 : i32
    return %c0_i32, %c0_i32_0 : i32, i32
  }
  func.func @transform_6(%arg0: i32) -> (i32, i32) {
    %c0_i32 = arith.constant 0 : i32
    %c0_i32_0 = arith.constant 0 : i32
    return %arg0, %c0_i32 : i32, i32
  }
}

module attributes {stable_mosaic.version = 11 : i64} {
  func.func @_conv_stats_kernel(%arg0: i32, %arg1: memref<64x8xbf16, #tpu.memory_space<vmem>>, %arg2: memref<8x128xbf16, #tpu.memory_space<vmem>>, %arg3: memref<64x128xbf16, #tpu.memory_space<vmem>>, %arg4: memref<1x1x128xf32, #tpu.memory_space<vmem>>, %arg5: memref<1x1x128xf32, #tpu.memory_space<vmem>>) attributes {dimension_semantics = [#tpu.dimension_semantics<parallel>], iteration_bounds = array<i64: 2>, scalar_prefetch = 0 : i64, scratch_operands = 0 : i64, tpu.core_type = #tpu.core_type<tc>, window_params = [{transform_indices = @transform_0, window_bounds = array<i64: 64, 8>}, {pipeline_mode = #tpu.pipeline_mode<synchronous>, transform_indices = @transform_1, window_bounds = array<i64: 8, 128>}, {transform_indices = @transform_2, window_bounds = array<i64: 64, 128>}, {transform_indices = @transform_3, window_bounds = array<i64: 1, 1, 128>}, {transform_indices = @transform_4, window_bounds = array<i64: 1, 1, 128>}]} {
    %c0 = arith.constant 0 : index
    %c0_0 = arith.constant 0 : index
    %0 = vector.load %arg1[%c0, %c0_0] : memref<64x8xbf16, #tpu.memory_space<vmem>>, vector<64x8xbf16>
    %c0_1 = arith.constant 0 : index
    %c0_2 = arith.constant 0 : index
    %1 = vector.load %arg2[%c0_1, %c0_2] : memref<8x128xbf16, #tpu.memory_space<vmem>>, vector<8x128xbf16>
    %cst = arith.constant dense<0.000000e+00> : vector<64x128xf32>
    %2 = tpu.matmul %0, %1, %cst {dimension_numbers = #tpu.dot_dimension_numbers<[1], [0], [0], [1], [0, 0, 1, 1], [], []>} : vector<64x8xbf16>, vector<8x128xbf16>, vector<64x128xf32> -> vector<64x128xf32>
    %3 = arith.truncf %2 : vector<64x128xf32> to vector<64x128xbf16>
    %c0_3 = arith.constant 0 : index
    %c0_4 = arith.constant 0 : index
    %4 = vector.load %arg3[%c0_3, %c0_4] : memref<64x128xbf16, #tpu.memory_space<vmem>>, vector<64x128xbf16>
    tpu.vector_store %arg3[%c0_3, %c0_4], %3 {strides = array<i32>} : memref<64x128xbf16, #tpu.memory_space<vmem>>, vector<64x128xbf16>,
    %cst_5 = arith.constant dense<0.000000e+00> : vector<128xf32>
    %5 = vector.multi_reduction <add>, %2, %cst_5 [0] : vector<64x128xf32> to vector<128xf32>
    %6 = vector.shape_cast %5 : vector<128xf32> to vector<1x128xf32>
    %7 = vector.shape_cast %6 : vector<1x128xf32> to vector<1x1x128xf32>
    %c0_6 = arith.constant 0 : index
    %c0_7 = arith.constant 0 : index
    %c0_8 = arith.constant 0 : index
    %8 = vector.load %arg4[%c0_6, %c0_7, %c0_8] : memref<1x1x128xf32, #tpu.memory_space<vmem>>, vector<1x1x128xf32>
    tpu.vector_store %arg4[%c0_6, %c0_7, %c0_8], %7 {strides = array<i32>} : memref<1x1x128xf32, #tpu.memory_space<vmem>>, vector<1x1x128xf32>,
    %9 = arith.mulf %2, %2 : vector<64x128xf32>
    %cst_9 = arith.constant dense<0.000000e+00> : vector<128xf32>
    %10 = vector.multi_reduction <add>, %9, %cst_9 [0] : vector<64x128xf32> to vector<128xf32>
    %11 = vector.shape_cast %10 : vector<128xf32> to vector<1x128xf32>
    %12 = vector.shape_cast %11 : vector<1x128xf32> to vector<1x1x128xf32>
    %c0_10 = arith.constant 0 : index
    %c0_11 = arith.constant 0 : index
    %c0_12 = arith.constant 0 : index
    %13 = vector.load %arg5[%c0_10, %c0_11, %c0_12] : memref<1x1x128xf32, #tpu.memory_space<vmem>>, vector<1x1x128xf32>
    tpu.vector_store %arg5[%c0_10, %c0_11, %c0_12], %12 {strides = array<i32>} : memref<1x1x128xf32, #tpu.memory_space<vmem>>, vector<1x1x128xf32>,
    return
  }
  func.func @transform_0(%arg0: i32) -> (i32, i32) {
    %c0_i32 = arith.constant 0 : i32
    %c0_i32_0 = arith.constant 0 : i32
    return %arg0, %c0_i32 : i32, i32
  }
  func.func @transform_1(%arg0: i32) -> (i32, i32) {
    %c0_i32 = arith.constant 0 : i32
    %c0_i32_0 = arith.constant 0 : i32
    %c0_i32_1 = arith.constant 0 : i32
    return %c0_i32, %c0_i32_0 : i32, i32
  }
  func.func @transform_2(%arg0: i32) -> (i32, i32) {
    %c0_i32 = arith.constant 0 : i32
    %c0_i32_0 = arith.constant 0 : i32
    return %arg0, %c0_i32 : i32, i32
  }
  func.func @transform_3(%arg0: i32) -> (i32, i32, i32) {
    %c0_i32 = arith.constant 0 : i32
    %c0_i32_0 = arith.constant 0 : i32
    %c0_i32_1 = arith.constant 0 : i32
    return %arg0, %c0_i32, %c0_i32_0 : i32, i32, i32
  }
  func.func @transform_4(%arg0: i32) -> (i32, i32, i32) {
    %c0_i32 = arith.constant 0 : i32
    %c0_i32_0 = arith.constant 0 : i32
    %c0_i32_1 = arith.constant 0 : i32
    return %arg0, %c0_i32, %c0_i32_0 : i32, i32, i32
  }
}

module attributes {stable_mosaic.version = 11 : i64} {
  func.func @_conv_stats_kernel(%arg0: i32, %arg1: memref<64x72xbf16, #tpu.memory_space<vmem>>, %arg2: memref<72x128xbf16, #tpu.memory_space<vmem>>, %arg3: memref<64x128xbf16, #tpu.memory_space<vmem>>, %arg4: memref<1x1x128xf32, #tpu.memory_space<vmem>>, %arg5: memref<1x1x128xf32, #tpu.memory_space<vmem>>) attributes {dimension_semantics = [#tpu.dimension_semantics<parallel>], iteration_bounds = array<i64: 2>, scalar_prefetch = 0 : i64, scratch_operands = 0 : i64, tpu.core_type = #tpu.core_type<tc>, window_params = [{transform_indices = @transform_0, window_bounds = array<i64: 64, 72>}, {pipeline_mode = #tpu.pipeline_mode<synchronous>, transform_indices = @transform_1, window_bounds = array<i64: 72, 128>}, {transform_indices = @transform_2, window_bounds = array<i64: 64, 128>}, {transform_indices = @transform_3, window_bounds = array<i64: 1, 1, 128>}, {transform_indices = @transform_4, window_bounds = array<i64: 1, 1, 128>}]} {
    %c0 = arith.constant 0 : index
    %c0_0 = arith.constant 0 : index
    %0 = vector.load %arg1[%c0, %c0_0] : memref<64x72xbf16, #tpu.memory_space<vmem>>, vector<64x72xbf16>
    %c0_1 = arith.constant 0 : index
    %c0_2 = arith.constant 0 : index
    %1 = vector.load %arg2[%c0_1, %c0_2] : memref<72x128xbf16, #tpu.memory_space<vmem>>, vector<72x128xbf16>
    %cst = arith.constant dense<0.000000e+00> : vector<64x128xf32>
    %2 = tpu.matmul %0, %1, %cst {dimension_numbers = #tpu.dot_dimension_numbers<[1], [0], [0], [1], [0, 0, 1, 1], [], []>} : vector<64x72xbf16>, vector<72x128xbf16>, vector<64x128xf32> -> vector<64x128xf32>
    %3 = arith.truncf %2 : vector<64x128xf32> to vector<64x128xbf16>
    %c0_3 = arith.constant 0 : index
    %c0_4 = arith.constant 0 : index
    %4 = vector.load %arg3[%c0_3, %c0_4] : memref<64x128xbf16, #tpu.memory_space<vmem>>, vector<64x128xbf16>
    tpu.vector_store %arg3[%c0_3, %c0_4], %3 {strides = array<i32>} : memref<64x128xbf16, #tpu.memory_space<vmem>>, vector<64x128xbf16>,
    %cst_5 = arith.constant dense<0.000000e+00> : vector<128xf32>
    %5 = vector.multi_reduction <add>, %2, %cst_5 [0] : vector<64x128xf32> to vector<128xf32>
    %6 = vector.shape_cast %5 : vector<128xf32> to vector<1x128xf32>
    %7 = vector.shape_cast %6 : vector<1x128xf32> to vector<1x1x128xf32>
    %c0_6 = arith.constant 0 : index
    %c0_7 = arith.constant 0 : index
    %c0_8 = arith.constant 0 : index
    %8 = vector.load %arg4[%c0_6, %c0_7, %c0_8] : memref<1x1x128xf32, #tpu.memory_space<vmem>>, vector<1x1x128xf32>
    tpu.vector_store %arg4[%c0_6, %c0_7, %c0_8], %7 {strides = array<i32>} : memref<1x1x128xf32, #tpu.memory_space<vmem>>, vector<1x1x128xf32>,
    %9 = arith.mulf %2, %2 : vector<64x128xf32>
    %cst_9 = arith.constant dense<0.000000e+00> : vector<128xf32>
    %10 = vector.multi_reduction <add>, %9, %cst_9 [0] : vector<64x128xf32> to vector<128xf32>
    %11 = vector.shape_cast %10 : vector<128xf32> to vector<1x128xf32>
    %12 = vector.shape_cast %11 : vector<1x128xf32> to vector<1x1x128xf32>
    %c0_10 = arith.constant 0 : index
    %c0_11 = arith.constant 0 : index
    %c0_12 = arith.constant 0 : index
    %13 = vector.load %arg5[%c0_10, %c0_11, %c0_12] : memref<1x1x128xf32, #tpu.memory_space<vmem>>, vector<1x1x128xf32>
    tpu.vector_store %arg5[%c0_10, %c0_11, %c0_12], %12 {strides = array<i32>} : memref<1x1x128xf32, #tpu.memory_space<vmem>>, vector<1x1x128xf32>,
    return
  }
  func.func @transform_0(%arg0: i32) -> (i32, i32) {
    %c0_i32 = arith.constant 0 : i32
    %c0_i32_0 = arith.constant 0 : i32
    return %arg0, %c0_i32 : i32, i32
  }
  func.func @transform_1(%arg0: i32) -> (i32, i32) {
    %c0_i32 = arith.constant 0 : i32
    %c0_i32_0 = arith.constant 0 : i32
    %c0_i32_1 = arith.constant 0 : i32
    return %c0_i32, %c0_i32_0 : i32, i32
  }
  func.func @transform_2(%arg0: i32) -> (i32, i32) {
    %c0_i32 = arith.constant 0 : i32
    %c0_i32_0 = arith.constant 0 : i32
    return %arg0, %c0_i32 : i32, i32
  }
  func.func @transform_3(%arg0: i32) -> (i32, i32, i32) {
    %c0_i32 = arith.constant 0 : i32
    %c0_i32_0 = arith.constant 0 : i32
    %c0_i32_1 = arith.constant 0 : i32
    return %arg0, %c0_i32, %c0_i32_0 : i32, i32, i32
  }
  func.func @transform_4(%arg0: i32) -> (i32, i32, i32) {
    %c0_i32 = arith.constant 0 : i32
    %c0_i32_0 = arith.constant 0 : i32
    %c0_i32_1 = arith.constant 0 : i32
    return %arg0, %c0_i32, %c0_i32_0 : i32, i32, i32
  }
}

module attributes {stable_mosaic.version = 11 : i64} {
  func.func @_bn_act_kernel(%arg0: i32, %arg1: memref<64x128xbf16, #tpu.memory_space<vmem>>, %arg2: memref<1x128xf32, #tpu.memory_space<vmem>>, %arg3: memref<1x128xf32, #tpu.memory_space<vmem>>, %arg4: memref<64x128xbf16, #tpu.memory_space<vmem>>) attributes {dimension_semantics = [#tpu.dimension_semantics<parallel>], iteration_bounds = array<i64: 2>, scalar_prefetch = 0 : i64, scratch_operands = 0 : i64, tpu.core_type = #tpu.core_type<tc>, window_params = [{transform_indices = @transform_0, window_bounds = array<i64: 64, 128>}, {pipeline_mode = #tpu.pipeline_mode<synchronous>, transform_indices = @transform_1, window_bounds = array<i64: 1, 128>}, {pipeline_mode = #tpu.pipeline_mode<synchronous>, transform_indices = @transform_2, window_bounds = array<i64: 1, 128>}, {transform_indices = @transform_3, window_bounds = array<i64: 64, 128>}]} {
    %c0 = arith.constant 0 : index
    %c0_0 = arith.constant 0 : index
    %0 = vector.load %arg1[%c0, %c0_0] : memref<64x128xbf16, #tpu.memory_space<vmem>>, vector<64x128xbf16>
    %1 = arith.extf %0 : vector<64x128xbf16> to vector<64x128xf32>
    %c0_1 = arith.constant 0 : index
    %c0_2 = arith.constant 0 : index
    %2 = vector.load %arg2[%c0_1, %c0_2] : memref<1x128xf32, #tpu.memory_space<vmem>>, vector<1x128xf32>
    %3 = vector.broadcast %2 : vector<1x128xf32> to vector<64x128xf32>
    %4 = arith.mulf %1, %3 : vector<64x128xf32>
    %c0_3 = arith.constant 0 : index
    %c0_4 = arith.constant 0 : index
    %5 = vector.load %arg3[%c0_3, %c0_4] : memref<1x128xf32, #tpu.memory_space<vmem>>, vector<1x128xf32>
    %6 = vector.broadcast %5 : vector<1x128xf32> to vector<64x128xf32>
    %7 = arith.addf %4, %6 : vector<64x128xf32>
    %cst = arith.constant 0.000000e+00 : f32
    %8 = vector.broadcast %cst : f32 to vector<64x128xf32>
    %9 = arith.maximumf %7, %8 : vector<64x128xf32>
    %10 = arith.truncf %9 : vector<64x128xf32> to vector<64x128xbf16>
    %c0_5 = arith.constant 0 : index
    %c0_6 = arith.constant 0 : index
    %11 = vector.load %arg4[%c0_5, %c0_6] : memref<64x128xbf16, #tpu.memory_space<vmem>>, vector<64x128xbf16>
    tpu.vector_store %arg4[%c0_5, %c0_6], %10 {strides = array<i32>} : memref<64x128xbf16, #tpu.memory_space<vmem>>, vector<64x128xbf16>,
    return
  }
  func.func @transform_0(%arg0: i32) -> (i32, i32) {
    %c0_i32 = arith.constant 0 : i32
    %c0_i32_0 = arith.constant 0 : i32
    return %arg0, %c0_i32 : i32, i32
  }
  func.func @transform_1(%arg0: i32) -> (i32, i32) {
    %c0_i32 = arith.constant 0 : i32
    %c0_i32_0 = arith.constant 0 : i32
    %c0_i32_1 = arith.constant 0 : i32
    return %c0_i32, %c0_i32_0 : i32, i32
  }
  func.func @transform_2(%arg0: i32) -> (i32, i32) {
    %c0_i32 = arith.constant 0 : i32
    %c0_i32_0 = arith.constant 0 : i32
    %c0_i32_1 = arith.constant 0 : i32
    return %c0_i32, %c0_i32_0 : i32, i32
  }
  func.func @transform_3(%arg0: i32) -> (i32, i32) {
    %c0_i32 = arith.constant 0 : i32
    %c0_i32_0 = arith.constant 0 : i32
    return %arg0, %c0_i32 : i32, i32
  }
}

module attributes {stable_mosaic.version = 11 : i64} {
  func.func @_bn_act_kernel(%arg0: i32, %arg1: memref<64x128xbf16, #tpu.memory_space<vmem>>, %arg2: memref<1x128xf32, #tpu.memory_space<vmem>>, %arg3: memref<1x128xf32, #tpu.memory_space<vmem>>, %arg4: memref<64x128xbf16, #tpu.memory_space<vmem>>, %arg5: memref<1x128xf32, #tpu.memory_space<vmem>>, %arg6: memref<1x128xf32, #tpu.memory_space<vmem>>, %arg7: memref<64x128xbf16, #tpu.memory_space<vmem>>) attributes {dimension_semantics = [#tpu.dimension_semantics<parallel>], iteration_bounds = array<i64: 2>, scalar_prefetch = 0 : i64, scratch_operands = 0 : i64, tpu.core_type = #tpu.core_type<tc>, window_params = [{transform_indices = @transform_0, window_bounds = array<i64: 64, 128>}, {pipeline_mode = #tpu.pipeline_mode<synchronous>, transform_indices = @transform_1, window_bounds = array<i64: 1, 128>}, {pipeline_mode = #tpu.pipeline_mode<synchronous>, transform_indices = @transform_2, window_bounds = array<i64: 1, 128>}, {transform_indices = @transform_3, window_bounds = array<i64: 64, 128>}, {pipeline_mode = #tpu.pipeline_mode<synchronous>, transform_indices = @transform_4, window_bounds = array<i64: 1, 128>}, {pipeline_mode = #tpu.pipeline_mode<synchronous>, transform_indices = @transform_5, window_bounds = array<i64: 1, 128>}, {transform_indices = @transform_6, window_bounds = array<i64: 64, 128>}]} {
    %c0 = arith.constant 0 : index
    %c0_0 = arith.constant 0 : index
    %0 = vector.load %arg1[%c0, %c0_0] : memref<64x128xbf16, #tpu.memory_space<vmem>>, vector<64x128xbf16>
    %1 = arith.extf %0 : vector<64x128xbf16> to vector<64x128xf32>
    %c0_1 = arith.constant 0 : index
    %c0_2 = arith.constant 0 : index
    %2 = vector.load %arg2[%c0_1, %c0_2] : memref<1x128xf32, #tpu.memory_space<vmem>>, vector<1x128xf32>
    %3 = vector.broadcast %2 : vector<1x128xf32> to vector<64x128xf32>
    %4 = arith.mulf %1, %3 : vector<64x128xf32>
    %c0_3 = arith.constant 0 : index
    %c0_4 = arith.constant 0 : index
    %5 = vector.load %arg3[%c0_3, %c0_4] : memref<1x128xf32, #tpu.memory_space<vmem>>, vector<1x128xf32>
    %6 = vector.broadcast %5 : vector<1x128xf32> to vector<64x128xf32>
    %7 = arith.addf %4, %6 : vector<64x128xf32>
    %c0_5 = arith.constant 0 : index
    %c0_6 = arith.constant 0 : index
    %8 = vector.load %arg4[%c0_5, %c0_6] : memref<64x128xbf16, #tpu.memory_space<vmem>>, vector<64x128xbf16>
    %9 = arith.extf %8 : vector<64x128xbf16> to vector<64x128xf32>
    %c0_7 = arith.constant 0 : index
    %c0_8 = arith.constant 0 : index
    %10 = vector.load %arg5[%c0_7, %c0_8] : memref<1x128xf32, #tpu.memory_space<vmem>>, vector<1x128xf32>
    %11 = vector.broadcast %10 : vector<1x128xf32> to vector<64x128xf32>
    %12 = arith.mulf %9, %11 : vector<64x128xf32>
    %c0_9 = arith.constant 0 : index
    %c0_10 = arith.constant 0 : index
    %13 = vector.load %arg6[%c0_9, %c0_10] : memref<1x128xf32, #tpu.memory_space<vmem>>, vector<1x128xf32>
    %14 = vector.broadcast %13 : vector<1x128xf32> to vector<64x128xf32>
    %15 = arith.addf %12, %14 : vector<64x128xf32>
    %16 = arith.addf %7, %15 : vector<64x128xf32>
    %cst = arith.constant 0.000000e+00 : f32
    %17 = vector.broadcast %cst : f32 to vector<64x128xf32>
    %18 = arith.maximumf %16, %17 : vector<64x128xf32>
    %19 = arith.truncf %18 : vector<64x128xf32> to vector<64x128xbf16>
    %c0_11 = arith.constant 0 : index
    %c0_12 = arith.constant 0 : index
    %20 = vector.load %arg7[%c0_11, %c0_12] : memref<64x128xbf16, #tpu.memory_space<vmem>>, vector<64x128xbf16>
    tpu.vector_store %arg7[%c0_11, %c0_12], %19 {strides = array<i32>} : memref<64x128xbf16, #tpu.memory_space<vmem>>, vector<64x128xbf16>,
    return
  }
  func.func @transform_0(%arg0: i32) -> (i32, i32) {
    %c0_i32 = arith.constant 0 : i32
    %c0_i32_0 = arith.constant 0 : i32
    return %arg0, %c0_i32 : i32, i32
  }
  func.func @transform_1(%arg0: i32) -> (i32, i32) {
    %c0_i32 = arith.constant 0 : i32
    %c0_i32_0 = arith.constant 0 : i32
    %c0_i32_1 = arith.constant 0 : i32
    return %c0_i32, %c0_i32_0 : i32, i32
  }
  func.func @transform_2(%arg0: i32) -> (i32, i32) {
    %c0_i32 = arith.constant 0 : i32
    %c0_i32_0 = arith.constant 0 : i32
    %c0_i32_1 = arith.constant 0 : i32
    return %c0_i32, %c0_i32_0 : i32, i32
  }
  func.func @transform_3(%arg0: i32) -> (i32, i32) {
    %c0_i32 = arith.constant 0 : i32
    %c0_i32_0 = arith.constant 0 : i32
    return %arg0, %c0_i32 : i32, i32
  }
  func.func @transform_4(%arg0: i32) -> (i32, i32) {
    %c0_i32 = arith.constant 0 : i32
    %c0_i32_0 = arith.constant 0 : i32
    %c0_i32_1 = arith.constant 0 : i32
    return %c0_i32, %c0_i32_0 : i32, i32
  }
  func.func @transform_5(%arg0: i32) -> (i32, i32) {
    %c0_i32 = arith.constant 0 : i32
    %c0_i32_0 = arith.constant 0 : i32
    %c0_i32_1 = arith.constant 0 : i32
    return %c0_i32, %c0_i32_0 : i32, i32
  }
  func.func @transform_6(%arg0: i32) -> (i32, i32) {
    %c0_i32 = arith.constant 0 : i32
    %c0_i32_0 = arith.constant 0 : i32
    return %arg0, %c0_i32 : i32, i32
  }
}

module attributes {stable_mosaic.version = 11 : i64} {
  func.func @_conv_stats_kernel(%arg0: i32, %arg1: memref<64x144xbf16, #tpu.memory_space<vmem>>, %arg2: memref<144x128xbf16, #tpu.memory_space<vmem>>, %arg3: memref<64x128xbf16, #tpu.memory_space<vmem>>, %arg4: memref<1x1x128xf32, #tpu.memory_space<vmem>>, %arg5: memref<1x1x128xf32, #tpu.memory_space<vmem>>) attributes {dimension_semantics = [#tpu.dimension_semantics<parallel>], iteration_bounds = array<i64: 2>, scalar_prefetch = 0 : i64, scratch_operands = 0 : i64, tpu.core_type = #tpu.core_type<tc>, window_params = [{transform_indices = @transform_0, window_bounds = array<i64: 64, 144>}, {pipeline_mode = #tpu.pipeline_mode<synchronous>, transform_indices = @transform_1, window_bounds = array<i64: 144, 128>}, {transform_indices = @transform_2, window_bounds = array<i64: 64, 128>}, {transform_indices = @transform_3, window_bounds = array<i64: 1, 1, 128>}, {transform_indices = @transform_4, window_bounds = array<i64: 1, 1, 128>}]} {
    %c0 = arith.constant 0 : index
    %c0_0 = arith.constant 0 : index
    %0 = vector.load %arg1[%c0, %c0_0] : memref<64x144xbf16, #tpu.memory_space<vmem>>, vector<64x144xbf16>
    %c0_1 = arith.constant 0 : index
    %c0_2 = arith.constant 0 : index
    %1 = vector.load %arg2[%c0_1, %c0_2] : memref<144x128xbf16, #tpu.memory_space<vmem>>, vector<144x128xbf16>
    %cst = arith.constant dense<0.000000e+00> : vector<64x128xf32>
    %2 = tpu.matmul %0, %1, %cst {dimension_numbers = #tpu.dot_dimension_numbers<[1], [0], [0], [1], [0, 0, 1, 1], [], []>} : vector<64x144xbf16>, vector<144x128xbf16>, vector<64x128xf32> -> vector<64x128xf32>
    %3 = arith.truncf %2 : vector<64x128xf32> to vector<64x128xbf16>
    %c0_3 = arith.constant 0 : index
    %c0_4 = arith.constant 0 : index
    %4 = vector.load %arg3[%c0_3, %c0_4] : memref<64x128xbf16, #tpu.memory_space<vmem>>, vector<64x128xbf16>
    tpu.vector_store %arg3[%c0_3, %c0_4], %3 {strides = array<i32>} : memref<64x128xbf16, #tpu.memory_space<vmem>>, vector<64x128xbf16>,
    %cst_5 = arith.constant dense<0.000000e+00> : vector<128xf32>
    %5 = vector.multi_reduction <add>, %2, %cst_5 [0] : vector<64x128xf32> to vector<128xf32>
    %6 = vector.shape_cast %5 : vector<128xf32> to vector<1x128xf32>
    %7 = vector.shape_cast %6 : vector<1x128xf32> to vector<1x1x128xf32>
    %c0_6 = arith.constant 0 : index
    %c0_7 = arith.constant 0 : index
    %c0_8 = arith.constant 0 : index
    %8 = vector.load %arg4[%c0_6, %c0_7, %c0_8] : memref<1x1x128xf32, #tpu.memory_space<vmem>>, vector<1x1x128xf32>
    tpu.vector_store %arg4[%c0_6, %c0_7, %c0_8], %7 {strides = array<i32>} : memref<1x1x128xf32, #tpu.memory_space<vmem>>, vector<1x1x128xf32>,
    %9 = arith.mulf %2, %2 : vector<64x128xf32>
    %cst_9 = arith.constant dense<0.000000e+00> : vector<128xf32>
    %10 = vector.multi_reduction <add>, %9, %cst_9 [0] : vector<64x128xf32> to vector<128xf32>
    %11 = vector.shape_cast %10 : vector<128xf32> to vector<1x128xf32>
    %12 = vector.shape_cast %11 : vector<1x128xf32> to vector<1x1x128xf32>
    %c0_10 = arith.constant 0 : index
    %c0_11 = arith.constant 0 : index
    %c0_12 = arith.constant 0 : index
    %13 = vector.load %arg5[%c0_10, %c0_11, %c0_12] : memref<1x1x128xf32, #tpu.memory_space<vmem>>, vector<1x1x128xf32>
    tpu.vector_store %arg5[%c0_10, %c0_11, %c0_12], %12 {strides = array<i32>} : memref<1x1x128xf32, #tpu.memory_space<vmem>>, vector<1x1x128xf32>,
    return
  }
  func.func @transform_0(%arg0: i32) -> (i32, i32) {
    %c0_i32 = arith.constant 0 : i32
    %c0_i32_0 = arith.constant 0 : i32
    return %arg0, %c0_i32 : i32, i32
  }
  func.func @transform_1(%arg0: i32) -> (i32, i32) {
    %c0_i32 = arith.constant 0 : i32
    %c0_i32_0 = arith.constant 0 : i32
    %c0_i32_1 = arith.constant 0 : i32
    return %c0_i32, %c0_i32_0 : i32, i32
  }
  func.func @transform_2(%arg0: i32) -> (i32, i32) {
    %c0_i32 = arith.constant 0 : i32
    %c0_i32_0 = arith.constant 0 : i32
    return %arg0, %c0_i32 : i32, i32
  }
  func.func @transform_3(%arg0: i32) -> (i32, i32, i32) {
    %c0_i32 = arith.constant 0 : i32
    %c0_i32_0 = arith.constant 0 : i32
    %c0_i32_1 = arith.constant 0 : i32
    return %arg0, %c0_i32, %c0_i32_0 : i32, i32, i32
  }
  func.func @transform_4(%arg0: i32) -> (i32, i32, i32) {
    %c0_i32 = arith.constant 0 : i32
    %c0_i32_0 = arith.constant 0 : i32
    %c0_i32_1 = arith.constant 0 : i32
    return %arg0, %c0_i32, %c0_i32_0 : i32, i32, i32
  }
}

</mosaic_0001>

<llo_original>
// kernel: tpu_custom_call.1
$region0: #{tpu_custom_call.1}
  #allocation0 [shape = 'u32[]', space=smem, size = 0x4, offset = 0x4, fixed_abs, tag = 'smem constant byte address 0x4 - core index']
  #allocation1 [shape = 'u32[72,128]{1,0:T(1,128)}', space=vmem, size = 0x9000, scoped, tag = 'internal scratch']
  %s0 = inlined_call_operand.hbm [shape: bf16[16,128], index: 0, kind: input, shape index: {}]
  %s1 = inlined_call_operand.hbm [shape: bf16[128,128], index: 1, kind: input, shape index: {}]
  %s2 = inlined_call_operand.hbm [shape: bf16[16,128], index: 2, kind: output, shape index: {0}]
  %s3 = inlined_call_operand.hbm [shape: f32[2,1,128], index: 3, kind: output, shape index: {1}]
  %s4 = inlined_call_operand.hbm [shape: f32[2,1,128], index: 4, kind: output, shape index: {2}]
  %5 = xla_tuple %s2, %s3, %s4
  %s6 = sld [smem:[#allocation0]]
  $region65: #{tpu_custom_call.1} parent=0
    _
  %s8 = ssub.s32 1, %s6
  %s9 = scalar_select 0, %s8, %s6
  $region1: #{tpu_custom_call.1} parent=0
    #allocation2 [shape = 'u8[4096]{0}', space=vmem, size = 0x1000, scoped, tag = 'input window, operand 0']
    #allocation3 [shape = 's32[2]{0}', space=sflag, size = 0x8, scoped, tag = 'scoped memory for tpu_custom_call.1']
    #allocation4 [shape = 's32[2]{0}', space=sflag, size = 0x8, scoped, tag = 'scoped memory for tpu_custom_call.1']
    #allocation5 [shape = 'u8[32768]{0}', space=vmem, size = 0x8000, scoped, tag = 'input window, operand 1, single buffered']
    #allocation6 [shape = 's32[1]{0}', space=sflag, size = 0x4, scoped, tag = 'scoped memory for tpu_custom_call.1']
    #allocation7 [shape = 'u8[4096]{0}', space=vmem, size = 0x1000, scoped, tag = 'output window, operand 0']
    #allocation8 [shape = 'u8[1024]{0}', space=vmem, size = 0x400, scoped, tag = 'output window, operand 1']
    #allocation9 [shape = 's32[2]{0}', space=sflag, size = 0x8, scoped, tag = 'scoped memory for tpu_custom_call.1']
    #allocation10 [shape = 'u8[1024]{0}', space=vmem, size = 0x400, scoped, tag = 'output window, operand 2']
    %10 = vsyncpa [#allocation3], 0
    %s11 = scalar_lea.sflag [#allocation3], 1
    %12 = vsyncpa %s11, 0
    %13 = vsyncpa [#allocation6], 0
    %14 = vsyncpa [#allocation4], 0
    %s15 = scalar_lea.sflag [#allocation4], 1
    %16 = vsyncpa %s15, 0
    %17 = vsyncpa [#allocation9], 0
    %s18 = scalar_lea.sflag [#allocation9], 1
    %19 = vsyncpa %s18, 0
    loop: start=0, step=1, limit=4
    $region2: #{tpu_custom_call.1} parent=1 // loop_pre_header
      _
    $region3: #{tpu_custom_call.1} parent=1 // loop_header
      %s21 = sphi 0, %s25
      %p22 = scmp.ge.s32.totalorder %s21, 4
      %s31 = sphi 0, %s33
      %s34 = sphi 0, %s31
      %s35 = sphi 0, %s34
      %s51 = sphi 0, %s35
      %s55 = sphi 0, %s55
      %s57 = sphi 0, %s55
      %s58 = sphi 0, %s57
      %s72 = sphi 0, %s58
      %s78 = sphi 0, %s80
      %s81 = sphi 0, %s78
      %s82 = sphi 0, %s81
      %s98 = sphi 0, %s82
      %s104 = sphi 0, %s106
      %s107 = sphi 0, %s104
      %s108 = sphi 0, %s107
      %s124 = sphi 0, %s108
      %s130 = sphi 0, %s132
      %s133 = sphi 0, %s130
      %s134 = sphi 0, %s133
      %s150 = sphi 0, %s134
    $region4: #{tpu_custom_call.1} parent=1 // loop_header_branch
      %24 = sbr.rel (%p22) target = $region8
    $region5: #{tpu_custom_call.1} parent=1 // loop_body
      %s26 = ssub.s32 %s21, 1
      %s27 = ssub.s32 %s21, 2
      %s28 = sadd.s32 %s21, 1
      %s29 = ssub.s32 %s21, %s28
      %p30 = scmp.eq.s32.totalorder %s29, 0
      %s32 = sadd.s32 %s31, 1
      %s33 = scalar_select %p30, %s31, %s32
      %p36 = pneg %p30
      %p37 = scmp.eq.s32.totalorder %s21, 1
      %p38 = por %p36, %p37
      %p39 = scmp.ne.s32.totalorder %s31, %s34
      %p40 = scmp.eq.s32.totalorder %s21, 0
      %p41 = por %p39, %p40
      %p42 = scmp.ne.s32.totalorder %s31, %s34
      %p43 = scmp.eq.s32.totalorder %s26, 1
      %p44 = por %p42, %p43
      %p45 = scmp.ne.s32.totalorder %s34, %s35
      %p46 = scmp.eq.s32.totalorder %s26, 0
      %p47 = por %p45, %p46
      %p48 = scmp.ne.s32.totalorder %s34, %s35
      %p49 = scmp.eq.s32.totalorder %s27, 1
      %p50 = por %p48, %p49
      %p52 = scmp.ne.s32.totalorder %s35, %s51
      %p53 = scmp.eq.s32.totalorder %s27, 0
      %p54 = por %p52, %p53
      %s56 = sadd.s32 %s55, 1
      %p59 = scmp.eq.s32.totalorder %s21, 1
      %p60 = scmp.ne.s32.totalorder %s55, %s57
      %p61 = scmp.eq.s32.totalorder %s21, 0
      %p62 = por %p60, %p61
      %p63 = scmp.ne.s32.totalorder %s55, %s57
      %p64 = scmp.eq.s32.totalorder %s26, 1
      %p65 = por %p63, %p64
      %p66 = scmp.ne.s32.totalorder %s57, %s58
      %p67 = scmp.eq.s32.totalorder %s26, 0
      %p68 = por %p66, %p67
      %p69 = scmp.ne.s32.totalorder %s57, %s58
      %p70 = scmp.eq.s32.totalorder %s27, 1
      %p71 = por %p69, %p70
      %p73 = scmp.ne.s32.totalorder %s58, %s72
      %p74 = scmp.eq.s32.totalorder %s27, 0
      %p75 = por %p73, %p74
      %s76 = ssub.s32 %s21, %s28
      %p77 = scmp.eq.s32.totalorder %s76, 0
      %s79 = sadd.s32 %s78, 1
      %s80 = scalar_select %p77, %s78, %s79
      %p83 = pneg %p77
      %p84 = scmp.eq.s32.totalorder %s21, 1
      %p85 = por %p83, %p84
      %p86 = scmp.ne.s32.totalorder %s78, %s81
      %p87 = scmp.eq.s32.totalorder %s21, 0
      %p88 = por %p86, %p87
      %p89 = scmp.ne.s32.totalorder %s78, %s81
      %p90 = scmp.eq.s32.totalorder %s26, 1
      %p91 = por %p89, %p90
      %p92 = scmp.ne.s32.totalorder %s81, %s82
      %p93 = scmp.eq.s32.totalorder %s26, 0
      %p94 = por %p92, %p93
      %p95 = scmp.ne.s32.totalorder %s81, %s82
      %p96 = scmp.eq.s32.totalorder %s27, 1
      %p97 = por %p95, %p96
      %p99 = scmp.ne.s32.totalorder %s82, %s98
      %p100 = scmp.eq.s32.totalorder %s27, 0
      %p101 = por %p99, %p100
      %s102 = ssub.s32 %s21, %s28
      %p103 = scmp.eq.s32.totalorder %s102, 0
      %s105 = sadd.s32 %s104, 1
      %s106 = scalar_select %p103, %s104, %s105
      %p109 = pneg %p103
      %p110 = scmp.eq.s32.totalorder %s21, 1
      %p111 = por %p109, %p110
      %p112 = scmp.ne.s32.totalorder %s104, %s107
      %p113 = scmp.eq.s32.totalorder %s21, 0
      %p114 = por %p112, %p113
      %p115 = scmp.ne.s32.totalorder %s104, %s107
      %p116 = scmp.eq.s32.totalorder %s26, 1
      %p117 = por %p115, %p116
      %p118 = scmp.ne.s32.totalorder %s107, %s108
      %p119 = scmp.eq.s32.totalorder %s26, 0
      %p120 = por %p118, %p119
      %p121 = scmp.ne.s32.totalorder %s107, %s108
      %p122 = scmp.eq.s32.totalorder %s27, 1
      %p123 = por %p121, %p122
      %p125 = scmp.ne.s32.totalorder %s108, %s124
      %p126 = scmp.eq.s32.totalorder %s27, 0
      %p127 = por %p125, %p126
      %s128 = ssub.s32 %s21, %s28
      %p129 = scmp.eq.s32.totalorder %s128, 0
      %s131 = sadd.s32 %s130, 1
      %s132 = scalar_select %p129, %s130, %s131
      %p135 = pneg %p129
      %p136 = scmp.eq.s32.totalorder %s21, 1
      %p137 = por %p135, %p136
      %p138 = scmp.ne.s32.totalorder %s130, %s133
      %p139 = scmp.eq.s32.totalorder %s21, 0
      %p140 = por %p138, %p139
      %p141 = scmp.ne.s32.totalorder %s130, %s133
      %p142 = scmp.eq.s32.totalorder %s26, 1
      %p143 = por %p141, %p142
      %p144 = scmp.ne.s32.totalorder %s133, %s134
      %p145 = scmp.eq.s32.totalorder %s26, 0
      %p146 = por %p144, %p145
      %p147 = scmp.ne.s32.totalorder %s133, %s134
      %p148 = scmp.eq.s32.totalorder %s27, 1
      %p149 = por %p147, %p148
      %p151 = scmp.ne.s32.totalorder %s134, %s150
      %p152 = scmp.eq.s32.totalorder %s27, 0
      %p153 = por %p151, %p152
      %p154 = scmp.le.s32.totalorder 1, %s21
      %p155 = scmp.lt.s32.totalorder %s21, 3
      %p156 = pnand %p154, %p155
      %p157 = pneg %p156
      // Predicated region
      $region9: #{tpu_custom_call.1} parent=5 // pred_check
        _
      $region10: #{tpu_custom_call.1} parent=5 // pred_check_branch
        %159 = sbr.rel (%p156) target = $region12
      $region11: #{tpu_custom_call.1} parent=5 // pred_region
        %s160 = ssub.s32 %s21, 1
        // Predicated region
        $region13: #{tpu_custom_call.1} parent=11 // pred_check
          %p161 = pneg %p68
        $region14: #{tpu_custom_call.1} parent=11 // pred_check_branch
          %163 = sbr.rel (%p161) target = $region16
        $region15: #{tpu_custom_call.1} parent=11 // pred_region
          %165 = vsyncadd [#allocation6], 0
          %s166 = sshll.u32 %s1, 4
          %s167 = int_to_ptr.hbm [resolvable:$true] %s166
          %s168 = sshll.u32 [#allocation5], 4
          %s169 = int_to_ptr.vmem [resolvable:$true] %s168
          %174 = dma.hbm_to_vmem [thread:$0]  %s167, 1024, %s169, [#allocation6], 64, 64, 4
        $region16: #{tpu_custom_call.1} parent=11 // pred_fallthru
          _
      $region12: #{tpu_custom_call.1} parent=5 // pred_fallthru
        _
      %p175 = scmp.lt.s32.totalorder %s21, 2
      // Predicated region
      $region17: #{tpu_custom_call.1} parent=5 // pred_check
        %p176 = pneg %p175
      $region18: #{tpu_custom_call.1} parent=5 // pred_check_branch
        %178 = sbr.rel (%p176) target = $region20
      $region19: #{tpu_custom_call.1} parent=5 // pred_region
        // Predicated region
        $region21: #{tpu_custom_call.1} parent=19 // pred_check
          %p179 = pneg %p41
        $region22: #{tpu_custom_call.1} parent=19 // pred_check_branch
          %181 = sbr.rel (%p179) target = $region24
        $region23: #{tpu_custom_call.1} parent=19 // pred_region
          %s182 = sand.u32 %s31, 1
          %s183 = scalar_lea.sflag [#allocation3], %s182
          %s184 = sand.u32 %s31, 1
          %s185 = smul.addr %s184, 4
          %s186 = scalar_lea.vmem [#allocation2], %s185
          %188 = vsyncadd %s183, 0
          %s189 = smul.addr %s21, 4
          %s190 = scalar_lea.hbm %s0, %s189
          %s192 = sshll.u32 %s190, 4
          %s193 = int_to_ptr.hbm [resolvable:$true] %s192
          %s194 = sshll.u32 %s186, 4
          %s195 = int_to_ptr.vmem [resolvable:$true] %s194
          %197 = dma.hbm_to_vmem [thread:$0]  %s193, 64, %s195, %s183
        $region24: #{tpu_custom_call.1} parent=19 // pred_fallthru
          _
      $region20: #{tpu_custom_call.1} parent=5 // pred_fallthru
        _
      %p198 = scmp.le.s32.totalorder 1, %s21
      %p199 = scmp.lt.s32.totalorder %s21, 3
      %p200 = pnand %p198, %p199
      %p201 = pneg %p200
      // Predicated region
      $region25: #{tpu_custom_call.1} parent=5 // pred_check
        _
      $region26: #{tpu_custom_call.1} parent=5 // pred_check_branch
        %203 = sbr.rel (%p200) target = $region28
      $region27: #{tpu_custom_call.1} parent=5 // pred_region
        %s204 = ssub.s32 %s21, 1
        %s205 = sand.u32 %s34, 1
        %s206 = scalar_lea.sflag [#allocation3], %s205
        %s207 = sand.u32 %s34, 1
        %s208 = smul.addr %s207, 4
        %s209 = scalar_lea.vmem [#allocation2], %s208
        // Predicated region
        $region29: #{tpu_custom_call.1} parent=27 // pred_check
          %p210 = pneg %p47
        $region30: #{tpu_custom_call.1} parent=27 // pred_check_branch
          %212 = sbr.rel (%p210) target = $region32
        $region31: #{tpu_custom_call.1} parent=27 // pred_region
          %214 = dma.done %s206, 64
        $region32: #{tpu_custom_call.1} parent=27 // pred_fallthru
          _
        // Predicated region
        $region33: #{tpu_custom_call.1} parent=27 // pred_check
          %p215 = pneg %p68
        $region34: #{tpu_custom_call.1} parent=27 // pred_check_branch
          %217 = sbr.rel (%p215) target = $region36
        $region35: #{tpu_custom_call.1} parent=27 // pred_region
          %219 = dma.done [#allocation6], 1024
        $region36: #{tpu_custom_call.1} parent=27 // pred_fallthru
          _
        %s220 = sand.u32 %s34, 1
        %s221 = scalar_lea.sflag [#allocation3], %s220
        %s222 = sand.u32 %s34, 1
        %s223 = smul.addr %s222, 4
        %s224 = scalar_lea.vmem [#allocation2], %s223
        %p225 = pneg %p47
        %p226 = pneg %p44
        %p227 = pneg %p68
        %p228 = pneg %p65
        %p229 = pneg %p94
        %p230 = pneg %p91
        %s231 = sand.u32 %s81, 1
        %s232 = scalar_lea.sflag [#allocation4], %s231
        %s233 = sand.u32 %s81, 1
        %s234 = smul.addr %s233, 4
        %s235 = scalar_lea.vmem [#allocation7], %s234
        %p236 = pneg %p120
        %p237 = pneg %p117
        %s238 = sand.u32 %s26, 1
        %s239 = scalar_lea.sflag [#allocation9], %s238
        %s240 = sand.u32 %s107, 1
        %s241 = scalar_lea.vmem [#allocation8], %s240
        %p242 = pneg %p146
        %p243 = pneg %p143
        %s244 = sand.u32 %s26, 1
        %s245 = scalar_lea.sflag [#allocation9], %s244
        %s246 = sand.u32 %s133, 1
        %s247 = scalar_lea.vmem [#allocation10], %s246
        %v248 = vld [vmem:[%s209] sm:$0xf]
        %v249 = vld [vmem:[#allocation5] sm:$0xf]
        %v250 = vld [vmem:[#allocation5 + $0x4] sm:$0xf]
        %v251 = vld [vmem:[#allocation5 + $0x8] sm:$0xf]
        %v252 = vld [vmem:[#allocation5 + $0xc] sm:$0xf]
        %v253 = vld [vmem:[#allocation5 + $0x10] sm:$0xf]
        %v254 = vld [vmem:[#allocation5 + $0x14] sm:$0xf]
        %v255 = vld [vmem:[#allocation5 + $0x18] sm:$0xf]
        %v256 = vld [vmem:[#allocation5 + $0x1c] sm:$0xf]
        %v257 = vld [vmem:[#allocation5 + $0x20] sm:$0xf]
        %v258 = vld [vmem:[#allocation5 + $0x24] sm:$0xf]
        %v259 = vld [vmem:[#allocation5 + $0x28] sm:$0xf]
        %v260 = vld [vmem:[#allocation5 + $0x2c] sm:$0xf]
        %v261 = vld [vmem:[#allocation5 + $0x30] sm:$0xf]
        %v262 = vld [vmem:[#allocation5 + $0x34] sm:$0xf]
        %v263 = vld [vmem:[#allocation5 + $0x38] sm:$0xf]
        %v264 = vld [vmem:[#allocation5 + $0x3c] sm:$0xf]
        %v281 = vunpack.c.l.b16 %v249
        %v282 = vunpack.c.l.b16 %v250
        %v283 = vunpack.c.l.b16 %v251
        %v284 = vunpack.c.l.b16 %v252
        %v285 = vunpack.c.l.b16 %v253
        %v286 = vunpack.c.l.b16 %v254
        %v287 = vunpack.c.l.b16 %v255
        %v288 = vunpack.c.l.b16 %v256
        %v289 = vunpack.c.l.b16 %v257
        %v290 = vunpack.c.l.b16 %v258
        %v291 = vunpack.c.l.b16 %v259
        %v292 = vunpack.c.l.b16 %v260
        %v293 = vunpack.c.l.b16 %v261
        %v294 = vunpack.c.l.b16 %v262
        %v295 = vunpack.c.l.b16 %v263
        %v296 = vunpack.c.l.b16 %v264
        %v297 = vpack.c.b16 %v282, %v281
        %v298 = vpack.c.b16 %v284, %v283
        %v299 = vpack.c.b16 %v286, %v285
        %v300 = vpack.c.b16 %v288, %v287
        %v301 = vpack.c.b16 %v290, %v289
        %v302 = vpack.c.b16 %v292, %v291
        %v303 = vpack.c.b16 %v294, %v293
        %v304 = vpack.c.b16 %v296, %v295
        %313 = vmatpush.bf16.msra.mxu0 %v304
        %314 = vmatpush.bf16.msra.mxu0 %v303
        %315 = vmatpush.bf16.msra.mxu0 %v302
        %316 = vmatpush.bf16.msra.mxu0 %v301
        %317 = vmatpush.bf16.msra.mxu0 %v300
        %318 = vmatpush.bf16.msra.mxu0 %v299
        %319 = vmatpush.bf16.msra.mxu0 %v298
        %320 = vmatpush.bf16.msra.mxu0 %v297
        %321 = vmatmul.bf16.gmra.mxu0 %v248
        %v322 = vpop.f32.mrf.mxu0
        %v323 = vadd.f32 0.0, %v322
        %v324 = vpop.f32.mrf.mxu0
        %325 = vdwg.mxu0
        %v326 = vpack.c.bf16 %v323, %v323
        %327 = vst [vmem:[%s235] sm:$0xf] %v326
        %v328 = vrot.slane %v323, 4
        %v329 = vadd.f32 %v323, %v328
        %v330 = vrot.slane %v329, 2
        %v331 = vadd.f32 %v329, %v330
        %v332 = vrot.slane %v331, 1
        %v333 = vadd.f32 %v331, %v332
        %334 = vst [vmem:[%s241] sm:$0x1] %v333
        %v335 = vmul.f32 %v323, %v323
        %v336 = vrot.slane %v335, 4
        %v337 = vadd.f32 %v335, %v336
        %v338 = vrot.slane %v337, 2
        %v339 = vadd.f32 %v337, %v338
        %v340 = vrot.slane %v339, 1
        %v341 = vadd.f32 %v339, %v340
        %342 = vst [vmem:[%s247] sm:$0x1] %v341
        %s343 = sand.u32 %s81, 1
        %s344 = scalar_lea.sflag [#allocation4], %s343
        %s345 = sand.u32 %s81, 1
        %s346 = smul.addr %s345, 4
        %s347 = scalar_lea.vmem [#allocation7], %s346
        %s348 = sand.u32 %s26, 1
        %s349 = scalar_lea.sflag [#allocation9], %s348
        %s350 = sand.u32 %s107, 1
        %s351 = scalar_lea.vmem [#allocation8], %s350
        %s352 = sand.u32 %s26, 1
        %s353 = scalar_lea.sflag [#allocation9], %s352
        %s354 = sand.u32 %s133, 1
        %s355 = scalar_lea.vmem [#allocation10], %s354
        // Predicated region
        $region37: #{tpu_custom_call.1} parent=27 // pred_check
          %p356 = pneg %p91
        $region38: #{tpu_custom_call.1} parent=27 // pred_check_branch
          %358 = sbr.rel (%p356) target = $region40
        $region39: #{tpu_custom_call.1} parent=27 // pred_region
          %360 = vsyncadd %s344, 0
          %s361 = smul.addr %s26, 4
          %s362 = scalar_lea.hbm %s2, %s361
          %s364 = sshll.u32 %s347, 4
          %s365 = int_to_ptr.vmem [resolvable:$true] %s364
          %s366 = sshll.u32 %s362, 4
          %s367 = int_to_ptr.hbm [resolvable:$true] %s366
          %369 = dma.vmem_to_hbm [thread:$0]  %s365, 64, %s367, %s344
        $region40: #{tpu_custom_call.1} parent=27 // pred_fallthru
          _
        // Predicated region
        $region41: #{tpu_custom_call.1} parent=27 // pred_check
          %p370 = pneg %p117
        $region42: #{tpu_custom_call.1} parent=27 // pred_check_branch
          %372 = sbr.rel (%p370) target = $region44
        $region43: #{tpu_custom_call.1} parent=27 // pred_region
          %374 = vsyncadd %s349, 0
          %s375 = scalar_lea.hbm %s3, %s26
          %s377 = sshll.u32 %s351, 4
          %s378 = int_to_ptr.vmem [resolvable:$true] %s377
          %s379 = sshll.u32 %s375, 4
          %s380 = int_to_ptr.hbm [resolvable:$true] %s379
          %382 = dma.vmem_to_hbm [thread:$0]  %s378, 16, %s380, %s349
        $region44: #{tpu_custom_call.1} parent=27 // pred_fallthru
          _
        // Predicated region
        $region45: #{tpu_custom_call.1} parent=27 // pred_check
          %p383 = pneg %p143
        $region46: #{tpu_custom_call.1} parent=27 // pred_check_branch
          %385 = sbr.rel (%p383) target = $region48
        $region47: #{tpu_custom_call.1} parent=27 // pred_region
          %387 = vsyncadd %s353, 0
          %s388 = scalar_lea.hbm %s4, %s26
          %s390 = sshll.u32 %s355, 4
          %s391 = int_to_ptr.vmem [resolvable:$true] %s390
          %s392 = sshll.u32 %s388, 4
          %s393 = int_to_ptr.hbm [resolvable:$true] %s392
          %395 = dma.vmem_to_hbm [thread:$0]  %s391, 16, %s393, %s353
        $region48: #{tpu_custom_call.1} parent=27 // pred_fallthru
          _
      $region28: #{tpu_custom_call.1} parent=5 // pred_fallthru
        _
      %p396 = scmp.le.s32.totalorder 2, %s21
      // Predicated region
      $region49: #{tpu_custom_call.1} parent=5 // pred_check
        %p397 = pneg %p396
      $region50: #{tpu_custom_call.1} parent=5 // pred_check_branch
        %399 = sbr.rel (%p397) target = $region52
      $region51: #{tpu_custom_call.1} parent=5 // pred_region
        %s400 = ssub.s32 %s21, 2
        // Predicated region
        $region53: #{tpu_custom_call.1} parent=51 // pred_check
          %p401 = pneg %p97
        $region54: #{tpu_custom_call.1} parent=51 // pred_check_branch
          %403 = sbr.rel (%p401) target = $region56
        $region55: #{tpu_custom_call.1} parent=51 // pred_region
          %s404 = sand.u32 %s82, 1
          %s405 = scalar_lea.sflag [#allocation4], %s404
          %s406 = sand.u32 %s82, 1
          %s407 = smul.addr %s406, 4
          %s408 = scalar_lea.vmem [#allocation7], %s407
          %410 = dma.done %s405, 64
        $region56: #{tpu_custom_call.1} parent=51 // pred_fallthru
          _
        // Predicated region
        $region57: #{tpu_custom_call.1} parent=51 // pred_check
          %p411 = pneg %p123
        $region58: #{tpu_custom_call.1} parent=51 // pred_check_branch
          %413 = sbr.rel (%p411) target = $region60
        $region59: #{tpu_custom_call.1} parent=51 // pred_region
          %s414 = sand.u32 %s27, 1
          %s415 = scalar_lea.sflag [#allocation9], %s414
          %s416 = sand.u32 %s108, 1
          %s417 = scalar_lea.vmem [#allocation8], %s416
          %419 = dma.done %s415, 16
        $region60: #{tpu_custom_call.1} parent=51 // pred_fallthru
          _
        // Predicated region
        $region61: #{tpu_custom_call.1} parent=51 // pred_check
          %p420 = pneg %p149
        $region62: #{tpu_custom_call.1} parent=51 // pred_check_branch
          %422 = sbr.rel (%p420) target = $region64
        $region63: #{tpu_custom_call.1} parent=51 // pred_region
          %s423 = sand.u32 %s27, 1
          %s424 = scalar_lea.sflag [#allocation9], %s423
          %s425 = sand.u32 %s134, 1
          %s426 = scalar_lea.vmem [#allocation10], %s425
          %428 = dma.done %s424, 16
        $region64: #{tpu_custom_call.1} parent=51 // pred_fallthru
          _
      $region52: #{tpu_custom_call.1} parent=5 // pred_fallthru
        _
    $region6: #{tpu_custom_call.1} parent=1 // loop_footer
      %s25 = sadd.s32 1, %s21
    $region7: #{tpu_custom_call.1} parent=1 // loop_footer_branch
      %20 = sbr.rel target = $region3
    $region8: #{tpu_custom_call.1} parent=1 // loop_exit
      _
    %429 = vsyncpa [#allocation3], 1
    %s430 = scalar_lea.sflag [#allocation3], 1
    %431 = vsyncpa %s430, 1
    %432 = vsyncpa [#allocation6], 1
    %433 = vsyncpa [#allocation4], 1
    %s434 = scalar_lea.sflag [#allocation4], 1
    %435 = vsyncpa %s434, 1
    %436 = vsyncpa [#allocation9], 1
    %s437 = scalar_lea.sflag [#allocation9], 1
    %438 = vsyncpa %s437, 1

// kernel: _lambda_.11
$region0: #{_lambda_.11}
  #allocation0 [shape = 'u32[]', space=smem, size = 0x4, offset = 0x4, fixed_abs, tag = 'smem constant byte address 0x4 - core index']
  #allocation1 [shape = 'u32[72,128]{1,0:T(1,128)}', space=vmem, size = 0x9000, scoped, tag = 'internal scratch']
  %s0 = inlined_call_operand.vmem [shape: bf16[512,128], index: 0, kind: input, shape index: {}]
  %s1 = inlined_call_operand.vmem [shape: f32[1,128], index: 1, kind: input, shape index: {}]
  %s2 = inlined_call_operand.vmem [shape: f32[1,128], index: 2, kind: input, shape index: {}]
  %s3 = inlined_call_operand.vmem [shape: bf16[512,128], index: 3, kind: output, shape index: {}]
  %s4 = sld [smem:[#allocation0]]
  $region45: #{_lambda_.11} parent=0
    _
  %s6 = ssub.s32 1, %s4
  %s7 = scalar_select 0, %s6, %s4
  loop: start=0, step=1, limit=4
  $region2: #{_lambda_.11} parent=0 // loop_pre_header
    _
  $region3: #{_lambda_.11} parent=0 // loop_header
    %s9 = sphi 0, %s13
    %p10 = scmp.ge.s32.totalorder %s9, 4
    %s19 = sphi 0, %s21
    %s22 = sphi 0, %s19
    %s23 = sphi 0, %s22
    %s39 = sphi 0, %s23
    %s43 = sphi 0, %s43
    %s45 = sphi 0, %s43
    %s46 = sphi 0, %s45
    %s60 = sphi 0, %s46
    %s64 = sphi 0, %s64
    %s66 = sphi 0, %s64
    %s67 = sphi 0, %s66
    %s81 = sphi 0, %s67
    %s87 = sphi 0, %s89
    %s90 = sphi 0, %s87
    %s91 = sphi 0, %s90
    %s107 = sphi 0, %s91
  $region4: #{_lambda_.11} parent=0 // loop_header_branch
    %12 = sbr.rel (%p10) target = $region8
  $region5: #{_lambda_.11} parent=0 // loop_body
    %s14 = ssub.s32 %s9, 1
    %s15 = ssub.s32 %s9, 2
    %s16 = sadd.s32 %s9, 1
    %s17 = ssub.s32 %s9, %s16
    %p18 = scmp.eq.s32.totalorder %s17, 0
    %s20 = sadd.s32 %s19, 1
    %s21 = scalar_select %p18, %s19, %s20
    %p24 = pneg %p18
    %p25 = scmp.eq.s32.totalorder %s9, 1
    %p26 = por %p24, %p25
    %p27 = scmp.ne.s32.totalorder %s19, %s22
    %p28 = scmp.eq.s32.totalorder %s9, 0
    %p29 = por %p27, %p28
    %p30 = scmp.ne.s32.totalorder %s19, %s22
    %p31 = scmp.eq.s32.totalorder %s14, 1
    %p32 = por %p30, %p31
    %p33 = scmp.ne.s32.totalorder %s22, %s23
    %p34 = scmp.eq.s32.totalorder %s14, 0
    %p35 = por %p33, %p34
    %p36 = scmp.ne.s32.totalorder %s22, %s23
    %p37 = scmp.eq.s32.totalorder %s15, 1
    %p38 = por %p36, %p37
    %p40 = scmp.ne.s32.totalorder %s23, %s39
    %p41 = scmp.eq.s32.totalorder %s15, 0
    %p42 = por %p40, %p41
    %s44 = sadd.s32 %s43, 1
    %p47 = scmp.eq.s32.totalorder %s9, 1
    %p48 = scmp.ne.s32.totalorder %s43, %s45
    %p49 = scmp.eq.s32.totalorder %s9, 0
    %p50 = por %p48, %p49
    %p51 = scmp.ne.s32.totalorder %s43, %s45
    %p52 = scmp.eq.s32.totalorder %s14, 1
    %p53 = por %p51, %p52
    %p54 = scmp.ne.s32.totalorder %s45, %s46
    %p55 = scmp.eq.s32.totalorder %s14, 0
    %p56 = por %p54, %p55
    %p57 = scmp.ne.s32.totalorder %s45, %s46
    %p58 = scmp.eq.s32.totalorder %s15, 1
    %p59 = por %p57, %p58
    %p61 = scmp.ne.s32.totalorder %s46, %s60
    %p62 = scmp.eq.s32.totalorder %s15, 0
    %p63 = por %p61, %p62
    %s65 = sadd.s32 %s64, 1
    %p68 = scmp.eq.s32.totalorder %s9, 1
    %p69 = scmp.ne.s32.totalorder %s64, %s66
    %p70 = scmp.eq.s32.totalorder %s9, 0
    %p71 = por %p69, %p70
    %p72 = scmp.ne.s32.totalorder %s64, %s66
    %p73 = scmp.eq.s32.totalorder %s14, 1
    %p74 = por %p72, %p73
    %p75 = scmp.ne.s32.totalorder %s66, %s67
    %p76 = scmp.eq.s32.totalorder %s14, 0
    %p77 = por %p75, %p76
    %p78 = scmp.ne.s32.totalorder %s66, %s67
    %p79 = scmp.eq.s32.totalorder %s15, 1
    %p80 = por %p78, %p79
    %p82 = scmp.ne.s32.totalorder %s67, %s81
    %p83 = scmp.eq.s32.totalorder %s15, 0
    %p84 = por %p82, %p83
    %s85 = ssub.s32 %s9, %s16
    %p86 = scmp.eq.s32.totalorder %s85, 0
    %s88 = sadd.s32 %s87, 1
    %s89 = scalar_select %p86, %s87, %s88
    %p92 = pneg %p86
    %p93 = scmp.eq.s32.totalorder %s9, 1
    %p94 = por %p92, %p93
    %p95 = scmp.ne.s32.totalorder %s87, %s90
    %p96 = scmp.eq.s32.totalorder %s9, 0
    %p97 = por %p95, %p96
    %p98 = scmp.ne.s32.totalorder %s87, %s90
    %p99 = scmp.eq.s32.totalorder %s14, 1
    %p100 = por %p98, %p99
    %p101 = scmp.ne.s32.totalorder %s90, %s91
    %p102 = scmp.eq.s32.totalorder %s14, 0
    %p103 = por %p101, %p102
    %p104 = scmp.ne.s32.totalorder %s90, %s91
    %p105 = scmp.eq.s32.totalorder %s15, 1
    %p106 = por %p104, %p105
    %p108 = scmp.ne.s32.totalorder %s91, %s107
    %p109 = scmp.eq.s32.totalorder %s15, 0
    %p110 = por %p108, %p109
    %p111 = scmp.le.s32.totalorder 1, %s9
    %p112 = scmp.lt.s32.totalorder %s9, 3
    %p113 = pnand %p111, %p112
    %p114 = pneg %p113
    // Predicated region
    $region9: #{_lambda_.11} parent=5 // pred_check
      _
    $region10: #{_lambda_.11} parent=5 // pred_check_branch
      %116 = sbr.rel (%p113) target = $region12
    $region11: #{_lambda_.11} parent=5 // pred_region
      %s117 = ssub.s32 %s9, 1
      // Predicated region
      $region13: #{_lambda_.11} parent=11 // pred_check
        %p118 = pneg %p56
      $region14: #{_lambda_.11} parent=11 // pred_check_branch
        %120 = sbr.rel (%p118) target = $region16
      $region15: #{_lambda_.11} parent=11 // pred_region
        _
      $region16: #{_lambda_.11} parent=11 // pred_fallthru
        _
      // Predicated region
      $region17: #{_lambda_.11} parent=11 // pred_check
        %p121 = pneg %p77
      $region18: #{_lambda_.11} parent=11 // pred_check_branch
        %123 = sbr.rel (%p121) target = $region20
      $region19: #{_lambda_.11} parent=11 // pred_region
        _
      $region20: #{_lambda_.11} parent=11 // pred_fallthru
        _
    $region12: #{_lambda_.11} parent=5 // pred_fallthru
      _
    %p124 = scmp.lt.s32.totalorder %s9, 2
    // Predicated region
    $region21: #{_lambda_.11} parent=5 // pred_check
      %p125 = pneg %p124
    $region22: #{_lambda_.11} parent=5 // pred_check_branch
      %127 = sbr.rel (%p125) target = $region24
    $region23: #{_lambda_.11} parent=5 // pred_region
      // Predicated region
      $region25: #{_lambda_.11} parent=23 // pred_check
        %p128 = pneg %p29
      $region26: #{_lambda_.11} parent=23 // pred_check_branch
        %130 = sbr.rel (%p128) target = $region28
      $region27: #{_lambda_.11} parent=23 // pred_region
        %s131 = smul.u32 32, %s9
        %p132 = scmp.lt.s32.totalorder %s131, 63
        %s133 = scalar_select %p132, %s131, 63
        %s134 = smul.addr %s133, 4
        %s135 = scalar_lea.vmem %s0, %s134
        %s136 = smul.u32 32, %s9
      $region28: #{_lambda_.11} parent=23 // pred_fallthru
        _
    $region24: #{_lambda_.11} parent=5 // pred_fallthru
      _
    %p137 = scmp.le.s32.totalorder 1, %s9
    %p138 = scmp.lt.s32.totalorder %s9, 3
    %p139 = pnand %p137, %p138
    %p140 = pneg %p139
    // Predicated region
    $region29: #{_lambda_.11} parent=5 // pred_check
      _
    $region30: #{_lambda_.11} parent=5 // pred_check_branch
      %142 = sbr.rel (%p139) target = $region32
    $region31: #{_lambda_.11} parent=5 // pred_region
      %s143 = ssub.s32 %s9, 1
      %s144 = smul.u32 32, %s14
      %p145 = scmp.lt.s32.totalorder %s144, 63
      %s146 = scalar_select %p145, %s144, 63
      %s147 = smul.addr %s146, 4
      %s148 = scalar_lea.vmem %s0, %s147
      %p149 = pneg %p35
      %p150 = pneg %p32
      %p151 = pneg %p56
      %p152 = pneg %p53
      %p153 = pneg %p77
      %p154 = pneg %p74
      %p155 = pneg %p103
      %p156 = pneg %p100
      %s157 = smul.u32 32, %s14
      %p158 = scmp.lt.s32.totalorder %s157, 63
      %s159 = scalar_select %p158, %s157, 63
      %s160 = smul.addr %s159, 4
      %s161 = scalar_lea.vmem %s3, %s160
      %s162 = smul.u32 32, %s14
      %p163 = scmp.lt.s32.totalorder %s162, 63
      %s164 = scalar_select %p163, %s162, 63
      %s165 = smul.addr %s164, 4
      %s166 = scalar_lea.vmem %s0, %s165
      %s167 = smul.u32 32, %s14
      %s168 = smul.u32 32, %s14
      %p169 = scmp.lt.s32.totalorder %s168, 63
      %s170 = scalar_select %p169, %s168, 63
      %s171 = smul.addr %s170, 4
      %s172 = scalar_lea.vmem %s3, %s171
      %s173 = smul.u32 32, %s14
      %v174 = vld [vmem:[%s166] sm:$0xf]
      %v175 = vld [vmem:[%s166 + $0x4] sm:$0xf]
      %v176 = vld [vmem:[%s166 + $0x8] sm:$0xf]
      %v177 = vld [vmem:[%s166 + $0xc] sm:$0xf]
      %v178 = vld [vmem:[%s166 + $0x10] sm:$0xf]
      %v179 = vld [vmem:[%s166 + $0x14] sm:$0xf]
      %v180 = vld [vmem:[%s166 + $0x18] sm:$0xf]
      %v181 = vld [vmem:[%s166 + $0x1c] sm:$0xf]
      %v182 = vld [vmem:[%s166 + $0x20] sm:$0xf]
      %v183 = vld [vmem:[%s166 + $0x24] sm:$0xf]
      %v184 = vld [vmem:[%s166 + $0x28] sm:$0xf]
      %v185 = vld [vmem:[%s166 + $0x2c] sm:$0xf]
      %v186 = vld [vmem:[%s166 + $0x30] sm:$0xf]
      %v187 = vld [vmem:[%s166 + $0x34] sm:$0xf]
      %v188 = vld [vmem:[%s166 + $0x38] sm:$0xf]
      %v189 = vld [vmem:[%s166 + $0x3c] sm:$0xf]
      %v190 = vld [vmem:[%s166 + $0x40] sm:$0xf]
      %v191 = vld [vmem:[%s166 + $0x44] sm:$0xf]
      %v192 = vld [vmem:[%s166 + $0x48] sm:$0xf]
      %v193 = vld [vmem:[%s166 + $0x4c] sm:$0xf]
      %v194 = vld [vmem:[%s166 + $0x50] sm:$0xf]
      %v195 = vld [vmem:[%s166 + $0x54] sm:$0xf]
      %v196 = vld [vmem:[%s166 + $0x58] sm:$0xf]
      %v197 = vld [vmem:[%s166 + $0x5c] sm:$0xf]
      %v198 = vld [vmem:[%s166 + $0x60] sm:$0xf]
      %v199 = vld [vmem:[%s166 + $0x64] sm:$0xf]
      %v200 = vld [vmem:[%s166 + $0x68] sm:$0xf]
      %v201 = vld [vmem:[%s166 + $0x6c] sm:$0xf]
      %v202 = vld [vmem:[%s166 + $0x70] sm:$0xf]
      %v203 = vld [vmem:[%s166 + $0x74] sm:$0xf]
      %v204 = vld [vmem:[%s166 + $0x78] sm:$0xf]
      %v205 = vld [vmem:[%s166 + $0x7c] sm:$0xf]
      %v206 = vunpack.c.l.bf16 %v174
      %v207 = vunpack.c.l.bf16 %v175
      %v208 = vunpack.c.l.bf16 %v176
      %v209 = vunpack.c.l.bf16 %v177
      %v210 = vunpack.c.l.bf16 %v178
      %v211 = vunpack.c.l.bf16 %v179
      %v212 = vunpack.c.l.bf16 %v180
      %v213 = vunpack.c.l.bf16 %v181
      %v214 = vunpack.c.l.bf16 %v182
      %v215 = vunpack.c.l.bf16 %v183
      %v216 = vunpack.c.l.bf16 %v184
      %v217 = vunpack.c.l.bf16 %v185
      %v218 = vunpack.c.l.bf16 %v186
      %v219 = vunpack.c.l.bf16 %v187
      %v220 = vunpack.c.l.bf16 %v188
      %v221 = vunpack.c.l.bf16 %v189
      %v222 = vunpack.c.l.bf16 %v190
      %v223 = vunpack.c.l.bf16 %v191
      %v224 = vunpack.c.l.bf16 %v192
      %v225 = vunpack.c.l.bf16 %v193
      %v226 = vunpack.c.l.bf16 %v194
      %v227 = vunpack.c.l.bf16 %v195
      %v228 = vunpack.c.l.bf16 %v196
      %v229 = vunpack.c.l.bf16 %v197
      %v230 = vunpack.c.l.bf16 %v198
      %v231 = vunpack.c.l.bf16 %v199
      %v232 = vunpack.c.l.bf16 %v200
      %v233 = vunpack.c.l.bf16 %v201
      %v234 = vunpack.c.l.bf16 %v202
      %v235 = vunpack.c.l.bf16 %v203
      %v236 = vunpack.c.l.bf16 %v204
      %v237 = vunpack.c.l.bf16 %v205
      %v238 = vld [vmem:[%s1] sm:$0x1]
      %v240 = vperm.slane %v238, 0
      %v242 = vmul.f32 %v206, %v240
      %v243 = vmul.f32 %v207, %v240
      %v244 = vmul.f32 %v208, %v240
      %v245 = vmul.f32 %v209, %v240
      %v246 = vmul.f32 %v210, %v240
      %v247 = vmul.f32 %v211, %v240
      %v248 = vmul.f32 %v212, %v240
      %v249 = vmul.f32 %v213, %v240
      %v250 = vmul.f32 %v214, %v240
      %v251 = vmul.f32 %v215, %v240
      %v252 = vmul.f32 %v216, %v240
      %v253 = vmul.f32 %v217, %v240
      %v254 = vmul.f32 %v218, %v240
      %v255 = vmul.f32 %v219, %v240
      %v256 = vmul.f32 %v220, %v240
      %v257 = vmul.f32 %v221, %v240
      %v258 = vmul.f32 %v222, %v240
      %v259 = vmul.f32 %v223, %v240
      %v260 = vmul.f32 %v224, %v240
      %v261 = vmul.f32 %v225, %v240
      %v262 = vmul.f32 %v226, %v240
      %v263 = vmul.f32 %v227, %v240
      %v264 = vmul.f32 %v228, %v240
      %v265 = vmul.f32 %v229, %v240
      %v266 = vmul.f32 %v230, %v240
      %v267 = vmul.f32 %v231, %v240
      %v268 = vmul.f32 %v232, %v240
      %v269 = vmul.f32 %v233, %v240
      %v270 = vmul.f32 %v234, %v240
      %v271 = vmul.f32 %v235, %v240
      %v272 = vmul.f32 %v236, %v240
      %v273 = vmul.f32 %v237, %v240
      %v274 = vld [vmem:[%s2] sm:$0x1]
      %v276 = vperm.slane %v274, 0
      %v278 = vadd.f32 %v242, %v276
      %v279 = vadd.f32 %v243, %v276
      %v280 = vadd.f32 %v244, %v276
      %v281 = vadd.f32 %v245, %v276
      %v282 = vadd.f32 %v246, %v276
      %v283 = vadd.f32 %v247, %v276
      %v284 = vadd.f32 %v248, %v276
      %v285 = vadd.f32 %v249, %v276
      %v286 = vadd.f32 %v250, %v276
      %v287 = vadd.f32 %v251, %v276
      %v288 = vadd.f32 %v252, %v276
      %v289 = vadd.f32 %v253, %v276
      %v290 = vadd.f32 %v254, %v276
      %v291 = vadd.f32 %v255, %v276
      %v292 = vadd.f32 %v256, %v276
      %v293 = vadd.f32 %v257, %v276
      %v294 = vadd.f32 %v258, %v276
      %v295 = vadd.f32 %v259, %v276
      %v296 = vadd.f32 %v260, %v276
      %v297 = vadd.f32 %v261, %v276
      %v298 = vadd.f32 %v262, %v276
      %v299 = vadd.f32 %v263, %v276
      %v300 = vadd.f32 %v264, %v276
      %v301 = vadd.f32 %v265, %v276
      %v302 = vadd.f32 %v266, %v276
      %v303 = vadd.f32 %v267, %v276
      %v304 = vadd.f32 %v268, %v276
      %v305 = vadd.f32 %v269, %v276
      %v306 = vadd.f32 %v270, %v276
      %v307 = vadd.f32 %v271, %v276
      %v308 = vadd.f32 %v272, %v276
      %v309 = vadd.f32 %v273, %v276
      %v310 = vmax.f32 %v278, 0.0
      %v311 = vmax.f32 %v279, 0.0
      %v312 = vmax.f32 %v280, 0.0
      %v313 = vmax.f32 %v281, 0.0
      %v314 = vmax.f32 %v282, 0.0
      %v315 = vmax.f32 %v283, 0.0
      %v316 = vmax.f32 %v284, 0.0
      %v317 = vmax.f32 %v285, 0.0
      %v318 = vmax.f32 %v286, 0.0
      %v319 = vmax.f32 %v287, 0.0
      %v320 = vmax.f32 %v288, 0.0
      %v321 = vmax.f32 %v289, 0.0
      %v322 = vmax.f32 %v290, 0.0
      %v323 = vmax.f32 %v291, 0.0
      %v324 = vmax.f32 %v292, 0.0
      %v325 = vmax.f32 %v293, 0.0
      %v326 = vmax.f32 %v294, 0.0
      %v327 = vmax.f32 %v295, 0.0
      %v328 = vmax.f32 %v296, 0.0
      %v329 = vmax.f32 %v297, 0.0
      %v330 = vmax.f32 %v298, 0.0
      %v331 = vmax.f32 %v299, 0.0
      %v332 = vmax.f32 %v300, 0.0
      %v333 = vmax.f32 %v301, 0.0
      %v334 = vmax.f32 %v302, 0.0
      %v335 = vmax.f32 %v303, 0.0
      %v336 = vmax.f32 %v304, 0.0
      %v337 = vmax.f32 %v305, 0.0
      %v338 = vmax.f32 %v306, 0.0
      %v339 = vmax.f32 %v307, 0.0
      %v340 = vmax.f32 %v308, 0.0
      %v341 = vmax.f32 %v309, 0.0
      %v342 = vpack.c.bf16 %v310, %v310
      %v343 = vpack.c.bf16 %v311, %v311
      %v344 = vpack.c.bf16 %v312, %v312
      %v345 = vpack.c.bf16 %v313, %v313
      %v346 = vpack.c.bf16 %v314, %v314
      %v347 = vpack.c.bf16 %v315, %v315
      %v348 = vpack.c.bf16 %v316, %v316
      %v349 = vpack.c.bf16 %v317, %v317
      %v350 = vpack.c.bf16 %v318, %v318
      %v351 = vpack.c.bf16 %v319, %v319
      %v352 = vpack.c.bf16 %v320, %v320
      %v353 = vpack.c.bf16 %v321, %v321
      %v354 = vpack.c.bf16 %v322, %v322
      %v355 = vpack.c.bf16 %v323, %v323
      %v356 = vpack.c.bf16 %v324, %v324
      %v357 = vpack.c.bf16 %v325, %v325
      %v358 = vpack.c.bf16 %v326, %v326
      %v359 = vpack.c.bf16 %v327, %v327
      %v360 = vpack.c.bf16 %v328, %v328
      %v361 = vpack.c.bf16 %v329, %v329
      %v362 = vpack.c.bf16 %v330, %v330
      %v363 = vpack.c.bf16 %v331, %v331
      %v364 = vpack.c.bf16 %v332, %v332
      %v365 = vpack.c.bf16 %v333, %v333
      %v366 = vpack.c.bf16 %v334, %v334
      %v367 = vpack.c.bf16 %v335, %v335
      %v368 = vpack.c.bf16 %v336, %v336
      %v369 = vpack.c.bf16 %v337, %v337
      %v370 = vpack.c.bf16 %v338, %v338
      %v371 = vpack.c.bf16 %v339, %v339
      %v372 = vpack.c.bf16 %v340, %v340
      %v373 = vpack.c.bf16 %v341, %v341
      %374 = vst [vmem:[%s172] sm:$0xf] %v342
      %375 = vst [vmem:[%s172 + $0x4] sm:$0xf] %v343
      %376 = vst [vmem:[%s172 + $0x8] sm:$0xf] %v344
      %377 = vst [vmem:[%s172 + $0xc] sm:$0xf] %v345
      %378 = vst [vmem:[%s172 + $0x10] sm:$0xf] %v346
      %379 = vst [vmem:[%s172 + $0x14] sm:$0xf] %v347
      %380 = vst [vmem:[%s172 + $0x18] sm:$0xf] %v348
      %381 = vst [vmem:[%s172 + $0x1c] sm:$0xf] %v349
      %382 = vst [vmem:[%s172 + $0x20] sm:$0xf] %v350
      %383 = vst [vmem:[%s172 + $0x24] sm:$0xf] %v351
      %384 = vst [vmem:[%s172 + $0x28] sm:$0xf] %v352
      %385 = vst [vmem:[%s172 + $0x2c] sm:$0xf] %v353
      %386 = vst [vmem:[%s172 + $0x30] sm:$0xf] %v354
      %387 = vst [vmem:[%s172 + $0x34] sm:$0xf] %v355
      %388 = vst [vmem:[%s172 + $0x38] sm:$0xf] %v356
      %389 = vst [vmem:[%s172 + $0x3c] sm:$0xf] %v357
      %390 = vst [vmem:[%s172 + $0x40] sm:$0xf] %v358
      %391 = vst [vmem:[%s172 + $0x44] sm:$0xf] %v359
      %392 = vst [vmem:[%s172 + $0x48] sm:$0xf] %v360
      %393 = vst [vmem:[%s172 + $0x4c] sm:$0xf] %v361
      %394 = vst [vmem:[%s172 + $0x50] sm:$0xf] %v362
      %395 = vst [vmem:[%s172 + $0x54] sm:$0xf] %v363
      %396 = vst [vmem:[%s172 + $0x58] sm:$0xf] %v364
      %397 = vst [vmem:[%s172 + $0x5c] sm:$0xf] %v365
      %398 = vst [vmem:[%s172 + $0x60] sm:$0xf] %v366
      %399 = vst [vmem:[%s172 + $0x64] sm:$0xf] %v367
      %400 = vst [vmem:[%s172 + $0x68] sm:$0xf] %v368
      %401 = vst [vmem:[%s172 + $0x6c] sm:$0xf] %v369
      %402 = vst [vmem:[%s172 + $0x70] sm:$0xf] %v370
      %403 = vst [vmem:[%s172 + $0x74] sm:$0xf] %v371
      %404 = vst [vmem:[%s172 + $0x78] sm:$0xf] %v372
      %405 = vst [vmem:[%s172 + $0x7c] sm:$0xf] %v373
      %s406 = smul.u32 32, %s14
      %p407 = scmp.lt.s32.totalorder %s406, 63
      %s408 = scalar_select %p407, %s406, 63
      %s409 = smul.addr %s408, 4
      %s410 = scalar_lea.vmem %s3, %s409
      // Predicated region
      $region33: #{_lambda_.11} parent=31 // pred_check
        %p411 = pneg %p100
      $region34: #{_lambda_.11} parent=31 // pred_check_branch
        %413 = sbr.rel (%p411) target = $region36
      $region35: #{_lambda_.11} parent=31 // pred_region
        %s414 = smul.u32 32, %s14
      $region36: #{_lambda_.11} parent=31 // pred_fallthru
        _
    $region32: #{_lambda_.11} parent=5 // pred_fallthru
      _
    %p415 = scmp.le.s32.totalorder 2, %s9
    // Predicated region
    $region37: #{_lambda_.11} parent=5 // pred_check
      %p416 = pneg %p415
    $region38: #{_lambda_.11} parent=5 // pred_check_branch
      %418 = sbr.rel (%p416) target = $region40
    $region39: #{_lambda_.11} parent=5 // pred_region
      %s419 = ssub.s32 %s9, 2
      // Predicated region
      $region41: #{_lambda_.11} parent=39 // pred_check
        %p420 = pneg %p106
      $region42: #{_lambda_.11} parent=39 // pred_check_branch
        %422 = sbr.rel (%p420) target = $region44
      $region43: #{_lambda_.11} parent=39 // pred_region
        %s423 = smul.u32 32, %s15
        %p424 = scmp.lt.s32.totalorder %s423, 63
        %s425 = scalar_select %p424, %s423, 63
        %s426 = smul.addr %s425, 4
        %s427 = scalar_lea.vmem %s3, %s426
      $region44: #{_lambda_.11} parent=39 // pred_fallthru
        _
    $region40: #{_lambda_.11} parent=5 // pred_fallthru
      _
  $region6: #{_lambda_.11} parent=0 // loop_footer
    %s13 = sadd.s32 1, %s9
  $region7: #{_lambda_.11} parent=0 // loop_footer_branch
    %8 = sbr.rel target = $region3
  $region8: #{_lambda_.11} parent=0 // loop_exit
    _

// kernel: _lambda_.10
$region0: #{_lambda_.10}
  #allocation0 [shape = 'u32[]', space=smem, size = 0x4, offset = 0x4, fixed_abs, tag = 'smem constant byte address 0x4 - core index']
  #allocation1 [shape = 'u32[72,128]{1,0:T(1,128)}', space=vmem, size = 0x9000, scoped, tag = 'internal scratch']
  %s0 = inlined_call_operand.vmem [shape: bf16[512,36], index: 0, kind: input, shape index: {}]
  %s1 = inlined_call_operand.vmem [shape: bf16[36,128], index: 1, kind: input, shape index: {}]
  %s2 = inlined_call_operand.vmem [shape: bf16[512,128], index: 2, kind: output, shape index: {0}]
  %s3 = inlined_call_operand.vmem [shape: f32[2,1,128], index: 3, kind: output, shape index: {1}]
  %s4 = inlined_call_operand.vmem [shape: f32[2,1,128], index: 4, kind: output, shape index: {2}]
  %5 = xla_tuple %s2, %s3, %s4
  %s6 = sld [smem:[#allocation0]]
  $region57: #{_lambda_.10} parent=0
    _
  %s8 = ssub.s32 1, %s6
  %s9 = scalar_select 0, %s8, %s6
  loop: start=0, step=1, limit=4
  $region2: #{_lambda_.10} parent=0 // loop_pre_header
    _
  $region3: #{_lambda_.10} parent=0 // loop_header
    %s11 = sphi 0, %s15
    %p12 = scmp.ge.s32.totalorder %s11, 4
    %s21 = sphi 0, %s23
    %s24 = sphi 0, %s21
    %s25 = sphi 0, %s24
    %s41 = sphi 0, %s25
    %s45 = sphi 0, %s45
    %s47 = sphi 0, %s45
    %s48 = sphi 0, %s47
    %s62 = sphi 0, %s48
    %s68 = sphi 0, %s70
    %s71 = sphi 0, %s68
    %s72 = sphi 0, %s71
    %s88 = sphi 0, %s72
    %s94 = sphi 0, %s96
    %s97 = sphi 0, %s94
    %s98 = sphi 0, %s97
    %s114 = sphi 0, %s98
    %s120 = sphi 0, %s122
    %s123 = sphi 0, %s120
    %s124 = sphi 0, %s123
    %s140 = sphi 0, %s124
  $region4: #{_lambda_.10} parent=0 // loop_header_branch
    %14 = sbr.rel (%p12) target = $region8
  $region5: #{_lambda_.10} parent=0 // loop_body
    %s16 = ssub.s32 %s11, 1
    %s17 = ssub.s32 %s11, 2
    %s18 = sadd.s32 %s11, 1
    %s19 = ssub.s32 %s11, %s18
    %p20 = scmp.eq.s32.totalorder %s19, 0
    %s22 = sadd.s32 %s21, 1
    %s23 = scalar_select %p20, %s21, %s22
    %p26 = pneg %p20
    %p27 = scmp.eq.s32.totalorder %s11, 1
    %p28 = por %p26, %p27
    %p29 = scmp.ne.s32.totalorder %s21, %s24
    %p30 = scmp.eq.s32.totalorder %s11, 0
    %p31 = por %p29, %p30
    %p32 = scmp.ne.s32.totalorder %s21, %s24
    %p33 = scmp.eq.s32.totalorder %s16, 1
    %p34 = por %p32, %p33
    %p35 = scmp.ne.s32.totalorder %s24, %s25
    %p36 = scmp.eq.s32.totalorder %s16, 0
    %p37 = por %p35, %p36
    %p38 = scmp.ne.s32.totalorder %s24, %s25
    %p39 = scmp.eq.s32.totalorder %s17, 1
    %p40 = por %p38, %p39
    %p42 = scmp.ne.s32.totalorder %s25, %s41
    %p43 = scmp.eq.s32.totalorder %s17, 0
    %p44 = por %p42, %p43
    %s46 = sadd.s32 %s45, 1
    %p49 = scmp.eq.s32.totalorder %s11, 1
    %p50 = scmp.ne.s32.totalorder %s45, %s47
    %p51 = scmp.eq.s32.totalorder %s11, 0
    %p52 = por %p50, %p51
    %p53 = scmp.ne.s32.totalorder %s45, %s47
    %p54 = scmp.eq.s32.totalorder %s16, 1
    %p55 = por %p53, %p54
    %p56 = scmp.ne.s32.totalorder %s47, %s48
    %p57 = scmp.eq.s32.totalorder %s16, 0
    %p58 = por %p56, %p57
    %p59 = scmp.ne.s32.totalorder %s47, %s48
    %p60 = scmp.eq.s32.totalorder %s17, 1
    %p61 = por %p59, %p60
    %p63 = scmp.ne.s32.totalorder %s48, %s62
    %p64 = scmp.eq.s32.totalorder %s17, 0
    %p65 = por %p63, %p64
    %s66 = ssub.s32 %s11, %s18
    %p67 = scmp.eq.s32.totalorder %s66, 0
    %s69 = sadd.s32 %s68, 1
    %s70 = scalar_select %p67, %s68, %s69
    %p73 = pneg %p67
    %p74 = scmp.eq.s32.totalorder %s11, 1
    %p75 = por %p73, %p74
    %p76 = scmp.ne.s32.totalorder %s68, %s71
    %p77 = scmp.eq.s32.totalorder %s11, 0
    %p78 = por %p76, %p77
    %p79 = scmp.ne.s32.totalorder %s68, %s71
    %p80 = scmp.eq.s32.totalorder %s16, 1
    %p81 = por %p79, %p80
    %p82 = scmp.ne.s32.totalorder %s71, %s72
    %p83 = scmp.eq.s32.totalorder %s16, 0
    %p84 = por %p82, %p83
    %p85 = scmp.ne.s32.totalorder %s71, %s72
    %p86 = scmp.eq.s32.totalorder %s17, 1
    %p87 = por %p85, %p86
    %p89 = scmp.ne.s32.totalorder %s72, %s88
    %p90 = scmp.eq.s32.totalorder %s17, 0
    %p91 = por %p89, %p90
    %s92 = ssub.s32 %s11, %s18
    %p93 = scmp.eq.s32.totalorder %s92, 0
    %s95 = sadd.s32 %s94, 1
    %s96 = scalar_select %p93, %s94, %s95
    %p99 = pneg %p93
    %p100 = scmp.eq.s32.totalorder %s11, 1
    %p101 = por %p99, %p100
    %p102 = scmp.ne.s32.totalorder %s94, %s97
    %p103 = scmp.eq.s32.totalorder %s11, 0
    %p104 = por %p102, %p103
    %p105 = scmp.ne.s32.totalorder %s94, %s97
    %p106 = scmp.eq.s32.totalorder %s16, 1
    %p107 = por %p105, %p106
    %p108 = scmp.ne.s32.totalorder %s97, %s98
    %p109 = scmp.eq.s32.totalorder %s16, 0
    %p110 = por %p108, %p109
    %p111 = scmp.ne.s32.totalorder %s97, %s98
    %p112 = scmp.eq.s32.totalorder %s17, 1
    %p113 = por %p111, %p112
    %p115 = scmp.ne.s32.totalorder %s98, %s114
    %p116 = scmp.eq.s32.totalorder %s17, 0
    %p117 = por %p115, %p116
    %s118 = ssub.s32 %s11, %s18
    %p119 = scmp.eq.s32.totalorder %s118, 0
    %s121 = sadd.s32 %s120, 1
    %s122 = scalar_select %p119, %s120, %s121
    %p125 = pneg %p119
    %p126 = scmp.eq.s32.totalorder %s11, 1
    %p127 = por %p125, %p126
    %p128 = scmp.ne.s32.totalorder %s120, %s123
    %p129 = scmp.eq.s32.totalorder %s11, 0
    %p130 = por %p128, %p129
    %p131 = scmp.ne.s32.totalorder %s120, %s123
    %p132 = scmp.eq.s32.totalorder %s16, 1
    %p133 = por %p131, %p132
    %p134 = scmp.ne.s32.totalorder %s123, %s124
    %p135 = scmp.eq.s32.totalorder %s16, 0
    %p136 = por %p134, %p135
    %p137 = scmp.ne.s32.totalorder %s123, %s124
    %p138 = scmp.eq.s32.totalorder %s17, 1
    %p139 = por %p137, %p138
    %p141 = scmp.ne.s32.totalorder %s124, %s140
    %p142 = scmp.eq.s32.totalorder %s17, 0
    %p143 = por %p141, %p142
    %p144 = scmp.le.s32.totalorder 1, %s11
    %p145 = scmp.lt.s32.totalorder %s11, 3
    %p146 = pnand %p144, %p145
    %p147 = pneg %p146
    // Predicated region
    $region9: #{_lambda_.10} parent=5 // pred_check
      _
    $region10: #{_lambda_.10} parent=5 // pred_check_branch
      %149 = sbr.rel (%p146) target = $region12
    $region11: #{_lambda_.10} parent=5 // pred_region
      %s150 = ssub.s32 %s11, 1
      // Predicated region
      $region13: #{_lambda_.10} parent=11 // pred_check
        %p151 = pneg %p58
      $region14: #{_lambda_.10} parent=11 // pred_check_branch
        %153 = sbr.rel (%p151) target = $region16
      $region15: #{_lambda_.10} parent=11 // pred_region
        _
      $region16: #{_lambda_.10} parent=11 // pred_fallthru
        _
    $region12: #{_lambda_.10} parent=5 // pred_fallthru
      _
    %p154 = scmp.lt.s32.totalorder %s11, 2
    // Predicated region
    $region17: #{_lambda_.10} parent=5 // pred_check
      %p155 = pneg %p154
    $region18: #{_lambda_.10} parent=5 // pred_check_branch
      %157 = sbr.rel (%p155) target = $region20
    $region19: #{_lambda_.10} parent=5 // pred_region
      // Predicated region
      $region21: #{_lambda_.10} parent=19 // pred_check
        %p158 = pneg %p31
      $region22: #{_lambda_.10} parent=19 // pred_check_branch
        %160 = sbr.rel (%p158) target = $region24
      $region23: #{_lambda_.10} parent=19 // pred_region
        %s161 = smul.u32 32, %s11
        %p162 = scmp.lt.s32.totalorder %s161, 63
        %s163 = scalar_select %p162, %s161, 63
        %s164 = smul.addr %s163, 4
        %s165 = scalar_lea.vmem %s0, %s164
        %s166 = smul.u32 32, %s11
      $region24: #{_lambda_.10} parent=19 // pred_fallthru
        _
    $region20: #{_lambda_.10} parent=5 // pred_fallthru
      _
    %p167 = scmp.le.s32.totalorder 1, %s11
    %p168 = scmp.lt.s32.totalorder %s11, 3
    %p169 = pnand %p167, %p168
    %p170 = pneg %p169
    // Predicated region
    $region25: #{_lambda_.10} parent=5 // pred_check
      _
    $region26: #{_lambda_.10} parent=5 // pred_check_branch
      %172 = sbr.rel (%p169) target = $region28
    $region27: #{_lambda_.10} parent=5 // pred_region
      %s173 = ssub.s32 %s11, 1
      %s174 = smul.u32 32, %s16
      %p175 = scmp.lt.s32.totalorder %s174, 63
      %s176 = scalar_select %p175, %s174, 63
      %s177 = smul.addr %s176, 4
      %s178 = scalar_lea.vmem %s0, %s177
      %p179 = pneg %p37
      %p180 = pneg %p34
      %p181 = pneg %p58
      %p182 = pneg %p55
      %p183 = pneg %p84
      %p184 = pneg %p81
      %s185 = smul.u32 32, %s16
      %p186 = scmp.lt.s32.totalorder %s185, 63
      %s187 = scalar_select %p186, %s185, 63
      %s188 = smul.addr %s187, 4
      %s189 = scalar_lea.vmem %s2, %s188
      %p190 = pneg %p110
      %p191 = pneg %p107
      %p192 = scmp.lt.s32.totalorder %s16, 1
      %s193 = scalar_select %p192, %s16, 1
      %s194 = scalar_lea.vmem %s3, %s193
      %p195 = pneg %p136
      %p196 = pneg %p133
      %p197 = scmp.lt.s32.totalorder %s16, 1
      %s198 = scalar_select %p197, %s16, 1
      %s199 = scalar_lea.vmem %s4, %s198
      %s200 = smul.u32 32, %s16
      %p201 = scmp.lt.s32.totalorder %s200, 63
      %s202 = scalar_select %p201, %s200, 63
      %s203 = smul.addr %s202, 4
      %s204 = scalar_lea.vmem %s0, %s203
      %s205 = smul.u32 32, %s16
      %s206 = smul.u32 32, %s16
      %p207 = scmp.lt.s32.totalorder %s206, 63
      %s208 = scalar_select %p207, %s206, 63
      %s209 = smul.addr %s208, 4
      %s210 = scalar_lea.vmem %s2, %s209
      %s211 = smul.u32 32, %s16
      %p212 = scmp.lt.s32.totalorder %s16, 1
      %s213 = scalar_select %p212, %s16, 1
      %s214 = scalar_lea.vmem %s3, %s213
      %p215 = scmp.lt.s32.totalorder %s16, 1
      %s216 = scalar_select %p215, %s16, 1
      %s217 = scalar_lea.vmem %s4, %s216
      %v219 = vld [vmem:[%s204] sm:$0xf]
      %v220 = vld [vmem:[%s204 + $0x4] sm:$0xf]
      %v221 = vld [vmem:[%s204 + $0x8] sm:$0xf]
      %v222 = vld [vmem:[%s204 + $0xc] sm:$0xf]
      %v223 = vld [vmem:[%s204 + $0x10] sm:$0xf]
      %v224 = vld [vmem:[%s204 + $0x14] sm:$0xf]
      %v225 = vld [vmem:[%s204 + $0x18] sm:$0xf]
      %v226 = vld [vmem:[%s204 + $0x1c] sm:$0xf]
      %v227 = vld [vmem:[%s204 + $0x20] sm:$0xf]
      %v228 = vld [vmem:[%s204 + $0x24] sm:$0xf]
      %v229 = vld [vmem:[%s204 + $0x28] sm:$0xf]
      %v230 = vld [vmem:[%s204 + $0x2c] sm:$0xf]
      %v231 = vld [vmem:[%s204 + $0x30] sm:$0xf]
      %v232 = vld [vmem:[%s204 + $0x34] sm:$0xf]
      %v233 = vld [vmem:[%s204 + $0x38] sm:$0xf]
      %v234 = vld [vmem:[%s204 + $0x3c] sm:$0xf]
      %v235 = vld [vmem:[%s204 + $0x40] sm:$0xf]
      %v236 = vld [vmem:[%s204 + $0x44] sm:$0xf]
      %v237 = vld [vmem:[%s204 + $0x48] sm:$0xf]
      %v238 = vld [vmem:[%s204 + $0x4c] sm:$0xf]
      %v239 = vld [vmem:[%s204 + $0x50] sm:$0xf]
      %v240 = vld [vmem:[%s204 + $0x54] sm:$0xf]
      %v241 = vld [vmem:[%s204 + $0x58] sm:$0xf]
      %v242 = vld [vmem:[%s204 + $0x5c] sm:$0xf]
      %v243 = vld [vmem:[%s204 + $0x60] sm:$0xf]
      %v244 = vld [vmem:[%s204 + $0x64] sm:$0xf]
      %v245 = vld [vmem:[%s204 + $0x68] sm:$0xf]
      %v246 = vld [vmem:[%s204 + $0x6c] sm:$0xf]
      %v247 = vld [vmem:[%s204 + $0x70] sm:$0xf]
      %v248 = vld [vmem:[%s204 + $0x74] sm:$0xf]
      %v249 = vld [vmem:[%s204 + $0x78] sm:$0xf]
      %v250 = vld [vmem:[%s204 + $0x7c] sm:$0xf]
      %v251 = vld [vmem:[%s1] sm:$0xf]
      %v252 = vld [vmem:[%s1 + $0x4] sm:$0xf]
      %v253 = vld [vmem:[%s1 + $0x8] sm:$0xf]
      %v254 = vld [vmem:[%s1 + $0xc] sm:$0xf]
      %v255 = vld [vmem:[%s1 + $0x10] sm:$0x3]
      %v288 = vunpack.c.l.b16 %v219
      %v289 = vunpack.c.l.b16 %v220
      %v290 = vunpack.c.l.b16 %v221
      %v291 = vunpack.c.l.b16 %v222
      %v292 = vunpack.c.l.b16 %v223
      %v293 = vunpack.c.l.b16 %v224
      %v294 = vunpack.c.l.b16 %v225
      %v295 = vunpack.c.l.b16 %v226
      %v296 = vunpack.c.l.b16 %v227
      %v297 = vunpack.c.l.b16 %v228
      %v298 = vunpack.c.l.b16 %v229
      %v299 = vunpack.c.l.b16 %v230
      %v300 = vunpack.c.l.b16 %v231
      %v301 = vunpack.c.l.b16 %v232
      %v302 = vunpack.c.l.b16 %v233
      %v303 = vunpack.c.l.b16 %v234
      %v304 = vunpack.c.l.b16 %v235
      %v305 = vunpack.c.l.b16 %v236
      %v306 = vunpack.c.l.b16 %v237
      %v307 = vunpack.c.l.b16 %v238
      %v308 = vunpack.c.l.b16 %v239
      %v309 = vunpack.c.l.b16 %v240
      %v310 = vunpack.c.l.b16 %v241
      %v311 = vunpack.c.l.b16 %v242
      %v312 = vunpack.c.l.b16 %v243
      %v313 = vunpack.c.l.b16 %v244
      %v314 = vunpack.c.l.b16 %v245
      %v315 = vunpack.c.l.b16 %v246
      %v316 = vunpack.c.l.b16 %v247
      %v317 = vunpack.c.l.b16 %v248
      %v318 = vunpack.c.l.b16 %v249
      %v319 = vunpack.c.l.b16 %v250
      %v320 = vpack.c.b16 %v289, %v288
      %v321 = vpack.c.b16 %v291, %v290
      %v322 = vpack.c.b16 %v293, %v292
      %v323 = vpack.c.b16 %v295, %v294
      %v324 = vpack.c.b16 %v297, %v296
      %v325 = vpack.c.b16 %v299, %v298
      %v326 = vpack.c.b16 %v301, %v300
      %v327 = vpack.c.b16 %v303, %v302
      %v328 = vpack.c.b16 %v305, %v304
      %v329 = vpack.c.b16 %v307, %v306
      %v330 = vpack.c.b16 %v309, %v308
      %v331 = vpack.c.b16 %v311, %v310
      %v332 = vpack.c.b16 %v313, %v312
      %v333 = vpack.c.b16 %v315, %v314
      %v334 = vpack.c.b16 %v317, %v316
      %v335 = vpack.c.b16 %v319, %v318
      %v341 = vunpack.c.l.b16 %v251
      %v342 = vunpack.c.l.b16 %v252
      %v343 = vunpack.c.l.b16 %v253
      %v344 = vunpack.c.l.b16 %v254
      %v345 = vunpack.c.l.b16 %v255
      %v346 = vpack.c.b16 %v342, %v341
      %v347 = vpack.c.b16 %v344, %v343
      %v348 = vpack.c.b16 %v345, %v345
      %vm351 = vcmask 293888
      %v353 = vsel %vm351, %v320, 0
      %v356 = vsel %vm351, %v321, 0
      %v359 = vsel %vm351, %v322, 0
      %v362 = vsel %vm351, %v323, 0
      %v365 = vsel %vm351, %v324, 0
      %v368 = vsel %vm351, %v325, 0
      %v371 = vsel %vm351, %v326, 0
      %v374 = vsel %vm351, %v327, 0
      %v377 = vsel %vm351, %v328, 0
      %v380 = vsel %vm351, %v329, 0
      %v383 = vsel %vm351, %v330, 0
      %v386 = vsel %vm351, %v331, 0
      %v389 = vsel %vm351, %v332, 0
      %v392 = vsel %vm351, %v333, 0
      %v395 = vsel %vm351, %v334, 0
      %v398 = vsel %vm351, %v335, 0
      %vm400 = vcmask 1041408
      %v402 = vsel %vm400, %v348, 0
      %404 = vmatpush.bf16.msra.mxu0 0
      %405 = vmatpush.bf16.msra.mxu0 0
      %406 = vmatpush.bf16.msra.mxu0 0
      %407 = vmatpush.bf16.msra.mxu0 0
      %408 = vmatpush.bf16.msra.mxu0 0
      %409 = vmatpush.bf16.msra.mxu0 %v402
      %410 = vmatpush.bf16.msra.mxu0 %v347
      %411 = vmatpush.bf16.msra.mxu0 %v346
      %412 = vmatmul.bf16.gmra.mxu0 %v353
      %v413 = vpop.f32.mrf.mxu0
      %v414 = vadd.f32 0.0, %v413
      %v415 = vpop.f32.mrf.mxu0
      %v416 = vadd.f32 0.0, %v415
      %417 = vmatmul.bf16.gmra.mxu0 %v356
      %v418 = vpop.f32.mrf.mxu0
      %v419 = vadd.f32 0.0, %v418
      %v420 = vpop.f32.mrf.mxu0
      %v421 = vadd.f32 0.0, %v420
      %422 = vmatmul.bf16.gmra.mxu0 %v359
      %v423 = vpop.f32.mrf.mxu0
      %v424 = vadd.f32 0.0, %v423
      %v425 = vpop.f32.mrf.mxu0
      %v426 = vadd.f32 0.0, %v425
      %427 = vmatmul.bf16.gmra.mxu0 %v362
      %v428 = vpop.f32.mrf.mxu0
      %v429 = vadd.f32 0.0, %v428
      %v430 = vpop.f32.mrf.mxu0
      %v431 = vadd.f32 0.0, %v430
      %432 = vmatmul.bf16.gmra.mxu0 %v365
      %v433 = vpop.f32.mrf.mxu0
      %v434 = vadd.f32 0.0, %v433
      %v435 = vpop.f32.mrf.mxu0
      %v436 = vadd.f32 0.0, %v435
      %437 = vmatmul.bf16.gmra.mxu0 %v368
      %v438 = vpop.f32.mrf.mxu0
      %v439 = vadd.f32 0.0, %v438
      %v440 = vpop.f32.mrf.mxu0
      %v441 = vadd.f32 0.0, %v440
      %442 = vmatmul.bf16.gmra.mxu0 %v371
      %v443 = vpop.f32.mrf.mxu0
      %v444 = vadd.f32 0.0, %v443
      %v445 = vpop.f32.mrf.mxu0
      %v446 = vadd.f32 0.0, %v445
      %447 = vmatmul.bf16.gmra.mxu0 %v374
      %v448 = vpop.f32.mrf.mxu0
      %v449 = vadd.f32 0.0, %v448
      %v450 = vpop.f32.mrf.mxu0
      %v451 = vadd.f32 0.0, %v450
      %452 = vmatmul.bf16.gmra.mxu0 %v377
      %v453 = vpop.f32.mrf.mxu0
      %v454 = vadd.f32 0.0, %v453
      %v455 = vpop.f32.mrf.mxu0
      %v456 = vadd.f32 0.0, %v455
      %457 = vmatmul.bf16.gmra.mxu0 %v380
      %v458 = vpop.f32.mrf.mxu0
      %v459 = vadd.f32 0.0, %v458
      %v460 = vpop.f32.mrf.mxu0
      %v461 = vadd.f32 0.0, %v460
      %462 = vmatmul.bf16.gmra.mxu0 %v383
      %v463 = vpop.f32.mrf.mxu0
      %v464 = vadd.f32 0.0, %v463
      %v465 = vpop.f32.mrf.mxu0
      %v466 = vadd.f32 0.0, %v465
      %467 = vmatmul.bf16.gmra.mxu0 %v386
      %v468 = vpop.f32.mrf.mxu0
      %v469 = vadd.f32 0.0, %v468
      %v470 = vpop.f32.mrf.mxu0
      %v471 = vadd.f32 0.0, %v470
      %472 = vmatmul.bf16.gmra.mxu0 %v389
      %v473 = vpop.f32.mrf.mxu0
      %v474 = vadd.f32 0.0, %v473
      %v475 = vpop.f32.mrf.mxu0
      %v476 = vadd.f32 0.0, %v475
      %477 = vmatmul.bf16.gmra.mxu0 %v392
      %v478 = vpop.f32.mrf.mxu0
      %v479 = vadd.f32 0.0, %v478
      %v480 = vpop.f32.mrf.mxu0
      %v481 = vadd.f32 0.0, %v480
      %482 = vmatmul.bf16.gmra.mxu0 %v395
      %v483 = vpop.f32.mrf.mxu0
      %v484 = vadd.f32 0.0, %v483
      %v485 = vpop.f32.mrf.mxu0
      %v486 = vadd.f32 0.0, %v485
      %487 = vmatmul.bf16.gmra.mxu0 %v398
      %v488 = vpop.f32.mrf.mxu0
      %v489 = vadd.f32 0.0, %v488
      %v490 = vpop.f32.mrf.mxu0
      %v491 = vadd.f32 0.0, %v490
      %492 = vdwg.mxu0
      %v493 = vpack.c.bf16 %v414, %v414
      %v494 = vpack.c.bf16 %v416, %v416
      %v495 = vpack.c.bf16 %v419, %v419
      %v496 = vpack.c.bf16 %v421, %v421
      %v497 = vpack.c.bf16 %v424, %v424
      %v498 = vpack.c.bf16 %v426, %v426
      %v499 = vpack.c.bf16 %v429, %v429
      %v500 = vpack.c.bf16 %v431, %v431
      %v501 = vpack.c.bf16 %v434, %v434
      %v502 = vpack.c.bf16 %v436, %v436
      %v503 = vpack.c.bf16 %v439, %v439
      %v504 = vpack.c.bf16 %v441, %v441
      %v505 = vpack.c.bf16 %v444, %v444
      %v506 = vpack.c.bf16 %v446, %v446
      %v507 = vpack.c.bf16 %v449, %v449
      %v508 = vpack.c.bf16 %v451, %v451
      %v509 = vpack.c.bf16 %v454, %v454
      %v510 = vpack.c.bf16 %v456, %v456
      %v511 = vpack.c.bf16 %v459, %v459
      %v512 = vpack.c.bf16 %v461, %v461
      %v513 = vpack.c.bf16 %v464, %v464
      %v514 = vpack.c.bf16 %v466, %v466
      %v515 = vpack.c.bf16 %v469, %v469
      %v516 = vpack.c.bf16 %v471, %v471
      %v517 = vpack.c.bf16 %v474, %v474
      %v518 = vpack.c.bf16 %v476, %v476
      %v519 = vpack.c.bf16 %v479, %v479
      %v520 = vpack.c.bf16 %v481, %v481
      %v521 = vpack.c.bf16 %v484, %v484
      %v522 = vpack.c.bf16 %v486, %v486
      %v523 = vpack.c.bf16 %v489, %v489
      %v524 = vpack.c.bf16 %v491, %v491
      %525 = vst [vmem:[%s210] sm:$0xf] %v493
      %526 = vst [vmem:[%s210 + $0x4] sm:$0xf] %v494
      %527 = vst [vmem:[%s210 + $0x8] sm:$0xf] %v495
      %528 = vst [vmem:[%s210 + $0xc] sm:$0xf] %v496
      %529 = vst [vmem:[%s210 + $0x10] sm:$0xf] %v497
      %530 = vst [vmem:[%s210 + $0x14] sm:$0xf] %v498
      %531 = vst [vmem:[%s210 + $0x18] sm:$0xf] %v499
      %532 = vst [vmem:[%s210 + $0x1c] sm:$0xf] %v500
      %533 = vst [vmem:[%s210 + $0x20] sm:$0xf] %v501
      %534 = vst [vmem:[%s210 + $0x24] sm:$0xf] %v502
      %535 = vst [vmem:[%s210 + $0x28] sm:$0xf] %v503
      %536 = vst [vmem:[%s210 + $0x2c] sm:$0xf] %v504
      %537 = vst [vmem:[%s210 + $0x30] sm:$0xf] %v505
      %538 = vst [vmem:[%s210 + $0x34] sm:$0xf] %v506
      %539 = vst [vmem:[%s210 + $0x38] sm:$0xf] %v507
      %540 = vst [vmem:[%s210 + $0x3c] sm:$0xf] %v508
      %541 = vst [vmem:[%s210 + $0x40] sm:$0xf] %v509
      %542 = vst [vmem:[%s210 + $0x44] sm:$0xf] %v510
      %543 = vst [vmem:[%s210 + $0x48] sm:$0xf] %v511
      %544 = vst [vmem:[%s210 + $0x4c] sm:$0xf] %v512
      %545 = vst [vmem:[%s210 + $0x50] sm:$0xf] %v513
      %546 = vst [vmem:[%s210 + $0x54] sm:$0xf] %v514
      %547 = vst [vmem:[%s210 + $0x58] sm:$0xf] %v515
      %548 = vst [vmem:[%s210 + $0x5c] sm:$0xf] %v516
      %549 = vst [vmem:[%s210 + $0x60] sm:$0xf] %v517
      %550 = vst [vmem:[%s210 + $0x64] sm:$0xf] %v518
      %551 = vst [vmem:[%s210 + $0x68] sm:$0xf] %v519
      %552 = vst [vmem:[%s210 + $0x6c] sm:$0xf] %v520
      %553 = vst [vmem:[%s210 + $0x70] sm:$0xf] %v521
      %554 = vst [vmem:[%s210 + $0x74] sm:$0xf] %v522
      %555 = vst [vmem:[%s210 + $0x78] sm:$0xf] %v523
      %556 = vst [vmem:[%s210 + $0x7c] sm:$0xf] %v524
      %v557 = vadd.f32 %v414, %v416
      %v558 = vadd.f32 %v557, %v419
      %v559 = vadd.f32 %v558, %v421
      %v560 = vadd.f32 %v559, %v424
      %v561 = vadd.f32 %v560, %v426
      %v562 = vadd.f32 %v561, %v429
      %v563 = vadd.f32 %v562, %v431
      %v564 = vadd.f32 %v563, %v434
      %v565 = vadd.f32 %v564, %v436
      %v566 = vadd.f32 %v565, %v439
      %v567 = vadd.f32 %v566, %v441
      %v568 = vadd.f32 %v567, %v444
      %v569 = vadd.f32 %v568, %v446
      %v570 = vadd.f32 %v569, %v449
      %v571 = vadd.f32 %v570, %v451
      %v572 = vadd.f32 %v571, %v454
      %v573 = vadd.f32 %v572, %v456
      %v574 = vadd.f32 %v573, %v459
      %v575 = vadd.f32 %v574, %v461
      %v576 = vadd.f32 %v575, %v464
      %v577 = vadd.f32 %v576, %v466
      %v578 = vadd.f32 %v577, %v469
      %v579 = vadd.f32 %v578, %v471
      %v580 = vadd.f32 %v579, %v474
      %v581 = vadd.f32 %v580, %v476
      %v582 = vadd.f32 %v581, %v479
      %v583 = vadd.f32 %v582, %v481
      %v584 = vadd.f32 %v583, %v484
      %v585 = vadd.f32 %v584, %v486
      %v586 = vadd.f32 %v585, %v489
      %v587 = vadd.f32 %v586, %v491
      %v588 = vrot.slane %v587, 4
      %v589 = vadd.f32 %v587, %v588
      %v590 = vrot.slane %v589, 2
      %v591 = vadd.f32 %v589, %v590
      %v592 = vrot.slane %v591, 1
      %v593 = vadd.f32 %v591, %v592
      %594 = vst [vmem:[%s214] sm:$0x1] %v593
      %v595 = vmul.f32 %v414, %v414
      %v596 = vmul.f32 %v416, %v416
      %v597 = vmul.f32 %v419, %v419
      %v598 = vmul.f32 %v421, %v421
      %v599 = vmul.f32 %v424, %v424
      %v600 = vmul.f32 %v426, %v426
      %v601 = vmul.f32 %v429, %v429
      %v602 = vmul.f32 %v431, %v431
      %v603 = vmul.f32 %v434, %v434
      %v604 = vmul.f32 %v436, %v436
      %v605 = vmul.f32 %v439, %v439
      %v606 = vmul.f32 %v441, %v441
      %v607 = vmul.f32 %v444, %v444
      %v608 = vmul.f32 %v446, %v446
      %v609 = vmul.f32 %v449, %v449
      %v610 = vmul.f32 %v451, %v451
      %v611 = vmul.f32 %v454, %v454
      %v612 = vmul.f32 %v456, %v456
      %v613 = vmul.f32 %v459, %v459
      %v614 = vmul.f32 %v461, %v461
      %v615 = vmul.f32 %v464, %v464
      %v616 = vmul.f32 %v466, %v466
      %v617 = vmul.f32 %v469, %v469
      %v618 = vmul.f32 %v471, %v471
      %v619 = vmul.f32 %v474, %v474
      %v620 = vmul.f32 %v476, %v476
      %v621 = vmul.f32 %v479, %v479
      %v622 = vmul.f32 %v481, %v481
      %v623 = vmul.f32 %v484, %v484
      %v624 = vmul.f32 %v486, %v486
      %v625 = vmul.f32 %v489, %v489
      %v626 = vmul.f32 %v491, %v491
      %v627 = vadd.f32 %v595, %v596
      %v628 = vadd.f32 %v627, %v597
      %v629 = vadd.f32 %v628, %v598
      %v630 = vadd.f32 %v629, %v599
      %v631 = vadd.f32 %v630, %v600
      %v632 = vadd.f32 %v631, %v601
      %v633 = vadd.f32 %v632, %v602
      %v634 = vadd.f32 %v633, %v603
      %v635 = vadd.f32 %v634, %v604
      %v636 = vadd.f32 %v635, %v605
      %v637 = vadd.f32 %v636, %v606
      %v638 = vadd.f32 %v637, %v607
      %v639 = vadd.f32 %v638, %v608
      %v640 = vadd.f32 %v639, %v609
      %v641 = vadd.f32 %v640, %v610
      %v642 = vadd.f32 %v641, %v611
      %v643 = vadd.f32 %v642, %v612
      %v644 = vadd.f32 %v643, %v613
      %v645 = vadd.f32 %v644, %v614
      %v646 = vadd.f32 %v645, %v615
      %v647 = vadd.f32 %v646, %v616
      %v648 = vadd.f32 %v647, %v617
      %v649 = vadd.f32 %v648, %v618
      %v650 = vadd.f32 %v649, %v619
      %v651 = vadd.f32 %v650, %v620
      %v652 = vadd.f32 %v651, %v621
      %v653 = vadd.f32 %v652, %v622
      %v654 = vadd.f32 %v653, %v623
      %v655 = vadd.f32 %v654, %v624
      %v656 = vadd.f32 %v655, %v625
      %v657 = vadd.f32 %v656, %v626
      %v658 = vrot.slane %v657, 4
      %v659 = vadd.f32 %v657, %v658
      %v660 = vrot.slane %v659, 2
      %v661 = vadd.f32 %v659, %v660
      %v662 = vrot.slane %v661, 1
      %v663 = vadd.f32 %v661, %v662
      %664 = vst [vmem:[%s217] sm:$0x1] %v663
      %s665 = smul.u32 32, %s16
      %p666 = scmp.lt.s32.totalorder %s665, 63
      %s667 = scalar_select %p666, %s665, 63
      %s668 = smul.addr %s667, 4
      %s669 = scalar_lea.vmem %s2, %s668
      %p670 = scmp.lt.s32.totalorder %s16, 1
      %s671 = scalar_select %p670, %s16, 1
      %s672 = scalar_lea.vmem %s3, %s671
      %p673 = scmp.lt.s32.totalorder %s16, 1
      %s674 = scalar_select %p673, %s16, 1
      %s675 = scalar_lea.vmem %s4, %s674
      // Predicated region
      $region29: #{_lambda_.10} parent=27 // pred_check
        %p676 = pneg %p81
      $region30: #{_lambda_.10} parent=27 // pred_check_branch
        %678 = sbr.rel (%p676) target = $region32
      $region31: #{_lambda_.10} parent=27 // pred_region
        %s679 = smul.u32 32, %s16
      $region32: #{_lambda_.10} parent=27 // pred_fallthru
        _
      // Predicated region
      $region33: #{_lambda_.10} parent=27 // pred_check
        %p680 = pneg %p107
      $region34: #{_lambda_.10} parent=27 // pred_check_branch
        %682 = sbr.rel (%p680) target = $region36
      $region35: #{_lambda_.10} parent=27 // pred_region
        _
      $region36: #{_lambda_.10} parent=27 // pred_fallthru
        _
      // Predicated region
      $region37: #{_lambda_.10} parent=27 // pred_check
        %p683 = pneg %p133
      $region38: #{_lambda_.10} parent=27 // pred_check_branch
        %685 = sbr.rel (%p683) target = $region40
      $region39: #{_lambda_.10} parent=27 // pred_region
        _
      $region40: #{_lambda_.10} parent=27 // pred_fallthru
        _
    $region28: #{_lambda_.10} parent=5 // pred_fallthru
      _
    %p686 = scmp.le.s32.totalorder 2, %s11
    // Predicated region
    $region41: #{_lambda_.10} parent=5 // pred_check
      %p687 = pneg %p686
    $region42: #{_lambda_.10} parent=5 // pred_check_branch
      %689 = sbr.rel (%p687) target = $region44
    $region43: #{_lambda_.10} parent=5 // pred_region
      %s690 = ssub.s32 %s11, 2
      // Predicated region
      $region45: #{_lambda_.10} parent=43 // pred_check
        %p691 = pneg %p87
      $region46: #{_lambda_.10} parent=43 // pred_check_branch
        %693 = sbr.rel (%p691) target = $region48
      $region47: #{_lambda_.10} parent=43 // pred_region
        %s694 = smul.u32 32, %s17
        %p695 = scmp.lt.s32.totalorder %s694, 63
        %s696 = scalar_select %p695, %s694, 63
        %s697 = smul.addr %s696, 4
        %s698 = scalar_lea.vmem %s2, %s697
      $region48: #{_lambda_.10} parent=43 // pred_fallthru
        _
      // Predicated region
      $region49: #{_lambda_.10} parent=43 // pred_check
        %p699 = pneg %p113
      $region50: #{_lambda_.10} parent=43 // pred_check_branch
        %701 = sbr.rel (%p699) target = $region52
      $region51: #{_lambda_.10} parent=43 // pred_region
        %p702 = scmp.lt.s32.totalorder %s17, 1
        %s703 = scalar_select %p702, %s17, 1
        %s704 = scalar_lea.vmem %s3, %s703
      $region52: #{_lambda_.10} parent=43 // pred_fallthru
        _
      // Predicated region
      $region53: #{_lambda_.10} parent=43 // pred_check
        %p705 = pneg %p139
      $region54: #{_lambda_.10} parent=43 // pred_check_branch
        %707 = sbr.rel (%p705) target = $region56
      $region55: #{_lambda_.10} parent=43 // pred_region
        %p708 = scmp.lt.s32.totalorder %s17, 1
        %s709 = scalar_select %p708, %s17, 1
        %s710 = scalar_lea.vmem %s4, %s709
      $region56: #{_lambda_.10} parent=43 // pred_fallthru
        _
    $region44: #{_lambda_.10} parent=5 // pred_fallthru
      _
  $region6: #{_lambda_.10} parent=0 // loop_footer
    %s15 = sadd.s32 1, %s11
  $region7: #{_lambda_.10} parent=0 // loop_footer_branch
    %10 = sbr.rel target = $region3
  $region8: #{_lambda_.10} parent=0 // loop_exit
    _

// kernel: _lambda_.13
$region0: #{_lambda_.13}
  #allocation0 [shape = 'u32[]', space=smem, size = 0x4, offset = 0x4, fixed_abs, tag = 'smem constant byte address 0x4 - core index']
  #allocation1 [shape = 'u32[72,128]{1,0:T(1,128)}', space=vmem, size = 0x9000, scoped, tag = 'internal scratch']
  %s0 = inlined_call_operand.vmem [shape: bf16[512,72], index: 0, kind: input, shape index: {}]
  %s1 = inlined_call_operand.vmem [shape: bf16[72,128], index: 1, kind: input, shape index: {}]
  %s2 = inlined_call_operand.vmem [shape: bf16[512,128], index: 2, kind: output, shape index: {0}]
  %s3 = inlined_call_operand.vmem [shape: f32[2,1,128], index: 3, kind: output, shape index: {1}]
  %s4 = inlined_call_operand.vmem [shape: f32[2,1,128], index: 4, kind: output, shape index: {2}]
  %5 = xla_tuple %s2, %s3, %s4
  %s6 = sld [smem:[#allocation0]]
  $region57: #{_lambda_.13} parent=0
    _
  %s8 = ssub.s32 1, %s6
  %s9 = scalar_select 0, %s8, %s6
  loop: start=0, step=1, limit=4
  $region2: #{_lambda_.13} parent=0 // loop_pre_header
    _
  $region3: #{_lambda_.13} parent=0 // loop_header
    %s11 = sphi 0, %s15
    %p12 = scmp.ge.s32.totalorder %s11, 4
    %s21 = sphi 0, %s23
    %s24 = sphi 0, %s21
    %s25 = sphi 0, %s24
    %s41 = sphi 0, %s25
    %s45 = sphi 0, %s45
    %s47 = sphi 0, %s45
    %s48 = sphi 0, %s47
    %s62 = sphi 0, %s48
    %s68 = sphi 0, %s70
    %s71 = sphi 0, %s68
    %s72 = sphi 0, %s71
    %s88 = sphi 0, %s72
    %s94 = sphi 0, %s96
    %s97 = sphi 0, %s94
    %s98 = sphi 0, %s97
    %s114 = sphi 0, %s98
    %s120 = sphi 0, %s122
    %s123 = sphi 0, %s120
    %s124 = sphi 0, %s123
    %s140 = sphi 0, %s124
  $region4: #{_lambda_.13} parent=0 // loop_header_branch
    %14 = sbr.rel (%p12) target = $region8
  $region5: #{_lambda_.13} parent=0 // loop_body
    %s16 = ssub.s32 %s11, 1
    %s17 = ssub.s32 %s11, 2
    %s18 = sadd.s32 %s11, 1
    %s19 = ssub.s32 %s11, %s18
    %p20 = scmp.eq.s32.totalorder %s19, 0
    %s22 = sadd.s32 %s21, 1
    %s23 = scalar_select %p20, %s21, %s22
    %p26 = pneg %p20
    %p27 = scmp.eq.s32.totalorder %s11, 1
    %p28 = por %p26, %p27
    %p29 = scmp.ne.s32.totalorder %s21, %s24
    %p30 = scmp.eq.s32.totalorder %s11, 0
    %p31 = por %p29, %p30
    %p32 = scmp.ne.s32.totalorder %s21, %s24
    %p33 = scmp.eq.s32.totalorder %s16, 1
    %p34 = por %p32, %p33
    %p35 = scmp.ne.s32.totalorder %s24, %s25
    %p36 = scmp.eq.s32.totalorder %s16, 0
    %p37 = por %p35, %p36
    %p38 = scmp.ne.s32.totalorder %s24, %s25
    %p39 = scmp.eq.s32.totalorder %s17, 1
    %p40 = por %p38, %p39
    %p42 = scmp.ne.s32.totalorder %s25, %s41
    %p43 = scmp.eq.s32.totalorder %s17, 0
    %p44 = por %p42, %p43
    %s46 = sadd.s32 %s45, 1
    %p49 = scmp.eq.s32.totalorder %s11, 1
    %p50 = scmp.ne.s32.totalorder %s45, %s47
    %p51 = scmp.eq.s32.totalorder %s11, 0
    %p52 = por %p50, %p51
    %p53 = scmp.ne.s32.totalorder %s45, %s47
    %p54 = scmp.eq.s32.totalorder %s16, 1
    %p55 = por %p53, %p54
    %p56 = scmp.ne.s32.totalorder %s47, %s48
    %p57 = scmp.eq.s32.totalorder %s16, 0
    %p58 = por %p56, %p57
    %p59 = scmp.ne.s32.totalorder %s47, %s48
    %p60 = scmp.eq.s32.totalorder %s17, 1
    %p61 = por %p59, %p60
    %p63 = scmp.ne.s32.totalorder %s48, %s62
    %p64 = scmp.eq.s32.totalorder %s17, 0
    %p65 = por %p63, %p64
    %s66 = ssub.s32 %s11, %s18
    %p67 = scmp.eq.s32.totalorder %s66, 0
    %s69 = sadd.s32 %s68, 1
    %s70 = scalar_select %p67, %s68, %s69
    %p73 = pneg %p67
    %p74 = scmp.eq.s32.totalorder %s11, 1
    %p75 = por %p73, %p74
    %p76 = scmp.ne.s32.totalorder %s68, %s71
    %p77 = scmp.eq.s32.totalorder %s11, 0
    %p78 = por %p76, %p77
    %p79 = scmp.ne.s32.totalorder %s68, %s71
    %p80 = scmp.eq.s32.totalorder %s16, 1
    %p81 = por %p79, %p80
    %p82 = scmp.ne.s32.totalorder %s71, %s72
    %p83 = scmp.eq.s32.totalorder %s16, 0
    %p84 = por %p82, %p83
    %p85 = scmp.ne.s32.totalorder %s71, %s72
    %p86 = scmp.eq.s32.totalorder %s17, 1
    %p87 = por %p85, %p86
    %p89 = scmp.ne.s32.totalorder %s72, %s88
    %p90 = scmp.eq.s32.totalorder %s17, 0
    %p91 = por %p89, %p90
    %s92 = ssub.s32 %s11, %s18
    %p93 = scmp.eq.s32.totalorder %s92, 0
    %s95 = sadd.s32 %s94, 1
    %s96 = scalar_select %p93, %s94, %s95
    %p99 = pneg %p93
    %p100 = scmp.eq.s32.totalorder %s11, 1
    %p101 = por %p99, %p100
    %p102 = scmp.ne.s32.totalorder %s94, %s97
    %p103 = scmp.eq.s32.totalorder %s11, 0
    %p104 = por %p102, %p103
    %p105 = scmp.ne.s32.totalorder %s94, %s97
    %p106 = scmp.eq.s32.totalorder %s16, 1
    %p107 = por %p105, %p106
    %p108 = scmp.ne.s32.totalorder %s97, %s98
    %p109 = scmp.eq.s32.totalorder %s16, 0
    %p110 = por %p108, %p109
    %p111 = scmp.ne.s32.totalorder %s97, %s98
    %p112 = scmp.eq.s32.totalorder %s17, 1
    %p113 = por %p111, %p112
    %p115 = scmp.ne.s32.totalorder %s98, %s114
    %p116 = scmp.eq.s32.totalorder %s17, 0
    %p117 = por %p115, %p116
    %s118 = ssub.s32 %s11, %s18
    %p119 = scmp.eq.s32.totalorder %s118, 0
    %s121 = sadd.s32 %s120, 1
    %s122 = scalar_select %p119, %s120, %s121
    %p125 = pneg %p119
    %p126 = scmp.eq.s32.totalorder %s11, 1
    %p127 = por %p125, %p126
    %p128 = scmp.ne.s32.totalorder %s120, %s123
    %p129 = scmp.eq.s32.totalorder %s11, 0
    %p130 = por %p128, %p129
    %p131 = scmp.ne.s32.totalorder %s120, %s123
    %p132 = scmp.eq.s32.totalorder %s16, 1
    %p133 = por %p131, %p132
    %p134 = scmp.ne.s32.totalorder %s123, %s124
    %p135 = scmp.eq.s32.totalorder %s16, 0
    %p136 = por %p134, %p135
    %p137 = scmp.ne.s32.totalorder %s123, %s124
    %p138 = scmp.eq.s32.totalorder %s17, 1
    %p139 = por %p137, %p138
    %p141 = scmp.ne.s32.totalorder %s124, %s140
    %p142 = scmp.eq.s32.totalorder %s17, 0
    %p143 = por %p141, %p142
    %p144 = scmp.le.s32.totalorder 1, %s11
    %p145 = scmp.lt.s32.totalorder %s11, 3
    %p146 = pnand %p144, %p145
    %p147 = pneg %p146
    // Predicated region
    $region9: #{_lambda_.13} parent=5 // pred_check
      _
    $region10: #{_lambda_.13} parent=5 // pred_check_branch
      %149 = sbr.rel (%p146) target = $region12
    $region11: #{_lambda_.13} parent=5 // pred_region
      %s150 = ssub.s32 %s11, 1
      // Predicated region
      $region13: #{_lambda_.13} parent=11 // pred_check
        %p151 = pneg %p58
      $region14: #{_lambda_.13} parent=11 // pred_check_branch
        %153 = sbr.rel (%p151) target = $region16
      $region15: #{_lambda_.13} parent=11 // pred_region
        _
      $region16: #{_lambda_.13} parent=11 // pred_fallthru
        _
    $region12: #{_lambda_.13} parent=5 // pred_fallthru
      _
    %p154 = scmp.lt.s32.totalorder %s11, 2
    // Predicated region
    $region17: #{_lambda_.13} parent=5 // pred_check
      %p155 = pneg %p154
    $region18: #{_lambda_.13} parent=5 // pred_check_branch
      %157 = sbr.rel (%p155) target = $region20
    $region19: #{_lambda_.13} parent=5 // pred_region
      // Predicated region
      $region21: #{_lambda_.13} parent=19 // pred_check
        %p158 = pneg %p31
      $region22: #{_lambda_.13} parent=19 // pred_check_branch
        %160 = sbr.rel (%p158) target = $region24
      $region23: #{_lambda_.13} parent=19 // pred_region
        %s161 = smul.u32 32, %s11
        %p162 = scmp.lt.s32.totalorder %s161, 63
        %s163 = scalar_select %p162, %s161, 63
        %s164 = smul.addr %s163, 4
        %s165 = scalar_lea.vmem %s0, %s164
        %s166 = smul.u32 32, %s11
      $region24: #{_lambda_.13} parent=19 // pred_fallthru
        _
    $region20: #{_lambda_.13} parent=5 // pred_fallthru
      _
    %p167 = scmp.le.s32.totalorder 1, %s11
    %p168 = scmp.lt.s32.totalorder %s11, 3
    %p169 = pnand %p167, %p168
    %p170 = pneg %p169
    // Predicated region
    $region25: #{_lambda_.13} parent=5 // pred_check
      _
    $region26: #{_lambda_.13} parent=5 // pred_check_branch
      %172 = sbr.rel (%p169) target = $region28
    $region27: #{_lambda_.13} parent=5 // pred_region
      %s173 = ssub.s32 %s11, 1
      %s174 = smul.u32 32, %s16
      %p175 = scmp.lt.s32.totalorder %s174, 63
      %s176 = scalar_select %p175, %s174, 63
      %s177 = smul.addr %s176, 4
      %s178 = scalar_lea.vmem %s0, %s177
      %p179 = pneg %p37
      %p180 = pneg %p34
      %p181 = pneg %p58
      %p182 = pneg %p55
      %p183 = pneg %p84
      %p184 = pneg %p81
      %s185 = smul.u32 32, %s16
      %p186 = scmp.lt.s32.totalorder %s185, 63
      %s187 = scalar_select %p186, %s185, 63
      %s188 = smul.addr %s187, 4
      %s189 = scalar_lea.vmem %s2, %s188
      %p190 = pneg %p110
      %p191 = pneg %p107
      %p192 = scmp.lt.s32.totalorder %s16, 1
      %s193 = scalar_select %p192, %s16, 1
      %s194 = scalar_lea.vmem %s3, %s193
      %p195 = pneg %p136
      %p196 = pneg %p133
      %p197 = scmp.lt.s32.totalorder %s16, 1
      %s198 = scalar_select %p197, %s16, 1
      %s199 = scalar_lea.vmem %s4, %s198
      %s200 = smul.u32 32, %s16
      %p201 = scmp.lt.s32.totalorder %s200, 63
      %s202 = scalar_select %p201, %s200, 63
      %s203 = smul.addr %s202, 4
      %s204 = scalar_lea.vmem %s0, %s203
      %s205 = smul.u32 32, %s16
      %s206 = smul.u32 32, %s16
      %p207 = scmp.lt.s32.totalorder %s206, 63
      %s208 = scalar_select %p207, %s206, 63
      %s209 = smul.addr %s208, 4
      %s210 = scalar_lea.vmem %s2, %s209
      %s211 = smul.u32 32, %s16
      %p212 = scmp.lt.s32.totalorder %s16, 1
      %s213 = scalar_select %p212, %s16, 1
      %s214 = scalar_lea.vmem %s3, %s213
      %p215 = scmp.lt.s32.totalorder %s16, 1
      %s216 = scalar_select %p215, %s16, 1
      %s217 = scalar_lea.vmem %s4, %s216
      %v219 = vld [vmem:[%s204] sm:$0xf]
      %v220 = vld [vmem:[%s204 + $0x4] sm:$0xf]
      %v221 = vld [vmem:[%s204 + $0x8] sm:$0xf]
      %v222 = vld [vmem:[%s204 + $0xc] sm:$0xf]
      %v223 = vld [vmem:[%s204 + $0x10] sm:$0xf]
      %v224 = vld [vmem:[%s204 + $0x14] sm:$0xf]
      %v225 = vld [vmem:[%s204 + $0x18] sm:$0xf]
      %v226 = vld [vmem:[%s204 + $0x1c] sm:$0xf]
      %v227 = vld [vmem:[%s204 + $0x20] sm:$0xf]
      %v228 = vld [vmem:[%s204 + $0x24] sm:$0xf]
      %v229 = vld [vmem:[%s204 + $0x28] sm:$0xf]
      %v230 = vld [vmem:[%s204 + $0x2c] sm:$0xf]
      %v231 = vld [vmem:[%s204 + $0x30] sm:$0xf]
      %v232 = vld [vmem:[%s204 + $0x34] sm:$0xf]
      %v233 = vld [vmem:[%s204 + $0x38] sm:$0xf]
      %v234 = vld [vmem:[%s204 + $0x3c] sm:$0xf]
      %v235 = vld [vmem:[%s204 + $0x40] sm:$0xf]
      %v236 = vld [vmem:[%s204 + $0x44] sm:$0xf]
      %v237 = vld [vmem:[%s204 + $0x48] sm:$0xf]
      %v238 = vld [vmem:[%s204 + $0x4c] sm:$0xf]
      %v239 = vld [vmem:[%s204 + $0x50] sm:$0xf]
      %v240 = vld [vmem:[%s204 + $0x54] sm:$0xf]
      %v241 = vld [vmem:[%s204 + $0x58] sm:$0xf]
      %v242 = vld [vmem:[%s204 + $0x5c] sm:$0xf]
      %v243 = vld [vmem:[%s204 + $0x60] sm:$0xf]
      %v244 = vld [vmem:[%s204 + $0x64] sm:$0xf]
      %v245 = vld [vmem:[%s204 + $0x68] sm:$0xf]
      %v246 = vld [vmem:[%s204 + $0x6c] sm:$0xf]
      %v247 = vld [vmem:[%s204 + $0x70] sm:$0xf]
      %v248 = vld [vmem:[%s204 + $0x74] sm:$0xf]
      %v249 = vld [vmem:[%s204 + $0x78] sm:$0xf]
      %v250 = vld [vmem:[%s204 + $0x7c] sm:$0xf]
      %v251 = vld [vmem:[%s1] sm:$0xf]
      %v252 = vld [vmem:[%s1 + $0x4] sm:$0xf]
      %v253 = vld [vmem:[%s1 + $0x8] sm:$0xf]
      %v254 = vld [vmem:[%s1 + $0xc] sm:$0xf]
      %v255 = vld [vmem:[%s1 + $0x10] sm:$0xf]
      %v256 = vld [vmem:[%s1 + $0x14] sm:$0xf]
      %v257 = vld [vmem:[%s1 + $0x18] sm:$0xf]
      %v258 = vld [vmem:[%s1 + $0x1c] sm:$0xf]
      %v259 = vld [vmem:[%s1 + $0x20] sm:$0xf]
      %v292 = vunpack.c.l.b16 %v219
      %v293 = vunpack.c.l.b16 %v220
      %v294 = vunpack.c.l.b16 %v221
      %v295 = vunpack.c.l.b16 %v222
      %v296 = vunpack.c.l.b16 %v223
      %v297 = vunpack.c.l.b16 %v224
      %v298 = vunpack.c.l.b16 %v225
      %v299 = vunpack.c.l.b16 %v226
      %v300 = vunpack.c.l.b16 %v227
      %v301 = vunpack.c.l.b16 %v228
      %v302 = vunpack.c.l.b16 %v229
      %v303 = vunpack.c.l.b16 %v230
      %v304 = vunpack.c.l.b16 %v231
      %v305 = vunpack.c.l.b16 %v232
      %v306 = vunpack.c.l.b16 %v233
      %v307 = vunpack.c.l.b16 %v234
      %v308 = vunpack.c.l.b16 %v235
      %v309 = vunpack.c.l.b16 %v236
      %v310 = vunpack.c.l.b16 %v237
      %v311 = vunpack.c.l.b16 %v238
      %v312 = vunpack.c.l.b16 %v239
      %v313 = vunpack.c.l.b16 %v240
      %v314 = vunpack.c.l.b16 %v241
      %v315 = vunpack.c.l.b16 %v242
      %v316 = vunpack.c.l.b16 %v243
      %v317 = vunpack.c.l.b16 %v244
      %v318 = vunpack.c.l.b16 %v245
      %v319 = vunpack.c.l.b16 %v246
      %v320 = vunpack.c.l.b16 %v247
      %v321 = vunpack.c.l.b16 %v248
      %v322 = vunpack.c.l.b16 %v249
      %v323 = vunpack.c.l.b16 %v250
      %v324 = vpack.c.b16 %v293, %v292
      %v325 = vpack.c.b16 %v295, %v294
      %v326 = vpack.c.b16 %v297, %v296
      %v327 = vpack.c.b16 %v299, %v298
      %v328 = vpack.c.b16 %v301, %v300
      %v329 = vpack.c.b16 %v303, %v302
      %v330 = vpack.c.b16 %v305, %v304
      %v331 = vpack.c.b16 %v307, %v306
      %v332 = vpack.c.b16 %v309, %v308
      %v333 = vpack.c.b16 %v311, %v310
      %v334 = vpack.c.b16 %v313, %v312
      %v335 = vpack.c.b16 %v315, %v314
      %v336 = vpack.c.b16 %v317, %v316
      %v337 = vpack.c.b16 %v319, %v318
      %v338 = vpack.c.b16 %v321, %v320
      %v339 = vpack.c.b16 %v323, %v322
      %v349 = vunpack.c.l.b16 %v251
      %v350 = vunpack.c.l.b16 %v252
      %v351 = vunpack.c.l.b16 %v253
      %v352 = vunpack.c.l.b16 %v254
      %v353 = vunpack.c.l.b16 %v255
      %v354 = vunpack.c.l.b16 %v256
      %v355 = vunpack.c.l.b16 %v257
      %v356 = vunpack.c.l.b16 %v258
      %v357 = vunpack.c.l.b16 %v259
      %v358 = vpack.c.b16 %v350, %v349
      %v359 = vpack.c.b16 %v352, %v351
      %v360 = vpack.c.b16 %v354, %v353
      %v361 = vpack.c.b16 %v356, %v355
      %v362 = vpack.c.b16 %v357, %v357
      %vm367 = vcmask 588800
      %v369 = vsel %vm367, %v324, 0
      %v372 = vsel %vm367, %v325, 0
      %v375 = vsel %vm367, %v326, 0
      %v378 = vsel %vm367, %v327, 0
      %v381 = vsel %vm367, %v328, 0
      %v384 = vsel %vm367, %v329, 0
      %v387 = vsel %vm367, %v330, 0
      %v390 = vsel %vm367, %v331, 0
      %v393 = vsel %vm367, %v332, 0
      %v396 = vsel %vm367, %v333, 0
      %v399 = vsel %vm367, %v334, 0
      %v402 = vsel %vm367, %v335, 0
      %v405 = vsel %vm367, %v336, 0
      %v408 = vsel %vm367, %v337, 0
      %v411 = vsel %vm367, %v338, 0
      %v414 = vsel %vm367, %v339, 0
      %vm416 = vcmask 1043456
      %v418 = vsel %vm416, %v362, 0
      %420 = vmatpush.bf16.msra.mxu0 0
      %421 = vmatpush.bf16.msra.mxu0 0
      %422 = vmatpush.bf16.msra.mxu0 0
      %423 = vmatpush.bf16.msra.mxu0 %v418
      %424 = vmatpush.bf16.msra.mxu0 %v361
      %425 = vmatpush.bf16.msra.mxu0 %v360
      %426 = vmatpush.bf16.msra.mxu0 %v359
      %427 = vmatpush.bf16.msra.mxu0 %v358
      %428 = vmatmul.bf16.gmra.mxu0 %v369
      %v429 = vpop.f32.mrf.mxu0
      %v430 = vadd.f32 0.0, %v429
      %v431 = vpop.f32.mrf.mxu0
      %v432 = vadd.f32 0.0, %v431
      %433 = vmatmul.bf16.gmra.mxu0 %v372
      %v434 = vpop.f32.mrf.mxu0
      %v435 = vadd.f32 0.0, %v434
      %v436 = vpop.f32.mrf.mxu0
      %v437 = vadd.f32 0.0, %v436
      %438 = vmatmul.bf16.gmra.mxu0 %v375
      %v439 = vpop.f32.mrf.mxu0
      %v440 = vadd.f32 0.0, %v439
      %v441 = vpop.f32.mrf.mxu0
      %v442 = vadd.f32 0.0, %v441
      %443 = vmatmul.bf16.gmra.mxu0 %v378
      %v444 = vpop.f32.mrf.mxu0
      %v445 = vadd.f32 0.0, %v444
      %v446 = vpop.f32.mrf.mxu0
      %v447 = vadd.f32 0.0, %v446
      %448 = vmatmul.bf16.gmra.mxu0 %v381
      %v449 = vpop.f32.mrf.mxu0
      %v450 = vadd.f32 0.0, %v449
      %v451 = vpop.f32.mrf.mxu0
      %v452 = vadd.f32 0.0, %v451
      %453 = vmatmul.bf16.gmra.mxu0 %v384
      %v454 = vpop.f32.mrf.mxu0
      %v455 = vadd.f32 0.0, %v454
      %v456 = vpop.f32.mrf.mxu0
      %v457 = vadd.f32 0.0, %v456
      %458 = vmatmul.bf16.gmra.mxu0 %v387
      %v459 = vpop.f32.mrf.mxu0
      %v460 = vadd.f32 0.0, %v459
      %v461 = vpop.f32.mrf.mxu0
      %v462 = vadd.f32 0.0, %v461
      %463 = vmatmul.bf16.gmra.mxu0 %v390
      %v464 = vpop.f32.mrf.mxu0
      %v465 = vadd.f32 0.0, %v464
      %v466 = vpop.f32.mrf.mxu0
      %v467 = vadd.f32 0.0, %v466
      %468 = vmatmul.bf16.gmra.mxu0 %v393
      %v469 = vpop.f32.mrf.mxu0
      %v470 = vadd.f32 0.0, %v469
      %v471 = vpop.f32.mrf.mxu0
      %v472 = vadd.f32 0.0, %v471
      %473 = vmatmul.bf16.gmra.mxu0 %v396
      %v474 = vpop.f32.mrf.mxu0
      %v475 = vadd.f32 0.0, %v474
      %v476 = vpop.f32.mrf.mxu0
      %v477 = vadd.f32 0.0, %v476
      %478 = vmatmul.bf16.gmra.mxu0 %v399
      %v479 = vpop.f32.mrf.mxu0
      %v480 = vadd.f32 0.0, %v479
      %v481 = vpop.f32.mrf.mxu0
      %v482 = vadd.f32 0.0, %v481
      %483 = vmatmul.bf16.gmra.mxu0 %v402
      %v484 = vpop.f32.mrf.mxu0
      %v485 = vadd.f32 0.0, %v484
      %v486 = vpop.f32.mrf.mxu0
      %v487 = vadd.f32 0.0, %v486
      %488 = vmatmul.bf16.gmra.mxu0 %v405
      %v489 = vpop.f32.mrf.mxu0
      %v490 = vadd.f32 0.0, %v489
      %v491 = vpop.f32.mrf.mxu0
      %v492 = vadd.f32 0.0, %v491
      %493 = vmatmul.bf16.gmra.mxu0 %v408
      %v494 = vpop.f32.mrf.mxu0
      %v495 = vadd.f32 0.0, %v494
      %v496 = vpop.f32.mrf.mxu0
      %v497 = vadd.f32 0.0, %v496
      %498 = vmatmul.bf16.gmra.mxu0 %v411
      %v499 = vpop.f32.mrf.mxu0
      %v500 = vadd.f32 0.0, %v499
      %v501 = vpop.f32.mrf.mxu0
      %v502 = vadd.f32 0.0, %v501
      %503 = vmatmul.bf16.gmra.mxu0 %v414
      %v504 = vpop.f32.mrf.mxu0
      %v505 = vadd.f32 0.0, %v504
      %v506 = vpop.f32.mrf.mxu0
      %v507 = vadd.f32 0.0, %v506
      %508 = vdwg.mxu0
      %v509 = vpack.c.bf16 %v430, %v430
      %v510 = vpack.c.bf16 %v432, %v432
      %v511 = vpack.c.bf16 %v435, %v435
      %v512 = vpack.c.bf16 %v437, %v437
      %v513 = vpack.c.bf16 %v440, %v440
      %v514 = vpack.c.bf16 %v442, %v442
      %v515 = vpack.c.bf16 %v445, %v445
      %v516 = vpack.c.bf16 %v447, %v447
      %v517 = vpack.c.bf16 %v450, %v450
      %v518 = vpack.c.bf16 %v452, %v452
      %v519 = vpack.c.bf16 %v455, %v455
      %v520 = vpack.c.bf16 %v457, %v457
      %v521 = vpack.c.bf16 %v460, %v460
      %v522 = vpack.c.bf16 %v462, %v462
      %v523 = vpack.c.bf16 %v465, %v465
      %v524 = vpack.c.bf16 %v467, %v467
      %v525 = vpack.c.bf16 %v470, %v470
      %v526 = vpack.c.bf16 %v472, %v472
      %v527 = vpack.c.bf16 %v475, %v475
      %v528 = vpack.c.bf16 %v477, %v477
      %v529 = vpack.c.bf16 %v480, %v480
      %v530 = vpack.c.bf16 %v482, %v482
      %v531 = vpack.c.bf16 %v485, %v485
      %v532 = vpack.c.bf16 %v487, %v487
      %v533 = vpack.c.bf16 %v490, %v490
      %v534 = vpack.c.bf16 %v492, %v492
      %v535 = vpack.c.bf16 %v495, %v495
      %v536 = vpack.c.bf16 %v497, %v497
      %v537 = vpack.c.bf16 %v500, %v500
      %v538 = vpack.c.bf16 %v502, %v502
      %v539 = vpack.c.bf16 %v505, %v505
      %v540 = vpack.c.bf16 %v507, %v507
      %541 = vst [vmem:[%s210] sm:$0xf] %v509
      %542 = vst [vmem:[%s210 + $0x4] sm:$0xf] %v510
      %543 = vst [vmem:[%s210 + $0x8] sm:$0xf] %v511
      %544 = vst [vmem:[%s210 + $0xc] sm:$0xf] %v512
      %545 = vst [vmem:[%s210 + $0x10] sm:$0xf] %v513
      %546 = vst [vmem:[%s210 + $0x14] sm:$0xf] %v514
      %547 = vst [vmem:[%s210 + $0x18] sm:$0xf] %v515
      %548 = vst [vmem:[%s210 + $0x1c] sm:$0xf] %v516
      %549 = vst [vmem:[%s210 + $0x20] sm:$0xf] %v517
      %550 = vst [vmem:[%s210 + $0x24] sm:$0xf] %v518
      %551 = vst [vmem:[%s210 + $0x28] sm:$0xf] %v519
      %552 = vst [vmem:[%s210 + $0x2c] sm:$0xf] %v520
      %553 = vst [vmem:[%s210 + $0x30] sm:$0xf] %v521
      %554 = vst [vmem:[%s210 + $0x34] sm:$0xf] %v522
      %555 = vst [vmem:[%s210 + $0x38] sm:$0xf] %v523
      %556 = vst [vmem:[%s210 + $0x3c] sm:$0xf] %v524
      %557 = vst [vmem:[%s210 + $0x40] sm:$0xf] %v525
      %558 = vst [vmem:[%s210 + $0x44] sm:$0xf] %v526
      %559 = vst [vmem:[%s210 + $0x48] sm:$0xf] %v527
      %560 = vst [vmem:[%s210 + $0x4c] sm:$0xf] %v528
      %561 = vst [vmem:[%s210 + $0x50] sm:$0xf] %v529
      %562 = vst [vmem:[%s210 + $0x54] sm:$0xf] %v530
      %563 = vst [vmem:[%s210 + $0x58] sm:$0xf] %v531
      %564 = vst [vmem:[%s210 + $0x5c] sm:$0xf] %v532
      %565 = vst [vmem:[%s210 + $0x60] sm:$0xf] %v533
      %566 = vst [vmem:[%s210 + $0x64] sm:$0xf] %v534
      %567 = vst [vmem:[%s210 + $0x68] sm:$0xf] %v535
      %568 = vst [vmem:[%s210 + $0x6c] sm:$0xf] %v536
      %569 = vst [vmem:[%s210 + $0x70] sm:$0xf] %v537
      %570 = vst [vmem:[%s210 + $0x74] sm:$0xf] %v538
      %571 = vst [vmem:[%s210 + $0x78] sm:$0xf] %v539
      %572 = vst [vmem:[%s210 + $0x7c] sm:$0xf] %v540
      %v573 = vadd.f32 %v430, %v432
      %v574 = vadd.f32 %v573, %v435
      %v575 = vadd.f32 %v574, %v437
      %v576 = vadd.f32 %v575, %v440
      %v577 = vadd.f32 %v576, %v442
      %v578 = vadd.f32 %v577, %v445
      %v579 = vadd.f32 %v578, %v447
      %v580 = vadd.f32 %v579, %v450
      %v581 = vadd.f32 %v580, %v452
      %v582 = vadd.f32 %v581, %v455
      %v583 = vadd.f32 %v582, %v457
      %v584 = vadd.f32 %v583, %v460
      %v585 = vadd.f32 %v584, %v462
      %v586 = vadd.f32 %v585, %v465
      %v587 = vadd.f32 %v586, %v467
      %v588 = vadd.f32 %v587, %v470
      %v589 = vadd.f32 %v588, %v472
      %v590 = vadd.f32 %v589, %v475
      %v591 = vadd.f32 %v590, %v477
      %v592 = vadd.f32 %v591, %v480
      %v593 = vadd.f32 %v592, %v482
      %v594 = vadd.f32 %v593, %v485
      %v595 = vadd.f32 %v594, %v487
      %v596 = vadd.f32 %v595, %v490
      %v597 = vadd.f32 %v596, %v492
      %v598 = vadd.f32 %v597, %v495
      %v599 = vadd.f32 %v598, %v497
      %v600 = vadd.f32 %v599, %v500
      %v601 = vadd.f32 %v600, %v502
      %v602 = vadd.f32 %v601, %v505
      %v603 = vadd.f32 %v602, %v507
      %v604 = vrot.slane %v603, 4
      %v605 = vadd.f32 %v603, %v604
      %v606 = vrot.slane %v605, 2
      %v607 = vadd.f32 %v605, %v606
      %v608 = vrot.slane %v607, 1
      %v609 = vadd.f32 %v607, %v608
      %610 = vst [vmem:[%s214] sm:$0x1] %v609
      %v611 = vmul.f32 %v430, %v430
      %v612 = vmul.f32 %v432, %v432
      %v613 = vmul.f32 %v435, %v435
      %v614 = vmul.f32 %v437, %v437
      %v615 = vmul.f32 %v440, %v440
      %v616 = vmul.f32 %v442, %v442
      %v617 = vmul.f32 %v445, %v445
      %v618 = vmul.f32 %v447, %v447
      %v619 = vmul.f32 %v450, %v450
      %v620 = vmul.f32 %v452, %v452
      %v621 = vmul.f32 %v455, %v455
      %v622 = vmul.f32 %v457, %v457
      %v623 = vmul.f32 %v460, %v460
      %v624 = vmul.f32 %v462, %v462
      %v625 = vmul.f32 %v465, %v465
      %v626 = vmul.f32 %v467, %v467
      %v627 = vmul.f32 %v470, %v470
      %v628 = vmul.f32 %v472, %v472
      %v629 = vmul.f32 %v475, %v475
      %v630 = vmul.f32 %v477, %v477
      %v631 = vmul.f32 %v480, %v480
      %v632 = vmul.f32 %v482, %v482
      %v633 = vmul.f32 %v485, %v485
      %v634 = vmul.f32 %v487, %v487
      %v635 = vmul.f32 %v490, %v490
      %v636 = vmul.f32 %v492, %v492
      %v637 = vmul.f32 %v495, %v495
      %v638 = vmul.f32 %v497, %v497
      %v639 = vmul.f32 %v500, %v500
      %v640 = vmul.f32 %v502, %v502
      %v641 = vmul.f32 %v505, %v505
      %v642 = vmul.f32 %v507, %v507
      %v643 = vadd.f32 %v611, %v612
      %v644 = vadd.f32 %v643, %v613
      %v645 = vadd.f32 %v644, %v614
      %v646 = vadd.f32 %v645, %v615
      %v647 = vadd.f32 %v646, %v616
      %v648 = vadd.f32 %v647, %v617
      %v649 = vadd.f32 %v648, %v618
      %v650 = vadd.f32 %v649, %v619
      %v651 = vadd.f32 %v650, %v620
      %v652 = vadd.f32 %v651, %v621
      %v653 = vadd.f32 %v652, %v622
      %v654 = vadd.f32 %v653, %v623
      %v655 = vadd.f32 %v654, %v624
      %v656 = vadd.f32 %v655, %v625
      %v657 = vadd.f32 %v656, %v626
      %v658 = vadd.f32 %v657, %v627
      %v659 = vadd.f32 %v658, %v628
      %v660 = vadd.f32 %v659, %v629
      %v661 = vadd.f32 %v660, %v630
      %v662 = vadd.f32 %v661, %v631
      %v663 = vadd.f32 %v662, %v632
      %v664 = vadd.f32 %v663, %v633
      %v665 = vadd.f32 %v664, %v634
      %v666 = vadd.f32 %v665, %v635
      %v667 = vadd.f32 %v666, %v636
      %v668 = vadd.f32 %v667, %v637
      %v669 = vadd.f32 %v668, %v638
      %v670 = vadd.f32 %v669, %v639
      %v671 = vadd.f32 %v670, %v640
      %v672 = vadd.f32 %v671, %v641
      %v673 = vadd.f32 %v672, %v642
      %v674 = vrot.slane %v673, 4
      %v675 = vadd.f32 %v673, %v674
      %v676 = vrot.slane %v675, 2
      %v677 = vadd.f32 %v675, %v676
      %v678 = vrot.slane %v677, 1
      %v679 = vadd.f32 %v677, %v678
      %680 = vst [vmem:[%s217] sm:$0x1] %v679
      %s681 = smul.u32 32, %s16
      %p682 = scmp.lt.s32.totalorder %s681, 63
      %s683 = scalar_select %p682, %s681, 63
      %s684 = smul.addr %s683, 4
      %s685 = scalar_lea.vmem %s2, %s684
      %p686 = scmp.lt.s32.totalorder %s16, 1
      %s687 = scalar_select %p686, %s16, 1
      %s688 = scalar_lea.vmem %s3, %s687
      %p689 = scmp.lt.s32.totalorder %s16, 1
      %s690 = scalar_select %p689, %s16, 1
      %s691 = scalar_lea.vmem %s4, %s690
      // Predicated region
      $region29: #{_lambda_.13} parent=27 // pred_check
        %p692 = pneg %p81
      $region30: #{_lambda_.13} parent=27 // pred_check_branch
        %694 = sbr.rel (%p692) target = $region32
      $region31: #{_lambda_.13} parent=27 // pred_region
        %s695 = smul.u32 32, %s16
      $region32: #{_lambda_.13} parent=27 // pred_fallthru
        _
      // Predicated region
      $region33: #{_lambda_.13} parent=27 // pred_check
        %p696 = pneg %p107
      $region34: #{_lambda_.13} parent=27 // pred_check_branch
        %698 = sbr.rel (%p696) target = $region36
      $region35: #{_lambda_.13} parent=27 // pred_region
        _
      $region36: #{_lambda_.13} parent=27 // pred_fallthru
        _
      // Predicated region
      $region37: #{_lambda_.13} parent=27 // pred_check
        %p699 = pneg %p133
      $region38: #{_lambda_.13} parent=27 // pred_check_branch
        %701 = sbr.rel (%p699) target = $region40
      $region39: #{_lambda_.13} parent=27 // pred_region
        _
      $region40: #{_lambda_.13} parent=27 // pred_fallthru
        _
    $region28: #{_lambda_.13} parent=5 // pred_fallthru
      _
    %p702 = scmp.le.s32.totalorder 2, %s11
    // Predicated region
    $region41: #{_lambda_.13} parent=5 // pred_check
      %p703 = pneg %p702
    $region42: #{_lambda_.13} parent=5 // pred_check_branch
      %705 = sbr.rel (%p703) target = $region44
    $region43: #{_lambda_.13} parent=5 // pred_region
      %s706 = ssub.s32 %s11, 2
      // Predicated region
      $region45: #{_lambda_.13} parent=43 // pred_check
        %p707 = pneg %p87
      $region46: #{_lambda_.13} parent=43 // pred_check_branch
        %709 = sbr.rel (%p707) target = $region48
      $region47: #{_lambda_.13} parent=43 // pred_region
        %s710 = smul.u32 32, %s17
        %p711 = scmp.lt.s32.totalorder %s710, 63
        %s712 = scalar_select %p711, %s710, 63
        %s713 = smul.addr %s712, 4
        %s714 = scalar_lea.vmem %s2, %s713
      $region48: #{_lambda_.13} parent=43 // pred_fallthru
        _
      // Predicated region
      $region49: #{_lambda_.13} parent=43 // pred_check
        %p715 = pneg %p113
      $region50: #{_lambda_.13} parent=43 // pred_check_branch
        %717 = sbr.rel (%p715) target = $region52
      $region51: #{_lambda_.13} parent=43 // pred_region
        %p718 = scmp.lt.s32.totalorder %s17, 1
        %s719 = scalar_select %p718, %s17, 1
        %s720 = scalar_lea.vmem %s3, %s719
      $region52: #{_lambda_.13} parent=43 // pred_fallthru
        _
      // Predicated region
      $region53: #{_lambda_.13} parent=43 // pred_check
        %p721 = pneg %p139
      $region54: #{_lambda_.13} parent=43 // pred_check_branch
        %723 = sbr.rel (%p721) target = $region56
      $region55: #{_lambda_.13} parent=43 // pred_region
        %p724 = scmp.lt.s32.totalorder %s17, 1
        %s725 = scalar_select %p724, %s17, 1
        %s726 = scalar_lea.vmem %s4, %s725
      $region56: #{_lambda_.13} parent=43 // pred_fallthru
        _
    $region44: #{_lambda_.13} parent=5 // pred_fallthru
      _
  $region6: #{_lambda_.13} parent=0 // loop_footer
    %s15 = sadd.s32 1, %s11
  $region7: #{_lambda_.13} parent=0 // loop_footer_branch
    %10 = sbr.rel target = $region3
  $region8: #{_lambda_.13} parent=0 // loop_exit
    _

// kernel: _lambda_.12
$region0: #{_lambda_.12}
  #allocation0 [shape = 'u32[]', space=smem, size = 0x4, offset = 0x4, fixed_abs, tag = 'smem constant byte address 0x4 - core index']
  #allocation1 [shape = 'u32[72,128]{1,0:T(1,128)}', space=vmem, size = 0x9000, scoped, tag = 'internal scratch']
  %s0 = inlined_call_operand.vmem [shape: bf16[512,4], index: 0, kind: input, shape index: {}]
  %s1 = inlined_call_operand.vmem [shape: bf16[4,128], index: 1, kind: input, shape index: {}]
  %s2 = inlined_call_operand.vmem [shape: bf16[512,128], index: 2, kind: output, shape index: {0}]
  %s3 = inlined_call_operand.vmem [shape: f32[2,1,128], index: 3, kind: output, shape index: {1}]
  %s4 = inlined_call_operand.vmem [shape: f32[2,1,128], index: 4, kind: output, shape index: {2}]
  %5 = xla_tuple %s2, %s3, %s4
  %s6 = sld [smem:[#allocation0]]
  $region57: #{_lambda_.12} parent=0
    _
  %s8 = ssub.s32 1, %s6
  %s9 = scalar_select 0, %s8, %s6
  loop: start=0, step=1, limit=4
  $region2: #{_lambda_.12} parent=0 // loop_pre_header
    _
  $region3: #{_lambda_.12} parent=0 // loop_header
    %s11 = sphi 0, %s15
    %p12 = scmp.ge.s32.totalorder %s11, 4
    %s21 = sphi 0, %s23
    %s24 = sphi 0, %s21
    %s25 = sphi 0, %s24
    %s41 = sphi 0, %s25
    %s45 = sphi 0, %s45
    %s47 = sphi 0, %s45
    %s48 = sphi 0, %s47
    %s62 = sphi 0, %s48
    %s68 = sphi 0, %s70
    %s71 = sphi 0, %s68
    %s72 = sphi 0, %s71
    %s88 = sphi 0, %s72
    %s94 = sphi 0, %s96
    %s97 = sphi 0, %s94
    %s98 = sphi 0, %s97
    %s114 = sphi 0, %s98
    %s120 = sphi 0, %s122
    %s123 = sphi 0, %s120
    %s124 = sphi 0, %s123
    %s140 = sphi 0, %s124
  $region4: #{_lambda_.12} parent=0 // loop_header_branch
    %14 = sbr.rel (%p12) target = $region8
  $region5: #{_lambda_.12} parent=0 // loop_body
    %s16 = ssub.s32 %s11, 1
    %s17 = ssub.s32 %s11, 2
    %s18 = sadd.s32 %s11, 1
    %s19 = ssub.s32 %s11, %s18
    %p20 = scmp.eq.s32.totalorder %s19, 0
    %s22 = sadd.s32 %s21, 1
    %s23 = scalar_select %p20, %s21, %s22
    %p26 = pneg %p20
    %p27 = scmp.eq.s32.totalorder %s11, 1
    %p28 = por %p26, %p27
    %p29 = scmp.ne.s32.totalorder %s21, %s24
    %p30 = scmp.eq.s32.totalorder %s11, 0
    %p31 = por %p29, %p30
    %p32 = scmp.ne.s32.totalorder %s21, %s24
    %p33 = scmp.eq.s32.totalorder %s16, 1
    %p34 = por %p32, %p33
    %p35 = scmp.ne.s32.totalorder %s24, %s25
    %p36 = scmp.eq.s32.totalorder %s16, 0
    %p37 = por %p35, %p36
    %p38 = scmp.ne.s32.totalorder %s24, %s25
    %p39 = scmp.eq.s32.totalorder %s17, 1
    %p40 = por %p38, %p39
    %p42 = scmp.ne.s32.totalorder %s25, %s41
    %p43 = scmp.eq.s32.totalorder %s17, 0
    %p44 = por %p42, %p43
    %s46 = sadd.s32 %s45, 1
    %p49 = scmp.eq.s32.totalorder %s11, 1
    %p50 = scmp.ne.s32.totalorder %s45, %s47
    %p51 = scmp.eq.s32.totalorder %s11, 0
    %p52 = por %p50, %p51
    %p53 = scmp.ne.s32.totalorder %s45, %s47
    %p54 = scmp.eq.s32.totalorder %s16, 1
    %p55 = por %p53, %p54
    %p56 = scmp.ne.s32.totalorder %s47, %s48
    %p57 = scmp.eq.s32.totalorder %s16, 0
    %p58 = por %p56, %p57
    %p59 = scmp.ne.s32.totalorder %s47, %s48
    %p60 = scmp.eq.s32.totalorder %s17, 1
    %p61 = por %p59, %p60
    %p63 = scmp.ne.s32.totalorder %s48, %s62
    %p64 = scmp.eq.s32.totalorder %s17, 0
    %p65 = por %p63, %p64
    %s66 = ssub.s32 %s11, %s18
    %p67 = scmp.eq.s32.totalorder %s66, 0
    %s69 = sadd.s32 %s68, 1
    %s70 = scalar_select %p67, %s68, %s69
    %p73 = pneg %p67
    %p74 = scmp.eq.s32.totalorder %s11, 1
    %p75 = por %p73, %p74
    %p76 = scmp.ne.s32.totalorder %s68, %s71
    %p77 = scmp.eq.s32.totalorder %s11, 0
    %p78 = por %p76, %p77
    %p79 = scmp.ne.s32.totalorder %s68, %s71
    %p80 = scmp.eq.s32.totalorder %s16, 1
    %p81 = por %p79, %p80
    %p82 = scmp.ne.s32.totalorder %s71, %s72
    %p83 = scmp.eq.s32.totalorder %s16, 0
    %p84 = por %p82, %p83
    %p85 = scmp.ne.s32.totalorder %s71, %s72
    %p86 = scmp.eq.s32.totalorder %s17, 1
    %p87 = por %p85, %p86
    %p89 = scmp.ne.s32.totalorder %s72, %s88
    %p90 = scmp.eq.s32.totalorder %s17, 0
    %p91 = por %p89, %p90
    %s92 = ssub.s32 %s11, %s18
    %p93 = scmp.eq.s32.totalorder %s92, 0
    %s95 = sadd.s32 %s94, 1
    %s96 = scalar_select %p93, %s94, %s95
    %p99 = pneg %p93
    %p100 = scmp.eq.s32.totalorder %s11, 1
    %p101 = por %p99, %p100
    %p102 = scmp.ne.s32.totalorder %s94, %s97
    %p103 = scmp.eq.s32.totalorder %s11, 0
    %p104 = por %p102, %p103
    %p105 = scmp.ne.s32.totalorder %s94, %s97
    %p106 = scmp.eq.s32.totalorder %s16, 1
    %p107 = por %p105, %p106
    %p108 = scmp.ne.s32.totalorder %s97, %s98
    %p109 = scmp.eq.s32.totalorder %s16, 0
    %p110 = por %p108, %p109
    %p111 = scmp.ne.s32.totalorder %s97, %s98
    %p112 = scmp.eq.s32.totalorder %s17, 1
    %p113 = por %p111, %p112
    %p115 = scmp.ne.s32.totalorder %s98, %s114
    %p116 = scmp.eq.s32.totalorder %s17, 0
    %p117 = por %p115, %p116
    %s118 = ssub.s32 %s11, %s18
    %p119 = scmp.eq.s32.totalorder %s118, 0
    %s121 = sadd.s32 %s120, 1
    %s122 = scalar_select %p119, %s120, %s121
    %p125 = pneg %p119
    %p126 = scmp.eq.s32.totalorder %s11, 1
    %p127 = por %p125, %p126
    %p128 = scmp.ne.s32.totalorder %s120, %s123
    %p129 = scmp.eq.s32.totalorder %s11, 0
    %p130 = por %p128, %p129
    %p131 = scmp.ne.s32.totalorder %s120, %s123
    %p132 = scmp.eq.s32.totalorder %s16, 1
    %p133 = por %p131, %p132
    %p134 = scmp.ne.s32.totalorder %s123, %s124
    %p135 = scmp.eq.s32.totalorder %s16, 0
    %p136 = por %p134, %p135
    %p137 = scmp.ne.s32.totalorder %s123, %s124
    %p138 = scmp.eq.s32.totalorder %s17, 1
    %p139 = por %p137, %p138
    %p141 = scmp.ne.s32.totalorder %s124, %s140
    %p142 = scmp.eq.s32.totalorder %s17, 0
    %p143 = por %p141, %p142
    %p144 = scmp.le.s32.totalorder 1, %s11
    %p145 = scmp.lt.s32.totalorder %s11, 3
    %p146 = pnand %p144, %p145
    %p147 = pneg %p146
    // Predicated region
    $region9: #{_lambda_.12} parent=5 // pred_check
      _
    $region10: #{_lambda_.12} parent=5 // pred_check_branch
      %149 = sbr.rel (%p146) target = $region12
    $region11: #{_lambda_.12} parent=5 // pred_region
      %s150 = ssub.s32 %s11, 1
      // Predicated region
      $region13: #{_lambda_.12} parent=11 // pred_check
        %p151 = pneg %p58
      $region14: #{_lambda_.12} parent=11 // pred_check_branch
        %153 = sbr.rel (%p151) target = $region16
      $region15: #{_lambda_.12} parent=11 // pred_region
        _
      $region16: #{_lambda_.12} parent=11 // pred_fallthru
        _
    $region12: #{_lambda_.12} parent=5 // pred_fallthru
      _
    %p154 = scmp.lt.s32.totalorder %s11, 2
    // Predicated region
    $region17: #{_lambda_.12} parent=5 // pred_check
      %p155 = pneg %p154
    $region18: #{_lambda_.12} parent=5 // pred_check_branch
      %157 = sbr.rel (%p155) target = $region20
    $region19: #{_lambda_.12} parent=5 // pred_region
      // Predicated region
      $region21: #{_lambda_.12} parent=19 // pred_check
        %p158 = pneg %p31
      $region22: #{_lambda_.12} parent=19 // pred_check_branch
        %160 = sbr.rel (%p158) target = $region24
      $region23: #{_lambda_.12} parent=19 // pred_region
        %s161 = smul.u32 32, %s11
        %p162 = scmp.lt.s32.totalorder %s161, 63
        %s163 = scalar_select %p162, %s161, 63
        %s164 = smul.addr %s163, 4
        %s165 = scalar_lea.vmem %s0, %s164
        %s166 = smul.u32 32, %s11
      $region24: #{_lambda_.12} parent=19 // pred_fallthru
        _
    $region20: #{_lambda_.12} parent=5 // pred_fallthru
      _
    %p167 = scmp.le.s32.totalorder 1, %s11
    %p168 = scmp.lt.s32.totalorder %s11, 3
    %p169 = pnand %p167, %p168
    %p170 = pneg %p169
    // Predicated region
    $region25: #{_lambda_.12} parent=5 // pred_check
      _
    $region26: #{_lambda_.12} parent=5 // pred_check_branch
      %172 = sbr.rel (%p169) target = $region28
    $region27: #{_lambda_.12} parent=5 // pred_region
      %s173 = ssub.s32 %s11, 1
      %s174 = smul.u32 32, %s16
      %p175 = scmp.lt.s32.totalorder %s174, 63
      %s176 = scalar_select %p175, %s174, 63
      %s177 = smul.addr %s176, 4
      %s178 = scalar_lea.vmem %s0, %s177
      %p179 = pneg %p37
      %p180 = pneg %p34
      %p181 = pneg %p58
      %p182 = pneg %p55
      %p183 = pneg %p84
      %p184 = pneg %p81
      %s185 = smul.u32 32, %s16
      %p186 = scmp.lt.s32.totalorder %s185, 63
      %s187 = scalar_select %p186, %s185, 63
      %s188 = smul.addr %s187, 4
      %s189 = scalar_lea.vmem %s2, %s188
      %p190 = pneg %p110
      %p191 = pneg %p107
      %p192 = scmp.lt.s32.totalorder %s16, 1
      %s193 = scalar_select %p192, %s16, 1
      %s194 = scalar_lea.vmem %s3, %s193
      %p195 = pneg %p136
      %p196 = pneg %p133
      %p197 = scmp.lt.s32.totalorder %s16, 1
      %s198 = scalar_select %p197, %s16, 1
      %s199 = scalar_lea.vmem %s4, %s198
      %s200 = smul.u32 32, %s16
      %p201 = scmp.lt.s32.totalorder %s200, 63
      %s202 = scalar_select %p201, %s200, 63
      %s203 = smul.addr %s202, 4
      %s204 = scalar_lea.vmem %s0, %s203
      %s205 = smul.u32 32, %s16
      %s206 = smul.u32 32, %s16
      %p207 = scmp.lt.s32.totalorder %s206, 63
      %s208 = scalar_select %p207, %s206, 63
      %s209 = smul.addr %s208, 4
      %s210 = scalar_lea.vmem %s2, %s209
      %s211 = smul.u32 32, %s16
      %p212 = scmp.lt.s32.totalorder %s16, 1
      %s213 = scalar_select %p212, %s16, 1
      %s214 = scalar_lea.vmem %s3, %s213
      %p215 = scmp.lt.s32.totalorder %s16, 1
      %s216 = scalar_select %p215, %s16, 1
      %s217 = scalar_lea.vmem %s4, %s216
      %v219 = vld [vmem:[%s204] sm:$0xf]
      %v220 = vld [vmem:[%s204 + $0x4] sm:$0xf]
      %v221 = vld [vmem:[%s204 + $0x8] sm:$0xf]
      %v222 = vld [vmem:[%s204 + $0xc] sm:$0xf]
      %v223 = vld [vmem:[%s204 + $0x10] sm:$0xf]
      %v224 = vld [vmem:[%s204 + $0x14] sm:$0xf]
      %v225 = vld [vmem:[%s204 + $0x18] sm:$0xf]
      %v226 = vld [vmem:[%s204 + $0x1c] sm:$0xf]
      %v227 = vld [vmem:[%s204 + $0x20] sm:$0xf]
      %v228 = vld [vmem:[%s204 + $0x24] sm:$0xf]
      %v229 = vld [vmem:[%s204 + $0x28] sm:$0xf]
      %v230 = vld [vmem:[%s204 + $0x2c] sm:$0xf]
      %v231 = vld [vmem:[%s204 + $0x30] sm:$0xf]
      %v232 = vld [vmem:[%s204 + $0x34] sm:$0xf]
      %v233 = vld [vmem:[%s204 + $0x38] sm:$0xf]
      %v234 = vld [vmem:[%s204 + $0x3c] sm:$0xf]
      %v235 = vld [vmem:[%s204 + $0x40] sm:$0xf]
      %v236 = vld [vmem:[%s204 + $0x44] sm:$0xf]
      %v237 = vld [vmem:[%s204 + $0x48] sm:$0xf]
      %v238 = vld [vmem:[%s204 + $0x4c] sm:$0xf]
      %v239 = vld [vmem:[%s204 + $0x50] sm:$0xf]
      %v240 = vld [vmem:[%s204 + $0x54] sm:$0xf]
      %v241 = vld [vmem:[%s204 + $0x58] sm:$0xf]
      %v242 = vld [vmem:[%s204 + $0x5c] sm:$0xf]
      %v243 = vld [vmem:[%s204 + $0x60] sm:$0xf]
      %v244 = vld [vmem:[%s204 + $0x64] sm:$0xf]
      %v245 = vld [vmem:[%s204 + $0x68] sm:$0xf]
      %v246 = vld [vmem:[%s204 + $0x6c] sm:$0xf]
      %v247 = vld [vmem:[%s204 + $0x70] sm:$0xf]
      %v248 = vld [vmem:[%s204 + $0x74] sm:$0xf]
      %v249 = vld [vmem:[%s204 + $0x78] sm:$0xf]
      %v250 = vld [vmem:[%s204 + $0x7c] sm:$0xf]
      %v251 = vld [vmem:[%s1] sm:$0x3]
      %v284 = vunpack.c.l.b16 %v219
      %v285 = vunpack.c.l.b16 %v220
      %v286 = vunpack.c.l.b16 %v221
      %v287 = vunpack.c.l.b16 %v222
      %v288 = vunpack.c.l.b16 %v223
      %v289 = vunpack.c.l.b16 %v224
      %v290 = vunpack.c.l.b16 %v225
      %v291 = vunpack.c.l.b16 %v226
      %v292 = vunpack.c.l.b16 %v227
      %v293 = vunpack.c.l.b16 %v228
      %v294 = vunpack.c.l.b16 %v229
      %v295 = vunpack.c.l.b16 %v230
      %v296 = vunpack.c.l.b16 %v231
      %v297 = vunpack.c.l.b16 %v232
      %v298 = vunpack.c.l.b16 %v233
      %v299 = vunpack.c.l.b16 %v234
      %v300 = vunpack.c.l.b16 %v235
      %v301 = vunpack.c.l.b16 %v236
      %v302 = vunpack.c.l.b16 %v237
      %v303 = vunpack.c.l.b16 %v238
      %v304 = vunpack.c.l.b16 %v239
      %v305 = vunpack.c.l.b16 %v240
      %v306 = vunpack.c.l.b16 %v241
      %v307 = vunpack.c.l.b16 %v242
      %v308 = vunpack.c.l.b16 %v243
      %v309 = vunpack.c.l.b16 %v244
      %v310 = vunpack.c.l.b16 %v245
      %v311 = vunpack.c.l.b16 %v246
      %v312 = vunpack.c.l.b16 %v247
      %v313 = vunpack.c.l.b16 %v248
      %v314 = vunpack.c.l.b16 %v249
      %v315 = vunpack.c.l.b16 %v250
      %v316 = vpack.c.b16 %v285, %v284
      %v317 = vpack.c.b16 %v287, %v286
      %v318 = vpack.c.b16 %v289, %v288
      %v319 = vpack.c.b16 %v291, %v290
      %v320 = vpack.c.b16 %v293, %v292
      %v321 = vpack.c.b16 %v295, %v294
      %v322 = vpack.c.b16 %v297, %v296
      %v323 = vpack.c.b16 %v299, %v298
      %v324 = vpack.c.b16 %v301, %v300
      %v325 = vpack.c.b16 %v303, %v302
      %v326 = vpack.c.b16 %v305, %v304
      %v327 = vpack.c.b16 %v307, %v306
      %v328 = vpack.c.b16 %v309, %v308
      %v329 = vpack.c.b16 %v311, %v310
      %v330 = vpack.c.b16 %v313, %v312
      %v331 = vpack.c.b16 %v315, %v314
      %vm332 = vcmask 31744
      %v334 = vsel %vm332, %v316, 0
      %v337 = vsel %vm332, %v317, 0
      %v340 = vsel %vm332, %v318, 0
      %v343 = vsel %vm332, %v319, 0
      %v346 = vsel %vm332, %v320, 0
      %v349 = vsel %vm332, %v321, 0
      %v352 = vsel %vm332, %v322, 0
      %v355 = vsel %vm332, %v323, 0
      %v358 = vsel %vm332, %v324, 0
      %v361 = vsel %vm332, %v325, 0
      %v364 = vsel %vm332, %v326, 0
      %v367 = vsel %vm332, %v327, 0
      %v370 = vsel %vm332, %v328, 0
      %v373 = vsel %vm332, %v329, 0
      %v376 = vsel %vm332, %v330, 0
      %v379 = vsel %vm332, %v331, 0
      %vm381 = vcmask 1041408
      %v383 = vsel %vm381, %v251, 0
      %385 = vmatpush.bf16.msra.mxu0 0
      %386 = vmatpush.bf16.msra.mxu0 0
      %387 = vmatpush.bf16.msra.mxu0 0
      %388 = vmatpush.bf16.msra.mxu0 0
      %389 = vmatpush.bf16.msra.mxu0 0
      %390 = vmatpush.bf16.msra.mxu0 0
      %391 = vmatpush.bf16.msra.mxu0 0
      %392 = vmatpush.bf16.msra.mxu0 %v383
      %393 = vmatmul.bf16.gmra.mxu0 %v334
      %v394 = vpop.f32.mrf.mxu0
      %v395 = vadd.f32 0.0, %v394
      %v396 = vpop.f32.mrf.mxu0
      %v397 = vadd.f32 0.0, %v396
      %398 = vmatmul.bf16.gmra.mxu0 %v337
      %v399 = vpop.f32.mrf.mxu0
      %v400 = vadd.f32 0.0, %v399
      %v401 = vpop.f32.mrf.mxu0
      %v402 = vadd.f32 0.0, %v401
      %403 = vmatmul.bf16.gmra.mxu0 %v340
      %v404 = vpop.f32.mrf.mxu0
      %v405 = vadd.f32 0.0, %v404
      %v406 = vpop.f32.mrf.mxu0
      %v407 = vadd.f32 0.0, %v406
      %408 = vmatmul.bf16.gmra.mxu0 %v343
      %v409 = vpop.f32.mrf.mxu0
      %v410 = vadd.f32 0.0, %v409
      %v411 = vpop.f32.mrf.mxu0
      %v412 = vadd.f32 0.0, %v411
      %413 = vmatmul.bf16.gmra.mxu0 %v346
      %v414 = vpop.f32.mrf.mxu0
      %v415 = vadd.f32 0.0, %v414
      %v416 = vpop.f32.mrf.mxu0
      %v417 = vadd.f32 0.0, %v416
      %418 = vmatmul.bf16.gmra.mxu0 %v349
      %v419 = vpop.f32.mrf.mxu0
      %v420 = vadd.f32 0.0, %v419
      %v421 = vpop.f32.mrf.mxu0
      %v422 = vadd.f32 0.0, %v421
      %423 = vmatmul.bf16.gmra.mxu0 %v352
      %v424 = vpop.f32.mrf.mxu0
      %v425 = vadd.f32 0.0, %v424
      %v426 = vpop.f32.mrf.mxu0
      %v427 = vadd.f32 0.0, %v426
      %428 = vmatmul.bf16.gmra.mxu0 %v355
      %v429 = vpop.f32.mrf.mxu0
      %v430 = vadd.f32 0.0, %v429
      %v431 = vpop.f32.mrf.mxu0
      %v432 = vadd.f32 0.0, %v431
      %433 = vmatmul.bf16.gmra.mxu0 %v358
      %v434 = vpop.f32.mrf.mxu0
      %v435 = vadd.f32 0.0, %v434
      %v436 = vpop.f32.mrf.mxu0
      %v437 = vadd.f32 0.0, %v436
      %438 = vmatmul.bf16.gmra.mxu0 %v361
      %v439 = vpop.f32.mrf.mxu0
      %v440 = vadd.f32 0.0, %v439
      %v441 = vpop.f32.mrf.mxu0
      %v442 = vadd.f32 0.0, %v441
      %443 = vmatmul.bf16.gmra.mxu0 %v364
      %v444 = vpop.f32.mrf.mxu0
      %v445 = vadd.f32 0.0, %v444
      %v446 = vpop.f32.mrf.mxu0
      %v447 = vadd.f32 0.0, %v446
      %448 = vmatmul.bf16.gmra.mxu0 %v367
      %v449 = vpop.f32.mrf.mxu0
      %v450 = vadd.f32 0.0, %v449
      %v451 = vpop.f32.mrf.mxu0
      %v452 = vadd.f32 0.0, %v451
      %453 = vmatmul.bf16.gmra.mxu0 %v370
      %v454 = vpop.f32.mrf.mxu0
      %v455 = vadd.f32 0.0, %v454
      %v456 = vpop.f32.mrf.mxu0
      %v457 = vadd.f32 0.0, %v456
      %458 = vmatmul.bf16.gmra.mxu0 %v373
      %v459 = vpop.f32.mrf.mxu0
      %v460 = vadd.f32 0.0, %v459
      %v461 = vpop.f32.mrf.mxu0
      %v462 = vadd.f32 0.0, %v461
      %463 = vmatmul.bf16.gmra.mxu0 %v376
      %v464 = vpop.f32.mrf.mxu0
      %v465 = vadd.f32 0.0, %v464
      %v466 = vpop.f32.mrf.mxu0
      %v467 = vadd.f32 0.0, %v466
      %468 = vmatmul.bf16.gmra.mxu0 %v379
      %v469 = vpop.f32.mrf.mxu0
      %v470 = vadd.f32 0.0, %v469
      %v471 = vpop.f32.mrf.mxu0
      %v472 = vadd.f32 0.0, %v471
      %473 = vdwg.mxu0
      %v474 = vpack.c.bf16 %v395, %v395
      %v475 = vpack.c.bf16 %v397, %v397
      %v476 = vpack.c.bf16 %v400, %v400
      %v477 = vpack.c.bf16 %v402, %v402
      %v478 = vpack.c.bf16 %v405, %v405
      %v479 = vpack.c.bf16 %v407, %v407
      %v480 = vpack.c.bf16 %v410, %v410
      %v481 = vpack.c.bf16 %v412, %v412
      %v482 = vpack.c.bf16 %v415, %v415
      %v483 = vpack.c.bf16 %v417, %v417
      %v484 = vpack.c.bf16 %v420, %v420
      %v485 = vpack.c.bf16 %v422, %v422
      %v486 = vpack.c.bf16 %v425, %v425
      %v487 = vpack.c.bf16 %v427, %v427
      %v488 = vpack.c.bf16 %v430, %v430
      %v489 = vpack.c.bf16 %v432, %v432
      %v490 = vpack.c.bf16 %v435, %v435
      %v491 = vpack.c.bf16 %v437, %v437
      %v492 = vpack.c.bf16 %v440, %v440
      %v493 = vpack.c.bf16 %v442, %v442
      %v494 = vpack.c.bf16 %v445, %v445
      %v495 = vpack.c.bf16 %v447, %v447
      %v496 = vpack.c.bf16 %v450, %v450
      %v497 = vpack.c.bf16 %v452, %v452
      %v498 = vpack.c.bf16 %v455, %v455
      %v499 = vpack.c.bf16 %v457, %v457
      %v500 = vpack.c.bf16 %v460, %v460
      %v501 = vpack.c.bf16 %v462, %v462
      %v502 = vpack.c.bf16 %v465, %v465
      %v503 = vpack.c.bf16 %v467, %v467
      %v504 = vpack.c.bf16 %v470, %v470
      %v505 = vpack.c.bf16 %v472, %v472
      %506 = vst [vmem:[%s210] sm:$0xf] %v474
      %507 = vst [vmem:[%s210 + $0x4] sm:$0xf] %v475
      %508 = vst [vmem:[%s210 + $0x8] sm:$0xf] %v476
      %509 = vst [vmem:[%s210 + $0xc] sm:$0xf] %v477
      %510 = vst [vmem:[%s210 + $0x10] sm:$0xf] %v478
      %511 = vst [vmem:[%s210 + $0x14] sm:$0xf] %v479
      %512 = vst [vmem:[%s210 + $0x18] sm:$0xf] %v480
      %513 = vst [vmem:[%s210 + $0x1c] sm:$0xf] %v481
      %514 = vst [vmem:[%s210 + $0x20] sm:$0xf] %v482
      %515 = vst [vmem:[%s210 + $0x24] sm:$0xf] %v483
      %516 = vst [vmem:[%s210 + $0x28] sm:$0xf] %v484
      %517 = vst [vmem:[%s210 + $0x2c] sm:$0xf] %v485
      %518 = vst [vmem:[%s210 + $0x30] sm:$0xf] %v486
      %519 = vst [vmem:[%s210 + $0x34] sm:$0xf] %v487
      %520 = vst [vmem:[%s210 + $0x38] sm:$0xf] %v488
      %521 = vst [vmem:[%s210 + $0x3c] sm:$0xf] %v489
      %522 = vst [vmem:[%s210 + $0x40] sm:$0xf] %v490
      %523 = vst [vmem:[%s210 + $0x44] sm:$0xf] %v491
      %524 = vst [vmem:[%s210 + $0x48] sm:$0xf] %v492
      %525 = vst [vmem:[%s210 + $0x4c] sm:$0xf] %v493
      %526 = vst [vmem:[%s210 + $0x50] sm:$0xf] %v494
      %527 = vst [vmem:[%s210 + $0x54] sm:$0xf] %v495
      %528 = vst [vmem:[%s210 + $0x58] sm:$0xf] %v496
      %529 = vst [vmem:[%s210 + $0x5c] sm:$0xf] %v497
      %530 = vst [vmem:[%s210 + $0x60] sm:$0xf] %v498
      %531 = vst [vmem:[%s210 + $0x64] sm:$0xf] %v499
      %532 = vst [vmem:[%s210 + $0x68] sm:$0xf] %v500
      %533 = vst [vmem:[%s210 + $0x6c] sm:$0xf] %v501
      %534 = vst [vmem:[%s210 + $0x70] sm:$0xf] %v502
      %535 = vst [vmem:[%s210 + $0x74] sm:$0xf] %v503
      %536 = vst [vmem:[%s210 + $0x78] sm:$0xf] %v504
      %537 = vst [vmem:[%s210 + $0x7c] sm:$0xf] %v505
      %v538 = vadd.f32 %v395, %v397
      %v539 = vadd.f32 %v538, %v400
      %v540 = vadd.f32 %v539, %v402
      %v541 = vadd.f32 %v540, %v405
      %v542 = vadd.f32 %v541, %v407
      %v543 = vadd.f32 %v542, %v410
      %v544 = vadd.f32 %v543, %v412
      %v545 = vadd.f32 %v544, %v415
      %v546 = vadd.f32 %v545, %v417
      %v547 = vadd.f32 %v546, %v420
      %v548 = vadd.f32 %v547, %v422
      %v549 = vadd.f32 %v548, %v425
      %v550 = vadd.f32 %v549, %v427
      %v551 = vadd.f32 %v550, %v430
      %v552 = vadd.f32 %v551, %v432
      %v553 = vadd.f32 %v552, %v435
      %v554 = vadd.f32 %v553, %v437
      %v555 = vadd.f32 %v554, %v440
      %v556 = vadd.f32 %v555, %v442
      %v557 = vadd.f32 %v556, %v445
      %v558 = vadd.f32 %v557, %v447
      %v559 = vadd.f32 %v558, %v450
      %v560 = vadd.f32 %v559, %v452
      %v561 = vadd.f32 %v560, %v455
      %v562 = vadd.f32 %v561, %v457
      %v563 = vadd.f32 %v562, %v460
      %v564 = vadd.f32 %v563, %v462
      %v565 = vadd.f32 %v564, %v465
      %v566 = vadd.f32 %v565, %v467
      %v567 = vadd.f32 %v566, %v470
      %v568 = vadd.f32 %v567, %v472
      %v569 = vrot.slane %v568, 4
      %v570 = vadd.f32 %v568, %v569
      %v571 = vrot.slane %v570, 2
      %v572 = vadd.f32 %v570, %v571
      %v573 = vrot.slane %v572, 1
      %v574 = vadd.f32 %v572, %v573
      %575 = vst [vmem:[%s214] sm:$0x1] %v574
      %v576 = vmul.f32 %v395, %v395
      %v577 = vmul.f32 %v397, %v397
      %v578 = vmul.f32 %v400, %v400
      %v579 = vmul.f32 %v402, %v402
      %v580 = vmul.f32 %v405, %v405
      %v581 = vmul.f32 %v407, %v407
      %v582 = vmul.f32 %v410, %v410
      %v583 = vmul.f32 %v412, %v412
      %v584 = vmul.f32 %v415, %v415
      %v585 = vmul.f32 %v417, %v417
      %v586 = vmul.f32 %v420, %v420
      %v587 = vmul.f32 %v422, %v422
      %v588 = vmul.f32 %v425, %v425
      %v589 = vmul.f32 %v427, %v427
      %v590 = vmul.f32 %v430, %v430
      %v591 = vmul.f32 %v432, %v432
      %v592 = vmul.f32 %v435, %v435
      %v593 = vmul.f32 %v437, %v437
      %v594 = vmul.f32 %v440, %v440
      %v595 = vmul.f32 %v442, %v442
      %v596 = vmul.f32 %v445, %v445
      %v597 = vmul.f32 %v447, %v447
      %v598 = vmul.f32 %v450, %v450
      %v599 = vmul.f32 %v452, %v452
      %v600 = vmul.f32 %v455, %v455
      %v601 = vmul.f32 %v457, %v457
      %v602 = vmul.f32 %v460, %v460
      %v603 = vmul.f32 %v462, %v462
      %v604 = vmul.f32 %v465, %v465
      %v605 = vmul.f32 %v467, %v467
      %v606 = vmul.f32 %v470, %v470
      %v607 = vmul.f32 %v472, %v472
      %v608 = vadd.f32 %v576, %v577
      %v609 = vadd.f32 %v608, %v578
      %v610 = vadd.f32 %v609, %v579
      %v611 = vadd.f32 %v610, %v580
      %v612 = vadd.f32 %v611, %v581
      %v613 = vadd.f32 %v612, %v582
      %v614 = vadd.f32 %v613, %v583
      %v615 = vadd.f32 %v614, %v584
      %v616 = vadd.f32 %v615, %v585
      %v617 = vadd.f32 %v616, %v586
      %v618 = vadd.f32 %v617, %v587
      %v619 = vadd.f32 %v618, %v588
      %v620 = vadd.f32 %v619, %v589
      %v621 = vadd.f32 %v620, %v590
      %v622 = vadd.f32 %v621, %v591
      %v623 = vadd.f32 %v622, %v592
      %v624 = vadd.f32 %v623, %v593
      %v625 = vadd.f32 %v624, %v594
      %v626 = vadd.f32 %v625, %v595
      %v627 = vadd.f32 %v626, %v596
      %v628 = vadd.f32 %v627, %v597
      %v629 = vadd.f32 %v628, %v598
      %v630 = vadd.f32 %v629, %v599
      %v631 = vadd.f32 %v630, %v600
      %v632 = vadd.f32 %v631, %v601
      %v633 = vadd.f32 %v632, %v602
      %v634 = vadd.f32 %v633, %v603
      %v635 = vadd.f32 %v634, %v604
      %v636 = vadd.f32 %v635, %v605
      %v637 = vadd.f32 %v636, %v606
      %v638 = vadd.f32 %v637, %v607
      %v639 = vrot.slane %v638, 4
      %v640 = vadd.f32 %v638, %v639
      %v641 = vrot.slane %v640, 2
      %v642 = vadd.f32 %v640, %v641
      %v643 = vrot.slane %v642, 1
      %v644 = vadd.f32 %v642, %v643
      %645 = vst [vmem:[%s217] sm:$0x1] %v644
      %s646 = smul.u32 32, %s16
      %p647 = scmp.lt.s32.totalorder %s646, 63
      %s648 = scalar_select %p647, %s646, 63
      %s649 = smul.addr %s648, 4
      %s650 = scalar_lea.vmem %s2, %s649
      %p651 = scmp.lt.s32.totalorder %s16, 1
      %s652 = scalar_select %p651, %s16, 1
      %s653 = scalar_lea.vmem %s3, %s652
      %p654 = scmp.lt.s32.totalorder %s16, 1
      %s655 = scalar_select %p654, %s16, 1
      %s656 = scalar_lea.vmem %s4, %s655
      // Predicated region
      $region29: #{_lambda_.12} parent=27 // pred_check
        %p657 = pneg %p81
      $region30: #{_lambda_.12} parent=27 // pred_check_branch
        %659 = sbr.rel (%p657) target = $region32
      $region31: #{_lambda_.12} parent=27 // pred_region
        %s660 = smul.u32 32, %s16
      $region32: #{_lambda_.12} parent=27 // pred_fallthru
        _
      // Predicated region
      $region33: #{_lambda_.12} parent=27 // pred_check
        %p661 = pneg %p107
      $region34: #{_lambda_.12} parent=27 // pred_check_branch
        %663 = sbr.rel (%p661) target = $region36
      $region35: #{_lambda_.12} parent=27 // pred_region
        _
      $region36: #{_lambda_.12} parent=27 // pred_fallthru
        _
      // Predicated region
      $region37: #{_lambda_.12} parent=27 // pred_check
        %p664 = pneg %p133
      $region38: #{_lambda_.12} parent=27 // pred_check_branch
        %666 = sbr.rel (%p664) target = $region40
      $region39: #{_lambda_.12} parent=27 // pred_region
        _
      $region40: #{_lambda_.12} parent=27 // pred_fallthru
        _
    $region28: #{_lambda_.12} parent=5 // pred_fallthru
      _
    %p667 = scmp.le.s32.totalorder 2, %s11
    // Predicated region
    $region41: #{_lambda_.12} parent=5 // pred_check
      %p668 = pneg %p667
    $region42: #{_lambda_.12} parent=5 // pred_check_branch
      %670 = sbr.rel (%p668) target = $region44
    $region43: #{_lambda_.12} parent=5 // pred_region
      %s671 = ssub.s32 %s11, 2
      // Predicated region
      $region45: #{_lambda_.12} parent=43 // pred_check
        %p672 = pneg %p87
      $region46: #{_lambda_.12} parent=43 // pred_check_branch
        %674 = sbr.rel (%p672) target = $region48
      $region47: #{_lambda_.12} parent=43 // pred_region
        %s675 = smul.u32 32, %s17
        %p676 = scmp.lt.s32.totalorder %s675, 63
        %s677 = scalar_select %p676, %s675, 63
        %s678 = smul.addr %s677, 4
        %s679 = scalar_lea.vmem %s2, %s678
      $region48: #{_lambda_.12} parent=43 // pred_fallthru
        _
      // Predicated region
      $region49: #{_lambda_.12} parent=43 // pred_check
        %p680 = pneg %p113
      $region50: #{_lambda_.12} parent=43 // pred_check_branch
        %682 = sbr.rel (%p680) target = $region52
      $region51: #{_lambda_.12} parent=43 // pred_region
        %p683 = scmp.lt.s32.totalorder %s17, 1
        %s684 = scalar_select %p683, %s17, 1
        %s685 = scalar_lea.vmem %s3, %s684
      $region52: #{_lambda_.12} parent=43 // pred_fallthru
        _
      // Predicated region
      $region53: #{_lambda_.12} parent=43 // pred_check
        %p686 = pneg %p139
      $region54: #{_lambda_.12} parent=43 // pred_check_branch
        %688 = sbr.rel (%p686) target = $region56
      $region55: #{_lambda_.12} parent=43 // pred_region
        %p689 = scmp.lt.s32.totalorder %s17, 1
        %s690 = scalar_select %p689, %s17, 1
        %s691 = scalar_lea.vmem %s4, %s690
      $region56: #{_lambda_.12} parent=43 // pred_fallthru
        _
    $region44: #{_lambda_.12} parent=5 // pred_fallthru
      _
  $region6: #{_lambda_.12} parent=0 // loop_footer
    %s15 = sadd.s32 1, %s11
  $region7: #{_lambda_.12} parent=0 // loop_footer_branch
    %10 = sbr.rel target = $region3
  $region8: #{_lambda_.12} parent=0 // loop_exit
    _

// kernel: _lambda_.17
$region0: #{_lambda_.17}
  #allocation0 [shape = 'u32[]', space=smem, size = 0x4, offset = 0x4, fixed_abs, tag = 'smem constant byte address 0x4 - core index']
  #allocation1 [shape = 'u32[72,128]{1,0:T(1,128)}', space=vmem, size = 0x9000, scoped, tag = 'internal scratch']
  %s0 = inlined_call_operand.vmem [shape: bf16[128,8], index: 0, kind: input, shape index: {}]
  %s1 = inlined_call_operand.vmem [shape: bf16[8,128], index: 1, kind: input, shape index: {}]
  %s2 = inlined_call_operand.vmem [shape: bf16[128,128], index: 2, kind: output, shape index: {0}]
  %s3 = inlined_call_operand.vmem [shape: f32[2,1,128], index: 3, kind: output, shape index: {1}]
  %s4 = inlined_call_operand.vmem [shape: f32[2,1,128], index: 4, kind: output, shape index: {2}]
  %5 = xla_tuple %s2, %s3, %s4
  %s6 = sld [smem:[#allocation0]]
  $region57: #{_lambda_.17} parent=0
    _
  %s8 = ssub.s32 1, %s6
  %s9 = scalar_select 0, %s8, %s6
  loop: start=0, step=1, limit=4
  $region2: #{_lambda_.17} parent=0 // loop_pre_header
    _
  $region3: #{_lambda_.17} parent=0 // loop_header
    %s11 = sphi 0, %s15
    %p12 = scmp.ge.s32.totalorder %s11, 4
    %s21 = sphi 0, %s23
    %s24 = sphi 0, %s21
    %s25 = sphi 0, %s24
    %s41 = sphi 0, %s25
    %s45 = sphi 0, %s45
    %s47 = sphi 0, %s45
    %s48 = sphi 0, %s47
    %s62 = sphi 0, %s48
    %s68 = sphi 0, %s70
    %s71 = sphi 0, %s68
    %s72 = sphi 0, %s71
    %s88 = sphi 0, %s72
    %s94 = sphi 0, %s96
    %s97 = sphi 0, %s94
    %s98 = sphi 0, %s97
    %s114 = sphi 0, %s98
    %s120 = sphi 0, %s122
    %s123 = sphi 0, %s120
    %s124 = sphi 0, %s123
    %s140 = sphi 0, %s124
  $region4: #{_lambda_.17} parent=0 // loop_header_branch
    %14 = sbr.rel (%p12) target = $region8
  $region5: #{_lambda_.17} parent=0 // loop_body
    %s16 = ssub.s32 %s11, 1
    %s17 = ssub.s32 %s11, 2
    %s18 = sadd.s32 %s11, 1
    %s19 = ssub.s32 %s11, %s18
    %p20 = scmp.eq.s32.totalorder %s19, 0
    %s22 = sadd.s32 %s21, 1
    %s23 = scalar_select %p20, %s21, %s22
    %p26 = pneg %p20
    %p27 = scmp.eq.s32.totalorder %s11, 1
    %p28 = por %p26, %p27
    %p29 = scmp.ne.s32.totalorder %s21, %s24
    %p30 = scmp.eq.s32.totalorder %s11, 0
    %p31 = por %p29, %p30
    %p32 = scmp.ne.s32.totalorder %s21, %s24
    %p33 = scmp.eq.s32.totalorder %s16, 1
    %p34 = por %p32, %p33
    %p35 = scmp.ne.s32.totalorder %s24, %s25
    %p36 = scmp.eq.s32.totalorder %s16, 0
    %p37 = por %p35, %p36
    %p38 = scmp.ne.s32.totalorder %s24, %s25
    %p39 = scmp.eq.s32.totalorder %s17, 1
    %p40 = por %p38, %p39
    %p42 = scmp.ne.s32.totalorder %s25, %s41
    %p43 = scmp.eq.s32.totalorder %s17, 0
    %p44 = por %p42, %p43
    %s46 = sadd.s32 %s45, 1
    %p49 = scmp.eq.s32.totalorder %s11, 1
    %p50 = scmp.ne.s32.totalorder %s45, %s47
    %p51 = scmp.eq.s32.totalorder %s11, 0
    %p52 = por %p50, %p51
    %p53 = scmp.ne.s32.totalorder %s45, %s47
    %p54 = scmp.eq.s32.totalorder %s16, 1
    %p55 = por %p53, %p54
    %p56 = scmp.ne.s32.totalorder %s47, %s48
    %p57 = scmp.eq.s32.totalorder %s16, 0
    %p58 = por %p56, %p57
    %p59 = scmp.ne.s32.totalorder %s47, %s48
    %p60 = scmp.eq.s32.totalorder %s17, 1
    %p61 = por %p59, %p60
    %p63 = scmp.ne.s32.totalorder %s48, %s62
    %p64 = scmp.eq.s32.totalorder %s17, 0
    %p65 = por %p63, %p64
    %s66 = ssub.s32 %s11, %s18
    %p67 = scmp.eq.s32.totalorder %s66, 0
    %s69 = sadd.s32 %s68, 1
    %s70 = scalar_select %p67, %s68, %s69
    %p73 = pneg %p67
    %p74 = scmp.eq.s32.totalorder %s11, 1
    %p75 = por %p73, %p74
    %p76 = scmp.ne.s32.totalorder %s68, %s71
    %p77 = scmp.eq.s32.totalorder %s11, 0
    %p78 = por %p76, %p77
    %p79 = scmp.ne.s32.totalorder %s68, %s71
    %p80 = scmp.eq.s32.totalorder %s16, 1
    %p81 = por %p79, %p80
    %p82 = scmp.ne.s32.totalorder %s71, %s72
    %p83 = scmp.eq.s32.totalorder %s16, 0
    %p84 = por %p82, %p83
    %p85 = scmp.ne.s32.totalorder %s71, %s72
    %p86 = scmp.eq.s32.totalorder %s17, 1
    %p87 = por %p85, %p86
    %p89 = scmp.ne.s32.totalorder %s72, %s88
    %p90 = scmp.eq.s32.totalorder %s17, 0
    %p91 = por %p89, %p90
    %s92 = ssub.s32 %s11, %s18
    %p93 = scmp.eq.s32.totalorder %s92, 0
    %s95 = sadd.s32 %s94, 1
    %s96 = scalar_select %p93, %s94, %s95
    %p99 = pneg %p93
    %p100 = scmp.eq.s32.totalorder %s11, 1
    %p101 = por %p99, %p100
    %p102 = scmp.ne.s32.totalorder %s94, %s97
    %p103 = scmp.eq.s32.totalorder %s11, 0
    %p104 = por %p102, %p103
    %p105 = scmp.ne.s32.totalorder %s94, %s97
    %p106 = scmp.eq.s32.totalorder %s16, 1
    %p107 = por %p105, %p106
    %p108 = scmp.ne.s32.totalorder %s97, %s98
    %p109 = scmp.eq.s32.totalorder %s16, 0
    %p110 = por %p108, %p109
    %p111 = scmp.ne.s32.totalorder %s97, %s98
    %p112 = scmp.eq.s32.totalorder %s17, 1
    %p113 = por %p111, %p112
    %p115 = scmp.ne.s32.totalorder %s98, %s114
    %p116 = scmp.eq.s32.totalorder %s17, 0
    %p117 = por %p115, %p116
    %s118 = ssub.s32 %s11, %s18
    %p119 = scmp.eq.s32.totalorder %s118, 0
    %s121 = sadd.s32 %s120, 1
    %s122 = scalar_select %p119, %s120, %s121
    %p125 = pneg %p119
    %p126 = scmp.eq.s32.totalorder %s11, 1
    %p127 = por %p125, %p126
    %p128 = scmp.ne.s32.totalorder %s120, %s123
    %p129 = scmp.eq.s32.totalorder %s11, 0
    %p130 = por %p128, %p129
    %p131 = scmp.ne.s32.totalorder %s120, %s123
    %p132 = scmp.eq.s32.totalorder %s16, 1
    %p133 = por %p131, %p132
    %p134 = scmp.ne.s32.totalorder %s123, %s124
    %p135 = scmp.eq.s32.totalorder %s16, 0
    %p136 = por %p134, %p135
    %p137 = scmp.ne.s32.totalorder %s123, %s124
    %p138 = scmp.eq.s32.totalorder %s17, 1
    %p139 = por %p137, %p138
    %p141 = scmp.ne.s32.totalorder %s124, %s140
    %p142 = scmp.eq.s32.totalorder %s17, 0
    %p143 = por %p141, %p142
    %p144 = scmp.le.s32.totalorder 1, %s11
    %p145 = scmp.lt.s32.totalorder %s11, 3
    %p146 = pnand %p144, %p145
    %p147 = pneg %p146
    // Predicated region
    $region9: #{_lambda_.17} parent=5 // pred_check
      _
    $region10: #{_lambda_.17} parent=5 // pred_check_branch
      %149 = sbr.rel (%p146) target = $region12
    $region11: #{_lambda_.17} parent=5 // pred_region
      %s150 = ssub.s32 %s11, 1
      // Predicated region
      $region13: #{_lambda_.17} parent=11 // pred_check
        %p151 = pneg %p58
      $region14: #{_lambda_.17} parent=11 // pred_check_branch
        %153 = sbr.rel (%p151) target = $region16
      $region15: #{_lambda_.17} parent=11 // pred_region
        _
      $region16: #{_lambda_.17} parent=11 // pred_fallthru
        _
    $region12: #{_lambda_.17} parent=5 // pred_fallthru
      _
    %p154 = scmp.lt.s32.totalorder %s11, 2
    // Predicated region
    $region17: #{_lambda_.17} parent=5 // pred_check
      %p155 = pneg %p154
    $region18: #{_lambda_.17} parent=5 // pred_check_branch
      %157 = sbr.rel (%p155) target = $region20
    $region19: #{_lambda_.17} parent=5 // pred_region
      // Predicated region
      $region21: #{_lambda_.17} parent=19 // pred_check
        %p158 = pneg %p31
      $region22: #{_lambda_.17} parent=19 // pred_check_branch
        %160 = sbr.rel (%p158) target = $region24
      $region23: #{_lambda_.17} parent=19 // pred_region
        %s161 = smul.u32 8, %s11
        %p162 = scmp.lt.s32.totalorder %s161, 15
        %s163 = scalar_select %p162, %s161, 15
        %s164 = smul.addr %s163, 4
        %s165 = scalar_lea.vmem %s0, %s164
        %s166 = smul.u32 8, %s11
      $region24: #{_lambda_.17} parent=19 // pred_fallthru
        _
    $region20: #{_lambda_.17} parent=5 // pred_fallthru
      _
    %p167 = scmp.le.s32.totalorder 1, %s11
    %p168 = scmp.lt.s32.totalorder %s11, 3
    %p169 = pnand %p167, %p168
    %p170 = pneg %p169
    // Predicated region
    $region25: #{_lambda_.17} parent=5 // pred_check
      _
    $region26: #{_lambda_.17} parent=5 // pred_check_branch
      %172 = sbr.rel (%p169) target = $region28
    $region27: #{_lambda_.17} parent=5 // pred_region
      %s173 = ssub.s32 %s11, 1
      %s174 = smul.u32 8, %s16
      %p175 = scmp.lt.s32.totalorder %s174, 15
      %s176 = scalar_select %p175, %s174, 15
      %s177 = smul.addr %s176, 4
      %s178 = scalar_lea.vmem %s0, %s177
      %p179 = pneg %p37
      %p180 = pneg %p34
      %p181 = pneg %p58
      %p182 = pneg %p55
      %p183 = pneg %p84
      %p184 = pneg %p81
      %s185 = smul.u32 8, %s16
      %p186 = scmp.lt.s32.totalorder %s185, 15
      %s187 = scalar_select %p186, %s185, 15
      %s188 = smul.addr %s187, 4
      %s189 = scalar_lea.vmem %s2, %s188
      %p190 = pneg %p110
      %p191 = pneg %p107
      %p192 = scmp.lt.s32.totalorder %s16, 1
      %s193 = scalar_select %p192, %s16, 1
      %s194 = scalar_lea.vmem %s3, %s193
      %p195 = pneg %p136
      %p196 = pneg %p133
      %p197 = scmp.lt.s32.totalorder %s16, 1
      %s198 = scalar_select %p197, %s16, 1
      %s199 = scalar_lea.vmem %s4, %s198
      %s200 = smul.u32 8, %s16
      %p201 = scmp.lt.s32.totalorder %s200, 15
      %s202 = scalar_select %p201, %s200, 15
      %s203 = smul.addr %s202, 4
      %s204 = scalar_lea.vmem %s0, %s203
      %s205 = smul.u32 8, %s16
      %s206 = smul.u32 8, %s16
      %p207 = scmp.lt.s32.totalorder %s206, 15
      %s208 = scalar_select %p207, %s206, 15
      %s209 = smul.addr %s208, 4
      %s210 = scalar_lea.vmem %s2, %s209
      %s211 = smul.u32 8, %s16
      %p212 = scmp.lt.s32.totalorder %s16, 1
      %s213 = scalar_select %p212, %s16, 1
      %s214 = scalar_lea.vmem %s3, %s213
      %p215 = scmp.lt.s32.totalorder %s16, 1
      %s216 = scalar_select %p215, %s16, 1
      %s217 = scalar_lea.vmem %s4, %s216
      %v219 = vld [vmem:[%s204] sm:$0xf]
      %v220 = vld [vmem:[%s204 + $0x4] sm:$0xf]
      %v221 = vld [vmem:[%s204 + $0x8] sm:$0xf]
      %v222 = vld [vmem:[%s204 + $0xc] sm:$0xf]
      %v223 = vld [vmem:[%s204 + $0x10] sm:$0xf]
      %v224 = vld [vmem:[%s204 + $0x14] sm:$0xf]
      %v225 = vld [vmem:[%s204 + $0x18] sm:$0xf]
      %v226 = vld [vmem:[%s204 + $0x1c] sm:$0xf]
      %v227 = vld [vmem:[%s1] sm:$0xf]
      %v236 = vunpack.c.l.b16 %v219
      %v237 = vunpack.c.l.b16 %v220
      %v238 = vunpack.c.l.b16 %v221
      %v239 = vunpack.c.l.b16 %v222
      %v240 = vunpack.c.l.b16 %v223
      %v241 = vunpack.c.l.b16 %v224
      %v242 = vunpack.c.l.b16 %v225
      %v243 = vunpack.c.l.b16 %v226
      %v244 = vpack.c.b16 %v237, %v236
      %v245 = vpack.c.b16 %v239, %v238
      %v246 = vpack.c.b16 %v241, %v240
      %v247 = vpack.c.b16 %v243, %v242
      %vm248 = vcmask 64512
      %v250 = vsel %vm248, %v244, 0
      %v253 = vsel %vm248, %v245, 0
      %v256 = vsel %vm248, %v246, 0
      %v259 = vsel %vm248, %v247, 0
      %vm261 = vcmask 1043456
      %v263 = vsel %vm261, %v227, 0
      %265 = vmatpush.bf16.msra.mxu0 0
      %266 = vmatpush.bf16.msra.mxu0 0
      %267 = vmatpush.bf16.msra.mxu0 0
      %268 = vmatpush.bf16.msra.mxu0 0
      %269 = vmatpush.bf16.msra.mxu0 0
      %270 = vmatpush.bf16.msra.mxu0 0
      %271 = vmatpush.bf16.msra.mxu0 0
      %272 = vmatpush.bf16.msra.mxu0 %v263
      %273 = vmatmul.bf16.gmra.mxu0 %v250
      %v274 = vpop.f32.mrf.mxu0
      %v275 = vadd.f32 0.0, %v274
      %v276 = vpop.f32.mrf.mxu0
      %v277 = vadd.f32 0.0, %v276
      %278 = vmatmul.bf16.gmra.mxu0 %v253
      %v279 = vpop.f32.mrf.mxu0
      %v280 = vadd.f32 0.0, %v279
      %v281 = vpop.f32.mrf.mxu0
      %v282 = vadd.f32 0.0, %v281
      %283 = vmatmul.bf16.gmra.mxu0 %v256
      %v284 = vpop.f32.mrf.mxu0
      %v285 = vadd.f32 0.0, %v284
      %v286 = vpop.f32.mrf.mxu0
      %v287 = vadd.f32 0.0, %v286
      %288 = vmatmul.bf16.gmra.mxu0 %v259
      %v289 = vpop.f32.mrf.mxu0
      %v290 = vadd.f32 0.0, %v289
      %v291 = vpop.f32.mrf.mxu0
      %v292 = vadd.f32 0.0, %v291
      %293 = vdwg.mxu0
      %v294 = vpack.c.bf16 %v275, %v275
      %v295 = vpack.c.bf16 %v277, %v277
      %v296 = vpack.c.bf16 %v280, %v280
      %v297 = vpack.c.bf16 %v282, %v282
      %v298 = vpack.c.bf16 %v285, %v285
      %v299 = vpack.c.bf16 %v287, %v287
      %v300 = vpack.c.bf16 %v290, %v290
      %v301 = vpack.c.bf16 %v292, %v292
      %302 = vst [vmem:[%s210] sm:$0xf] %v294
      %303 = vst [vmem:[%s210 + $0x4] sm:$0xf] %v295
      %304 = vst [vmem:[%s210 + $0x8] sm:$0xf] %v296
      %305 = vst [vmem:[%s210 + $0xc] sm:$0xf] %v297
      %306 = vst [vmem:[%s210 + $0x10] sm:$0xf] %v298
      %307 = vst [vmem:[%s210 + $0x14] sm:$0xf] %v299
      %308 = vst [vmem:[%s210 + $0x18] sm:$0xf] %v300
      %309 = vst [vmem:[%s210 + $0x1c] sm:$0xf] %v301
      %v310 = vadd.f32 %v275, %v277
      %v311 = vadd.f32 %v310, %v280
      %v312 = vadd.f32 %v311, %v282
      %v313 = vadd.f32 %v312, %v285
      %v314 = vadd.f32 %v313, %v287
      %v315 = vadd.f32 %v314, %v290
      %v316 = vadd.f32 %v315, %v292
      %v317 = vrot.slane %v316, 4
      %v318 = vadd.f32 %v316, %v317
      %v319 = vrot.slane %v318, 2
      %v320 = vadd.f32 %v318, %v319
      %v321 = vrot.slane %v320, 1
      %v322 = vadd.f32 %v320, %v321
      %323 = vst [vmem:[%s214] sm:$0x1] %v322
      %v324 = vmul.f32 %v275, %v275
      %v325 = vmul.f32 %v277, %v277
      %v326 = vmul.f32 %v280, %v280
      %v327 = vmul.f32 %v282, %v282
      %v328 = vmul.f32 %v285, %v285
      %v329 = vmul.f32 %v287, %v287
      %v330 = vmul.f32 %v290, %v290
      %v331 = vmul.f32 %v292, %v292
      %v332 = vadd.f32 %v324, %v325
      %v333 = vadd.f32 %v332, %v326
      %v334 = vadd.f32 %v333, %v327
      %v335 = vadd.f32 %v334, %v328
      %v336 = vadd.f32 %v335, %v329
      %v337 = vadd.f32 %v336, %v330
      %v338 = vadd.f32 %v337, %v331
      %v339 = vrot.slane %v338, 4
      %v340 = vadd.f32 %v338, %v339
      %v341 = vrot.slane %v340, 2
      %v342 = vadd.f32 %v340, %v341
      %v343 = vrot.slane %v342, 1
      %v344 = vadd.f32 %v342, %v343
      %345 = vst [vmem:[%s217] sm:$0x1] %v344
      %s346 = smul.u32 8, %s16
      %p347 = scmp.lt.s32.totalorder %s346, 15
      %s348 = scalar_select %p347, %s346, 15
      %s349 = smul.addr %s348, 4
      %s350 = scalar_lea.vmem %s2, %s349
      %p351 = scmp.lt.s32.totalorder %s16, 1
      %s352 = scalar_select %p351, %s16, 1
      %s353 = scalar_lea.vmem %s3, %s352
      %p354 = scmp.lt.s32.totalorder %s16, 1
      %s355 = scalar_select %p354, %s16, 1
      %s356 = scalar_lea.vmem %s4, %s355
      // Predicated region
      $region29: #{_lambda_.17} parent=27 // pred_check
        %p357 = pneg %p81
      $region30: #{_lambda_.17} parent=27 // pred_check_branch
        %359 = sbr.rel (%p357) target = $region32
      $region31: #{_lambda_.17} parent=27 // pred_region
        %s360 = smul.u32 8, %s16
      $region32: #{_lambda_.17} parent=27 // pred_fallthru
        _
      // Predicated region
      $region33: #{_lambda_.17} parent=27 // pred_check
        %p361 = pneg %p107
      $region34: #{_lambda_.17} parent=27 // pred_check_branch
        %363 = sbr.rel (%p361) target = $region36
      $region35: #{_lambda_.17} parent=27 // pred_region
        _
      $region36: #{_lambda_.17} parent=27 // pred_fallthru
        _
      // Predicated region
      $region37: #{_lambda_.17} parent=27 // pred_check
        %p364 = pneg %p133
      $region38: #{_lambda_.17} parent=27 // pred_check_branch
        %366 = sbr.rel (%p364) target = $region40
      $region39: #{_lambda_.17} parent=27 // pred_region
        _
      $region40: #{_lambda_.17} parent=27 // pred_fallthru
        _
    $region28: #{_lambda_.17} parent=5 // pred_fallthru
      _
    %p367 = scmp.le.s32.totalorder 2, %s11
    // Predicated region
    $region41: #{_lambda_.17} parent=5 // pred_check
      %p368 = pneg %p367
    $region42: #{_lambda_.17} parent=5 // pred_check_branch
      %370 = sbr.rel (%p368) target = $region44
    $region43: #{_lambda_.17} parent=5 // pred_region
      %s371 = ssub.s32 %s11, 2
      // Predicated region
      $region45: #{_lambda_.17} parent=43 // pred_check
        %p372 = pneg %p87
      $region46: #{_lambda_.17} parent=43 // pred_check_branch
        %374 = sbr.rel (%p372) target = $region48
      $region47: #{_lambda_.17} parent=43 // pred_region
        %s375 = smul.u32 8, %s17
        %p376 = scmp.lt.s32.totalorder %s375, 15
        %s377 = scalar_select %p376, %s375, 15
        %s378 = smul.addr %s377, 4
        %s379 = scalar_lea.vmem %s2, %s378
      $region48: #{_lambda_.17} parent=43 // pred_fallthru
        _
      // Predicated region
      $region49: #{_lambda_.17} parent=43 // pred_check
        %p380 = pneg %p113
      $region50: #{_lambda_.17} parent=43 // pred_check_branch
        %382 = sbr.rel (%p380) target = $region52
      $region51: #{_lambda_.17} parent=43 // pred_region
        %p383 = scmp.lt.s32.totalorder %s17, 1
        %s384 = scalar_select %p383, %s17, 1
        %s385 = scalar_lea.vmem %s3, %s384
      $region52: #{_lambda_.17} parent=43 // pred_fallthru
        _
      // Predicated region
      $region53: #{_lambda_.17} parent=43 // pred_check
        %p386 = pneg %p139
      $region54: #{_lambda_.17} parent=43 // pred_check_branch
        %388 = sbr.rel (%p386) target = $region56
      $region55: #{_lambda_.17} parent=43 // pred_region
        %p389 = scmp.lt.s32.totalorder %s17, 1
        %s390 = scalar_select %p389, %s17, 1
        %s391 = scalar_lea.vmem %s4, %s390
      $region56: #{_lambda_.17} parent=43 // pred_fallthru
        _
    $region44: #{_lambda_.17} parent=5 // pred_fallthru
      _
  $region6: #{_lambda_.17} parent=0 // loop_footer
    %s15 = sadd.s32 1, %s11
  $region7: #{_lambda_.17} parent=0 // loop_footer_branch
    %10 = sbr.rel target = $region3
  $region8: #{_lambda_.17} parent=0 // loop_exit
    _

// kernel: _lambda_.14
$region0: #{_lambda_.14}
  #allocation0 [shape = 'u32[]', space=smem, size = 0x4, offset = 0x4, fixed_abs, tag = 'smem constant byte address 0x4 - core index']
  #allocation1 [shape = 'u32[72,128]{1,0:T(1,128)}', space=vmem, size = 0x9000, scoped, tag = 'internal scratch']
  %s0 = inlined_call_operand.vmem [shape: bf16[512,128], index: 0, kind: input, shape index: {}]
  %s1 = inlined_call_operand.vmem [shape: f32[1,128], index: 1, kind: input, shape index: {}]
  %s2 = inlined_call_operand.vmem [shape: f32[1,128], index: 2, kind: input, shape index: {}]
  %s3 = inlined_call_operand.vmem [shape: bf16[512,128], index: 3, kind: input, shape index: {}]
  %s4 = inlined_call_operand.vmem [shape: f32[1,128], index: 4, kind: input, shape index: {}]
  %s5 = inlined_call_operand.vmem [shape: f32[1,128], index: 5, kind: input, shape index: {}]
  %s6 = inlined_call_operand.vmem [shape: bf16[512,128], index: 6, kind: output, shape index: {}]
  %s7 = sld [smem:[#allocation0]]
  $region57: #{_lambda_.14} parent=0
    _
  %s9 = ssub.s32 1, %s7
  %s10 = scalar_select 0, %s9, %s7
  loop: start=0, step=1, limit=4
  $region2: #{_lambda_.14} parent=0 // loop_pre_header
    _
  $region3: #{_lambda_.14} parent=0 // loop_header
    %s12 = sphi 0, %s16
    %p13 = scmp.ge.s32.totalorder %s12, 4
    %s22 = sphi 0, %s24
    %s25 = sphi 0, %s22
    %s26 = sphi 0, %s25
    %s42 = sphi 0, %s26
    %s46 = sphi 0, %s46
    %s48 = sphi 0, %s46
    %s49 = sphi 0, %s48
    %s63 = sphi 0, %s49
    %s67 = sphi 0, %s67
    %s69 = sphi 0, %s67
    %s70 = sphi 0, %s69
    %s84 = sphi 0, %s70
    %s90 = sphi 0, %s92
    %s93 = sphi 0, %s90
    %s94 = sphi 0, %s93
    %s110 = sphi 0, %s94
    %s114 = sphi 0, %s114
    %s116 = sphi 0, %s114
    %s117 = sphi 0, %s116
    %s131 = sphi 0, %s117
    %s135 = sphi 0, %s135
    %s137 = sphi 0, %s135
    %s138 = sphi 0, %s137
    %s152 = sphi 0, %s138
    %s158 = sphi 0, %s160
    %s161 = sphi 0, %s158
    %s162 = sphi 0, %s161
    %s178 = sphi 0, %s162
  $region4: #{_lambda_.14} parent=0 // loop_header_branch
    %15 = sbr.rel (%p13) target = $region8
  $region5: #{_lambda_.14} parent=0 // loop_body
    %s17 = ssub.s32 %s12, 1
    %s18 = ssub.s32 %s12, 2
    %s19 = sadd.s32 %s12, 1
    %s20 = ssub.s32 %s12, %s19
    %p21 = scmp.eq.s32.totalorder %s20, 0
    %s23 = sadd.s32 %s22, 1
    %s24 = scalar_select %p21, %s22, %s23
    %p27 = pneg %p21
    %p28 = scmp.eq.s32.totalorder %s12, 1
    %p29 = por %p27, %p28
    %p30 = scmp.ne.s32.totalorder %s22, %s25
    %p31 = scmp.eq.s32.totalorder %s12, 0
    %p32 = por %p30, %p31
    %p33 = scmp.ne.s32.totalorder %s22, %s25
    %p34 = scmp.eq.s32.totalorder %s17, 1
    %p35 = por %p33, %p34
    %p36 = scmp.ne.s32.totalorder %s25, %s26
    %p37 = scmp.eq.s32.totalorder %s17, 0
    %p38 = por %p36, %p37
    %p39 = scmp.ne.s32.totalorder %s25, %s26
    %p40 = scmp.eq.s32.totalorder %s18, 1
    %p41 = por %p39, %p40
    %p43 = scmp.ne.s32.totalorder %s26, %s42
    %p44 = scmp.eq.s32.totalorder %s18, 0
    %p45 = por %p43, %p44
    %s47 = sadd.s32 %s46, 1
    %p50 = scmp.eq.s32.totalorder %s12, 1
    %p51 = scmp.ne.s32.totalorder %s46, %s48
    %p52 = scmp.eq.s32.totalorder %s12, 0
    %p53 = por %p51, %p52
    %p54 = scmp.ne.s32.totalorder %s46, %s48
    %p55 = scmp.eq.s32.totalorder %s17, 1
    %p56 = por %p54, %p55
    %p57 = scmp.ne.s32.totalorder %s48, %s49
    %p58 = scmp.eq.s32.totalorder %s17, 0
    %p59 = por %p57, %p58
    %p60 = scmp.ne.s32.totalorder %s48, %s49
    %p61 = scmp.eq.s32.totalorder %s18, 1
    %p62 = por %p60, %p61
    %p64 = scmp.ne.s32.totalorder %s49, %s63
    %p65 = scmp.eq.s32.totalorder %s18, 0
    %p66 = por %p64, %p65
    %s68 = sadd.s32 %s67, 1
    %p71 = scmp.eq.s32.totalorder %s12, 1
    %p72 = scmp.ne.s32.totalorder %s67, %s69
    %p73 = scmp.eq.s32.totalorder %s12, 0
    %p74 = por %p72, %p73
    %p75 = scmp.ne.s32.totalorder %s67, %s69
    %p76 = scmp.eq.s32.totalorder %s17, 1
    %p77 = por %p75, %p76
    %p78 = scmp.ne.s32.totalorder %s69, %s70
    %p79 = scmp.eq.s32.totalorder %s17, 0
    %p80 = por %p78, %p79
    %p81 = scmp.ne.s32.totalorder %s69, %s70
    %p82 = scmp.eq.s32.totalorder %s18, 1
    %p83 = por %p81, %p82
    %p85 = scmp.ne.s32.totalorder %s70, %s84
    %p86 = scmp.eq.s32.totalorder %s18, 0
    %p87 = por %p85, %p86
    %s88 = ssub.s32 %s12, %s19
    %p89 = scmp.eq.s32.totalorder %s88, 0
    %s91 = sadd.s32 %s90, 1
    %s92 = scalar_select %p89, %s90, %s91
    %p95 = pneg %p89
    %p96 = scmp.eq.s32.totalorder %s12, 1
    %p97 = por %p95, %p96
    %p98 = scmp.ne.s32.totalorder %s90, %s93
    %p99 = scmp.eq.s32.totalorder %s12, 0
    %p100 = por %p98, %p99
    %p101 = scmp.ne.s32.totalorder %s90, %s93
    %p102 = scmp.eq.s32.totalorder %s17, 1
    %p103 = por %p101, %p102
    %p104 = scmp.ne.s32.totalorder %s93, %s94
    %p105 = scmp.eq.s32.totalorder %s17, 0
    %p106 = por %p104, %p105
    %p107 = scmp.ne.s32.totalorder %s93, %s94
    %p108 = scmp.eq.s32.totalorder %s18, 1
    %p109 = por %p107, %p108
    %p111 = scmp.ne.s32.totalorder %s94, %s110
    %p112 = scmp.eq.s32.totalorder %s18, 0
    %p113 = por %p111, %p112
    %s115 = sadd.s32 %s114, 1
    %p118 = scmp.eq.s32.totalorder %s12, 1
    %p119 = scmp.ne.s32.totalorder %s114, %s116
    %p120 = scmp.eq.s32.totalorder %s12, 0
    %p121 = por %p119, %p120
    %p122 = scmp.ne.s32.totalorder %s114, %s116
    %p123 = scmp.eq.s32.totalorder %s17, 1
    %p124 = por %p122, %p123
    %p125 = scmp.ne.s32.totalorder %s116, %s117
    %p126 = scmp.eq.s32.totalorder %s17, 0
    %p127 = por %p125, %p126
    %p128 = scmp.ne.s32.totalorder %s116, %s117
    %p129 = scmp.eq.s32.totalorder %s18, 1
    %p130 = por %p128, %p129
    %p132 = scmp.ne.s32.totalorder %s117, %s131
    %p133 = scmp.eq.s32.totalorder %s18, 0
    %p134 = por %p132, %p133
    %s136 = sadd.s32 %s135, 1
    %p139 = scmp.eq.s32.totalorder %s12, 1
    %p140 = scmp.ne.s32.totalorder %s135, %s137
    %p141 = scmp.eq.s32.totalorder %s12, 0
    %p142 = por %p140, %p141
    %p143 = scmp.ne.s32.totalorder %s135, %s137
    %p144 = scmp.eq.s32.totalorder %s17, 1
    %p145 = por %p143, %p144
    %p146 = scmp.ne.s32.totalorder %s137, %s138
    %p147 = scmp.eq.s32.totalorder %s17, 0
    %p148 = por %p146, %p147
    %p149 = scmp.ne.s32.totalorder %s137, %s138
    %p150 = scmp.eq.s32.totalorder %s18, 1
    %p151 = por %p149, %p150
    %p153 = scmp.ne.s32.totalorder %s138, %s152
    %p154 = scmp.eq.s32.totalorder %s18, 0
    %p155 = por %p153, %p154
    %s156 = ssub.s32 %s12, %s19
    %p157 = scmp.eq.s32.totalorder %s156, 0
    %s159 = sadd.s32 %s158, 1
    %s160 = scalar_select %p157, %s158, %s159
    %p163 = pneg %p157
    %p164 = scmp.eq.s32.totalorder %s12, 1
    %p165 = por %p163, %p164
    %p166 = scmp.ne.s32.totalorder %s158, %s161
    %p167 = scmp.eq.s32.totalorder %s12, 0
    %p168 = por %p166, %p167
    %p169 = scmp.ne.s32.totalorder %s158, %s161
    %p170 = scmp.eq.s32.totalorder %s17, 1
    %p171 = por %p169, %p170
    %p172 = scmp.ne.s32.totalorder %s161, %s162
    %p173 = scmp.eq.s32.totalorder %s17, 0
    %p174 = por %p172, %p173
    %p175 = scmp.ne.s32.totalorder %s161, %s162
    %p176 = scmp.eq.s32.totalorder %s18, 1
    %p177 = por %p175, %p176
    %p179 = scmp.ne.s32.totalorder %s162, %s178
    %p180 = scmp.eq.s32.totalorder %s18, 0
    %p181 = por %p179, %p180
    %p182 = scmp.le.s32.totalorder 1, %s12
    %p183 = scmp.lt.s32.totalorder %s12, 3
    %p184 = pnand %p182, %p183
    %p185 = pneg %p184
    // Predicated region
    $region9: #{_lambda_.14} parent=5 // pred_check
      _
    $region10: #{_lambda_.14} parent=5 // pred_check_branch
      %187 = sbr.rel (%p184) target = $region12
    $region11: #{_lambda_.14} parent=5 // pred_region
      %s188 = ssub.s32 %s12, 1
      // Predicated region
      $region13: #{_lambda_.14} parent=11 // pred_check
        %p189 = pneg %p59
      $region14: #{_lambda_.14} parent=11 // pred_check_branch
        %191 = sbr.rel (%p189) target = $region16
      $region15: #{_lambda_.14} parent=11 // pred_region
        _
      $region16: #{_lambda_.14} parent=11 // pred_fallthru
        _
      // Predicated region
      $region17: #{_lambda_.14} parent=11 // pred_check
        %p192 = pneg %p80
      $region18: #{_lambda_.14} parent=11 // pred_check_branch
        %194 = sbr.rel (%p192) target = $region20
      $region19: #{_lambda_.14} parent=11 // pred_region
        _
      $region20: #{_lambda_.14} parent=11 // pred_fallthru
        _
      // Predicated region
      $region21: #{_lambda_.14} parent=11 // pred_check
        %p195 = pneg %p127
      $region22: #{_lambda_.14} parent=11 // pred_check_branch
        %197 = sbr.rel (%p195) target = $region24
      $region23: #{_lambda_.14} parent=11 // pred_region
        _
      $region24: #{_lambda_.14} parent=11 // pred_fallthru
        _
      // Predicated region
      $region25: #{_lambda_.14} parent=11 // pred_check
        %p198 = pneg %p148
      $region26: #{_lambda_.14} parent=11 // pred_check_branch
        %200 = sbr.rel (%p198) target = $region28
      $region27: #{_lambda_.14} parent=11 // pred_region
        _
      $region28: #{_lambda_.14} parent=11 // pred_fallthru
        _
    $region12: #{_lambda_.14} parent=5 // pred_fallthru
      _
    %p201 = scmp.lt.s32.totalorder %s12, 2
    // Predicated region
    $region29: #{_lambda_.14} parent=5 // pred_check
      %p202 = pneg %p201
    $region30: #{_lambda_.14} parent=5 // pred_check_branch
      %204 = sbr.rel (%p202) target = $region32
    $region31: #{_lambda_.14} parent=5 // pred_region
      // Predicated region
      $region33: #{_lambda_.14} parent=31 // pred_check
        %p205 = pneg %p32
      $region34: #{_lambda_.14} parent=31 // pred_check_branch
        %207 = sbr.rel (%p205) target = $region36
      $region35: #{_lambda_.14} parent=31 // pred_region
        %s208 = smul.u32 32, %s12
        %p209 = scmp.lt.s32.totalorder %s208, 63
        %s210 = scalar_select %p209, %s208, 63
        %s211 = smul.addr %s210, 4
        %s212 = scalar_lea.vmem %s0, %s211
        %s213 = smul.u32 32, %s12
      $region36: #{_lambda_.14} parent=31 // pred_fallthru
        _
      // Predicated region
      $region37: #{_lambda_.14} parent=31 // pred_check
        %p214 = pneg %p100
      $region38: #{_lambda_.14} parent=31 // pred_check_branch
        %216 = sbr.rel (%p214) target = $region40
      $region39: #{_lambda_.14} parent=31 // pred_region
        %s217 = smul.u32 32, %s12
        %p218 = scmp.lt.s32.totalorder %s217, 63
        %s219 = scalar_select %p218, %s217, 63
        %s220 = smul.addr %s219, 4
        %s221 = scalar_lea.vmem %s3, %s220
        %s222 = smul.u32 32, %s12
      $region40: #{_lambda_.14} parent=31 // pred_fallthru
        _
    $region32: #{_lambda_.14} parent=5 // pred_fallthru
      _
    %p223 = scmp.le.s32.totalorder 1, %s12
    %p224 = scmp.lt.s32.totalorder %s12, 3
    %p225 = pnand %p223, %p224
    %p226 = pneg %p225
    // Predicated region
    $region41: #{_lambda_.14} parent=5 // pred_check
      _
    $region42: #{_lambda_.14} parent=5 // pred_check_branch
      %228 = sbr.rel (%p225) target = $region44
    $region43: #{_lambda_.14} parent=5 // pred_region
      %s229 = ssub.s32 %s12, 1
      %s230 = smul.u32 32, %s17
      %p231 = scmp.lt.s32.totalorder %s230, 63
      %s232 = scalar_select %p231, %s230, 63
      %s233 = smul.addr %s232, 4
      %s234 = scalar_lea.vmem %s0, %s233
      %p235 = pneg %p38
      %p236 = pneg %p35
      %p237 = pneg %p59
      %p238 = pneg %p56
      %p239 = pneg %p80
      %p240 = pneg %p77
      %s241 = smul.u32 32, %s17
      %p242 = scmp.lt.s32.totalorder %s241, 63
      %s243 = scalar_select %p242, %s241, 63
      %s244 = smul.addr %s243, 4
      %s245 = scalar_lea.vmem %s3, %s244
      %p246 = pneg %p106
      %p247 = pneg %p103
      %p248 = pneg %p127
      %p249 = pneg %p124
      %p250 = pneg %p148
      %p251 = pneg %p145
      %p252 = pneg %p174
      %p253 = pneg %p171
      %s254 = smul.u32 32, %s17
      %p255 = scmp.lt.s32.totalorder %s254, 63
      %s256 = scalar_select %p255, %s254, 63
      %s257 = smul.addr %s256, 4
      %s258 = scalar_lea.vmem %s6, %s257
      %s259 = smul.u32 32, %s17
      %p260 = scmp.lt.s32.totalorder %s259, 63
      %s261 = scalar_select %p260, %s259, 63
      %s262 = smul.addr %s261, 4
      %s263 = scalar_lea.vmem %s0, %s262
      %s264 = smul.u32 32, %s17
      %s265 = smul.u32 32, %s17
      %p266 = scmp.lt.s32.totalorder %s265, 63
      %s267 = scalar_select %p266, %s265, 63
      %s268 = smul.addr %s267, 4
      %s269 = scalar_lea.vmem %s3, %s268
      %s270 = smul.u32 32, %s17
      %s271 = smul.u32 32, %s17
      %p272 = scmp.lt.s32.totalorder %s271, 63
      %s273 = scalar_select %p272, %s271, 63
      %s274 = smul.addr %s273, 4
      %s275 = scalar_lea.vmem %s6, %s274
      %s276 = smul.u32 32, %s17
      %v277 = vld [vmem:[%s263] sm:$0xf]
      %v278 = vld [vmem:[%s263 + $0x4] sm:$0xf]
      %v279 = vld [vmem:[%s263 + $0x8] sm:$0xf]
      %v280 = vld [vmem:[%s263 + $0xc] sm:$0xf]
      %v281 = vld [vmem:[%s263 + $0x10] sm:$0xf]
      %v282 = vld [vmem:[%s263 + $0x14] sm:$0xf]
      %v283 = vld [vmem:[%s263 + $0x18] sm:$0xf]
      %v284 = vld [vmem:[%s263 + $0x1c] sm:$0xf]
      %v285 = vld [vmem:[%s263 + $0x20] sm:$0xf]
      %v286 = vld [vmem:[%s263 + $0x24] sm:$0xf]
      %v287 = vld [vmem:[%s263 + $0x28] sm:$0xf]
      %v288 = vld [vmem:[%s263 + $0x2c] sm:$0xf]
      %v289 = vld [vmem:[%s263 + $0x30] sm:$0xf]
      %v290 = vld [vmem:[%s263 + $0x34] sm:$0xf]
      %v291 = vld [vmem:[%s263 + $0x38] sm:$0xf]
      %v292 = vld [vmem:[%s263 + $0x3c] sm:$0xf]
      %v293 = vld [vmem:[%s263 + $0x40] sm:$0xf]
      %v294 = vld [vmem:[%s263 + $0x44] sm:$0xf]
      %v295 = vld [vmem:[%s263 + $0x48] sm:$0xf]
      %v296 = vld [vmem:[%s263 + $0x4c] sm:$0xf]
      %v297 = vld [vmem:[%s263 + $0x50] sm:$0xf]
      %v298 = vld [vmem:[%s263 + $0x54] sm:$0xf]
      %v299 = vld [vmem:[%s263 + $0x58] sm:$0xf]
      %v300 = vld [vmem:[%s263 + $0x5c] sm:$0xf]
      %v301 = vld [vmem:[%s263 + $0x60] sm:$0xf]
      %v302 = vld [vmem:[%s263 + $0x64] sm:$0xf]
      %v303 = vld [vmem:[%s263 + $0x68] sm:$0xf]
      %v304 = vld [vmem:[%s263 + $0x6c] sm:$0xf]
      %v305 = vld [vmem:[%s263 + $0x70] sm:$0xf]
      %v306 = vld [vmem:[%s263 + $0x74] sm:$0xf]
      %v307 = vld [vmem:[%s263 + $0x78] sm:$0xf]
      %v308 = vld [vmem:[%s263 + $0x7c] sm:$0xf]
      %v309 = vunpack.c.l.bf16 %v277
      %v310 = vunpack.c.l.bf16 %v278
      %v311 = vunpack.c.l.bf16 %v279
      %v312 = vunpack.c.l.bf16 %v280
      %v313 = vunpack.c.l.bf16 %v281
      %v314 = vunpack.c.l.bf16 %v282
      %v315 = vunpack.c.l.bf16 %v283
      %v316 = vunpack.c.l.bf16 %v284
      %v317 = vunpack.c.l.bf16 %v285
      %v318 = vunpack.c.l.bf16 %v286
      %v319 = vunpack.c.l.bf16 %v287
      %v320 = vunpack.c.l.bf16 %v288
      %v321 = vunpack.c.l.bf16 %v289
      %v322 = vunpack.c.l.bf16 %v290
      %v323 = vunpack.c.l.bf16 %v291
      %v324 = vunpack.c.l.bf16 %v292
      %v325 = vunpack.c.l.bf16 %v293
      %v326 = vunpack.c.l.bf16 %v294
      %v327 = vunpack.c.l.bf16 %v295
      %v328 = vunpack.c.l.bf16 %v296
      %v329 = vunpack.c.l.bf16 %v297
      %v330 = vunpack.c.l.bf16 %v298
      %v331 = vunpack.c.l.bf16 %v299
      %v332 = vunpack.c.l.bf16 %v300
      %v333 = vunpack.c.l.bf16 %v301
      %v334 = vunpack.c.l.bf16 %v302
      %v335 = vunpack.c.l.bf16 %v303
      %v336 = vunpack.c.l.bf16 %v304
      %v337 = vunpack.c.l.bf16 %v305
      %v338 = vunpack.c.l.bf16 %v306
      %v339 = vunpack.c.l.bf16 %v307
      %v340 = vunpack.c.l.bf16 %v308
      %v341 = vld [vmem:[%s1] sm:$0x1]
      %v343 = vperm.slane %v341, 0
      %v345 = vmul.f32 %v309, %v343
      %v346 = vmul.f32 %v310, %v343
      %v347 = vmul.f32 %v311, %v343
      %v348 = vmul.f32 %v312, %v343
      %v349 = vmul.f32 %v313, %v343
      %v350 = vmul.f32 %v314, %v343
      %v351 = vmul.f32 %v315, %v343
      %v352 = vmul.f32 %v316, %v343
      %v353 = vmul.f32 %v317, %v343
      %v354 = vmul.f32 %v318, %v343
      %v355 = vmul.f32 %v319, %v343
      %v356 = vmul.f32 %v320, %v343
      %v357 = vmul.f32 %v321, %v343
      %v358 = vmul.f32 %v322, %v343
      %v359 = vmul.f32 %v323, %v343
      %v360 = vmul.f32 %v324, %v343
      %v361 = vmul.f32 %v325, %v343
      %v362 = vmul.f32 %v326, %v343
      %v363 = vmul.f32 %v327, %v343
      %v364 = vmul.f32 %v328, %v343
      %v365 = vmul.f32 %v329, %v343
      %v366 = vmul.f32 %v330, %v343
      %v367 = vmul.f32 %v331, %v343
      %v368 = vmul.f32 %v332, %v343
      %v369 = vmul.f32 %v333, %v343
      %v370 = vmul.f32 %v334, %v343
      %v371 = vmul.f32 %v335, %v343
      %v372 = vmul.f32 %v336, %v343
      %v373 = vmul.f32 %v337, %v343
      %v374 = vmul.f32 %v338, %v343
      %v375 = vmul.f32 %v339, %v343
      %v376 = vmul.f32 %v340, %v343
      %v377 = vld [vmem:[%s2] sm:$0x1]
      %v379 = vperm.slane %v377, 0
      %v381 = vadd.f32 %v345, %v379
      %v382 = vadd.f32 %v346, %v379
      %v383 = vadd.f32 %v347, %v379
      %v384 = vadd.f32 %v348, %v379
      %v385 = vadd.f32 %v349, %v379
      %v386 = vadd.f32 %v350, %v379
      %v387 = vadd.f32 %v351, %v379
      %v388 = vadd.f32 %v352, %v379
      %v389 = vadd.f32 %v353, %v379
      %v390 = vadd.f32 %v354, %v379
      %v391 = vadd.f32 %v355, %v379
      %v392 = vadd.f32 %v356, %v379
      %v393 = vadd.f32 %v357, %v379
      %v394 = vadd.f32 %v358, %v379
      %v395 = vadd.f32 %v359, %v379
      %v396 = vadd.f32 %v360, %v379
      %v397 = vadd.f32 %v361, %v379
      %v398 = vadd.f32 %v362, %v379
      %v399 = vadd.f32 %v363, %v379
      %v400 = vadd.f32 %v364, %v379
      %v401 = vadd.f32 %v365, %v379
      %v402 = vadd.f32 %v366, %v379
      %v403 = vadd.f32 %v367, %v379
      %v404 = vadd.f32 %v368, %v379
      %v405 = vadd.f32 %v369, %v379
      %v406 = vadd.f32 %v370, %v379
      %v407 = vadd.f32 %v371, %v379
      %v408 = vadd.f32 %v372, %v379
      %v409 = vadd.f32 %v373, %v379
      %v410 = vadd.f32 %v374, %v379
      %v411 = vadd.f32 %v375, %v379
      %v412 = vadd.f32 %v376, %v379
      %v413 = vld [vmem:[%s269] sm:$0xf]
      %v414 = vld [vmem:[%s269 + $0x4] sm:$0xf]
      %v415 = vld [vmem:[%s269 + $0x8] sm:$0xf]
      %v416 = vld [vmem:[%s269 + $0xc] sm:$0xf]
      %v417 = vld [vmem:[%s269 + $0x10] sm:$0xf]
      %v418 = vld [vmem:[%s269 + $0x14] sm:$0xf]
      %v419 = vld [vmem:[%s269 + $0x18] sm:$0xf]
      %v420 = vld [vmem:[%s269 + $0x1c] sm:$0xf]
      %v421 = vld [vmem:[%s269 + $0x20] sm:$0xf]
      %v422 = vld [vmem:[%s269 + $0x24] sm:$0xf]
      %v423 = vld [vmem:[%s269 + $0x28] sm:$0xf]
      %v424 = vld [vmem:[%s269 + $0x2c] sm:$0xf]
      %v425 = vld [vmem:[%s269 + $0x30] sm:$0xf]
      %v426 = vld [vmem:[%s269 + $0x34] sm:$0xf]
      %v427 = vld [vmem:[%s269 + $0x38] sm:$0xf]
      %v428 = vld [vmem:[%s269 + $0x3c] sm:$0xf]
      %v429 = vld [vmem:[%s269 + $0x40] sm:$0xf]
      %v430 = vld [vmem:[%s269 + $0x44] sm:$0xf]
      %v431 = vld [vmem:[%s269 + $0x48] sm:$0xf]
      %v432 = vld [vmem:[%s269 + $0x4c] sm:$0xf]
      %v433 = vld [vmem:[%s269 + $0x50] sm:$0xf]
      %v434 = vld [vmem:[%s269 + $0x54] sm:$0xf]
      %v435 = vld [vmem:[%s269 + $0x58] sm:$0xf]
      %v436 = vld [vmem:[%s269 + $0x5c] sm:$0xf]
      %v437 = vld [vmem:[%s269 + $0x60] sm:$0xf]
      %v438 = vld [vmem:[%s269 + $0x64] sm:$0xf]
      %v439 = vld [vmem:[%s269 + $0x68] sm:$0xf]
      %v440 = vld [vmem:[%s269 + $0x6c] sm:$0xf]
      %v441 = vld [vmem:[%s269 + $0x70] sm:$0xf]
      %v442 = vld [vmem:[%s269 + $0x74] sm:$0xf]
      %v443 = vld [vmem:[%s269 + $0x78] sm:$0xf]
      %v444 = vld [vmem:[%s269 + $0x7c] sm:$0xf]
      %v445 = vunpack.c.l.bf16 %v413
      %v446 = vunpack.c.l.bf16 %v414
      %v447 = vunpack.c.l.bf16 %v415
      %v448 = vunpack.c.l.bf16 %v416
      %v449 = vunpack.c.l.bf16 %v417
      %v450 = vunpack.c.l.bf16 %v418
      %v451 = vunpack.c.l.bf16 %v419
      %v452 = vunpack.c.l.bf16 %v420
      %v453 = vunpack.c.l.bf16 %v421
      %v454 = vunpack.c.l.bf16 %v422
      %v455 = vunpack.c.l.bf16 %v423
      %v456 = vunpack.c.l.bf16 %v424
      %v457 = vunpack.c.l.bf16 %v425
      %v458 = vunpack.c.l.bf16 %v426
      %v459 = vunpack.c.l.bf16 %v427
      %v460 = vunpack.c.l.bf16 %v428
      %v461 = vunpack.c.l.bf16 %v429
      %v462 = vunpack.c.l.bf16 %v430
      %v463 = vunpack.c.l.bf16 %v431
      %v464 = vunpack.c.l.bf16 %v432
      %v465 = vunpack.c.l.bf16 %v433
      %v466 = vunpack.c.l.bf16 %v434
      %v467 = vunpack.c.l.bf16 %v435
      %v468 = vunpack.c.l.bf16 %v436
      %v469 = vunpack.c.l.bf16 %v437
      %v470 = vunpack.c.l.bf16 %v438
      %v471 = vunpack.c.l.bf16 %v439
      %v472 = vunpack.c.l.bf16 %v440
      %v473 = vunpack.c.l.bf16 %v441
      %v474 = vunpack.c.l.bf16 %v442
      %v475 = vunpack.c.l.bf16 %v443
      %v476 = vunpack.c.l.bf16 %v444
      %v477 = vld [vmem:[%s4] sm:$0x1]
      %v479 = vperm.slane %v477, 0
      %v481 = vmul.f32 %v445, %v479
      %v482 = vmul.f32 %v446, %v479
      %v483 = vmul.f32 %v447, %v479
      %v484 = vmul.f32 %v448, %v479
      %v485 = vmul.f32 %v449, %v479
      %v486 = vmul.f32 %v450, %v479
      %v487 = vmul.f32 %v451, %v479
      %v488 = vmul.f32 %v452, %v479
      %v489 = vmul.f32 %v453, %v479
      %v490 = vmul.f32 %v454, %v479
      %v491 = vmul.f32 %v455, %v479
      %v492 = vmul.f32 %v456, %v479
      %v493 = vmul.f32 %v457, %v479
      %v494 = vmul.f32 %v458, %v479
      %v495 = vmul.f32 %v459, %v479
      %v496 = vmul.f32 %v460, %v479
      %v497 = vmul.f32 %v461, %v479
      %v498 = vmul.f32 %v462, %v479
      %v499 = vmul.f32 %v463, %v479
      %v500 = vmul.f32 %v464, %v479
      %v501 = vmul.f32 %v465, %v479
      %v502 = vmul.f32 %v466, %v479
      %v503 = vmul.f32 %v467, %v479
      %v504 = vmul.f32 %v468, %v479
      %v505 = vmul.f32 %v469, %v479
      %v506 = vmul.f32 %v470, %v479
      %v507 = vmul.f32 %v471, %v479
      %v508 = vmul.f32 %v472, %v479
      %v509 = vmul.f32 %v473, %v479
      %v510 = vmul.f32 %v474, %v479
      %v511 = vmul.f32 %v475, %v479
      %v512 = vmul.f32 %v476, %v479
      %v513 = vld [vmem:[%s5] sm:$0x1]
      %v515 = vperm.slane %v513, 0
      %v517 = vadd.f32 %v481, %v515
      %v518 = vadd.f32 %v482, %v515
      %v519 = vadd.f32 %v483, %v515
      %v520 = vadd.f32 %v484, %v515
      %v521 = vadd.f32 %v485, %v515
      %v522 = vadd.f32 %v486, %v515
      %v523 = vadd.f32 %v487, %v515
      %v524 = vadd.f32 %v488, %v515
      %v525 = vadd.f32 %v489, %v515
      %v526 = vadd.f32 %v490, %v515
      %v527 = vadd.f32 %v491, %v515
      %v528 = vadd.f32 %v492, %v515
      %v529 = vadd.f32 %v493, %v515
      %v530 = vadd.f32 %v494, %v515
      %v531 = vadd.f32 %v495, %v515
      %v532 = vadd.f32 %v496, %v515
      %v533 = vadd.f32 %v497, %v515
      %v534 = vadd.f32 %v498, %v515
      %v535 = vadd.f32 %v499, %v515
      %v536 = vadd.f32 %v500, %v515
      %v537 = vadd.f32 %v501, %v515
      %v538 = vadd.f32 %v502, %v515
      %v539 = vadd.f32 %v503, %v515
      %v540 = vadd.f32 %v504, %v515
      %v541 = vadd.f32 %v505, %v515
      %v542 = vadd.f32 %v506, %v515
      %v543 = vadd.f32 %v507, %v515
      %v544 = vadd.f32 %v508, %v515
      %v545 = vadd.f32 %v509, %v515
      %v546 = vadd.f32 %v510, %v515
      %v547 = vadd.f32 %v511, %v515
      %v548 = vadd.f32 %v512, %v515
      %v549 = vadd.f32 %v381, %v517
      %v550 = vadd.f32 %v382, %v518
      %v551 = vadd.f32 %v383, %v519
      %v552 = vadd.f32 %v384, %v520
      %v553 = vadd.f32 %v385, %v521
      %v554 = vadd.f32 %v386, %v522
      %v555 = vadd.f32 %v387, %v523
      %v556 = vadd.f32 %v388, %v524
      %v557 = vadd.f32 %v389, %v525
      %v558 = vadd.f32 %v390, %v526
      %v559 = vadd.f32 %v391, %v527
      %v560 = vadd.f32 %v392, %v528
      %v561 = vadd.f32 %v393, %v529
      %v562 = vadd.f32 %v394, %v530
      %v563 = vadd.f32 %v395, %v531
      %v564 = vadd.f32 %v396, %v532
      %v565 = vadd.f32 %v397, %v533
      %v566 = vadd.f32 %v398, %v534
      %v567 = vadd.f32 %v399, %v535
      %v568 = vadd.f32 %v400, %v536
      %v569 = vadd.f32 %v401, %v537
      %v570 = vadd.f32 %v402, %v538
      %v571 = vadd.f32 %v403, %v539
      %v572 = vadd.f32 %v404, %v540
      %v573 = vadd.f32 %v405, %v541
      %v574 = vadd.f32 %v406, %v542
      %v575 = vadd.f32 %v407, %v543
      %v576 = vadd.f32 %v408, %v544
      %v577 = vadd.f32 %v409, %v545
      %v578 = vadd.f32 %v410, %v546
      %v579 = vadd.f32 %v411, %v547
      %v580 = vadd.f32 %v412, %v548
      %v581 = vmax.f32 %v549, 0.0
      %v582 = vmax.f32 %v550, 0.0
      %v583 = vmax.f32 %v551, 0.0
      %v584 = vmax.f32 %v552, 0.0
      %v585 = vmax.f32 %v553, 0.0
      %v586 = vmax.f32 %v554, 0.0
      %v587 = vmax.f32 %v555, 0.0
      %v588 = vmax.f32 %v556, 0.0
      %v589 = vmax.f32 %v557, 0.0
      %v590 = vmax.f32 %v558, 0.0
      %v591 = vmax.f32 %v559, 0.0
      %v592 = vmax.f32 %v560, 0.0
      %v593 = vmax.f32 %v561, 0.0
      %v594 = vmax.f32 %v562, 0.0
      %v595 = vmax.f32 %v563, 0.0
      %v596 = vmax.f32 %v564, 0.0
      %v597 = vmax.f32 %v565, 0.0
      %v598 = vmax.f32 %v566, 0.0
      %v599 = vmax.f32 %v567, 0.0
      %v600 = vmax.f32 %v568, 0.0
      %v601 = vmax.f32 %v569, 0.0
      %v602 = vmax.f32 %v570, 0.0
      %v603 = vmax.f32 %v571, 0.0
      %v604 = vmax.f32 %v572, 0.0
      %v605 = vmax.f32 %v573, 0.0
      %v606 = vmax.f32 %v574, 0.0
      %v607 = vmax.f32 %v575, 0.0
      %v608 = vmax.f32 %v576, 0.0
      %v609 = vmax.f32 %v577, 0.0
      %v610 = vmax.f32 %v578, 0.0
      %v611 = vmax.f32 %v579, 0.0
      %v612 = vmax.f32 %v580, 0.0
      %v613 = vpack.c.bf16 %v581, %v581
      %v614 = vpack.c.bf16 %v582, %v582
      %v615 = vpack.c.bf16 %v583, %v583
      %v616 = vpack.c.bf16 %v584, %v584
      %v617 = vpack.c.bf16 %v585, %v585
      %v618 = vpack.c.bf16 %v586, %v586
      %v619 = vpack.c.bf16 %v587, %v587
      %v620 = vpack.c.bf16 %v588, %v588
      %v621 = vpack.c.bf16 %v589, %v589
      %v622 = vpack.c.bf16 %v590, %v590
      %v623 = vpack.c.bf16 %v591, %v591
      %v624 = vpack.c.bf16 %v592, %v592
      %v625 = vpack.c.bf16 %v593, %v593
      %v626 = vpack.c.bf16 %v594, %v594
      %v627 = vpack.c.bf16 %v595, %v595
      %v628 = vpack.c.bf16 %v596, %v596
      %v629 = vpack.c.bf16 %v597, %v597
      %v630 = vpack.c.bf16 %v598, %v598
      %v631 = vpack.c.bf16 %v599, %v599
      %v632 = vpack.c.bf16 %v600, %v600
      %v633 = vpack.c.bf16 %v601, %v601
      %v634 = vpack.c.bf16 %v602, %v602
      %v635 = vpack.c.bf16 %v603, %v603
      %v636 = vpack.c.bf16 %v604, %v604
      %v637 = vpack.c.bf16 %v605, %v605
      %v638 = vpack.c.bf16 %v606, %v606
      %v639 = vpack.c.bf16 %v607, %v607
      %v640 = vpack.c.bf16 %v608, %v608
      %v641 = vpack.c.bf16 %v609, %v609
      %v642 = vpack.c.bf16 %v610, %v610
      %v643 = vpack.c.bf16 %v611, %v611
      %v644 = vpack.c.bf16 %v612, %v612
      %645 = vst [vmem:[%s275] sm:$0xf] %v613
      %646 = vst [vmem:[%s275 + $0x4] sm:$0xf] %v614
      %647 = vst [vmem:[%s275 + $0x8] sm:$0xf] %v615
      %648 = vst [vmem:[%s275 + $0xc] sm:$0xf] %v616
      %649 = vst [vmem:[%s275 + $0x10] sm:$0xf] %v617
      %650 = vst [vmem:[%s275 + $0x14] sm:$0xf] %v618
      %651 = vst [vmem:[%s275 + $0x18] sm:$0xf] %v619
      %652 = vst [vmem:[%s275 + $0x1c] sm:$0xf] %v620
      %653 = vst [vmem:[%s275 + $0x20] sm:$0xf] %v621
      %654 = vst [vmem:[%s275 + $0x24] sm:$0xf] %v622
      %655 = vst [vmem:[%s275 + $0x28] sm:$0xf] %v623
      %656 = vst [vmem:[%s275 + $0x2c] sm:$0xf] %v624
      %657 = vst [vmem:[%s275 + $0x30] sm:$0xf] %v625
      %658 = vst [vmem:[%s275 + $0x34] sm:$0xf] %v626
      %659 = vst [vmem:[%s275 + $0x38] sm:$0xf] %v627
      %660 = vst [vmem:[%s275 + $0x3c] sm:$0xf] %v628
      %661 = vst [vmem:[%s275 + $0x40] sm:$0xf] %v629
      %662 = vst [vmem:[%s275 + $0x44] sm:$0xf] %v630
      %663 = vst [vmem:[%s275 + $0x48] sm:$0xf] %v631
      %664 = vst [vmem:[%s275 + $0x4c] sm:$0xf] %v632
      %665 = vst [vmem:[%s275 + $0x50] sm:$0xf] %v633
      %666 = vst [vmem:[%s275 + $0x54] sm:$0xf] %v634
      %667 = vst [vmem:[%s275 + $0x58] sm:$0xf] %v635
      %668 = vst [vmem:[%s275 + $0x5c] sm:$0xf] %v636
      %669 = vst [vmem:[%s275 + $0x60] sm:$0xf] %v637
      %670 = vst [vmem:[%s275 + $0x64] sm:$0xf] %v638
      %671 = vst [vmem:[%s275 + $0x68] sm:$0xf] %v639
      %672 = vst [vmem:[%s275 + $0x6c] sm:$0xf] %v640
      %673 = vst [vmem:[%s275 + $0x70] sm:$0xf] %v641
      %674 = vst [vmem:[%s275 + $0x74] sm:$0xf] %v642
      %675 = vst [vmem:[%s275 + $0x78] sm:$0xf] %v643
      %676 = vst [vmem:[%s275 + $0x7c] sm:$0xf] %v644
      %s677 = smul.u32 32, %s17
      %p678 = scmp.lt.s32.totalorder %s677, 63
      %s679 = scalar_select %p678, %s677, 63
      %s680 = smul.addr %s679, 4
      %s681 = scalar_lea.vmem %s6, %s680
      // Predicated region
      $region45: #{_lambda_.14} parent=43 // pred_check
        %p682 = pneg %p171
      $region46: #{_lambda_.14} parent=43 // pred_check_branch
        %684 = sbr.rel (%p682) target = $region48
      $region47: #{_lambda_.14} parent=43 // pred_region
        %s685 = smul.u32 32, %s17
      $region48: #{_lambda_.14} parent=43 // pred_fallthru
        _
    $region44: #{_lambda_.14} parent=5 // pred_fallthru
      _
    %p686 = scmp.le.s32.totalorder 2, %s12
    // Predicated region
    $region49: #{_lambda_.14} parent=5 // pred_check
      %p687 = pneg %p686
    $region50: #{_lambda_.14} parent=5 // pred_check_branch
      %689 = sbr.rel (%p687) target = $region52
    $region51: #{_lambda_.14} parent=5 // pred_region
      %s690 = ssub.s32 %s12, 2
      // Predicated region
      $region53: #{_lambda_.14} parent=51 // pred_check
        %p691 = pneg %p177
      $region54: #{_lambda_.14} parent=51 // pred_check_branch
        %693 = sbr.rel (%p691) target = $region56
      $region55: #{_lambda_.14} parent=51 // pred_region
        %s694 = smul.u32 32, %s18
        %p695 = scmp.lt.s32.totalorder %s694, 63
        %s696 = scalar_select %p695, %s694, 63
        %s697 = smul.addr %s696, 4
        %s698 = scalar_lea.vmem %s6, %s697
      $region56: #{_lambda_.14} parent=51 // pred_fallthru
        _
    $region52: #{_lambda_.14} parent=5 // pred_fallthru
      _
  $region6: #{_lambda_.14} parent=0 // loop_footer
    %s16 = sadd.s32 1, %s12
  $region7: #{_lambda_.14} parent=0 // loop_footer_branch
    %11 = sbr.rel target = $region3
  $region8: #{_lambda_.14} parent=0 // loop_exit
    _

// kernel: _lambda_.15
$region0: #{_lambda_.15}
  #allocation0 [shape = 'u32[]', space=smem, size = 0x4, offset = 0x4, fixed_abs, tag = 'smem constant byte address 0x4 - core index']
  #allocation1 [shape = 'u32[72,128]{1,0:T(1,128)}', space=vmem, size = 0x9000, scoped, tag = 'internal scratch']
  %s0 = inlined_call_operand.vmem [shape: bf16[128,72], index: 0, kind: input, shape index: {}]
  %s1 = inlined_call_operand.vmem [shape: bf16[72,128], index: 1, kind: input, shape index: {}]
  %s2 = inlined_call_operand.vmem [shape: bf16[128,128], index: 2, kind: output, shape index: {0}]
  %s3 = inlined_call_operand.vmem [shape: f32[2,1,128], index: 3, kind: output, shape index: {1}]
  %s4 = inlined_call_operand.vmem [shape: f32[2,1,128], index: 4, kind: output, shape index: {2}]
  %5 = xla_tuple %s2, %s3, %s4
  %s6 = sld [smem:[#allocation0]]
  $region57: #{_lambda_.15} parent=0
    _
  %s8 = ssub.s32 1, %s6
  %s9 = scalar_select 0, %s8, %s6
  loop: start=0, step=1, limit=4
  $region2: #{_lambda_.15} parent=0 // loop_pre_header
    _
  $region3: #{_lambda_.15} parent=0 // loop_header
    %s11 = sphi 0, %s15
    %p12 = scmp.ge.s32.totalorder %s11, 4
    %s21 = sphi 0, %s23
    %s24 = sphi 0, %s21
    %s25 = sphi 0, %s24
    %s41 = sphi 0, %s25
    %s45 = sphi 0, %s45
    %s47 = sphi 0, %s45
    %s48 = sphi 0, %s47
    %s62 = sphi 0, %s48
    %s68 = sphi 0, %s70
    %s71 = sphi 0, %s68
    %s72 = sphi 0, %s71
    %s88 = sphi 0, %s72
    %s94 = sphi 0, %s96
    %s97 = sphi 0, %s94
    %s98 = sphi 0, %s97
    %s114 = sphi 0, %s98
    %s120 = sphi 0, %s122
    %s123 = sphi 0, %s120
    %s124 = sphi 0, %s123
    %s140 = sphi 0, %s124
  $region4: #{_lambda_.15} parent=0 // loop_header_branch
    %14 = sbr.rel (%p12) target = $region8
  $region5: #{_lambda_.15} parent=0 // loop_body
    %s16 = ssub.s32 %s11, 1
    %s17 = ssub.s32 %s11, 2
    %s18 = sadd.s32 %s11, 1
    %s19 = ssub.s32 %s11, %s18
    %p20 = scmp.eq.s32.totalorder %s19, 0
    %s22 = sadd.s32 %s21, 1
    %s23 = scalar_select %p20, %s21, %s22
    %p26 = pneg %p20
    %p27 = scmp.eq.s32.totalorder %s11, 1
    %p28 = por %p26, %p27
    %p29 = scmp.ne.s32.totalorder %s21, %s24
    %p30 = scmp.eq.s32.totalorder %s11, 0
    %p31 = por %p29, %p30
    %p32 = scmp.ne.s32.totalorder %s21, %s24
    %p33 = scmp.eq.s32.totalorder %s16, 1
    %p34 = por %p32, %p33
    %p35 = scmp.ne.s32.totalorder %s24, %s25
    %p36 = scmp.eq.s32.totalorder %s16, 0
    %p37 = por %p35, %p36
    %p38 = scmp.ne.s32.totalorder %s24, %s25
    %p39 = scmp.eq.s32.totalorder %s17, 1
    %p40 = por %p38, %p39
    %p42 = scmp.ne.s32.totalorder %s25, %s41
    %p43 = scmp.eq.s32.totalorder %s17, 0
    %p44 = por %p42, %p43
    %s46 = sadd.s32 %s45, 1
    %p49 = scmp.eq.s32.totalorder %s11, 1
    %p50 = scmp.ne.s32.totalorder %s45, %s47
    %p51 = scmp.eq.s32.totalorder %s11, 0
    %p52 = por %p50, %p51
    %p53 = scmp.ne.s32.totalorder %s45, %s47
    %p54 = scmp.eq.s32.totalorder %s16, 1
    %p55 = por %p53, %p54
    %p56 = scmp.ne.s32.totalorder %s47, %s48
    %p57 = scmp.eq.s32.totalorder %s16, 0
    %p58 = por %p56, %p57
    %p59 = scmp.ne.s32.totalorder %s47, %s48
    %p60 = scmp.eq.s32.totalorder %s17, 1
    %p61 = por %p59, %p60
    %p63 = scmp.ne.s32.totalorder %s48, %s62
    %p64 = scmp.eq.s32.totalorder %s17, 0
    %p65 = por %p63, %p64
    %s66 = ssub.s32 %s11, %s18
    %p67 = scmp.eq.s32.totalorder %s66, 0
    %s69 = sadd.s32 %s68, 1
    %s70 = scalar_select %p67, %s68, %s69
    %p73 = pneg %p67
    %p74 = scmp.eq.s32.totalorder %s11, 1
    %p75 = por %p73, %p74
    %p76 = scmp.ne.s32.totalorder %s68, %s71
    %p77 = scmp.eq.s32.totalorder %s11, 0
    %p78 = por %p76, %p77
    %p79 = scmp.ne.s32.totalorder %s68, %s71
    %p80 = scmp.eq.s32.totalorder %s16, 1
    %p81 = por %p79, %p80
    %p82 = scmp.ne.s32.totalorder %s71, %s72
    %p83 = scmp.eq.s32.totalorder %s16, 0
    %p84 = por %p82, %p83
    %p85 = scmp.ne.s32.totalorder %s71, %s72
    %p86 = scmp.eq.s32.totalorder %s17, 1
    %p87 = por %p85, %p86
    %p89 = scmp.ne.s32.totalorder %s72, %s88
    %p90 = scmp.eq.s32.totalorder %s17, 0
    %p91 = por %p89, %p90
    %s92 = ssub.s32 %s11, %s18
    %p93 = scmp.eq.s32.totalorder %s92, 0
    %s95 = sadd.s32 %s94, 1
    %s96 = scalar_select %p93, %s94, %s95
    %p99 = pneg %p93
    %p100 = scmp.eq.s32.totalorder %s11, 1
    %p101 = por %p99, %p100
    %p102 = scmp.ne.s32.totalorder %s94, %s97
    %p103 = scmp.eq.s32.totalorder %s11, 0
    %p104 = por %p102, %p103
    %p105 = scmp.ne.s32.totalorder %s94, %s97
    %p106 = scmp.eq.s32.totalorder %s16, 1
    %p107 = por %p105, %p106
    %p108 = scmp.ne.s32.totalorder %s97, %s98
    %p109 = scmp.eq.s32.totalorder %s16, 0
    %p110 = por %p108, %p109
    %p111 = scmp.ne.s32.totalorder %s97, %s98
    %p112 = scmp.eq.s32.totalorder %s17, 1
    %p113 = por %p111, %p112
    %p115 = scmp.ne.s32.totalorder %s98, %s114
    %p116 = scmp.eq.s32.totalorder %s17, 0
    %p117 = por %p115, %p116
    %s118 = ssub.s32 %s11, %s18
    %p119 = scmp.eq.s32.totalorder %s118, 0
    %s121 = sadd.s32 %s120, 1
    %s122 = scalar_select %p119, %s120, %s121
    %p125 = pneg %p119
    %p126 = scmp.eq.s32.totalorder %s11, 1
    %p127 = por %p125, %p126
    %p128 = scmp.ne.s32.totalorder %s120, %s123
    %p129 = scmp.eq.s32.totalorder %s11, 0
    %p130 = por %p128, %p129
    %p131 = scmp.ne.s32.totalorder %s120, %s123
    %p132 = scmp.eq.s32.totalorder %s16, 1
    %p133 = por %p131, %p132
    %p134 = scmp.ne.s32.totalorder %s123, %s124
    %p135 = scmp.eq.s32.totalorder %s16, 0
    %p136 = por %p134, %p135
    %p137 = scmp.ne.s32.totalorder %s123, %s124
    %p138 = scmp.eq.s32.totalorder %s17, 1
    %p139 = por %p137, %p138
    %p141 = scmp.ne.s32.totalorder %s124, %s140
    %p142 = scmp.eq.s32.totalorder %s17, 0
    %p143 = por %p141, %p142
    %p144 = scmp.le.s32.totalorder 1, %s11
    %p145 = scmp.lt.s32.totalorder %s11, 3
    %p146 = pnand %p144, %p145
    %p147 = pneg %p146
    // Predicated region
    $region9: #{_lambda_.15} parent=5 // pred_check
      _
    $region10: #{_lambda_.15} parent=5 // pred_check_branch
      %149 = sbr.rel (%p146) target = $region12
    $region11: #{_lambda_.15} parent=5 // pred_region
      %s150 = ssub.s32 %s11, 1
      // Predicated region
      $region13: #{_lambda_.15} parent=11 // pred_check
        %p151 = pneg %p58
      $region14: #{_lambda_.15} parent=11 // pred_check_branch
        %153 = sbr.rel (%p151) target = $region16
      $region15: #{_lambda_.15} parent=11 // pred_region
        _
      $region16: #{_lambda_.15} parent=11 // pred_fallthru
        _
    $region12: #{_lambda_.15} parent=5 // pred_fallthru
      _
    %p154 = scmp.lt.s32.totalorder %s11, 2
    // Predicated region
    $region17: #{_lambda_.15} parent=5 // pred_check
      %p155 = pneg %p154
    $region18: #{_lambda_.15} parent=5 // pred_check_branch
      %157 = sbr.rel (%p155) target = $region20
    $region19: #{_lambda_.15} parent=5 // pred_region
      // Predicated region
      $region21: #{_lambda_.15} parent=19 // pred_check
        %p158 = pneg %p31
      $region22: #{_lambda_.15} parent=19 // pred_check_branch
        %160 = sbr.rel (%p158) target = $region24
      $region23: #{_lambda_.15} parent=19 // pred_region
        %s161 = smul.u32 8, %s11
        %p162 = scmp.lt.s32.totalorder %s161, 15
        %s163 = scalar_select %p162, %s161, 15
        %s164 = smul.addr %s163, 4
        %s165 = scalar_lea.vmem %s0, %s164
        %s166 = smul.u32 8, %s11
      $region24: #{_lambda_.15} parent=19 // pred_fallthru
        _
    $region20: #{_lambda_.15} parent=5 // pred_fallthru
      _
    %p167 = scmp.le.s32.totalorder 1, %s11
    %p168 = scmp.lt.s32.totalorder %s11, 3
    %p169 = pnand %p167, %p168
    %p170 = pneg %p169
    // Predicated region
    $region25: #{_lambda_.15} parent=5 // pred_check
      _
    $region26: #{_lambda_.15} parent=5 // pred_check_branch
      %172 = sbr.rel (%p169) target = $region28
    $region27: #{_lambda_.15} parent=5 // pred_region
      %s173 = ssub.s32 %s11, 1
      %s174 = smul.u32 8, %s16
      %p175 = scmp.lt.s32.totalorder %s174, 15
      %s176 = scalar_select %p175, %s174, 15
      %s177 = smul.addr %s176, 4
      %s178 = scalar_lea.vmem %s0, %s177
      %p179 = pneg %p37
      %p180 = pneg %p34
      %p181 = pneg %p58
      %p182 = pneg %p55
      %p183 = pneg %p84
      %p184 = pneg %p81
      %s185 = smul.u32 8, %s16
      %p186 = scmp.lt.s32.totalorder %s185, 15
      %s187 = scalar_select %p186, %s185, 15
      %s188 = smul.addr %s187, 4
      %s189 = scalar_lea.vmem %s2, %s188
      %p190 = pneg %p110
      %p191 = pneg %p107
      %p192 = scmp.lt.s32.totalorder %s16, 1
      %s193 = scalar_select %p192, %s16, 1
      %s194 = scalar_lea.vmem %s3, %s193
      %p195 = pneg %p136
      %p196 = pneg %p133
      %p197 = scmp.lt.s32.totalorder %s16, 1
      %s198 = scalar_select %p197, %s16, 1
      %s199 = scalar_lea.vmem %s4, %s198
      %s200 = smul.u32 8, %s16
      %p201 = scmp.lt.s32.totalorder %s200, 15
      %s202 = scalar_select %p201, %s200, 15
      %s203 = smul.addr %s202, 4
      %s204 = scalar_lea.vmem %s0, %s203
      %s205 = smul.u32 8, %s16
      %s206 = smul.u32 8, %s16
      %p207 = scmp.lt.s32.totalorder %s206, 15
      %s208 = scalar_select %p207, %s206, 15
      %s209 = smul.addr %s208, 4
      %s210 = scalar_lea.vmem %s2, %s209
      %s211 = smul.u32 8, %s16
      %p212 = scmp.lt.s32.totalorder %s16, 1
      %s213 = scalar_select %p212, %s16, 1
      %s214 = scalar_lea.vmem %s3, %s213
      %p215 = scmp.lt.s32.totalorder %s16, 1
      %s216 = scalar_select %p215, %s16, 1
      %s217 = scalar_lea.vmem %s4, %s216
      %v219 = vld [vmem:[%s204] sm:$0xf]
      %v220 = vld [vmem:[%s204 + $0x4] sm:$0xf]
      %v221 = vld [vmem:[%s204 + $0x8] sm:$0xf]
      %v222 = vld [vmem:[%s204 + $0xc] sm:$0xf]
      %v223 = vld [vmem:[%s204 + $0x10] sm:$0xf]
      %v224 = vld [vmem:[%s204 + $0x14] sm:$0xf]
      %v225 = vld [vmem:[%s204 + $0x18] sm:$0xf]
      %v226 = vld [vmem:[%s204 + $0x1c] sm:$0xf]
      %v227 = vld [vmem:[%s1] sm:$0xf]
      %v228 = vld [vmem:[%s1 + $0x4] sm:$0xf]
      %v229 = vld [vmem:[%s1 + $0x8] sm:$0xf]
      %v230 = vld [vmem:[%s1 + $0xc] sm:$0xf]
      %v231 = vld [vmem:[%s1 + $0x10] sm:$0xf]
      %v232 = vld [vmem:[%s1 + $0x14] sm:$0xf]
      %v233 = vld [vmem:[%s1 + $0x18] sm:$0xf]
      %v234 = vld [vmem:[%s1 + $0x1c] sm:$0xf]
      %v235 = vld [vmem:[%s1 + $0x20] sm:$0xf]
      %v244 = vunpack.c.l.b16 %v219
      %v245 = vunpack.c.l.b16 %v220
      %v246 = vunpack.c.l.b16 %v221
      %v247 = vunpack.c.l.b16 %v222
      %v248 = vunpack.c.l.b16 %v223
      %v249 = vunpack.c.l.b16 %v224
      %v250 = vunpack.c.l.b16 %v225
      %v251 = vunpack.c.l.b16 %v226
      %v252 = vpack.c.b16 %v245, %v244
      %v253 = vpack.c.b16 %v247, %v246
      %v254 = vpack.c.b16 %v249, %v248
      %v255 = vpack.c.b16 %v251, %v250
      %v265 = vunpack.c.l.b16 %v227
      %v266 = vunpack.c.l.b16 %v228
      %v267 = vunpack.c.l.b16 %v229
      %v268 = vunpack.c.l.b16 %v230
      %v269 = vunpack.c.l.b16 %v231
      %v270 = vunpack.c.l.b16 %v232
      %v271 = vunpack.c.l.b16 %v233
      %v272 = vunpack.c.l.b16 %v234
      %v273 = vunpack.c.l.b16 %v235
      %v274 = vpack.c.b16 %v266, %v265
      %v275 = vpack.c.b16 %v268, %v267
      %v276 = vpack.c.b16 %v270, %v269
      %v277 = vpack.c.b16 %v272, %v271
      %v278 = vpack.c.b16 %v273, %v273
      %vm283 = vcmask 588800
      %v285 = vsel %vm283, %v252, 0
      %v288 = vsel %vm283, %v253, 0
      %v291 = vsel %vm283, %v254, 0
      %v294 = vsel %vm283, %v255, 0
      %vm296 = vcmask 1043456
      %v298 = vsel %vm296, %v278, 0
      %300 = vmatpush.bf16.msra.mxu0 0
      %301 = vmatpush.bf16.msra.mxu0 0
      %302 = vmatpush.bf16.msra.mxu0 0
      %303 = vmatpush.bf16.msra.mxu0 %v298
      %304 = vmatpush.bf16.msra.mxu0 %v277
      %305 = vmatpush.bf16.msra.mxu0 %v276
      %306 = vmatpush.bf16.msra.mxu0 %v275
      %307 = vmatpush.bf16.msra.mxu0 %v274
      %308 = vmatmul.bf16.gmra.mxu0 %v285
      %v309 = vpop.f32.mrf.mxu0
      %v310 = vadd.f32 0.0, %v309
      %v311 = vpop.f32.mrf.mxu0
      %v312 = vadd.f32 0.0, %v311
      %313 = vmatmul.bf16.gmra.mxu0 %v288
      %v314 = vpop.f32.mrf.mxu0
      %v315 = vadd.f32 0.0, %v314
      %v316 = vpop.f32.mrf.mxu0
      %v317 = vadd.f32 0.0, %v316
      %318 = vmatmul.bf16.gmra.mxu0 %v291
      %v319 = vpop.f32.mrf.mxu0
      %v320 = vadd.f32 0.0, %v319
      %v321 = vpop.f32.mrf.mxu0
      %v322 = vadd.f32 0.0, %v321
      %323 = vmatmul.bf16.gmra.mxu0 %v294
      %v324 = vpop.f32.mrf.mxu0
      %v325 = vadd.f32 0.0, %v324
      %v326 = vpop.f32.mrf.mxu0
      %v327 = vadd.f32 0.0, %v326
      %328 = vdwg.mxu0
      %v329 = vpack.c.bf16 %v310, %v310
      %v330 = vpack.c.bf16 %v312, %v312
      %v331 = vpack.c.bf16 %v315, %v315
      %v332 = vpack.c.bf16 %v317, %v317
      %v333 = vpack.c.bf16 %v320, %v320
      %v334 = vpack.c.bf16 %v322, %v322
      %v335 = vpack.c.bf16 %v325, %v325
      %v336 = vpack.c.bf16 %v327, %v327
      %337 = vst [vmem:[%s210] sm:$0xf] %v329
      %338 = vst [vmem:[%s210 + $0x4] sm:$0xf] %v330
      %339 = vst [vmem:[%s210 + $0x8] sm:$0xf] %v331
      %340 = vst [vmem:[%s210 + $0xc] sm:$0xf] %v332
      %341 = vst [vmem:[%s210 + $0x10] sm:$0xf] %v333
      %342 = vst [vmem:[%s210 + $0x14] sm:$0xf] %v334
      %343 = vst [vmem:[%s210 + $0x18] sm:$0xf] %v335
      %344 = vst [vmem:[%s210 + $0x1c] sm:$0xf] %v336
      %v345 = vadd.f32 %v310, %v312
      %v346 = vadd.f32 %v345, %v315
      %v347 = vadd.f32 %v346, %v317
      %v348 = vadd.f32 %v347, %v320
      %v349 = vadd.f32 %v348, %v322
      %v350 = vadd.f32 %v349, %v325
      %v351 = vadd.f32 %v350, %v327
      %v352 = vrot.slane %v351, 4
      %v353 = vadd.f32 %v351, %v352
      %v354 = vrot.slane %v353, 2
      %v355 = vadd.f32 %v353, %v354
      %v356 = vrot.slane %v355, 1
      %v357 = vadd.f32 %v355, %v356
      %358 = vst [vmem:[%s214] sm:$0x1] %v357
      %v359 = vmul.f32 %v310, %v310
      %v360 = vmul.f32 %v312, %v312
      %v361 = vmul.f32 %v315, %v315
      %v362 = vmul.f32 %v317, %v317
      %v363 = vmul.f32 %v320, %v320
      %v364 = vmul.f32 %v322, %v322
      %v365 = vmul.f32 %v325, %v325
      %v366 = vmul.f32 %v327, %v327
      %v367 = vadd.f32 %v359, %v360
      %v368 = vadd.f32 %v367, %v361
      %v369 = vadd.f32 %v368, %v362
      %v370 = vadd.f32 %v369, %v363
      %v371 = vadd.f32 %v370, %v364
      %v372 = vadd.f32 %v371, %v365
      %v373 = vadd.f32 %v372, %v366
      %v374 = vrot.slane %v373, 4
      %v375 = vadd.f32 %v373, %v374
      %v376 = vrot.slane %v375, 2
      %v377 = vadd.f32 %v375, %v376
      %v378 = vrot.slane %v377, 1
      %v379 = vadd.f32 %v377, %v378
      %380 = vst [vmem:[%s217] sm:$0x1] %v379
      %s381 = smul.u32 8, %s16
      %p382 = scmp.lt.s32.totalorder %s381, 15
      %s383 = scalar_select %p382, %s381, 15
      %s384 = smul.addr %s383, 4
      %s385 = scalar_lea.vmem %s2, %s384
      %p386 = scmp.lt.s32.totalorder %s16, 1
      %s387 = scalar_select %p386, %s16, 1
      %s388 = scalar_lea.vmem %s3, %s387
      %p389 = scmp.lt.s32.totalorder %s16, 1
      %s390 = scalar_select %p389, %s16, 1
      %s391 = scalar_lea.vmem %s4, %s390
      // Predicated region
      $region29: #{_lambda_.15} parent=27 // pred_check
        %p392 = pneg %p81
      $region30: #{_lambda_.15} parent=27 // pred_check_branch
        %394 = sbr.rel (%p392) target = $region32
      $region31: #{_lambda_.15} parent=27 // pred_region
        %s395 = smul.u32 8, %s16
      $region32: #{_lambda_.15} parent=27 // pred_fallthru
        _
      // Predicated region
      $region33: #{_lambda_.15} parent=27 // pred_check
        %p396 = pneg %p107
      $region34: #{_lambda_.15} parent=27 // pred_check_branch
        %398 = sbr.rel (%p396) target = $region36
      $region35: #{_lambda_.15} parent=27 // pred_region
        _
      $region36: #{_lambda_.15} parent=27 // pred_fallthru
        _
      // Predicated region
      $region37: #{_lambda_.15} parent=27 // pred_check
        %p399 = pneg %p133
      $region38: #{_lambda_.15} parent=27 // pred_check_branch
        %401 = sbr.rel (%p399) target = $region40
      $region39: #{_lambda_.15} parent=27 // pred_region
        _
      $region40: #{_lambda_.15} parent=27 // pred_fallthru
        _
    $region28: #{_lambda_.15} parent=5 // pred_fallthru
      _
    %p402 = scmp.le.s32.totalorder 2, %s11
    // Predicated region
    $region41: #{_lambda_.15} parent=5 // pred_check
      %p403 = pneg %p402
    $region42: #{_lambda_.15} parent=5 // pred_check_branch
      %405 = sbr.rel (%p403) target = $region44
    $region43: #{_lambda_.15} parent=5 // pred_region
      %s406 = ssub.s32 %s11, 2
      // Predicated region
      $region45: #{_lambda_.15} parent=43 // pred_check
        %p407 = pneg %p87
      $region46: #{_lambda_.15} parent=43 // pred_check_branch
        %409 = sbr.rel (%p407) target = $region48
      $region47: #{_lambda_.15} parent=43 // pred_region
        %s410 = smul.u32 8, %s17
        %p411 = scmp.lt.s32.totalorder %s410, 15
        %s412 = scalar_select %p411, %s410, 15
        %s413 = smul.addr %s412, 4
        %s414 = scalar_lea.vmem %s2, %s413
      $region48: #{_lambda_.15} parent=43 // pred_fallthru
        _
      // Predicated region
      $region49: #{_lambda_.15} parent=43 // pred_check
        %p415 = pneg %p113
      $region50: #{_lambda_.15} parent=43 // pred_check_branch
        %417 = sbr.rel (%p415) target = $region52
      $region51: #{_lambda_.15} parent=43 // pred_region
        %p418 = scmp.lt.s32.totalorder %s17, 1
        %s419 = scalar_select %p418, %s17, 1
        %s420 = scalar_lea.vmem %s3, %s419
      $region52: #{_lambda_.15} parent=43 // pred_fallthru
        _
      // Predicated region
      $region53: #{_lambda_.15} parent=43 // pred_check
        %p421 = pneg %p139
      $region54: #{_lambda_.15} parent=43 // pred_check_branch
        %423 = sbr.rel (%p421) target = $region56
      $region55: #{_lambda_.15} parent=43 // pred_region
        %p424 = scmp.lt.s32.totalorder %s17, 1
        %s425 = scalar_select %p424, %s17, 1
        %s426 = scalar_lea.vmem %s4, %s425
      $region56: #{_lambda_.15} parent=43 // pred_fallthru
        _
    $region44: #{_lambda_.15} parent=5 // pred_fallthru
      _
  $region6: #{_lambda_.15} parent=0 // loop_footer
    %s15 = sadd.s32 1, %s11
  $region7: #{_lambda_.15} parent=0 // loop_footer_branch
    %10 = sbr.rel target = $region3
  $region8: #{_lambda_.15} parent=0 // loop_exit
    _

// kernel: _lambda_.16
$region0: #{_lambda_.16}
  #allocation0 [shape = 'u32[]', space=smem, size = 0x4, offset = 0x4, fixed_abs, tag = 'smem constant byte address 0x4 - core index']
  #allocation1 [shape = 'u32[72,128]{1,0:T(1,128)}', space=vmem, size = 0x9000, scoped, tag = 'internal scratch']
  %s0 = inlined_call_operand.vmem [shape: bf16[128,128], index: 0, kind: input, shape index: {}]
  %s1 = inlined_call_operand.vmem [shape: f32[1,128], index: 1, kind: input, shape index: {}]
  %s2 = inlined_call_operand.vmem [shape: f32[1,128], index: 2, kind: input, shape index: {}]
  %s3 = inlined_call_operand.vmem [shape: bf16[128,128], index: 3, kind: output, shape index: {}]
  %s4 = sld [smem:[#allocation0]]
  $region45: #{_lambda_.16} parent=0
    _
  %s6 = ssub.s32 1, %s4
  %s7 = scalar_select 0, %s6, %s4
  loop: start=0, step=1, limit=4
  $region2: #{_lambda_.16} parent=0 // loop_pre_header
    _
  $region3: #{_lambda_.16} parent=0 // loop_header
    %s9 = sphi 0, %s13
    %p10 = scmp.ge.s32.totalorder %s9, 4
    %s19 = sphi 0, %s21
    %s22 = sphi 0, %s19
    %s23 = sphi 0, %s22
    %s39 = sphi 0, %s23
    %s43 = sphi 0, %s43
    %s45 = sphi 0, %s43
    %s46 = sphi 0, %s45
    %s60 = sphi 0, %s46
    %s64 = sphi 0, %s64
    %s66 = sphi 0, %s64
    %s67 = sphi 0, %s66
    %s81 = sphi 0, %s67
    %s87 = sphi 0, %s89
    %s90 = sphi 0, %s87
    %s91 = sphi 0, %s90
    %s107 = sphi 0, %s91
  $region4: #{_lambda_.16} parent=0 // loop_header_branch
    %12 = sbr.rel (%p10) target = $region8
  $region5: #{_lambda_.16} parent=0 // loop_body
    %s14 = ssub.s32 %s9, 1
    %s15 = ssub.s32 %s9, 2
    %s16 = sadd.s32 %s9, 1
    %s17 = ssub.s32 %s9, %s16
    %p18 = scmp.eq.s32.totalorder %s17, 0
    %s20 = sadd.s32 %s19, 1
    %s21 = scalar_select %p18, %s19, %s20
    %p24 = pneg %p18
    %p25 = scmp.eq.s32.totalorder %s9, 1
    %p26 = por %p24, %p25
    %p27 = scmp.ne.s32.totalorder %s19, %s22
    %p28 = scmp.eq.s32.totalorder %s9, 0
    %p29 = por %p27, %p28
    %p30 = scmp.ne.s32.totalorder %s19, %s22
    %p31 = scmp.eq.s32.totalorder %s14, 1
    %p32 = por %p30, %p31
    %p33 = scmp.ne.s32.totalorder %s22, %s23
    %p34 = scmp.eq.s32.totalorder %s14, 0
    %p35 = por %p33, %p34
    %p36 = scmp.ne.s32.totalorder %s22, %s23
    %p37 = scmp.eq.s32.totalorder %s15, 1
    %p38 = por %p36, %p37
    %p40 = scmp.ne.s32.totalorder %s23, %s39
    %p41 = scmp.eq.s32.totalorder %s15, 0
    %p42 = por %p40, %p41
    %s44 = sadd.s32 %s43, 1
    %p47 = scmp.eq.s32.totalorder %s9, 1
    %p48 = scmp.ne.s32.totalorder %s43, %s45
    %p49 = scmp.eq.s32.totalorder %s9, 0
    %p50 = por %p48, %p49
    %p51 = scmp.ne.s32.totalorder %s43, %s45
    %p52 = scmp.eq.s32.totalorder %s14, 1
    %p53 = por %p51, %p52
    %p54 = scmp.ne.s32.totalorder %s45, %s46
    %p55 = scmp.eq.s32.totalorder %s14, 0
    %p56 = por %p54, %p55
    %p57 = scmp.ne.s32.totalorder %s45, %s46
    %p58 = scmp.eq.s32.totalorder %s15, 1
    %p59 = por %p57, %p58
    %p61 = scmp.ne.s32.totalorder %s46, %s60
    %p62 = scmp.eq.s32.totalorder %s15, 0
    %p63 = por %p61, %p62
    %s65 = sadd.s32 %s64, 1
    %p68 = scmp.eq.s32.totalorder %s9, 1
    %p69 = scmp.ne.s32.totalorder %s64, %s66
    %p70 = scmp.eq.s32.totalorder %s9, 0
    %p71 = por %p69, %p70
    %p72 = scmp.ne.s32.totalorder %s64, %s66
    %p73 = scmp.eq.s32.totalorder %s14, 1
    %p74 = por %p72, %p73
    %p75 = scmp.ne.s32.totalorder %s66, %s67
    %p76 = scmp.eq.s32.totalorder %s14, 0
    %p77 = por %p75, %p76
    %p78 = scmp.ne.s32.totalorder %s66, %s67
    %p79 = scmp.eq.s32.totalorder %s15, 1
    %p80 = por %p78, %p79
    %p82 = scmp.ne.s32.totalorder %s67, %s81
    %p83 = scmp.eq.s32.totalorder %s15, 0
    %p84 = por %p82, %p83
    %s85 = ssub.s32 %s9, %s16
    %p86 = scmp.eq.s32.totalorder %s85, 0
    %s88 = sadd.s32 %s87, 1
    %s89 = scalar_select %p86, %s87, %s88
    %p92 = pneg %p86
    %p93 = scmp.eq.s32.totalorder %s9, 1
    %p94 = por %p92, %p93
    %p95 = scmp.ne.s32.totalorder %s87, %s90
    %p96 = scmp.eq.s32.totalorder %s9, 0
    %p97 = por %p95, %p96
    %p98 = scmp.ne.s32.totalorder %s87, %s90
    %p99 = scmp.eq.s32.totalorder %s14, 1
    %p100 = por %p98, %p99
    %p101 = scmp.ne.s32.totalorder %s90, %s91
    %p102 = scmp.eq.s32.totalorder %s14, 0
    %p103 = por %p101, %p102
    %p104 = scmp.ne.s32.totalorder %s90, %s91
    %p105 = scmp.eq.s32.totalorder %s15, 1
    %p106 = por %p104, %p105
    %p108 = scmp.ne.s32.totalorder %s91, %s107
    %p109 = scmp.eq.s32.totalorder %s15, 0
    %p110 = por %p108, %p109
    %p111 = scmp.le.s32.totalorder 1, %s9
    %p112 = scmp.lt.s32.totalorder %s9, 3
    %p113 = pnand %p111, %p112
    %p114 = pneg %p113
    // Predicated region
    $region9: #{_lambda_.16} parent=5 // pred_check
      _
    $region10: #{_lambda_.16} parent=5 // pred_check_branch
      %116 = sbr.rel (%p113) target = $region12
    $region11: #{_lambda_.16} parent=5 // pred_region
      %s117 = ssub.s32 %s9, 1
      // Predicated region
      $region13: #{_lambda_.16} parent=11 // pred_check
        %p118 = pneg %p56
      $region14: #{_lambda_.16} parent=11 // pred_check_branch
        %120 = sbr.rel (%p118) target = $region16
      $region15: #{_lambda_.16} parent=11 // pred_region
        _
      $region16: #{_lambda_.16} parent=11 // pred_fallthru
        _
      // Predicated region
      $region17: #{_lambda_.16} parent=11 // pred_check
        %p121 = pneg %p77
      $region18: #{_lambda_.16} parent=11 // pred_check_branch
        %123 = sbr.rel (%p121) target = $region20
      $region19: #{_lambda_.16} parent=11 // pred_region
        _
      $region20: #{_lambda_.16} parent=11 // pred_fallthru
        _
    $region12: #{_lambda_.16} parent=5 // pred_fallthru
      _
    %p124 = scmp.lt.s32.totalorder %s9, 2
    // Predicated region
    $region21: #{_lambda_.16} parent=5 // pred_check
      %p125 = pneg %p124
    $region22: #{_lambda_.16} parent=5 // pred_check_branch
      %127 = sbr.rel (%p125) target = $region24
    $region23: #{_lambda_.16} parent=5 // pred_region
      // Predicated region
      $region25: #{_lambda_.16} parent=23 // pred_check
        %p128 = pneg %p29
      $region26: #{_lambda_.16} parent=23 // pred_check_branch
        %130 = sbr.rel (%p128) target = $region28
      $region27: #{_lambda_.16} parent=23 // pred_region
        %s131 = smul.u32 8, %s9
        %p132 = scmp.lt.s32.totalorder %s131, 15
        %s133 = scalar_select %p132, %s131, 15
        %s134 = smul.addr %s133, 4
        %s135 = scalar_lea.vmem %s0, %s134
        %s136 = smul.u32 8, %s9
      $region28: #{_lambda_.16} parent=23 // pred_fallthru
        _
    $region24: #{_lambda_.16} parent=5 // pred_fallthru
      _
    %p137 = scmp.le.s32.totalorder 1, %s9
    %p138 = scmp.lt.s32.totalorder %s9, 3
    %p139 = pnand %p137, %p138
    %p140 = pneg %p139
    // Predicated region
    $region29: #{_lambda_.16} parent=5 // pred_check
      _
    $region30: #{_lambda_.16} parent=5 // pred_check_branch
      %142 = sbr.rel (%p139) target = $region32
    $region31: #{_lambda_.16} parent=5 // pred_region
      %s143 = ssub.s32 %s9, 1
      %s144 = smul.u32 8, %s14
      %p145 = scmp.lt.s32.totalorder %s144, 15
      %s146 = scalar_select %p145, %s144, 15
      %s147 = smul.addr %s146, 4
      %s148 = scalar_lea.vmem %s0, %s147
      %p149 = pneg %p35
      %p150 = pneg %p32
      %p151 = pneg %p56
      %p152 = pneg %p53
      %p153 = pneg %p77
      %p154 = pneg %p74
      %p155 = pneg %p103
      %p156 = pneg %p100
      %s157 = smul.u32 8, %s14
      %p158 = scmp.lt.s32.totalorder %s157, 15
      %s159 = scalar_select %p158, %s157, 15
      %s160 = smul.addr %s159, 4
      %s161 = scalar_lea.vmem %s3, %s160
      %s162 = smul.u32 8, %s14
      %p163 = scmp.lt.s32.totalorder %s162, 15
      %s164 = scalar_select %p163, %s162, 15
      %s165 = smul.addr %s164, 4
      %s166 = scalar_lea.vmem %s0, %s165
      %s167 = smul.u32 8, %s14
      %s168 = smul.u32 8, %s14
      %p169 = scmp.lt.s32.totalorder %s168, 15
      %s170 = scalar_select %p169, %s168, 15
      %s171 = smul.addr %s170, 4
      %s172 = scalar_lea.vmem %s3, %s171
      %s173 = smul.u32 8, %s14
      %v174 = vld [vmem:[%s166] sm:$0xf]
      %v175 = vld [vmem:[%s166 + $0x4] sm:$0xf]
      %v176 = vld [vmem:[%s166 + $0x8] sm:$0xf]
      %v177 = vld [vmem:[%s166 + $0xc] sm:$0xf]
      %v178 = vld [vmem:[%s166 + $0x10] sm:$0xf]
      %v179 = vld [vmem:[%s166 + $0x14] sm:$0xf]
      %v180 = vld [vmem:[%s166 + $0x18] sm:$0xf]
      %v181 = vld [vmem:[%s166 + $0x1c] sm:$0xf]
      %v182 = vunpack.c.l.bf16 %v174
      %v183 = vunpack.c.l.bf16 %v175
      %v184 = vunpack.c.l.bf16 %v176
      %v185 = vunpack.c.l.bf16 %v177
      %v186 = vunpack.c.l.bf16 %v178
      %v187 = vunpack.c.l.bf16 %v179
      %v188 = vunpack.c.l.bf16 %v180
      %v189 = vunpack.c.l.bf16 %v181
      %v190 = vld [vmem:[%s1] sm:$0x1]
      %v192 = vperm.slane %v190, 0
      %v194 = vmul.f32 %v182, %v192
      %v195 = vmul.f32 %v183, %v192
      %v196 = vmul.f32 %v184, %v192
      %v197 = vmul.f32 %v185, %v192
      %v198 = vmul.f32 %v186, %v192
      %v199 = vmul.f32 %v187, %v192
      %v200 = vmul.f32 %v188, %v192
      %v201 = vmul.f32 %v189, %v192
      %v202 = vld [vmem:[%s2] sm:$0x1]
      %v204 = vperm.slane %v202, 0
      %v206 = vadd.f32 %v194, %v204
      %v207 = vadd.f32 %v195, %v204
      %v208 = vadd.f32 %v196, %v204
      %v209 = vadd.f32 %v197, %v204
      %v210 = vadd.f32 %v198, %v204
      %v211 = vadd.f32 %v199, %v204
      %v212 = vadd.f32 %v200, %v204
      %v213 = vadd.f32 %v201, %v204
      %v214 = vmax.f32 %v206, 0.0
      %v215 = vmax.f32 %v207, 0.0
      %v216 = vmax.f32 %v208, 0.0
      %v217 = vmax.f32 %v209, 0.0
      %v218 = vmax.f32 %v210, 0.0
      %v219 = vmax.f32 %v211, 0.0
      %v220 = vmax.f32 %v212, 0.0
      %v221 = vmax.f32 %v213, 0.0
      %v222 = vpack.c.bf16 %v214, %v214
      %v223 = vpack.c.bf16 %v215, %v215
      %v224 = vpack.c.bf16 %v216, %v216
      %v225 = vpack.c.bf16 %v217, %v217
      %v226 = vpack.c.bf16 %v218, %v218
      %v227 = vpack.c.bf16 %v219, %v219
      %v228 = vpack.c.bf16 %v220, %v220
      %v229 = vpack.c.bf16 %v221, %v221
      %230 = vst [vmem:[%s172] sm:$0xf] %v222
      %231 = vst [vmem:[%s172 + $0x4] sm:$0xf] %v223
      %232 = vst [vmem:[%s172 + $0x8] sm:$0xf] %v224
      %233 = vst [vmem:[%s172 + $0xc] sm:$0xf] %v225
      %234 = vst [vmem:[%s172 + $0x10] sm:$0xf] %v226
      %235 = vst [vmem:[%s172 + $0x14] sm:$0xf] %v227
      %236 = vst [vmem:[%s172 + $0x18] sm:$0xf] %v228
      %237 = vst [vmem:[%s172 + $0x1c] sm:$0xf] %v229
      %s238 = smul.u32 8, %s14
      %p239 = scmp.lt.s32.totalorder %s238, 15
      %s240 = scalar_select %p239, %s238, 15
      %s241 = smul.addr %s240, 4
      %s242 = scalar_lea.vmem %s3, %s241
      // Predicated region
      $region33: #{_lambda_.16} parent=31 // pred_check
        %p243 = pneg %p100
      $region34: #{_lambda_.16} parent=31 // pred_check_branch
        %245 = sbr.rel (%p243) target = $region36
      $region35: #{_lambda_.16} parent=31 // pred_region
        %s246 = smul.u32 8, %s14
      $region36: #{_lambda_.16} parent=31 // pred_fallthru
        _
    $region32: #{_lambda_.16} parent=5 // pred_fallthru
      _
    %p247 = scmp.le.s32.totalorder 2, %s9
    // Predicated region
    $region37: #{_lambda_.16} parent=5 // pred_check
      %p248 = pneg %p247
    $region38: #{_lambda_.16} parent=5 // pred_check_branch
      %250 = sbr.rel (%p248) target = $region40
    $region39: #{_lambda_.16} parent=5 // pred_region
      %s251 = ssub.s32 %s9, 2
      // Predicated region
      $region41: #{_lambda_.16} parent=39 // pred_check
        %p252 = pneg %p106
      $region42: #{_lambda_.16} parent=39 // pred_check_branch
        %254 = sbr.rel (%p252) target = $region44
      $region43: #{_lambda_.16} parent=39 // pred_region
        %s255 = smul.u32 8, %s15
        %p256 = scmp.lt.s32.totalorder %s255, 15
        %s257 = scalar_select %p256, %s255, 15
        %s258 = smul.addr %s257, 4
        %s259 = scalar_lea.vmem %s3, %s258
      $region44: #{_lambda_.16} parent=39 // pred_fallthru
        _
    $region40: #{_lambda_.16} parent=5 // pred_fallthru
      _
  $region6: #{_lambda_.16} parent=0 // loop_footer
    %s13 = sadd.s32 1, %s9
  $region7: #{_lambda_.16} parent=0 // loop_footer_branch
    %8 = sbr.rel target = $region3
  $region8: #{_lambda_.16} parent=0 // loop_exit
    _

// kernel: _lambda_.18
$region0: #{_lambda_.18}
  #allocation0 [shape = 'u32[]', space=smem, size = 0x4, offset = 0x4, fixed_abs, tag = 'smem constant byte address 0x4 - core index']
  #allocation1 [shape = 'u32[72,128]{1,0:T(1,128)}', space=vmem, size = 0x9000, scoped, tag = 'internal scratch']
  %s0 = inlined_call_operand.vmem [shape: bf16[128,144], index: 0, kind: input, shape index: {}]
  %s1 = inlined_call_operand.vmem [shape: bf16[144,128], index: 1, kind: input, shape index: {}]
  %s2 = inlined_call_operand.vmem [shape: bf16[128,128], index: 2, kind: output, shape index: {0}]
  %s3 = inlined_call_operand.vmem [shape: f32[2,1,128], index: 3, kind: output, shape index: {1}]
  %s4 = inlined_call_operand.vmem [shape: f32[2,1,128], index: 4, kind: output, shape index: {2}]
  %5 = xla_tuple %s2, %s3, %s4
  %s6 = sld [smem:[#allocation0]]
  $region57: #{_lambda_.18} parent=0
    _
  %s8 = ssub.s32 1, %s6
  %s9 = scalar_select 0, %s8, %s6
  loop: start=0, step=1, limit=4
  $region2: #{_lambda_.18} parent=0 // loop_pre_header
    _
  $region3: #{_lambda_.18} parent=0 // loop_header
    %s11 = sphi 0, %s15
    %p12 = scmp.ge.s32.totalorder %s11, 4
    %s21 = sphi 0, %s23
    %s24 = sphi 0, %s21
    %s25 = sphi 0, %s24
    %s41 = sphi 0, %s25
    %s45 = sphi 0, %s45
    %s47 = sphi 0, %s45
    %s48 = sphi 0, %s47
    %s62 = sphi 0, %s48
    %s68 = sphi 0, %s70
    %s71 = sphi 0, %s68
    %s72 = sphi 0, %s71
    %s88 = sphi 0, %s72
    %s94 = sphi 0, %s96
    %s97 = sphi 0, %s94
    %s98 = sphi 0, %s97
    %s114 = sphi 0, %s98
    %s120 = sphi 0, %s122
    %s123 = sphi 0, %s120
    %s124 = sphi 0, %s123
    %s140 = sphi 0, %s124
  $region4: #{_lambda_.18} parent=0 // loop_header_branch
    %14 = sbr.rel (%p12) target = $region8
  $region5: #{_lambda_.18} parent=0 // loop_body
    %s16 = ssub.s32 %s11, 1
    %s17 = ssub.s32 %s11, 2
    %s18 = sadd.s32 %s11, 1
    %s19 = ssub.s32 %s11, %s18
    %p20 = scmp.eq.s32.totalorder %s19, 0
    %s22 = sadd.s32 %s21, 1
    %s23 = scalar_select %p20, %s21, %s22
    %p26 = pneg %p20
    %p27 = scmp.eq.s32.totalorder %s11, 1
    %p28 = por %p26, %p27
    %p29 = scmp.ne.s32.totalorder %s21, %s24
    %p30 = scmp.eq.s32.totalorder %s11, 0
    %p31 = por %p29, %p30
    %p32 = scmp.ne.s32.totalorder %s21, %s24
    %p33 = scmp.eq.s32.totalorder %s16, 1
    %p34 = por %p32, %p33
    %p35 = scmp.ne.s32.totalorder %s24, %s25
    %p36 = scmp.eq.s32.totalorder %s16, 0
    %p37 = por %p35, %p36
    %p38 = scmp.ne.s32.totalorder %s24, %s25
    %p39 = scmp.eq.s32.totalorder %s17, 1
    %p40 = por %p38, %p39
    %p42 = scmp.ne.s32.totalorder %s25, %s41
    %p43 = scmp.eq.s32.totalorder %s17, 0
    %p44 = por %p42, %p43
    %s46 = sadd.s32 %s45, 1
    %p49 = scmp.eq.s32.totalorder %s11, 1
    %p50 = scmp.ne.s32.totalorder %s45, %s47
    %p51 = scmp.eq.s32.totalorder %s11, 0
    %p52 = por %p50, %p51
    %p53 = scmp.ne.s32.totalorder %s45, %s47
    %p54 = scmp.eq.s32.totalorder %s16, 1
    %p55 = por %p53, %p54
    %p56 = scmp.ne.s32.totalorder %s47, %s48
    %p57 = scmp.eq.s32.totalorder %s16, 0
    %p58 = por %p56, %p57
    %p59 = scmp.ne.s32.totalorder %s47, %s48
    %p60 = scmp.eq.s32.totalorder %s17, 1
    %p61 = por %p59, %p60
    %p63 = scmp.ne.s32.totalorder %s48, %s62
    %p64 = scmp.eq.s32.totalorder %s17, 0
    %p65 = por %p63, %p64
    %s66 = ssub.s32 %s11, %s18
    %p67 = scmp.eq.s32.totalorder %s66, 0
    %s69 = sadd.s32 %s68, 1
    %s70 = scalar_select %p67, %s68, %s69
    %p73 = pneg %p67
    %p74 = scmp.eq.s32.totalorder %s11, 1
    %p75 = por %p73, %p74
    %p76 = scmp.ne.s32.totalorder %s68, %s71
    %p77 = scmp.eq.s32.totalorder %s11, 0
    %p78 = por %p76, %p77
    %p79 = scmp.ne.s32.totalorder %s68, %s71
    %p80 = scmp.eq.s32.totalorder %s16, 1
    %p81 = por %p79, %p80
    %p82 = scmp.ne.s32.totalorder %s71, %s72
    %p83 = scmp.eq.s32.totalorder %s16, 0
    %p84 = por %p82, %p83
    %p85 = scmp.ne.s32.totalorder %s71, %s72
    %p86 = scmp.eq.s32.totalorder %s17, 1
    %p87 = por %p85, %p86
    %p89 = scmp.ne.s32.totalorder %s72, %s88
    %p90 = scmp.eq.s32.totalorder %s17, 0
    %p91 = por %p89, %p90
    %s92 = ssub.s32 %s11, %s18
    %p93 = scmp.eq.s32.totalorder %s92, 0
    %s95 = sadd.s32 %s94, 1
    %s96 = scalar_select %p93, %s94, %s95
    %p99 = pneg %p93
    %p100 = scmp.eq.s32.totalorder %s11, 1
    %p101 = por %p99, %p100
    %p102 = scmp.ne.s32.totalorder %s94, %s97
    %p103 = scmp.eq.s32.totalorder %s11, 0
    %p104 = por %p102, %p103
    %p105 = scmp.ne.s32.totalorder %s94, %s97
    %p106 = scmp.eq.s32.totalorder %s16, 1
    %p107 = por %p105, %p106
    %p108 = scmp.ne.s32.totalorder %s97, %s98
    %p109 = scmp.eq.s32.totalorder %s16, 0
    %p110 = por %p108, %p109
    %p111 = scmp.ne.s32.totalorder %s97, %s98
    %p112 = scmp.eq.s32.totalorder %s17, 1
    %p113 = por %p111, %p112
    %p115 = scmp.ne.s32.totalorder %s98, %s114
    %p116 = scmp.eq.s32.totalorder %s17, 0
    %p117 = por %p115, %p116
    %s118 = ssub.s32 %s11, %s18
    %p119 = scmp.eq.s32.totalorder %s118, 0
    %s121 = sadd.s32 %s120, 1
    %s122 = scalar_select %p119, %s120, %s121
    %p125 = pneg %p119
    %p126 = scmp.eq.s32.totalorder %s11, 1
    %p127 = por %p125, %p126
    %p128 = scmp.ne.s32.totalorder %s120, %s123
    %p129 = scmp.eq.s32.totalorder %s11, 0
    %p130 = por %p128, %p129
    %p131 = scmp.ne.s32.totalorder %s120, %s123
    %p132 = scmp.eq.s32.totalorder %s16, 1
    %p133 = por %p131, %p132
    %p134 = scmp.ne.s32.totalorder %s123, %s124
    %p135 = scmp.eq.s32.totalorder %s16, 0
    %p136 = por %p134, %p135
    %p137 = scmp.ne.s32.totalorder %s123, %s124
    %p138 = scmp.eq.s32.totalorder %s17, 1
    %p139 = por %p137, %p138
    %p141 = scmp.ne.s32.totalorder %s124, %s140
    %p142 = scmp.eq.s32.totalorder %s17, 0
    %p143 = por %p141, %p142
    %p144 = scmp.le.s32.totalorder 1, %s11
    %p145 = scmp.lt.s32.totalorder %s11, 3
    %p146 = pnand %p144, %p145
    %p147 = pneg %p146
    // Predicated region
    $region9: #{_lambda_.18} parent=5 // pred_check
      _
    $region10: #{_lambda_.18} parent=5 // pred_check_branch
      %149 = sbr.rel (%p146) target = $region12
    $region11: #{_lambda_.18} parent=5 // pred_region
      %s150 = ssub.s32 %s11, 1
      // Predicated region
      $region13: #{_lambda_.18} parent=11 // pred_check
        %p151 = pneg %p58
      $region14: #{_lambda_.18} parent=11 // pred_check_branch
        %153 = sbr.rel (%p151) target = $region16
      $region15: #{_lambda_.18} parent=11 // pred_region
        _
      $region16: #{_lambda_.18} parent=11 // pred_fallthru
        _
    $region12: #{_lambda_.18} parent=5 // pred_fallthru
      _
    %p154 = scmp.lt.s32.totalorder %s11, 2
    // Predicated region
    $region17: #{_lambda_.18} parent=5 // pred_check
      %p155 = pneg %p154
    $region18: #{_lambda_.18} parent=5 // pred_check_branch
      %157 = sbr.rel (%p155) target = $region20
    $region19: #{_lambda_.18} parent=5 // pred_region
      // Predicated region
      $region21: #{_lambda_.18} parent=19 // pred_check
        %p158 = pneg %p31
      $region22: #{_lambda_.18} parent=19 // pred_check_branch
        %160 = sbr.rel (%p158) target = $region24
      $region23: #{_lambda_.18} parent=19 // pred_region
        %s161 = smul.u32 8, %s11
        %p162 = scmp.lt.s32.totalorder %s161, 15
        %s163 = scalar_select %p162, %s161, 15
        %s164 = smul.addr %s163, 2
        %s165 = smul.addr %s164, 4
        %s166 = scalar_lea.vmem %s0, %s165
        %s167 = smul.u32 8, %s11
      $region24: #{_lambda_.18} parent=19 // pred_fallthru
        _
    $region20: #{_lambda_.18} parent=5 // pred_fallthru
      _
    %p168 = scmp.le.s32.totalorder 1, %s11
    %p169 = scmp.lt.s32.totalorder %s11, 3
    %p170 = pnand %p168, %p169
    %p171 = pneg %p170
    // Predicated region
    $region25: #{_lambda_.18} parent=5 // pred_check
      _
    $region26: #{_lambda_.18} parent=5 // pred_check_branch
      %173 = sbr.rel (%p170) target = $region28
    $region27: #{_lambda_.18} parent=5 // pred_region
      %s174 = ssub.s32 %s11, 1
      %s175 = smul.u32 8, %s16
      %p176 = scmp.lt.s32.totalorder %s175, 15
      %s177 = scalar_select %p176, %s175, 15
      %s178 = smul.addr %s177, 2
      %s179 = smul.addr %s178, 4
      %s180 = scalar_lea.vmem %s0, %s179
      %p181 = pneg %p37
      %p182 = pneg %p34
      %p183 = pneg %p58
      %p184 = pneg %p55
      %p185 = pneg %p84
      %p186 = pneg %p81
      %s187 = smul.u32 8, %s16
      %p188 = scmp.lt.s32.totalorder %s187, 15
      %s189 = scalar_select %p188, %s187, 15
      %s190 = smul.addr %s189, 4
      %s191 = scalar_lea.vmem %s2, %s190
      %p192 = pneg %p110
      %p193 = pneg %p107
      %p194 = scmp.lt.s32.totalorder %s16, 1
      %s195 = scalar_select %p194, %s16, 1
      %s196 = scalar_lea.vmem %s3, %s195
      %p197 = pneg %p136
      %p198 = pneg %p133
      %p199 = scmp.lt.s32.totalorder %s16, 1
      %s200 = scalar_select %p199, %s16, 1
      %s201 = scalar_lea.vmem %s4, %s200
      %s202 = smul.u32 8, %s16
      %p203 = scmp.lt.s32.totalorder %s202, 15
      %s204 = scalar_select %p203, %s202, 15
      %s205 = smul.addr %s204, 2
      %s206 = smul.addr %s205, 4
      %s207 = scalar_lea.vmem %s0, %s206
      %s208 = smul.u32 8, %s16
      %s209 = smul.u32 8, %s16
      %p210 = scmp.lt.s32.totalorder %s209, 15
      %s211 = scalar_select %p210, %s209, 15
      %s212 = smul.addr %s211, 4
      %s213 = scalar_lea.vmem %s2, %s212
      %s214 = smul.u32 8, %s16
      %p215 = scmp.lt.s32.totalorder %s16, 1
      %s216 = scalar_select %p215, %s16, 1
      %s217 = scalar_lea.vmem %s3, %s216
      %p218 = scmp.lt.s32.totalorder %s16, 1
      %s219 = scalar_select %p218, %s16, 1
      %s220 = scalar_lea.vmem %s4, %s219
      %v222 = vld [vmem:[%s207] sm:$0xff]
      %v223 = vld [vmem:[%s207 + $0x8] sm:$0xff]
      %v224 = vld [vmem:[%s207 + $0x10] sm:$0xff]
      %v225 = vld [vmem:[%s207 + $0x18] sm:$0xff]
      %v226 = vld [vmem:[%s207 + $0x20] sm:$0xff]
      %v227 = vld [vmem:[%s207 + $0x28] sm:$0xff]
      %v228 = vld [vmem:[%s207 + $0x30] sm:$0xff]
      %v229 = vld [vmem:[%s207 + $0x38] sm:$0xff]
      %v230 = vld [vmem:[%s1] sm:$0xf]
      %v231 = vld [vmem:[%s1 + $0x4] sm:$0xf]
      %v232 = vld [vmem:[%s1 + $0x8] sm:$0xf]
      %v233 = vld [vmem:[%s1 + $0xc] sm:$0xf]
      %v234 = vld [vmem:[%s1 + $0x10] sm:$0xf]
      %v235 = vld [vmem:[%s1 + $0x14] sm:$0xf]
      %v236 = vld [vmem:[%s1 + $0x18] sm:$0xf]
      %v237 = vld [vmem:[%s1 + $0x1c] sm:$0xf]
      %v238 = vld [vmem:[%s1 + $0x20] sm:$0xf]
      %v239 = vld [vmem:[%s1 + $0x24] sm:$0xf]
      %v240 = vld [vmem:[%s1 + $0x28] sm:$0xf]
      %v241 = vld [vmem:[%s1 + $0x2c] sm:$0xf]
      %v242 = vld [vmem:[%s1 + $0x30] sm:$0xf]
      %v243 = vld [vmem:[%s1 + $0x34] sm:$0xf]
      %v244 = vld [vmem:[%s1 + $0x38] sm:$0xf]
      %v245 = vld [vmem:[%s1 + $0x3c] sm:$0xf]
      %v246 = vld [vmem:[%s1 + $0x40] sm:$0xf]
      %v247 = vld [vmem:[%s1 + $0x44] sm:$0xf]
      %v256 = vunpack.c.l.b16 %v222
      %v257 = vunpack.c.h.b16 %v222
      %v258 = vunpack.c.l.b16 %v223
      %v259 = vunpack.c.h.b16 %v223
      %v260 = vunpack.c.l.b16 %v224
      %v261 = vunpack.c.h.b16 %v224
      %v262 = vunpack.c.l.b16 %v225
      %v263 = vunpack.c.h.b16 %v225
      %v264 = vunpack.c.l.b16 %v226
      %v265 = vunpack.c.h.b16 %v226
      %v266 = vunpack.c.l.b16 %v227
      %v267 = vunpack.c.h.b16 %v227
      %v268 = vunpack.c.l.b16 %v228
      %v269 = vunpack.c.h.b16 %v228
      %v270 = vunpack.c.l.b16 %v229
      %v271 = vunpack.c.h.b16 %v229
      %v272 = vpack.c.b16 %v258, %v256
      %v273 = vpack.c.b16 %v259, %v257
      %v274 = vpack.c.b16 %v262, %v260
      %v275 = vpack.c.b16 %v263, %v261
      %v276 = vpack.c.b16 %v266, %v264
      %v277 = vpack.c.b16 %v267, %v265
      %v278 = vpack.c.b16 %v270, %v268
      %v279 = vpack.c.b16 %v271, %v269
      %v302 = vunpack.c.l.b16 %v230
      %v303 = vunpack.c.l.b16 %v231
      %v304 = vunpack.c.l.b16 %v232
      %v305 = vunpack.c.l.b16 %v233
      %v306 = vunpack.c.l.b16 %v234
      %v307 = vunpack.c.l.b16 %v235
      %v308 = vunpack.c.l.b16 %v236
      %v309 = vunpack.c.l.b16 %v237
      %v310 = vunpack.c.l.b16 %v238
      %v311 = vunpack.c.l.b16 %v239
      %v312 = vunpack.c.l.b16 %v240
      %v313 = vunpack.c.l.b16 %v241
      %v314 = vunpack.c.l.b16 %v242
      %v315 = vunpack.c.l.b16 %v243
      %v316 = vunpack.c.l.b16 %v244
      %v317 = vunpack.c.l.b16 %v245
      %v318 = vunpack.c.l.b16 %v246
      %v319 = vunpack.c.l.b16 %v247
      %v320 = vpack.c.b16 %v303, %v302
      %v321 = vpack.c.b16 %v305, %v304
      %v322 = vpack.c.b16 %v307, %v306
      %v323 = vpack.c.b16 %v309, %v308
      %v324 = vpack.c.b16 %v311, %v310
      %v325 = vpack.c.b16 %v313, %v312
      %v326 = vpack.c.b16 %v315, %v314
      %v327 = vpack.c.b16 %v317, %v316
      %v328 = vpack.c.b16 %v319, %v318
      %vm338 = vcmask 130048
      %v340 = vsel %vm338, %v273, 0
      %v343 = vsel %vm338, %v275, 0
      %v346 = vsel %vm338, %v277, 0
      %v349 = vsel %vm338, %v279, 0
      %351 = vmatpush.bf16.msra.mxu0 %v327
      %352 = vmatpush.bf16.msra.mxu0 %v326
      %353 = vmatpush.bf16.msra.mxu0 %v325
      %354 = vmatpush.bf16.msra.mxu0 %v324
      %355 = vmatpush.bf16.msra.mxu0 %v323
      %356 = vmatpush.bf16.msra.mxu0 %v322
      %357 = vmatpush.bf16.msra.mxu0 %v321
      %358 = vmatpush.bf16.msra.mxu0 %v320
      %359 = vmatmul.bf16.gmra.mxu0 %v272
      %v360 = vpop.f32.mrf.mxu0
      %v361 = vadd.f32 0.0, %v360
      %v362 = vpop.f32.mrf.mxu0
      %v363 = vadd.f32 0.0, %v362
      %364 = vmatmul.bf16.gmra.mxu0 %v274
      %v365 = vpop.f32.mrf.mxu0
      %v366 = vadd.f32 0.0, %v365
      %v367 = vpop.f32.mrf.mxu0
      %v368 = vadd.f32 0.0, %v367
      %369 = vmatmul.bf16.gmra.mxu0 %v276
      %v370 = vpop.f32.mrf.mxu0
      %v371 = vadd.f32 0.0, %v370
      %v372 = vpop.f32.mrf.mxu0
      %v373 = vadd.f32 0.0, %v372
      %374 = vmatmul.bf16.gmra.mxu0 %v278
      %v375 = vpop.f32.mrf.mxu0
      %v376 = vadd.f32 0.0, %v375
      %v377 = vpop.f32.mrf.mxu0
      %v378 = vadd.f32 0.0, %v377
      %379 = vdwg.mxu0
      %380 = vmatpush.bf16.msra.mxu0 0
      %381 = vmatpush.bf16.msra.mxu0 0
      %382 = vmatpush.bf16.msra.mxu0 0
      %383 = vmatpush.bf16.msra.mxu0 0
      %384 = vmatpush.bf16.msra.mxu0 0
      %385 = vmatpush.bf16.msra.mxu0 0
      %386 = vmatpush.bf16.msra.mxu0 0
      %387 = vmatpush.bf16.msra.mxu0 %v328
      %388 = vmatmul.bf16.gmra.mxu0 %v340
      %v389 = vpop.f32.mrf.mxu0
      %v390 = vadd.f32 %v361, %v389
      %v391 = vpop.f32.mrf.mxu0
      %v392 = vadd.f32 %v363, %v391
      %393 = vmatmul.bf16.gmra.mxu0 %v343
      %v394 = vpop.f32.mrf.mxu0
      %v395 = vadd.f32 %v366, %v394
      %v396 = vpop.f32.mrf.mxu0
      %v397 = vadd.f32 %v368, %v396
      %398 = vmatmul.bf16.gmra.mxu0 %v346
      %v399 = vpop.f32.mrf.mxu0
      %v400 = vadd.f32 %v371, %v399
      %v401 = vpop.f32.mrf.mxu0
      %v402 = vadd.f32 %v373, %v401
      %403 = vmatmul.bf16.gmra.mxu0 %v349
      %v404 = vpop.f32.mrf.mxu0
      %v405 = vadd.f32 %v376, %v404
      %v406 = vpop.f32.mrf.mxu0
      %v407 = vadd.f32 %v378, %v406
      %408 = vdwg.mxu0
      %v409 = vpack.c.bf16 %v390, %v390
      %v410 = vpack.c.bf16 %v392, %v392
      %v411 = vpack.c.bf16 %v395, %v395
      %v412 = vpack.c.bf16 %v397, %v397
      %v413 = vpack.c.bf16 %v400, %v400
      %v414 = vpack.c.bf16 %v402, %v402
      %v415 = vpack.c.bf16 %v405, %v405
      %v416 = vpack.c.bf16 %v407, %v407
      %417 = vst [vmem:[%s213] sm:$0xf] %v409
      %418 = vst [vmem:[%s213 + $0x4] sm:$0xf] %v410
      %419 = vst [vmem:[%s213 + $0x8] sm:$0xf] %v411
      %420 = vst [vmem:[%s213 + $0xc] sm:$0xf] %v412
      %421 = vst [vmem:[%s213 + $0x10] sm:$0xf] %v413
      %422 = vst [vmem:[%s213 + $0x14] sm:$0xf] %v414
      %423 = vst [vmem:[%s213 + $0x18] sm:$0xf] %v415
      %424 = vst [vmem:[%s213 + $0x1c] sm:$0xf] %v416
      %v425 = vadd.f32 %v390, %v392
      %v426 = vadd.f32 %v425, %v395
      %v427 = vadd.f32 %v426, %v397
      %v428 = vadd.f32 %v427, %v400
      %v429 = vadd.f32 %v428, %v402
      %v430 = vadd.f32 %v429, %v405
      %v431 = vadd.f32 %v430, %v407
      %v432 = vrot.slane %v431, 4
      %v433 = vadd.f32 %v431, %v432
      %v434 = vrot.slane %v433, 2
      %v435 = vadd.f32 %v433, %v434
      %v436 = vrot.slane %v435, 1
      %v437 = vadd.f32 %v435, %v436
      %438 = vst [vmem:[%s217] sm:$0x1] %v437
      %v439 = vmul.f32 %v390, %v390
      %v440 = vmul.f32 %v392, %v392
      %v441 = vmul.f32 %v395, %v395
      %v442 = vmul.f32 %v397, %v397
      %v443 = vmul.f32 %v400, %v400
      %v444 = vmul.f32 %v402, %v402
      %v445 = vmul.f32 %v405, %v405
      %v446 = vmul.f32 %v407, %v407
      %v447 = vadd.f32 %v439, %v440
      %v448 = vadd.f32 %v447, %v441
      %v449 = vadd.f32 %v448, %v442
      %v450 = vadd.f32 %v449, %v443
      %v451 = vadd.f32 %v450, %v444
      %v452 = vadd.f32 %v451, %v445
      %v453 = vadd.f32 %v452, %v446
      %v454 = vrot.slane %v453, 4
      %v455 = vadd.f32 %v453, %v454
      %v456 = vrot.slane %v455, 2
      %v457 = vadd.f32 %v455, %v456
      %v458 = vrot.slane %v457, 1
      %v459 = vadd.f32 %v457, %v458
      %460 = vst [vmem:[%s220] sm:$0x1] %v459
      %s461 = smul.u32 8, %s16
      %p462 = scmp.lt.s32.totalorder %s461, 15
      %s463 = scalar_select %p462, %s461, 15
      %s464 = smul.addr %s463, 4
      %s465 = scalar_lea.vmem %s2, %s464
      %p466 = scmp.lt.s32.totalorder %s16, 1
      %s467 = scalar_select %p466, %s16, 1
      %s468 = scalar_lea.vmem %s3, %s467
      %p469 = scmp.lt.s32.totalorder %s16, 1
      %s470 = scalar_select %p469, %s16, 1
      %s471 = scalar_lea.vmem %s4, %s470
      // Predicated region
      $region29: #{_lambda_.18} parent=27 // pred_check
        %p472 = pneg %p81
      $region30: #{_lambda_.18} parent=27 // pred_check_branch
        %474 = sbr.rel (%p472) target = $region32
      $region31: #{_lambda_.18} parent=27 // pred_region
        %s475 = smul.u32 8, %s16
      $region32: #{_lambda_.18} parent=27 // pred_fallthru
        _
      // Predicated region
      $region33: #{_lambda_.18} parent=27 // pred_check
        %p476 = pneg %p107
      $region34: #{_lambda_.18} parent=27 // pred_check_branch
        %478 = sbr.rel (%p476) target = $region36
      $region35: #{_lambda_.18} parent=27 // pred_region
        _
      $region36: #{_lambda_.18} parent=27 // pred_fallthru
        _
      // Predicated region
      $region37: #{_lambda_.18} parent=27 // pred_check
        %p479 = pneg %p133
      $region38: #{_lambda_.18} parent=27 // pred_check_branch
        %481 = sbr.rel (%p479) target = $region40
      $region39: #{_lambda_.18} parent=27 // pred_region
        _
      $region40: #{_lambda_.18} parent=27 // pred_fallthru
        _
    $region28: #{_lambda_.18} parent=5 // pred_fallthru
      _
    %p482 = scmp.le.s32.totalorder 2, %s11
    // Predicated region
    $region41: #{_lambda_.18} parent=5 // pred_check
      %p483 = pneg %p482
    $region42: #{_lambda_.18} parent=5 // pred_check_branch
      %485 = sbr.rel (%p483) target = $region44
    $region43: #{_lambda_.18} parent=5 // pred_region
      %s486 = ssub.s32 %s11, 2
      // Predicated region
      $region45: #{_lambda_.18} parent=43 // pred_check
        %p487 = pneg %p87
      $region46: #{_lambda_.18} parent=43 // pred_check_branch
        %489 = sbr.rel (%p487) target = $region48
      $region47: #{_lambda_.18} parent=43 // pred_region
        %s490 = smul.u32 8, %s17
        %p491 = scmp.lt.s32.totalorder %s490, 15
        %s492 = scalar_select %p491, %s490, 15
        %s493 = smul.addr %s492, 4
        %s494 = scalar_lea.vmem %s2, %s493
      $region48: #{_lambda_.18} parent=43 // pred_fallthru
        _
      // Predicated region
      $region49: #{_lambda_.18} parent=43 // pred_check
        %p495 = pneg %p113
      $region50: #{_lambda_.18} parent=43 // pred_check_branch
        %497 = sbr.rel (%p495) target = $region52
      $region51: #{_lambda_.18} parent=43 // pred_region
        %p498 = scmp.lt.s32.totalorder %s17, 1
        %s499 = scalar_select %p498, %s17, 1
        %s500 = scalar_lea.vmem %s3, %s499
      $region52: #{_lambda_.18} parent=43 // pred_fallthru
        _
      // Predicated region
      $region53: #{_lambda_.18} parent=43 // pred_check
        %p501 = pneg %p139
      $region54: #{_lambda_.18} parent=43 // pred_check_branch
        %503 = sbr.rel (%p501) target = $region56
      $region55: #{_lambda_.18} parent=43 // pred_region
        %p504 = scmp.lt.s32.totalorder %s17, 1
        %s505 = scalar_select %p504, %s17, 1
        %s506 = scalar_lea.vmem %s4, %s505
      $region56: #{_lambda_.18} parent=43 // pred_fallthru
        _
    $region44: #{_lambda_.18} parent=5 // pred_fallthru
      _
  $region6: #{_lambda_.18} parent=0 // loop_footer
    %s15 = sadd.s32 1, %s11
  $region7: #{_lambda_.18} parent=0 // loop_footer_branch
    %10 = sbr.rel target = $region3
  $region8: #{_lambda_.18} parent=0 // loop_exit
    _

// kernel: _lambda_.19
$region0: #{_lambda_.19}
  #allocation0 [shape = 'u32[]', space=smem, size = 0x4, offset = 0x4, fixed_abs, tag = 'smem constant byte address 0x4 - core index']
  #allocation1 [shape = 'u32[72,128]{1,0:T(1,128)}', space=vmem, size = 0x9000, scoped, tag = 'internal scratch']
  %s0 = inlined_call_operand.vmem [shape: bf16[128,128], index: 0, kind: input, shape index: {}]
  %s1 = inlined_call_operand.vmem [shape: f32[1,128], index: 1, kind: input, shape index: {}]
  %s2 = inlined_call_operand.vmem [shape: f32[1,128], index: 2, kind: input, shape index: {}]
  %s3 = inlined_call_operand.vmem [shape: bf16[128,128], index: 3, kind: input, shape index: {}]
  %s4 = inlined_call_operand.vmem [shape: f32[1,128], index: 4, kind: input, shape index: {}]
  %s5 = inlined_call_operand.vmem [shape: f32[1,128], index: 5, kind: input, shape index: {}]
  %s6 = inlined_call_operand.vmem [shape: bf16[128,128], index: 6, kind: output, shape index: {}]
  %s7 = sld [smem:[#allocation0]]
  $region57: #{_lambda_.19} parent=0
    _
  %s9 = ssub.s32 1, %s7
  %s10 = scalar_select 0, %s9, %s7
  loop: start=0, step=1, limit=4
  $region2: #{_lambda_.19} parent=0 // loop_pre_header
    _
  $region3: #{_lambda_.19} parent=0 // loop_header
    %s12 = sphi 0, %s16
    %p13 = scmp.ge.s32.totalorder %s12, 4
    %s22 = sphi 0, %s24
    %s25 = sphi 0, %s22
    %s26 = sphi 0, %s25
    %s42 = sphi 0, %s26
    %s46 = sphi 0, %s46
    %s48 = sphi 0, %s46
    %s49 = sphi 0, %s48
    %s63 = sphi 0, %s49
    %s67 = sphi 0, %s67
    %s69 = sphi 0, %s67
    %s70 = sphi 0, %s69
    %s84 = sphi 0, %s70
    %s90 = sphi 0, %s92
    %s93 = sphi 0, %s90
    %s94 = sphi 0, %s93
    %s110 = sphi 0, %s94
    %s114 = sphi 0, %s114
    %s116 = sphi 0, %s114
    %s117 = sphi 0, %s116
    %s131 = sphi 0, %s117
    %s135 = sphi 0, %s135
    %s137 = sphi 0, %s135
    %s138 = sphi 0, %s137
    %s152 = sphi 0, %s138
    %s158 = sphi 0, %s160
    %s161 = sphi 0, %s158
    %s162 = sphi 0, %s161
    %s178 = sphi 0, %s162
  $region4: #{_lambda_.19} parent=0 // loop_header_branch
    %15 = sbr.rel (%p13) target = $region8
  $region5: #{_lambda_.19} parent=0 // loop_body
    %s17 = ssub.s32 %s12, 1
    %s18 = ssub.s32 %s12, 2
    %s19 = sadd.s32 %s12, 1
    %s20 = ssub.s32 %s12, %s19
    %p21 = scmp.eq.s32.totalorder %s20, 0
    %s23 = sadd.s32 %s22, 1
    %s24 = scalar_select %p21, %s22, %s23
    %p27 = pneg %p21
    %p28 = scmp.eq.s32.totalorder %s12, 1
    %p29 = por %p27, %p28
    %p30 = scmp.ne.s32.totalorder %s22, %s25
    %p31 = scmp.eq.s32.totalorder %s12, 0
    %p32 = por %p30, %p31
    %p33 = scmp.ne.s32.totalorder %s22, %s25
    %p34 = scmp.eq.s32.totalorder %s17, 1
    %p35 = por %p33, %p34
    %p36 = scmp.ne.s32.totalorder %s25, %s26
    %p37 = scmp.eq.s32.totalorder %s17, 0
    %p38 = por %p36, %p37
    %p39 = scmp.ne.s32.totalorder %s25, %s26
    %p40 = scmp.eq.s32.totalorder %s18, 1
    %p41 = por %p39, %p40
    %p43 = scmp.ne.s32.totalorder %s26, %s42
    %p44 = scmp.eq.s32.totalorder %s18, 0
    %p45 = por %p43, %p44
    %s47 = sadd.s32 %s46, 1
    %p50 = scmp.eq.s32.totalorder %s12, 1
    %p51 = scmp.ne.s32.totalorder %s46, %s48
    %p52 = scmp.eq.s32.totalorder %s12, 0
    %p53 = por %p51, %p52
    %p54 = scmp.ne.s32.totalorder %s46, %s48
    %p55 = scmp.eq.s32.totalorder %s17, 1
    %p56 = por %p54, %p55
    %p57 = scmp.ne.s32.totalorder %s48, %s49
    %p58 = scmp.eq.s32.totalorder %s17, 0
    %p59 = por %p57, %p58
    %p60 = scmp.ne.s32.totalorder %s48, %s49
    %p61 = scmp.eq.s32.totalorder %s18, 1
    %p62 = por %p60, %p61
    %p64 = scmp.ne.s32.totalorder %s49, %s63
    %p65 = scmp.eq.s32.totalorder %s18, 0
    %p66 = por %p64, %p65
    %s68 = sadd.s32 %s67, 1
    %p71 = scmp.eq.s32.totalorder %s12, 1
    %p72 = scmp.ne.s32.totalorder %s67, %s69
    %p73 = scmp.eq.s32.totalorder %s12, 0
    %p74 = por %p72, %p73
    %p75 = scmp.ne.s32.totalorder %s67, %s69
    %p76 = scmp.eq.s32.totalorder %s17, 1
    %p77 = por %p75, %p76
    %p78 = scmp.ne.s32.totalorder %s69, %s70
    %p79 = scmp.eq.s32.totalorder %s17, 0
    %p80 = por %p78, %p79
    %p81 = scmp.ne.s32.totalorder %s69, %s70
    %p82 = scmp.eq.s32.totalorder %s18, 1
    %p83 = por %p81, %p82
    %p85 = scmp.ne.s32.totalorder %s70, %s84
    %p86 = scmp.eq.s32.totalorder %s18, 0
    %p87 = por %p85, %p86
    %s88 = ssub.s32 %s12, %s19
    %p89 = scmp.eq.s32.totalorder %s88, 0
    %s91 = sadd.s32 %s90, 1
    %s92 = scalar_select %p89, %s90, %s91
    %p95 = pneg %p89
    %p96 = scmp.eq.s32.totalorder %s12, 1
    %p97 = por %p95, %p96
    %p98 = scmp.ne.s32.totalorder %s90, %s93
    %p99 = scmp.eq.s32.totalorder %s12, 0
    %p100 = por %p98, %p99
    %p101 = scmp.ne.s32.totalorder %s90, %s93
    %p102 = scmp.eq.s32.totalorder %s17, 1
    %p103 = por %p101, %p102
    %p104 = scmp.ne.s32.totalorder %s93, %s94
    %p105 = scmp.eq.s32.totalorder %s17, 0
    %p106 = por %p104, %p105
    %p107 = scmp.ne.s32.totalorder %s93, %s94
    %p108 = scmp.eq.s32.totalorder %s18, 1
    %p109 = por %p107, %p108
    %p111 = scmp.ne.s32.totalorder %s94, %s110
    %p112 = scmp.eq.s32.totalorder %s18, 0
    %p113 = por %p111, %p112
    %s115 = sadd.s32 %s114, 1
    %p118 = scmp.eq.s32.totalorder %s12, 1
    %p119 = scmp.ne.s32.totalorder %s114, %s116
    %p120 = scmp.eq.s32.totalorder %s12, 0
    %p121 = por %p119, %p120
    %p122 = scmp.ne.s32.totalorder %s114, %s116
    %p123 = scmp.eq.s32.totalorder %s17, 1
    %p124 = por %p122, %p123
    %p125 = scmp.ne.s32.totalorder %s116, %s117
    %p126 = scmp.eq.s32.totalorder %s17, 0
    %p127 = por %p125, %p126
    %p128 = scmp.ne.s32.totalorder %s116, %s117
    %p129 = scmp.eq.s32.totalorder %s18, 1
    %p130 = por %p128, %p129
    %p132 = scmp.ne.s32.totalorder %s117, %s131
    %p133 = scmp.eq.s32.totalorder %s18, 0
    %p134 = por %p132, %p133
    %s136 = sadd.s32 %s135, 1
    %p139 = scmp.eq.s32.totalorder %s12, 1
    %p140 = scmp.ne.s32.totalorder %s135, %s137
    %p141 = scmp.eq.s32.totalorder %s12, 0
    %p142 = por %p140, %p141
    %p143 = scmp.ne.s32.totalorder %s135, %s137
    %p144 = scmp.eq.s32.totalorder %s17, 1
    %p145 = por %p143, %p144
    %p146 = scmp.ne.s32.totalorder %s137, %s138
    %p147 = scmp.eq.s32.totalorder %s17, 0
    %p148 = por %p146, %p147
    %p149 = scmp.ne.s32.totalorder %s137, %s138
    %p150 = scmp.eq.s32.totalorder %s18, 1
    %p151 = por %p149, %p150
    %p153 = scmp.ne.s32.totalorder %s138, %s152
    %p154 = scmp.eq.s32.totalorder %s18, 0
    %p155 = por %p153, %p154
    %s156 = ssub.s32 %s12, %s19
    %p157 = scmp.eq.s32.totalorder %s156, 0
    %s159 = sadd.s32 %s158, 1
    %s160 = scalar_select %p157, %s158, %s159
    %p163 = pneg %p157
    %p164 = scmp.eq.s32.totalorder %s12, 1
    %p165 = por %p163, %p164
    %p166 = scmp.ne.s32.totalorder %s158, %s161
    %p167 = scmp.eq.s32.totalorder %s12, 0
    %p168 = por %p166, %p167
    %p169 = scmp.ne.s32.totalorder %s158, %s161
    %p170 = scmp.eq.s32.totalorder %s17, 1
    %p171 = por %p169, %p170
    %p172 = scmp.ne.s32.totalorder %s161, %s162
    %p173 = scmp.eq.s32.totalorder %s17, 0
    %p174 = por %p172, %p173
    %p175 = scmp.ne.s32.totalorder %s161, %s162
    %p176 = scmp.eq.s32.totalorder %s18, 1
    %p177 = por %p175, %p176
    %p179 = scmp.ne.s32.totalorder %s162, %s178
    %p180 = scmp.eq.s32.totalorder %s18, 0
    %p181 = por %p179, %p180
    %p182 = scmp.le.s32.totalorder 1, %s12
    %p183 = scmp.lt.s32.totalorder %s12, 3
    %p184 = pnand %p182, %p183
    %p185 = pneg %p184
    // Predicated region
    $region9: #{_lambda_.19} parent=5 // pred_check
      _
    $region10: #{_lambda_.19} parent=5 // pred_check_branch
      %187 = sbr.rel (%p184) target = $region12
    $region11: #{_lambda_.19} parent=5 // pred_region
      %s188 = ssub.s32 %s12, 1
      // Predicated region
      $region13: #{_lambda_.19} parent=11 // pred_check
        %p189 = pneg %p59
      $region14: #{_lambda_.19} parent=11 // pred_check_branch
        %191 = sbr.rel (%p189) target = $region16
      $region15: #{_lambda_.19} parent=11 // pred_region
        _
      $region16: #{_lambda_.19} parent=11 // pred_fallthru
        _
      // Predicated region
      $region17: #{_lambda_.19} parent=11 // pred_check
        %p192 = pneg %p80
      $region18: #{_lambda_.19} parent=11 // pred_check_branch
        %194 = sbr.rel (%p192) target = $region20
      $region19: #{_lambda_.19} parent=11 // pred_region
        _
      $region20: #{_lambda_.19} parent=11 // pred_fallthru
        _
      // Predicated region
      $region21: #{_lambda_.19} parent=11 // pred_check
        %p195 = pneg %p127
      $region22: #{_lambda_.19} parent=11 // pred_check_branch
        %197 = sbr.rel (%p195) target = $region24
      $region23: #{_lambda_.19} parent=11 // pred_region
        _
      $region24: #{_lambda_.19} parent=11 // pred_fallthru
        _
      // Predicated region
      $region25: #{_lambda_.19} parent=11 // pred_check
        %p198 = pneg %p148
      $region26: #{_lambda_.19} parent=11 // pred_check_branch
        %200 = sbr.rel (%p198) target = $region28
      $region27: #{_lambda_.19} parent=11 // pred_region
        _
      $region28: #{_lambda_.19} parent=11 // pred_fallthru
        _
    $region12: #{_lambda_.19} parent=5 // pred_fallthru
      _
    %p201 = scmp.lt.s32.totalorder %s12, 2
    // Predicated region
    $region29: #{_lambda_.19} parent=5 // pred_check
      %p202 = pneg %p201
    $region30: #{_lambda_.19} parent=5 // pred_check_branch
      %204 = sbr.rel (%p202) target = $region32
    $region31: #{_lambda_.19} parent=5 // pred_region
      // Predicated region
      $region33: #{_lambda_.19} parent=31 // pred_check
        %p205 = pneg %p32
      $region34: #{_lambda_.19} parent=31 // pred_check_branch
        %207 = sbr.rel (%p205) target = $region36
      $region35: #{_lambda_.19} parent=31 // pred_region
        %s208 = smul.u32 8, %s12
        %p209 = scmp.lt.s32.totalorder %s208, 15
        %s210 = scalar_select %p209, %s208, 15
        %s211 = smul.addr %s210, 4
        %s212 = scalar_lea.vmem %s0, %s211
        %s213 = smul.u32 8, %s12
      $region36: #{_lambda_.19} parent=31 // pred_fallthru
        _
      // Predicated region
      $region37: #{_lambda_.19} parent=31 // pred_check
        %p214 = pneg %p100
      $region38: #{_lambda_.19} parent=31 // pred_check_branch
        %216 = sbr.rel (%p214) target = $region40
      $region39: #{_lambda_.19} parent=31 // pred_region
        %s217 = smul.u32 8, %s12
        %p218 = scmp.lt.s32.totalorder %s217, 15
        %s219 = scalar_select %p218, %s217, 15
        %s220 = smul.addr %s219, 4
        %s221 = scalar_lea.vmem %s3, %s220
        %s222 = smul.u32 8, %s12
      $region40: #{_lambda_.19} parent=31 // pred_fallthru
        _
    $region32: #{_lambda_.19} parent=5 // pred_fallthru
      _
    %p223 = scmp.le.s32.totalorder 1, %s12
    %p224 = scmp.lt.s32.totalorder %s12, 3
    %p225 = pnand %p223, %p224
    %p226 = pneg %p225
    // Predicated region
    $region41: #{_lambda_.19} parent=5 // pred_check
      _
    $region42: #{_lambda_.19} parent=5 // pred_check_branch
      %228 = sbr.rel (%p225) target = $region44
    $region43: #{_lambda_.19} parent=5 // pred_region
      %s229 = ssub.s32 %s12, 1
      %s230 = smul.u32 8, %s17
      %p231 = scmp.lt.s32.totalorder %s230, 15
      %s232 = scalar_select %p231, %s230, 15
      %s233 = smul.addr %s232, 4
      %s234 = scalar_lea.vmem %s0, %s233
      %p235 = pneg %p38
      %p236 = pneg %p35
      %p237 = pneg %p59
      %p238 = pneg %p56
      %p239 = pneg %p80
      %p240 = pneg %p77
      %s241 = smul.u32 8, %s17
      %p242 = scmp.lt.s32.totalorder %s241, 15
      %s243 = scalar_select %p242, %s241, 15
      %s244 = smul.addr %s243, 4
      %s245 = scalar_lea.vmem %s3, %s244
      %p246 = pneg %p106
      %p247 = pneg %p103
      %p248 = pneg %p127
      %p249 = pneg %p124
      %p250 = pneg %p148
      %p251 = pneg %p145
      %p252 = pneg %p174
      %p253 = pneg %p171
      %s254 = smul.u32 8, %s17
      %p255 = scmp.lt.s32.totalorder %s254, 15
      %s256 = scalar_select %p255, %s254, 15
      %s257 = smul.addr %s256, 4
      %s258 = scalar_lea.vmem %s6, %s257
      %s259 = smul.u32 8, %s17
      %p260 = scmp.lt.s32.totalorder %s259, 15
      %s261 = scalar_select %p260, %s259, 15
      %s262 = smul.addr %s261, 4
      %s263 = scalar_lea.vmem %s0, %s262
      %s264 = smul.u32 8, %s17
      %s265 = smul.u32 8, %s17
      %p266 = scmp.lt.s32.totalorder %s265, 15
      %s267 = scalar_select %p266, %s265, 15
      %s268 = smul.addr %s267, 4
      %s269 = scalar_lea.vmem %s3, %s268
      %s270 = smul.u32 8, %s17
      %s271 = smul.u32 8, %s17
      %p272 = scmp.lt.s32.totalorder %s271, 15
      %s273 = scalar_select %p272, %s271, 15
      %s274 = smul.addr %s273, 4
      %s275 = scalar_lea.vmem %s6, %s274
      %s276 = smul.u32 8, %s17
      %v277 = vld [vmem:[%s263] sm:$0xf]
      %v278 = vld [vmem:[%s263 + $0x4] sm:$0xf]
      %v279 = vld [vmem:[%s263 + $0x8] sm:$0xf]
      %v280 = vld [vmem:[%s263 + $0xc] sm:$0xf]
      %v281 = vld [vmem:[%s263 + $0x10] sm:$0xf]
      %v282 = vld [vmem:[%s263 + $0x14] sm:$0xf]
      %v283 = vld [vmem:[%s263 + $0x18] sm:$0xf]
      %v284 = vld [vmem:[%s263 + $0x1c] sm:$0xf]
      %v285 = vunpack.c.l.bf16 %v277
      %v286 = vunpack.c.l.bf16 %v278
      %v287 = vunpack.c.l.bf16 %v279
      %v288 = vunpack.c.l.bf16 %v280
      %v289 = vunpack.c.l.bf16 %v281
      %v290 = vunpack.c.l.bf16 %v282
      %v291 = vunpack.c.l.bf16 %v283
      %v292 = vunpack.c.l.bf16 %v284
      %v293 = vld [vmem:[%s1] sm:$0x1]
      %v295 = vperm.slane %v293, 0
      %v297 = vmul.f32 %v285, %v295
      %v298 = vmul.f32 %v286, %v295
      %v299 = vmul.f32 %v287, %v295
      %v300 = vmul.f32 %v288, %v295
      %v301 = vmul.f32 %v289, %v295
      %v302 = vmul.f32 %v290, %v295
      %v303 = vmul.f32 %v291, %v295
      %v304 = vmul.f32 %v292, %v295
      %v305 = vld [vmem:[%s2] sm:$0x1]
      %v307 = vperm.slane %v305, 0
      %v309 = vadd.f32 %v297, %v307
      %v310 = vadd.f32 %v298, %v307
      %v311 = vadd.f32 %v299, %v307
      %v312 = vadd.f32 %v300, %v307
      %v313 = vadd.f32 %v301, %v307
      %v314 = vadd.f32 %v302, %v307
      %v315 = vadd.f32 %v303, %v307
      %v316 = vadd.f32 %v304, %v307
      %v317 = vld [vmem:[%s269] sm:$0xf]
      %v318 = vld [vmem:[%s269 + $0x4] sm:$0xf]
      %v319 = vld [vmem:[%s269 + $0x8] sm:$0xf]
      %v320 = vld [vmem:[%s269 + $0xc] sm:$0xf]
      %v321 = vld [vmem:[%s269 + $0x10] sm:$0xf]
      %v322 = vld [vmem:[%s269 + $0x14] sm:$0xf]
      %v323 = vld [vmem:[%s269 + $0x18] sm:$0xf]
      %v324 = vld [vmem:[%s269 + $0x1c] sm:$0xf]
      %v325 = vunpack.c.l.bf16 %v317
      %v326 = vunpack.c.l.bf16 %v318
      %v327 = vunpack.c.l.bf16 %v319
      %v328 = vunpack.c.l.bf16 %v320
      %v329 = vunpack.c.l.bf16 %v321
      %v330 = vunpack.c.l.bf16 %v322
      %v331 = vunpack.c.l.bf16 %v323
      %v332 = vunpack.c.l.bf16 %v324
      %v333 = vld [vmem:[%s4] sm:$0x1]
      %v335 = vperm.slane %v333, 0
      %v337 = vmul.f32 %v325, %v335
      %v338 = vmul.f32 %v326, %v335
      %v339 = vmul.f32 %v327, %v335
      %v340 = vmul.f32 %v328, %v335
      %v341 = vmul.f32 %v329, %v335
      %v342 = vmul.f32 %v330, %v335
      %v343 = vmul.f32 %v331, %v335
      %v344 = vmul.f32 %v332, %v335
      %v345 = vld [vmem:[%s5] sm:$0x1]
      %v347 = vperm.slane %v345, 0
      %v349 = vadd.f32 %v337, %v347
      %v350 = vadd.f32 %v338, %v347
      %v351 = vadd.f32 %v339, %v347
      %v352 = vadd.f32 %v340, %v347
      %v353 = vadd.f32 %v341, %v347
      %v354 = vadd.f32 %v342, %v347
      %v355 = vadd.f32 %v343, %v347
      %v356 = vadd.f32 %v344, %v347
      %v357 = vadd.f32 %v309, %v349
      %v358 = vadd.f32 %v310, %v350
      %v359 = vadd.f32 %v311, %v351
      %v360 = vadd.f32 %v312, %v352
      %v361 = vadd.f32 %v313, %v353
      %v362 = vadd.f32 %v314, %v354
      %v363 = vadd.f32 %v315, %v355
      %v364 = vadd.f32 %v316, %v356
      %v365 = vmax.f32 %v357, 0.0
      %v366 = vmax.f32 %v358, 0.0
      %v367 = vmax.f32 %v359, 0.0
      %v368 = vmax.f32 %v360, 0.0
      %v369 = vmax.f32 %v361, 0.0
      %v370 = vmax.f32 %v362, 0.0
      %v371 = vmax.f32 %v363, 0.0
      %v372 = vmax.f32 %v364, 0.0
      %v373 = vpack.c.bf16 %v365, %v365
      %v374 = vpack.c.bf16 %v366, %v366
      %v375 = vpack.c.bf16 %v367, %v367
      %v376 = vpack.c.bf16 %v368, %v368
      %v377 = vpack.c.bf16 %v369, %v369
      %v378 = vpack.c.bf16 %v370, %v370
      %v379 = vpack.c.bf16 %v371, %v371
      %v380 = vpack.c.bf16 %v372, %v372
      %381 = vst [vmem:[%s275] sm:$0xf] %v373
      %382 = vst [vmem:[%s275 + $0x4] sm:$0xf] %v374
      %383 = vst [vmem:[%s275 + $0x8] sm:$0xf] %v375
      %384 = vst [vmem:[%s275 + $0xc] sm:$0xf] %v376
      %385 = vst [vmem:[%s275 + $0x10] sm:$0xf] %v377
      %386 = vst [vmem:[%s275 + $0x14] sm:$0xf] %v378
      %387 = vst [vmem:[%s275 + $0x18] sm:$0xf] %v379
      %388 = vst [vmem:[%s275 + $0x1c] sm:$0xf] %v380
      %s389 = smul.u32 8, %s17
      %p390 = scmp.lt.s32.totalorder %s389, 15
      %s391 = scalar_select %p390, %s389, 15
      %s392 = smul.addr %s391, 4
      %s393 = scalar_lea.vmem %s6, %s392
      // Predicated region
      $region45: #{_lambda_.19} parent=43 // pred_check
        %p394 = pneg %p171
      $region46: #{_lambda_.19} parent=43 // pred_check_branch
        %396 = sbr.rel (%p394) target = $region48
      $region47: #{_lambda_.19} parent=43 // pred_region
        %s397 = smul.u32 8, %s17
      $region48: #{_lambda_.19} parent=43 // pred_fallthru
        _
    $region44: #{_lambda_.19} parent=5 // pred_fallthru
      _
    %p398 = scmp.le.s32.totalorder 2, %s12
    // Predicated region
    $region49: #{_lambda_.19} parent=5 // pred_check
      %p399 = pneg %p398
    $region50: #{_lambda_.19} parent=5 // pred_check_branch
      %401 = sbr.rel (%p399) target = $region52
    $region51: #{_lambda_.19} parent=5 // pred_region
      %s402 = ssub.s32 %s12, 2
      // Predicated region
      $region53: #{_lambda_.19} parent=51 // pred_check
        %p403 = pneg %p177
      $region54: #{_lambda_.19} parent=51 // pred_check_branch
        %405 = sbr.rel (%p403) target = $region56
      $region55: #{_lambda_.19} parent=51 // pred_region
        %s406 = smul.u32 8, %s18
        %p407 = scmp.lt.s32.totalorder %s406, 15
        %s408 = scalar_select %p407, %s406, 15
        %s409 = smul.addr %s408, 4
        %s410 = scalar_lea.vmem %s6, %s409
      $region56: #{_lambda_.19} parent=51 // pred_fallthru
        _
    $region52: #{_lambda_.19} parent=5 // pred_fallthru
      _
  $region6: #{_lambda_.19} parent=0 // loop_footer
    %s16 = sadd.s32 1, %s12
  $region7: #{_lambda_.19} parent=0 // loop_footer_branch
    %11 = sbr.rel target = $region3
  $region8: #{_lambda_.19} parent=0 // loop_exit
    _

</llo_original>
